<compile_context>
chip_gen: v7x
topology: tpu7x:2x2x1
jax: 0.10.0
libtpu: 0.0.40
codegen_flags: <defaults>
</compile_context>

<pallas_src>
import functools

import numpy as np
import jax
import jax.numpy as jnp
from jax.experimental import pallas as pl
from jax.experimental.pallas import tpu as pltpu

_BN_EPS = 1e-5


# ----------------------------------------------------------------------------
# Geometry helpers for the flat zero-padded activation layout
# ----------------------------------------------------------------------------

def _nbuf_rows(r):
    """Rows of the flat padded buffer for resolution r (covers the largest tap read).

    Padded pixel (a, b) of the (r+2)x(r+2) image lives at buffer row a*(r+2)+b.
    Tap (di, dj) of a 3x3 conv is rows [di*(r+2)+dj, di*(r+2)+dj + r*(r+2)).
    """
    p = r + 2
    need = r * p + 2 * p + 2
    return ((need + 7) // 8) * 8


def _decimation_matrix(r_in, r_out):
    """0/1 matrix: stride-1 semi-padded rows (r_in, r_in+2) -> stride-2 output rows
    (r_out, r_out+2).  Junk output rows (col >= r_out) map to all-zero rows."""
    p_in, p_out = r_in + 2, r_out + 2
    s = np.zeros((r_out * p_out, r_in * p_in), np.float32)
    for i in range(r_out):
        for j in range(r_out):
            s[i * p_out + j, (2 * i) * p_in + 2 * j] = 1.0
    return jnp.asarray(s, dtype=jnp.bfloat16)


def _col_mask(r):
    """(r*(r+2), 1) f32 mask: 1 on meaningful rows (b < r), 0 on junk/pad rows."""
    p = r + 2
    m = np.zeros((r * p, 1), np.float32)
    for i in range(r):
        m[i * p:i * p + r, 0] = 1.0
    return jnp.asarray(m)


def _conv1_im2col(x_nhwc, r):
    """Wrapper-side im2col of the 3-channel stem input -> (N, r*(r+2), 27) bf16,
    rows in the kernel's semi-padded layout m = i*(r+2) + j (junk rows j >= r)."""
    p = r + 2
    n = x_nhwc.shape[0]
    c = x_nhwc.shape[-1]
    xp = jnp.pad(x_nhwc, ((0, 0), (1, 1), (1, 3), (0, 0)))
    pieces = [xp[:, di:di + r, dj:dj + p, :] for di in range(3) for dj in range(3)]
    xim = jnp.concatenate(pieces, axis=-1)                    # (N, r, p, 9*c)
    return xim.reshape(n, r * p, 9 * c).astype(jnp.bfloat16)


# ----------------------------------------------------------------------------
# The fused Pallas kernel (whole network, one image per grid step)
# ----------------------------------------------------------------------------

def _foldnet_kernel(
    x1_ref,
    w0_ref, b0_ref,
    w1a_ref, b1a_ref, w1b_ref, b1b_ref,
    w2a_ref, b2a_ref, w2b_ref, b2b_ref, w2s_ref, b2s_ref,
    w3a_ref, b3a_ref, w3b_ref, b3b_ref, w3s_ref, b3s_ref,
    s2_ref, s3_ref,
    m1_ref, m2_ref, m3_ref,
    wl_ref, bl_ref,
    out_ref,
    buf1a, buf1b, buf1c, buf2a, buf2b, buf3a,
    *, r1, r2, r3,
):
    """FoldNet forward for one image.

    Activations live in VMEM scratch as flat zero-padded images (row = padded
    pixel).  Each 3x3 conv = concat of 9 *contiguous* tap slices (K = 9*Cin)
    + one MXU matmul + folded-BN shift.  Stride-2 convs reuse the stride-1
    im2col and decimate with a constant 0/1 selection matmul (no strided
    indexing).  Rows with padded-col >= R are junk; they are zeroed by the
    column mask before every buffer store and excluded from the pooled head.
    """
    pp1, pp2, pp3 = r1 + 2, r2 + 2, r3 + 2

    # Zero the padded buffers so the zero-pad ring (and junk rows) are valid.
    for buf in (buf1a, buf1b, buf1c, buf2a, buf2b, buf3a):
        buf[...] = jnp.zeros(buf.shape, buf.dtype)

    def taps(buf, r, p):
        """(r*p, 9*C) im2col of the padded flat buffer, contiguous slices only."""
        pieces = []
        for di in range(3):
            for dj in range(3):
                off = di * p + dj
                pieces.append(buf[off:off + r * p, :])
        return jnp.concatenate(pieces, axis=-1)

    def store(buf, vals, r, p, mask_ref):
        """Zero the junk columns (keeps the pad ring clean), cast, write interior."""
        buf[p + 1:p + 1 + r * p, :] = (vals * mask_ref[...]).astype(buf.dtype)

    def mm(a, w_ref, b_ref):
        return jnp.dot(a, w_ref[...], preferred_element_type=jnp.float32) + b_ref[...]

    relu = lambda v: jnp.maximum(v, 0.0)

    # ---- stem: conv3x3(3->c1) + folded BN + ReLU (im2col pre-packed in wrapper).
    z0 = relu(mm(x1_ref[0], w0_ref, b0_ref))
    store(buf1a, z0, r1, pp1, m1_ref)

    # ---- block1: c1 -> c1, stride 1, identity shortcut.
    c = relu(mm(taps(buf1a, r1, pp1), w1a_ref, b1a_ref))
    store(buf1b, c, r1, pp1, m1_ref)
    c = mm(taps(buf1b, r1, pp1), w1b_ref, b1b_ref)
    idn = buf1a[pp1 + 1:pp1 + 1 + r1 * pp1, :].astype(jnp.float32)
    store(buf1c, relu(c + idn), r1, pp1, m1_ref)

    # ---- block2: c1 -> c2, stride 2, projected (1x1 stride-2) shortcut.
    cin = w2s_ref.shape[0]
    xd = jnp.dot(s2_ref[...], taps(buf1c, r1, pp1),
                 preferred_element_type=jnp.float32).astype(jnp.bfloat16)
    c = relu(mm(xd, w2a_ref, b2a_ref))
    store(buf2a, c, r2, pp2, m2_ref)
    c = mm(taps(buf2a, r2, pp2), w2b_ref, b2b_ref)
    sc = mm(xd[:, 4 * cin:5 * cin], w2s_ref, b2s_ref)   # center tap == x[2i, 2j]
    store(buf2b, relu(c + sc), r2, pp2, m2_ref)

    # ---- block3: c2 -> c3, stride 2, projected shortcut.
    cin = w3s_ref.shape[0]
    xd = jnp.dot(s3_ref[...], taps(buf2b, r2, pp2),
                 preferred_element_type=jnp.float32).astype(jnp.bfloat16)
    c = relu(mm(xd, w3a_ref, b3a_ref))
    store(buf3a, c, r3, pp3, m3_ref)
    c = mm(taps(buf3a, r3, pp3), w3b_ref, b3b_ref)
    sc = mm(xd[:, 4 * cin:5 * cin], w3s_ref, b3s_ref)
    y = relu(c + sc)                                    # (r3*pp3, c3) f32

    # ---- head: masked global average pool + Linear, fused epilogue.
    pooled = jnp.sum(y * m3_ref[...], axis=0, keepdims=True) * (1.0 / (r3 * r3))
    logits = jnp.dot(pooled, wl_ref[...],
                     preferred_element_type=jnp.float32) + bl_ref[...]
    out_ref[0] = logits.astype(out_ref.dtype)


# ----------------------------------------------------------------------------
# Wrapper
# ----------------------------------------------------------------------------

def foldnet_forward(params, x_nchw):
    n, _, h, w = x_nchw.shape
    assert h == w and h % 4 == 0, "fused kernel assumes square input, H % 4 == 0"
    r1, r2, r3 = h, h // 2, h // 4
    c1 = params["w0"].shape[1]
    c2 = params["w2a"].shape[1]
    c3 = params["w3a"].shape[1]
    nc = params["wl"].shape[1]

    x = jnp.transpose(x_nchw, (0, 2, 3, 1))            # NCHW -> NHWC once
    x1 = _conv1_im2col(x, r1)                          # (N, r1*(r1+2), 27) bf16

    inputs = [
        x1,
        params["w0"], params["b0"],
        params["w1a"], params["b1a"], params["w1b"], params["b1b"],
        params["w2a"], params["b2a"], params["w2b"], params["b2b"],
        params["w2s"], params["b2s"],
        params["w3a"], params["b3a"], params["w3b"], params["b3b"],
        params["w3s"], params["b3s"],
        _decimation_matrix(r1, r2), _decimation_matrix(r2, r3),
        _col_mask(r1), _col_mask(r2), _col_mask(r3),
        params["wl"], params["bl"],
    ]
    # x1 is tiled over the batch; everything else is a full-array (constant) block.
    in_specs = ([pl.BlockSpec((1,) + x1.shape[1:], lambda i: (i, 0, 0))]
                + [pl.BlockSpec(a.shape, lambda i: (0, 0)) for a in inputs[1:]])

    scratch = [
        pltpu.VMEM((_nbuf_rows(r1), c1), jnp.bfloat16),   # stem out / block1 in
        pltpu.VMEM((_nbuf_rows(r1), c1), jnp.bfloat16),   # block1 mid
        pltpu.VMEM((_nbuf_rows(r1), c1), jnp.bfloat16),   # block1 out / block2 in
        pltpu.VMEM((_nbuf_rows(r2), c2), jnp.bfloat16),   # block2 mid
        pltpu.VMEM((_nbuf_rows(r2), c2), jnp.bfloat16),   # block2 out / block3 in
        pltpu.VMEM((_nbuf_rows(r3), c3), jnp.bfloat16),   # block3 mid
    ]

    out = pl.pallas_call(
        functools.partial(_foldnet_kernel, r1=r1, r2=r2, r3=r3),
        out_shape=jax.ShapeDtypeStruct((n, 1, nc), jnp.float32),
        grid=(n,),
        in_specs=in_specs,
        out_specs=pl.BlockSpec((1, 1, nc), lambda i: (i, 0, 0)),
        scratch_shapes=scratch,
        compiler_params=pltpu.CompilerParams(
            dimension_semantics=("parallel",)),   # one image per v7x TensorCore
    )(*inputs)
    return out.reshape(n, nc)


# ----------------------------------------------------------------------------
# Deterministic parameter construction with inference-time BN folding
# ----------------------------------------------------------------------------

def _init_conv(key, kh, kw, cin, cout):
    fan_in = kh * kw * cin
    return (jax.random.normal(key, (kh, kw, cin, cout))
            * np.sqrt(2.0 / fan_in)).astype(jnp.float32)


def _init_bn(key, c):
    kg, kb = jax.random.split(key)
    gamma = 1.0 + 0.1 * jax.random.normal(kg, (c,))
    beta = 0.1 * jax.random.normal(kb, (c,))
    scale = gamma / jnp.sqrt(1.0 + _BN_EPS)     # running mean = 0, var = 1
    shift = beta
    return scale.astype(jnp.float32), shift.astype(jnp.float32)


def _fold3(w, scale, shift):
    """3x3 weight (3,3,Cin,Cout) * BN scale -> (9*Cin, Cout) bf16 (tap-major rows)."""
    cin, cout = w.shape[2], w.shape[3]
    wf = (w * scale[None, None, None, :]).reshape(9 * cin, cout)
    return wf.astype(jnp.bfloat16), shift.reshape(1, cout).astype(jnp.float32)


def _fold1(w, scale, shift):
    cin, cout = w.shape
    wf = (w * scale[None, :]).astype(jnp.bfloat16)
    return wf, shift.reshape(1, cout).astype(jnp.float32)


def build_foldnet_params(key, num_classes=10, width_scaler=1.0):
    # TODO(synk): the fused kernel is specialised to FoldNet(BasicBlock, [1, 1, 1]);
    # num_blocks > 1 per stage would need extra (identity) block segments.
    c1 = int(16 * width_scaler)
    c2 = int(32 * width_scaler)
    c3 = int(64 * width_scaler)
    ks = jax.random.split(key, 20)
    p = {}
    p["w0"], p["b0"] = _fold3(_init_conv(ks[0], 3, 3, 3, c1), *_init_bn(ks[1], c1))
    # block1: c1 -> c1, stride 1, identity shortcut
    p["w1a"], p["b1a"] = _fold3(_init_conv(ks[2], 3, 3, c1, c1), *_init_bn(ks[3], c1))
    p["w1b"], p["b1b"] = _fold3(_init_conv(ks[4], 3, 3, c1, c1), *_init_bn(ks[5], c1))
    # block2: c1 -> c2, stride 2, projected shortcut
    p["w2a"], p["b2a"] = _fold3(_init_conv(ks[6], 3, 3, c1, c2), *_init_bn(ks[7], c2))
    p["w2b"], p["b2b"] = _fold3(_init_conv(ks[8], 3, 3, c2, c2), *_init_bn(ks[9], c2))
    p["w2s"], p["b2s"] = _fold1(_init_conv(ks[10], 1, 1, c1, c2).reshape(c1, c2),
                                *_init_bn(ks[11], c2))
    # block3: c2 -> c3, stride 2, projected shortcut
    p["w3a"], p["b3a"] = _fold3(_init_conv(ks[12], 3, 3, c2, c3), *_init_bn(ks[13], c3))
    p["w3b"], p["b3b"] = _fold3(_init_conv(ks[14], 3, 3, c3, c3), *_init_bn(ks[15], c3))
    p["w3s"], p["b3s"] = _fold1(_init_conv(ks[16], 1, 1, c2, c3).reshape(c2, c3),
                                *_init_bn(ks[17], c3))
    p["wl"] = (jax.random.normal(ks[18], (c3, num_classes))
               * np.sqrt(1.0 / c3)).astype(jnp.float32)
    p["bl"] = jnp.zeros((1, num_classes), jnp.float32)
    return p


# ----------------------------------------------------------------------------
# Pure-XLA reference (same folded weights) for a sanity cross-check
# ----------------------------------------------------------------------------

def _ref_forward(params, x_nchw):
    def conv(x, wf, b, k, stride):
        cin, cout = x.shape[-1], wf.shape[-1]
        w = wf.astype(jnp.float32).reshape(k, k, cin, cout)
        pad = ((1, 1), (1, 1)) if k == 3 else ((0, 0), (0, 0))
        y = jax.lax.conv_general_dilated(
            x, w, (stride, stride), pad,
            dimension_numbers=("NHWC", "HWIO", "NHWC"))
        return y + b.reshape(1, 1, 1, cout)

    relu = lambda v: jnp.maximum(v, 0.0)
    x = jnp.transpose(x_nchw, (0, 2, 3, 1)).astype(jnp.float32)
    z = relu(conv(x, params["w0"], params["b0"], 3, 1))
    h = relu(conv(z, params["w1a"], params["b1a"], 3, 1))
    z = relu(conv(h, params["w1b"], params["b1b"], 3, 1) + z)
    h = relu(conv(z, params["w2a"], params["b2a"], 3, 2))
    z = relu(conv(h, params["w2b"], params["b2b"], 3, 1)
             + conv(z, params["w2s"], params["b2s"], 1, 2))
    h = relu(conv(z, params["w3a"], params["b3a"], 3, 2))
    z = relu(conv(h, params["w3b"], params["b3b"], 3, 1)
             + conv(z, params["w3s"], params["b3s"], 1, 2))
    pooled = jnp.mean(z, axis=(1, 2))
    return pooled @ params["wl"] + params["bl"].reshape(-1)


# ----------------------------------------------------------------------------

if __name__ == "__main__":
    key = jax.random.PRNGKey(0)
    kp, kx = jax.random.split(key)

    params = build_foldnet_params(kp, num_classes=10, width_scaler=1.0)

    # Small CIFAR-like input (NCHW, like the PyTorch module): batch=2, 3x16x16.
    x = jax.random.normal(kx, (2, 3, 16, 16), dtype=jnp.float32)

    fwd = jax.jit(foldnet_forward)
    logits = fwd(params, x)
    jax.block_until_ready(logits)

    assert logits.shape == (2, 10), logits.shape
    assert bool(jnp.all(jnp.isfinite(logits)))

    # Cross-check vs. pure-XLA reference using the same folded weights; the only
    # divergence is bf16 rounding of activations inside the fused kernel.
    ref = jax.jit(_ref_forward)(params, x)
    np.testing.assert_allclose(np.asarray(logits), np.asarray(ref),
                               atol=0.25, rtol=0.05)

    print("KERNEL_OK")
</pallas_src>

<mosaic_0001>
module attributes {stable_mosaic.version = 11 : i64} {
  func.func @_foldnet_kernel(%arg0: i32, %arg1: memref<1x288x27xbf16, #tpu.memory_space<vmem>>, %arg2: memref<27x16xbf16, #tpu.memory_space<vmem>>, %arg3: memref<1x16xf32, #tpu.memory_space<vmem>>, %arg4: memref<144x16xbf16, #tpu.memory_space<vmem>>, %arg5: memref<1x16xf32, #tpu.memory_space<vmem>>, %arg6: memref<144x16xbf16, #tpu.memory_space<vmem>>, %arg7: memref<1x16xf32, #tpu.memory_space<vmem>>, %arg8: memref<144x32xbf16, #tpu.memory_space<vmem>>, %arg9: memref<1x32xf32, #tpu.memory_space<vmem>>, %arg10: memref<288x32xbf16, #tpu.memory_space<vmem>>, %arg11: memref<1x32xf32, #tpu.memory_space<vmem>>, %arg12: memref<16x32xbf16, #tpu.memory_space<vmem>>, %arg13: memref<1x32xf32, #tpu.memory_space<vmem>>, %arg14: memref<288x64xbf16, #tpu.memory_space<vmem>>, %arg15: memref<1x64xf32, #tpu.memory_space<vmem>>, %arg16: memref<576x64xbf16, #tpu.memory_space<vmem>>, %arg17: memref<1x64xf32, #tpu.memory_space<vmem>>, %arg18: memref<32x64xbf16, #tpu.memory_space<vmem>>, %arg19: memref<1x64xf32, #tpu.memory_space<vmem>>, %arg20: memref<80x288xbf16, #tpu.memory_space<vmem>>, %arg21: memref<24x80xbf16, #tpu.memory_space<vmem>>, %arg22: memref<288x1xf32, #tpu.memory_space<vmem>>, %arg23: memref<80x1xf32, #tpu.memory_space<vmem>>, %arg24: memref<24x1xf32, #tpu.memory_space<vmem>>, %arg25: memref<64x10xf32, #tpu.memory_space<vmem>>, %arg26: memref<1x10xf32, #tpu.memory_space<vmem>>, %arg27: memref<1x1x10xf32, #tpu.memory_space<vmem>>, %arg28: memref<328x16xbf16, #tpu.memory_space<vmem>>, %arg29: memref<328x16xbf16, #tpu.memory_space<vmem>>, %arg30: memref<328x16xbf16, #tpu.memory_space<vmem>>, %arg31: memref<104x32xbf16, #tpu.memory_space<vmem>>, %arg32: memref<104x32xbf16, #tpu.memory_space<vmem>>, %arg33: memref<40x64xbf16, #tpu.memory_space<vmem>>) attributes {dimension_semantics = [#tpu.dimension_semantics<parallel>], iteration_bounds = array<i64: 2>, scalar_prefetch = 0 : i64, scratch_operands = 6 : i64, tpu.core_type = #tpu.core_type<tc>, window_params = [{transform_indices = @transform_0, window_bounds = array<i64: 1, 288, 27>}, {pipeline_mode = #tpu.pipeline_mode<synchronous>, transform_indices = @transform_1, window_bounds = array<i64: 27, 16>}, {pipeline_mode = #tpu.pipeline_mode<synchronous>, transform_indices = @transform_2, window_bounds = array<i64: 1, 16>}, {pipeline_mode = #tpu.pipeline_mode<synchronous>, transform_indices = @transform_3, window_bounds = array<i64: 144, 16>}, {pipeline_mode = #tpu.pipeline_mode<synchronous>, transform_indices = @transform_4, window_bounds = array<i64: 1, 16>}, {pipeline_mode = #tpu.pipeline_mode<synchronous>, transform_indices = @transform_5, window_bounds = array<i64: 144, 16>}, {pipeline_mode = #tpu.pipeline_mode<synchronous>, transform_indices = @transform_6, window_bounds = array<i64: 1, 16>}, {pipeline_mode = #tpu.pipeline_mode<synchronous>, transform_indices = @transform_7, window_bounds = array<i64: 144, 32>}, {pipeline_mode = #tpu.pipeline_mode<synchronous>, transform_indices = @transform_8, window_bounds = array<i64: 1, 32>}, {pipeline_mode = #tpu.pipeline_mode<synchronous>, transform_indices = @transform_9, window_bounds = array<i64: 288, 32>}, {pipeline_mode = #tpu.pipeline_mode<synchronous>, transform_indices = @transform_10, window_bounds = array<i64: 1, 32>}, {pipeline_mode = #tpu.pipeline_mode<synchronous>, transform_indices = @transform_11, window_bounds = array<i64: 16, 32>}, {pipeline_mode = #tpu.pipeline_mode<synchronous>, transform_indices = @transform_12, window_bounds = array<i64: 1, 32>}, {pipeline_mode = #tpu.pipeline_mode<synchronous>, transform_indices = @transform_13, window_bounds = array<i64: 288, 64>}, {pipeline_mode = #tpu.pipeline_mode<synchronous>, transform_indices = @transform_14, window_bounds = array<i64: 1, 64>}, {pipeline_mode = #tpu.pipeline_mode<synchronous>, transform_indices = @transform_15, window_bounds = array<i64: 576, 64>}, {pipeline_mode = #tpu.pipeline_mode<synchronous>, transform_indices = @transform_16, window_bounds = array<i64: 1, 64>}, {pipeline_mode = #tpu.pipeline_mode<synchronous>, transform_indices = @transform_17, window_bounds = array<i64: 32, 64>}, {pipeline_mode = #tpu.pipeline_mode<synchronous>, transform_indices = @transform_18, window_bounds = array<i64: 1, 64>}, {pipeline_mode = #tpu.pipeline_mode<synchronous>, transform_indices = @transform_19, window_bounds = array<i64: 80, 288>}, {pipeline_mode = #tpu.pipeline_mode<synchronous>, transform_indices = @transform_20, window_bounds = array<i64: 24, 80>}, {pipeline_mode = #tpu.pipeline_mode<synchronous>, transform_indices = @transform_21, window_bounds = array<i64: 288, 1>}, {pipeline_mode = #tpu.pipeline_mode<synchronous>, transform_indices = @transform_22, window_bounds = array<i64: 80, 1>}, {pipeline_mode = #tpu.pipeline_mode<synchronous>, transform_indices = @transform_23, window_bounds = array<i64: 24, 1>}, {pipeline_mode = #tpu.pipeline_mode<synchronous>, transform_indices = @transform_24, window_bounds = array<i64: 64, 10>}, {pipeline_mode = #tpu.pipeline_mode<synchronous>, transform_indices = @transform_25, window_bounds = array<i64: 1, 10>}, {transform_indices = @transform_26, window_bounds = array<i64: 1, 1, 10>}]} {
    %cst = arith.constant 0.000000e+00 : bf16
    %0 = vector.broadcast %cst : bf16 to vector<328x16xbf16>
    %c0 = arith.constant 0 : index
    %c0_0 = arith.constant 0 : index
    %1 = vector.load %arg28[%c0, %c0_0] : memref<328x16xbf16, #tpu.memory_space<vmem>>, vector<328x16xbf16>
    tpu.vector_store %arg28[%c0, %c0_0], %0 {strides = array<i32>} : memref<328x16xbf16, #tpu.memory_space<vmem>>, vector<328x16xbf16>,
    %cst_1 = arith.constant 0.000000e+00 : bf16
    %2 = vector.broadcast %cst_1 : bf16 to vector<328x16xbf16>
    %c0_2 = arith.constant 0 : index
    %c0_3 = arith.constant 0 : index
    %3 = vector.load %arg29[%c0_2, %c0_3] : memref<328x16xbf16, #tpu.memory_space<vmem>>, vector<328x16xbf16>
    tpu.vector_store %arg29[%c0_2, %c0_3], %2 {strides = array<i32>} : memref<328x16xbf16, #tpu.memory_space<vmem>>, vector<328x16xbf16>,
    %cst_4 = arith.constant 0.000000e+00 : bf16
    %4 = vector.broadcast %cst_4 : bf16 to vector<328x16xbf16>
    %c0_5 = arith.constant 0 : index
    %c0_6 = arith.constant 0 : index
    %5 = vector.load %arg30[%c0_5, %c0_6] : memref<328x16xbf16, #tpu.memory_space<vmem>>, vector<328x16xbf16>
    tpu.vector_store %arg30[%c0_5, %c0_6], %4 {strides = array<i32>} : memref<328x16xbf16, #tpu.memory_space<vmem>>, vector<328x16xbf16>,
    %cst_7 = arith.constant 0.000000e+00 : bf16
    %6 = vector.broadcast %cst_7 : bf16 to vector<104x32xbf16>
    %c0_8 = arith.constant 0 : index
    %c0_9 = arith.constant 0 : index
    %7 = vector.load %arg31[%c0_8, %c0_9] : memref<104x32xbf16, #tpu.memory_space<vmem>>, vector<104x32xbf16>
    tpu.vector_store %arg31[%c0_8, %c0_9], %6 {strides = array<i32>} : memref<104x32xbf16, #tpu.memory_space<vmem>>, vector<104x32xbf16>,
    %cst_10 = arith.constant 0.000000e+00 : bf16
    %8 = vector.broadcast %cst_10 : bf16 to vector<104x32xbf16>
    %c0_11 = arith.constant 0 : index
    %c0_12 = arith.constant 0 : index
    %9 = vector.load %arg32[%c0_11, %c0_12] : memref<104x32xbf16, #tpu.memory_space<vmem>>, vector<104x32xbf16>
    tpu.vector_store %arg32[%c0_11, %c0_12], %8 {strides = array<i32>} : memref<104x32xbf16, #tpu.memory_space<vmem>>, vector<104x32xbf16>,
    %cst_13 = arith.constant 0.000000e+00 : bf16
    %10 = vector.broadcast %cst_13 : bf16 to vector<40x64xbf16>
    %c0_14 = arith.constant 0 : index
    %c0_15 = arith.constant 0 : index
    %11 = vector.load %arg33[%c0_14, %c0_15] : memref<40x64xbf16, #tpu.memory_space<vmem>>, vector<40x64xbf16>
    tpu.vector_store %arg33[%c0_14, %c0_15], %10 {strides = array<i32>} : memref<40x64xbf16, #tpu.memory_space<vmem>>, vector<40x64xbf16>,
    %c0_16 = arith.constant 0 : index
    %c0_17 = arith.constant 0 : index
    %c0_18 = arith.constant 0 : index
    %12 = vector.load %arg1[%c0_16, %c0_17, %c0_18] : memref<1x288x27xbf16, #tpu.memory_space<vmem>>, vector<1x288x27xbf16>
    %13 = vector.shape_cast %12 : vector<1x288x27xbf16> to vector<288x27xbf16>
    %c0_19 = arith.constant 0 : index
    %c0_20 = arith.constant 0 : index
    %14 = vector.load %arg2[%c0_19, %c0_20] : memref<27x16xbf16, #tpu.memory_space<vmem>>, vector<27x16xbf16>
    %cst_21 = arith.constant dense<0.000000e+00> : vector<288x16xf32>
    %15 = tpu.matmul %13, %14, %cst_21 {dimension_numbers = #tpu.dot_dimension_numbers<[1], [0], [0], [1], [0, 0, 1, 1], [], []>} : vector<288x27xbf16>, vector<27x16xbf16>, vector<288x16xf32> -> vector<288x16xf32>
    %c0_22 = arith.constant 0 : index
    %c0_23 = arith.constant 0 : index
    %16 = vector.load %arg3[%c0_22, %c0_23] : memref<1x16xf32, #tpu.memory_space<vmem>>, vector<1x16xf32>
    %17 = vector.broadcast %16 : vector<1x16xf32> to vector<288x16xf32>
    %18 = arith.addf %15, %17 : vector<288x16xf32>
    %cst_24 = arith.constant 0.000000e+00 : f32
    %19 = vector.broadcast %cst_24 : f32 to vector<288x16xf32>
    %20 = arith.maximumf %18, %19 : vector<288x16xf32>
    %c0_25 = arith.constant 0 : index
    %c0_26 = arith.constant 0 : index
    %21 = vector.load %arg22[%c0_25, %c0_26] : memref<288x1xf32, #tpu.memory_space<vmem>>, vector<288x1xf32>
    %22 = vector.broadcast %21 : vector<288x1xf32> to vector<288x16xf32>
    %23 = arith.mulf %20, %22 : vector<288x16xf32>
    %24 = arith.truncf %23 : vector<288x16xf32> to vector<288x16xbf16>
    %c19 = arith.constant 19 : index
    %c0_27 = arith.constant 0 : index
    %25 = vector.load %arg28[%c19, %c0_27] : memref<328x16xbf16, #tpu.memory_space<vmem>>, vector<288x16xbf16>
    tpu.vector_store %arg28[%c19, %c0_27], %24 {strides = array<i32>} : memref<328x16xbf16, #tpu.memory_space<vmem>>, vector<288x16xbf16>,
    %c0_28 = arith.constant 0 : index
    %c0_29 = arith.constant 0 : index
    %26 = vector.load %arg28[%c0_28, %c0_29] : memref<328x16xbf16, #tpu.memory_space<vmem>>, vector<288x16xbf16>
    %c1 = arith.constant 1 : index
    %c0_30 = arith.constant 0 : index
    %27 = vector.load %arg28[%c1, %c0_30] : memref<328x16xbf16, #tpu.memory_space<vmem>>, vector<288x16xbf16>
    %c2 = arith.constant 2 : index
    %c0_31 = arith.constant 0 : index
    %28 = vector.load %arg28[%c2, %c0_31] : memref<328x16xbf16, #tpu.memory_space<vmem>>, vector<288x16xbf16>
    %c18 = arith.constant 18 : index
    %c0_32 = arith.constant 0 : index
    %29 = vector.load %arg28[%c18, %c0_32] : memref<328x16xbf16, #tpu.memory_space<vmem>>, vector<288x16xbf16>
    %c19_33 = arith.constant 19 : index
    %c0_34 = arith.constant 0 : index
    %30 = vector.load %arg28[%c19_33, %c0_34] : memref<328x16xbf16, #tpu.memory_space<vmem>>, vector<288x16xbf16>
    %c20 = arith.constant 20 : index
    %c0_35 = arith.constant 0 : index
    %31 = vector.load %arg28[%c20, %c0_35] : memref<328x16xbf16, #tpu.memory_space<vmem>>, vector<288x16xbf16>
    %c36 = arith.constant 36 : index
    %c0_36 = arith.constant 0 : index
    %32 = vector.load %arg28[%c36, %c0_36] : memref<328x16xbf16, #tpu.memory_space<vmem>>, vector<288x16xbf16>
    %c37 = arith.constant 37 : index
    %c0_37 = arith.constant 0 : index
    %33 = vector.load %arg28[%c37, %c0_37] : memref<328x16xbf16, #tpu.memory_space<vmem>>, vector<288x16xbf16>
    %c38 = arith.constant 38 : index
    %c0_38 = arith.constant 0 : index
    %34 = vector.load %arg28[%c38, %c0_38] : memref<328x16xbf16, #tpu.memory_space<vmem>>, vector<288x16xbf16>
    %35 = tpu.concatenate %26, %27, %28, %29, %30, %31, %32, %33, %34 in 1 : vector<288x16xbf16>, vector<288x16xbf16>, vector<288x16xbf16>, vector<288x16xbf16>, vector<288x16xbf16>, vector<288x16xbf16>, vector<288x16xbf16>, vector<288x16xbf16>, vector<288x16xbf16> -> vector<288x144xbf16>
    %c0_39 = arith.constant 0 : index
    %c0_40 = arith.constant 0 : index
    %36 = vector.load %arg4[%c0_39, %c0_40] : memref<144x16xbf16, #tpu.memory_space<vmem>>, vector<144x16xbf16>
    %cst_41 = arith.constant dense<0.000000e+00> : vector<288x16xf32>
    %37 = tpu.matmul %35, %36, %cst_41 {dimension_numbers = #tpu.dot_dimension_numbers<[1], [0], [0], [1], [0, 0, 1, 1], [], []>} : vector<288x144xbf16>, vector<144x16xbf16>, vector<288x16xf32> -> vector<288x16xf32>
    %c0_42 = arith.constant 0 : index
    %c0_43 = arith.constant 0 : index
    %38 = vector.load %arg5[%c0_42, %c0_43] : memref<1x16xf32, #tpu.memory_space<vmem>>, vector<1x16xf32>
    %39 = vector.broadcast %38 : vector<1x16xf32> to vector<288x16xf32>
    %40 = arith.addf %37, %39 : vector<288x16xf32>
    %cst_44 = arith.constant 0.000000e+00 : f32
    %41 = vector.broadcast %cst_44 : f32 to vector<288x16xf32>
    %42 = arith.maximumf %40, %41 : vector<288x16xf32>
    %c0_45 = arith.constant 0 : index
    %c0_46 = arith.constant 0 : index
    %43 = vector.load %arg22[%c0_45, %c0_46] : memref<288x1xf32, #tpu.memory_space<vmem>>, vector<288x1xf32>
    %44 = vector.broadcast %43 : vector<288x1xf32> to vector<288x16xf32>
    %45 = arith.mulf %42, %44 : vector<288x16xf32>
    %46 = arith.truncf %45 : vector<288x16xf32> to vector<288x16xbf16>
    %c19_47 = arith.constant 19 : index
    %c0_48 = arith.constant 0 : index
    %47 = vector.load %arg29[%c19_47, %c0_48] : memref<328x16xbf16, #tpu.memory_space<vmem>>, vector<288x16xbf16>
    tpu.vector_store %arg29[%c19_47, %c0_48], %46 {strides = array<i32>} : memref<328x16xbf16, #tpu.memory_space<vmem>>, vector<288x16xbf16>,
    %c0_49 = arith.constant 0 : index
    %c0_50 = arith.constant 0 : index
    %48 = vector.load %arg29[%c0_49, %c0_50] : memref<328x16xbf16, #tpu.memory_space<vmem>>, vector<288x16xbf16>
    %c1_51 = arith.constant 1 : index
    %c0_52 = arith.constant 0 : index
    %49 = vector.load %arg29[%c1_51, %c0_52] : memref<328x16xbf16, #tpu.memory_space<vmem>>, vector<288x16xbf16>
    %c2_53 = arith.constant 2 : index
    %c0_54 = arith.constant 0 : index
    %50 = vector.load %arg29[%c2_53, %c0_54] : memref<328x16xbf16, #tpu.memory_space<vmem>>, vector<288x16xbf16>
    %c18_55 = arith.constant 18 : index
    %c0_56 = arith.constant 0 : index
    %51 = vector.load %arg29[%c18_55, %c0_56] : memref<328x16xbf16, #tpu.memory_space<vmem>>, vector<288x16xbf16>
    %c19_57 = arith.constant 19 : index
    %c0_58 = arith.constant 0 : index
    %52 = vector.load %arg29[%c19_57, %c0_58] : memref<328x16xbf16, #tpu.memory_space<vmem>>, vector<288x16xbf16>
    %c20_59 = arith.constant 20 : index
    %c0_60 = arith.constant 0 : index
    %53 = vector.load %arg29[%c20_59, %c0_60] : memref<328x16xbf16, #tpu.memory_space<vmem>>, vector<288x16xbf16>
    %c36_61 = arith.constant 36 : index
    %c0_62 = arith.constant 0 : index
    %54 = vector.load %arg29[%c36_61, %c0_62] : memref<328x16xbf16, #tpu.memory_space<vmem>>, vector<288x16xbf16>
    %c37_63 = arith.constant 37 : index
    %c0_64 = arith.constant 0 : index
    %55 = vector.load %arg29[%c37_63, %c0_64] : memref<328x16xbf16, #tpu.memory_space<vmem>>, vector<288x16xbf16>
    %c38_65 = arith.constant 38 : index
    %c0_66 = arith.constant 0 : index
    %56 = vector.load %arg29[%c38_65, %c0_66] : memref<328x16xbf16, #tpu.memory_space<vmem>>, vector<288x16xbf16>
    %57 = tpu.concatenate %48, %49, %50, %51, %52, %53, %54, %55, %56 in 1 : vector<288x16xbf16>, vector<288x16xbf16>, vector<288x16xbf16>, vector<288x16xbf16>, vector<288x16xbf16>, vector<288x16xbf16>, vector<288x16xbf16>, vector<288x16xbf16>, vector<288x16xbf16> -> vector<288x144xbf16>
    %c0_67 = arith.constant 0 : index
    %c0_68 = arith.constant 0 : index
    %58 = vector.load %arg6[%c0_67, %c0_68] : memref<144x16xbf16, #tpu.memory_space<vmem>>, vector<144x16xbf16>
    %cst_69 = arith.constant dense<0.000000e+00> : vector<288x16xf32>
    %59 = tpu.matmul %57, %58, %cst_69 {dimension_numbers = #tpu.dot_dimension_numbers<[1], [0], [0], [1], [0, 0, 1, 1], [], []>} : vector<288x144xbf16>, vector<144x16xbf16>, vector<288x16xf32> -> vector<288x16xf32>
    %c0_70 = arith.constant 0 : index
    %c0_71 = arith.constant 0 : index
    %60 = vector.load %arg7[%c0_70, %c0_71] : memref<1x16xf32, #tpu.memory_space<vmem>>, vector<1x16xf32>
    %61 = vector.broadcast %60 : vector<1x16xf32> to vector<288x16xf32>
    %62 = arith.addf %59, %61 : vector<288x16xf32>
    %c19_72 = arith.constant 19 : index
    %c0_73 = arith.constant 0 : index
    %63 = vector.load %arg28[%c19_72, %c0_73] : memref<328x16xbf16, #tpu.memory_space<vmem>>, vector<288x16xbf16>
    %64 = arith.extf %63 : vector<288x16xbf16> to vector<288x16xf32>
    %65 = arith.addf %62, %64 : vector<288x16xf32>
    %cst_74 = arith.constant 0.000000e+00 : f32
    %66 = vector.broadcast %cst_74 : f32 to vector<288x16xf32>
    %67 = arith.maximumf %65, %66 : vector<288x16xf32>
    %c0_75 = arith.constant 0 : index
    %c0_76 = arith.constant 0 : index
    %68 = vector.load %arg22[%c0_75, %c0_76] : memref<288x1xf32, #tpu.memory_space<vmem>>, vector<288x1xf32>
    %69 = vector.broadcast %68 : vector<288x1xf32> to vector<288x16xf32>
    %70 = arith.mulf %67, %69 : vector<288x16xf32>
    %71 = arith.truncf %70 : vector<288x16xf32> to vector<288x16xbf16>
    %c19_77 = arith.constant 19 : index
    %c0_78 = arith.constant 0 : index
    %72 = vector.load %arg30[%c19_77, %c0_78] : memref<328x16xbf16, #tpu.memory_space<vmem>>, vector<288x16xbf16>
    tpu.vector_store %arg30[%c19_77, %c0_78], %71 {strides = array<i32>} : memref<328x16xbf16, #tpu.memory_space<vmem>>, vector<288x16xbf16>,
    %c0_79 = arith.constant 0 : index
    %c0_80 = arith.constant 0 : index
    %73 = vector.load %arg20[%c0_79, %c0_80] : memref<80x288xbf16, #tpu.memory_space<vmem>>, vector<80x288xbf16>
    %c0_81 = arith.constant 0 : index
    %c0_82 = arith.constant 0 : index
    %74 = vector.load %arg30[%c0_81, %c0_82] : memref<328x16xbf16, #tpu.memory_space<vmem>>, vector<288x16xbf16>
    %c1_83 = arith.constant 1 : index
    %c0_84 = arith.constant 0 : index
    %75 = vector.load %arg30[%c1_83, %c0_84] : memref<328x16xbf16, #tpu.memory_space<vmem>>, vector<288x16xbf16>
    %c2_85 = arith.constant 2 : index
    %c0_86 = arith.constant 0 : index
    %76 = vector.load %arg30[%c2_85, %c0_86] : memref<328x16xbf16, #tpu.memory_space<vmem>>, vector<288x16xbf16>
    %c18_87 = arith.constant 18 : index
    %c0_88 = arith.constant 0 : index
    %77 = vector.load %arg30[%c18_87, %c0_88] : memref<328x16xbf16, #tpu.memory_space<vmem>>, vector<288x16xbf16>
    %c19_89 = arith.constant 19 : index
    %c0_90 = arith.constant 0 : index
    %78 = vector.load %arg30[%c19_89, %c0_90] : memref<328x16xbf16, #tpu.memory_space<vmem>>, vector<288x16xbf16>
    %c20_91 = arith.constant 20 : index
    %c0_92 = arith.constant 0 : index
    %79 = vector.load %arg30[%c20_91, %c0_92] : memref<328x16xbf16, #tpu.memory_space<vmem>>, vector<288x16xbf16>
    %c36_93 = arith.constant 36 : index
    %c0_94 = arith.constant 0 : index
    %80 = vector.load %arg30[%c36_93, %c0_94] : memref<328x16xbf16, #tpu.memory_space<vmem>>, vector<288x16xbf16>
    %c37_95 = arith.constant 37 : index
    %c0_96 = arith.constant 0 : index
    %81 = vector.load %arg30[%c37_95, %c0_96] : memref<328x16xbf16, #tpu.memory_space<vmem>>, vector<288x16xbf16>
    %c38_97 = arith.constant 38 : index
    %c0_98 = arith.constant 0 : index
    %82 = vector.load %arg30[%c38_97, %c0_98] : memref<328x16xbf16, #tpu.memory_space<vmem>>, vector<288x16xbf16>
    %83 = tpu.concatenate %74, %75, %76, %77, %78, %79, %80, %81, %82 in 1 : vector<288x16xbf16>, vector<288x16xbf16>, vector<288x16xbf16>, vector<288x16xbf16>, vector<288x16xbf16>, vector<288x16xbf16>, vector<288x16xbf16>, vector<288x16xbf16>, vector<288x16xbf16> -> vector<288x144xbf16>
    %cst_99 = arith.constant dense<0.000000e+00> : vector<80x144xf32>
    %84 = tpu.matmul %73, %83, %cst_99 {dimension_numbers = #tpu.dot_dimension_numbers<[1], [0], [0], [1], [0, 0, 1, 1], [], []>} : vector<80x288xbf16>, vector<288x144xbf16>, vector<80x144xf32> -> vector<80x144xf32>
    %85 = arith.truncf %84 : vector<80x144xf32> to vector<80x144xbf16>
    %c0_100 = arith.constant 0 : index
    %c0_101 = arith.constant 0 : index
    %86 = vector.load %arg8[%c0_100, %c0_101] : memref<144x32xbf16, #tpu.memory_space<vmem>>, vector<144x32xbf16>
    %cst_102 = arith.constant dense<0.000000e+00> : vector<80x32xf32>
    %87 = tpu.matmul %85, %86, %cst_102 {dimension_numbers = #tpu.dot_dimension_numbers<[1], [0], [0], [1], [0, 0, 1, 1], [], []>} : vector<80x144xbf16>, vector<144x32xbf16>, vector<80x32xf32> -> vector<80x32xf32>
    %c0_103 = arith.constant 0 : index
    %c0_104 = arith.constant 0 : index
    %88 = vector.load %arg9[%c0_103, %c0_104] : memref<1x32xf32, #tpu.memory_space<vmem>>, vector<1x32xf32>
    %89 = vector.broadcast %88 : vector<1x32xf32> to vector<80x32xf32>
    %90 = arith.addf %87, %89 : vector<80x32xf32>
    %cst_105 = arith.constant 0.000000e+00 : f32
    %91 = vector.broadcast %cst_105 : f32 to vector<80x32xf32>
    %92 = arith.maximumf %90, %91 : vector<80x32xf32>
    %c0_106 = arith.constant 0 : index
    %c0_107 = arith.constant 0 : index
    %93 = vector.load %arg23[%c0_106, %c0_107] : memref<80x1xf32, #tpu.memory_space<vmem>>, vector<80x1xf32>
    %94 = vector.broadcast %93 : vector<80x1xf32> to vector<80x32xf32>
    %95 = arith.mulf %92, %94 : vector<80x32xf32>
    %96 = arith.truncf %95 : vector<80x32xf32> to vector<80x32xbf16>
    %c11 = arith.constant 11 : index
    %c0_108 = arith.constant 0 : index
    %97 = vector.load %arg31[%c11, %c0_108] : memref<104x32xbf16, #tpu.memory_space<vmem>>, vector<80x32xbf16>
    tpu.vector_store %arg31[%c11, %c0_108], %96 {strides = array<i32>} : memref<104x32xbf16, #tpu.memory_space<vmem>>, vector<80x32xbf16>,
    %c0_109 = arith.constant 0 : index
    %c0_110 = arith.constant 0 : index
    %98 = vector.load %arg31[%c0_109, %c0_110] : memref<104x32xbf16, #tpu.memory_space<vmem>>, vector<80x32xbf16>
    %c1_111 = arith.constant 1 : index
    %c0_112 = arith.constant 0 : index
    %99 = vector.load %arg31[%c1_111, %c0_112] : memref<104x32xbf16, #tpu.memory_space<vmem>>, vector<80x32xbf16>
    %c2_113 = arith.constant 2 : index
    %c0_114 = arith.constant 0 : index
    %100 = vector.load %arg31[%c2_113, %c0_114] : memref<104x32xbf16, #tpu.memory_space<vmem>>, vector<80x32xbf16>
    %c10 = arith.constant 10 : index
    %c0_115 = arith.constant 0 : index
    %101 = vector.load %arg31[%c10, %c0_115] : memref<104x32xbf16, #tpu.memory_space<vmem>>, vector<80x32xbf16>
    %c11_116 = arith.constant 11 : index
    %c0_117 = arith.constant 0 : index
    %102 = vector.load %arg31[%c11_116, %c0_117] : memref<104x32xbf16, #tpu.memory_space<vmem>>, vector<80x32xbf16>
    %c12 = arith.constant 12 : index
    %c0_118 = arith.constant 0 : index
    %103 = vector.load %arg31[%c12, %c0_118] : memref<104x32xbf16, #tpu.memory_space<vmem>>, vector<80x32xbf16>
    %c20_119 = arith.constant 20 : index
    %c0_120 = arith.constant 0 : index
    %104 = vector.load %arg31[%c20_119, %c0_120] : memref<104x32xbf16, #tpu.memory_space<vmem>>, vector<80x32xbf16>
    %c21 = arith.constant 21 : index
    %c0_121 = arith.constant 0 : index
    %105 = vector.load %arg31[%c21, %c0_121] : memref<104x32xbf16, #tpu.memory_space<vmem>>, vector<80x32xbf16>
    %c22 = arith.constant 22 : index
    %c0_122 = arith.constant 0 : index
    %106 = vector.load %arg31[%c22, %c0_122] : memref<104x32xbf16, #tpu.memory_space<vmem>>, vector<80x32xbf16>
    %107 = tpu.concatenate %98, %99, %100, %101, %102, %103, %104, %105, %106 in 1 : vector<80x32xbf16>, vector<80x32xbf16>, vector<80x32xbf16>, vector<80x32xbf16>, vector<80x32xbf16>, vector<80x32xbf16>, vector<80x32xbf16>, vector<80x32xbf16>, vector<80x32xbf16> -> vector<80x288xbf16>
    %c0_123 = arith.constant 0 : index
    %c0_124 = arith.constant 0 : index
    %108 = vector.load %arg10[%c0_123, %c0_124] : memref<288x32xbf16, #tpu.memory_space<vmem>>, vector<288x32xbf16>
    %cst_125 = arith.constant dense<0.000000e+00> : vector<80x32xf32>
    %109 = tpu.matmul %107, %108, %cst_125 {dimension_numbers = #tpu.dot_dimension_numbers<[1], [0], [0], [1], [0, 0, 1, 1], [], []>} : vector<80x288xbf16>, vector<288x32xbf16>, vector<80x32xf32> -> vector<80x32xf32>
    %c0_126 = arith.constant 0 : index
    %c0_127 = arith.constant 0 : index
    %110 = vector.load %arg11[%c0_126, %c0_127] : memref<1x32xf32, #tpu.memory_space<vmem>>, vector<1x32xf32>
    %111 = vector.broadcast %110 : vector<1x32xf32> to vector<80x32xf32>
    %112 = arith.addf %109, %111 : vector<80x32xf32>
    %113 = vector.extract_strided_slice %85 {offsets = [0, 64], sizes = [80, 16], strides = [1, 1]} : vector<80x144xbf16> to vector<80x16xbf16>
    %c0_128 = arith.constant 0 : index
    %c0_129 = arith.constant 0 : index
    %114 = vector.load %arg12[%c0_128, %c0_129] : memref<16x32xbf16, #tpu.memory_space<vmem>>, vector<16x32xbf16>
    %cst_130 = arith.constant dense<0.000000e+00> : vector<80x32xf32>
    %115 = tpu.matmul %113, %114, %cst_130 {dimension_numbers = #tpu.dot_dimension_numbers<[1], [0], [0], [1], [0, 0, 1, 1], [], []>} : vector<80x16xbf16>, vector<16x32xbf16>, vector<80x32xf32> -> vector<80x32xf32>
    %c0_131 = arith.constant 0 : index
    %c0_132 = arith.constant 0 : index
    %116 = vector.load %arg13[%c0_131, %c0_132] : memref<1x32xf32, #tpu.memory_space<vmem>>, vector<1x32xf32>
    %117 = vector.broadcast %116 : vector<1x32xf32> to vector<80x32xf32>
    %118 = arith.addf %115, %117 : vector<80x32xf32>
    %119 = arith.addf %112, %118 : vector<80x32xf32>
    %cst_133 = arith.constant 0.000000e+00 : f32
    %120 = vector.broadcast %cst_133 : f32 to vector<80x32xf32>
    %121 = arith.maximumf %119, %120 : vector<80x32xf32>
    %c0_134 = arith.constant 0 : index
    %c0_135 = arith.constant 0 : index
    %122 = vector.load %arg23[%c0_134, %c0_135] : memref<80x1xf32, #tpu.memory_space<vmem>>, vector<80x1xf32>
    %123 = vector.broadcast %122 : vector<80x1xf32> to vector<80x32xf32>
    %124 = arith.mulf %121, %123 : vector<80x32xf32>
    %125 = arith.truncf %124 : vector<80x32xf32> to vector<80x32xbf16>
    %c11_136 = arith.constant 11 : index
    %c0_137 = arith.constant 0 : index
    %126 = vector.load %arg32[%c11_136, %c0_137] : memref<104x32xbf16, #tpu.memory_space<vmem>>, vector<80x32xbf16>
    tpu.vector_store %arg32[%c11_136, %c0_137], %125 {strides = array<i32>} : memref<104x32xbf16, #tpu.memory_space<vmem>>, vector<80x32xbf16>,
    %c0_138 = arith.constant 0 : index
    %c0_139 = arith.constant 0 : index
    %127 = vector.load %arg21[%c0_138, %c0_139] : memref<24x80xbf16, #tpu.memory_space<vmem>>, vector<24x80xbf16>
    %c0_140 = arith.constant 0 : index
    %c0_141 = arith.constant 0 : index
    %128 = vector.load %arg32[%c0_140, %c0_141] : memref<104x32xbf16, #tpu.memory_space<vmem>>, vector<80x32xbf16>
    %c1_142 = arith.constant 1 : index
    %c0_143 = arith.constant 0 : index
    %129 = vector.load %arg32[%c1_142, %c0_143] : memref<104x32xbf16, #tpu.memory_space<vmem>>, vector<80x32xbf16>
    %c2_144 = arith.constant 2 : index
    %c0_145 = arith.constant 0 : index
    %130 = vector.load %arg32[%c2_144, %c0_145] : memref<104x32xbf16, #tpu.memory_space<vmem>>, vector<80x32xbf16>
    %c10_146 = arith.constant 10 : index
    %c0_147 = arith.constant 0 : index
    %131 = vector.load %arg32[%c10_146, %c0_147] : memref<104x32xbf16, #tpu.memory_space<vmem>>, vector<80x32xbf16>
    %c11_148 = arith.constant 11 : index
    %c0_149 = arith.constant 0 : index
    %132 = vector.load %arg32[%c11_148, %c0_149] : memref<104x32xbf16, #tpu.memory_space<vmem>>, vector<80x32xbf16>
    %c12_150 = arith.constant 12 : index
    %c0_151 = arith.constant 0 : index
    %133 = vector.load %arg32[%c12_150, %c0_151] : memref<104x32xbf16, #tpu.memory_space<vmem>>, vector<80x32xbf16>
    %c20_152 = arith.constant 20 : index
    %c0_153 = arith.constant 0 : index
    %134 = vector.load %arg32[%c20_152, %c0_153] : memref<104x32xbf16, #tpu.memory_space<vmem>>, vector<80x32xbf16>
    %c21_154 = arith.constant 21 : index
    %c0_155 = arith.constant 0 : index
    %135 = vector.load %arg32[%c21_154, %c0_155] : memref<104x32xbf16, #tpu.memory_space<vmem>>, vector<80x32xbf16>
    %c22_156 = arith.constant 22 : index
    %c0_157 = arith.constant 0 : index
    %136 = vector.load %arg32[%c22_156, %c0_157] : memref<104x32xbf16, #tpu.memory_space<vmem>>, vector<80x32xbf16>
    %137 = tpu.concatenate %128, %129, %130, %131, %132, %133, %134, %135, %136 in 1 : vector<80x32xbf16>, vector<80x32xbf16>, vector<80x32xbf16>, vector<80x32xbf16>, vector<80x32xbf16>, vector<80x32xbf16>, vector<80x32xbf16>, vector<80x32xbf16>, vector<80x32xbf16> -> vector<80x288xbf16>
    %cst_158 = arith.constant dense<0.000000e+00> : vector<24x288xf32>
    %138 = tpu.matmul %127, %137, %cst_158 {dimension_numbers = #tpu.dot_dimension_numbers<[1], [0], [0], [1], [0, 0, 1, 1], [], []>} : vector<24x80xbf16>, vector<80x288xbf16>, vector<24x288xf32> -> vector<24x288xf32>
    %139 = arith.truncf %138 : vector<24x288xf32> to vector<24x288xbf16>
    %c0_159 = arith.constant 0 : index
    %c0_160 = arith.constant 0 : index
    %140 = vector.load %arg14[%c0_159, %c0_160] : memref<288x64xbf16, #tpu.memory_space<vmem>>, vector<288x64xbf16>
    %cst_161 = arith.constant dense<0.000000e+00> : vector<24x64xf32>
    %141 = tpu.matmul %139, %140, %cst_161 {dimension_numbers = #tpu.dot_dimension_numbers<[1], [0], [0], [1], [0, 0, 1, 1], [], []>} : vector<24x288xbf16>, vector<288x64xbf16>, vector<24x64xf32> -> vector<24x64xf32>
    %c0_162 = arith.constant 0 : index
    %c0_163 = arith.constant 0 : index
    %142 = vector.load %arg15[%c0_162, %c0_163] : memref<1x64xf32, #tpu.memory_space<vmem>>, vector<1x64xf32>
    %143 = vector.broadcast %142 : vector<1x64xf32> to vector<24x64xf32>
    %144 = arith.addf %141, %143 : vector<24x64xf32>
    %cst_164 = arith.constant 0.000000e+00 : f32
    %145 = vector.broadcast %cst_164 : f32 to vector<24x64xf32>
    %146 = arith.maximumf %144, %145 : vector<24x64xf32>
    %c0_165 = arith.constant 0 : index
    %c0_166 = arith.constant 0 : index
    %147 = vector.load %arg24[%c0_165, %c0_166] : memref<24x1xf32, #tpu.memory_space<vmem>>, vector<24x1xf32>
    %148 = vector.broadcast %147 : vector<24x1xf32> to vector<24x64xf32>
    %149 = arith.mulf %146, %148 : vector<24x64xf32>
    %150 = arith.truncf %149 : vector<24x64xf32> to vector<24x64xbf16>
    %c7 = arith.constant 7 : index
    %c0_167 = arith.constant 0 : index
    %151 = vector.load %arg33[%c7, %c0_167] : memref<40x64xbf16, #tpu.memory_space<vmem>>, vector<24x64xbf16>
    tpu.vector_store %arg33[%c7, %c0_167], %150 {strides = array<i32>} : memref<40x64xbf16, #tpu.memory_space<vmem>>, vector<24x64xbf16>,
    %c0_168 = arith.constant 0 : index
    %c0_169 = arith.constant 0 : index
    %152 = vector.load %arg33[%c0_168, %c0_169] : memref<40x64xbf16, #tpu.memory_space<vmem>>, vector<24x64xbf16>
    %c1_170 = arith.constant 1 : index
    %c0_171 = arith.constant 0 : index
    %153 = vector.load %arg33[%c1_170, %c0_171] : memref<40x64xbf16, #tpu.memory_space<vmem>>, vector<24x64xbf16>
    %c2_172 = arith.constant 2 : index
    %c0_173 = arith.constant 0 : index
    %154 = vector.load %arg33[%c2_172, %c0_173] : memref<40x64xbf16, #tpu.memory_space<vmem>>, vector<24x64xbf16>
    %c6 = arith.constant 6 : index
    %c0_174 = arith.constant 0 : index
    %155 = vector.load %arg33[%c6, %c0_174] : memref<40x64xbf16, #tpu.memory_space<vmem>>, vector<24x64xbf16>
    %c7_175 = arith.constant 7 : index
    %c0_176 = arith.constant 0 : index
    %156 = vector.load %arg33[%c7_175, %c0_176] : memref<40x64xbf16, #tpu.memory_space<vmem>>, vector<24x64xbf16>
    %c8 = arith.constant 8 : index
    %c0_177 = arith.constant 0 : index
    %157 = vector.load %arg33[%c8, %c0_177] : memref<40x64xbf16, #tpu.memory_space<vmem>>, vector<24x64xbf16>
    %c12_178 = arith.constant 12 : index
    %c0_179 = arith.constant 0 : index
    %158 = vector.load %arg33[%c12_178, %c0_179] : memref<40x64xbf16, #tpu.memory_space<vmem>>, vector<24x64xbf16>
    %c13 = arith.constant 13 : index
    %c0_180 = arith.constant 0 : index
    %159 = vector.load %arg33[%c13, %c0_180] : memref<40x64xbf16, #tpu.memory_space<vmem>>, vector<24x64xbf16>
    %c14 = arith.constant 14 : index
    %c0_181 = arith.constant 0 : index
    %160 = vector.load %arg33[%c14, %c0_181] : memref<40x64xbf16, #tpu.memory_space<vmem>>, vector<24x64xbf16>
    %161 = tpu.concatenate %152, %153, %154, %155, %156, %157, %158, %159, %160 in 1 : vector<24x64xbf16>, vector<24x64xbf16>, vector<24x64xbf16>, vector<24x64xbf16>, vector<24x64xbf16>, vector<24x64xbf16>, vector<24x64xbf16>, vector<24x64xbf16>, vector<24x64xbf16> -> vector<24x576xbf16>
    %c0_182 = arith.constant 0 : index
    %c0_183 = arith.constant 0 : index
    %162 = vector.load %arg16[%c0_182, %c0_183] : memref<576x64xbf16, #tpu.memory_space<vmem>>, vector<576x64xbf16>
    %cst_184 = arith.constant dense<0.000000e+00> : vector<24x64xf32>
    %163 = tpu.matmul %161, %162, %cst_184 {dimension_numbers = #tpu.dot_dimension_numbers<[1], [0], [0], [1], [0, 0, 1, 1], [], []>} : vector<24x576xbf16>, vector<576x64xbf16>, vector<24x64xf32> -> vector<24x64xf32>
    %c0_185 = arith.constant 0 : index
    %c0_186 = arith.constant 0 : index
    %164 = vector.load %arg17[%c0_185, %c0_186] : memref<1x64xf32, #tpu.memory_space<vmem>>, vector<1x64xf32>
    %165 = vector.broadcast %164 : vector<1x64xf32> to vector<24x64xf32>
    %166 = arith.addf %163, %165 : vector<24x64xf32>
    %167 = vector.extract_strided_slice %139 {offsets = [0, 128], sizes = [24, 32], strides = [1, 1]} : vector<24x288xbf16> to vector<24x32xbf16>
    %c0_187 = arith.constant 0 : index
    %c0_188 = arith.constant 0 : index
    %168 = vector.load %arg18[%c0_187, %c0_188] : memref<32x64xbf16, #tpu.memory_space<vmem>>, vector<32x64xbf16>
    %cst_189 = arith.constant dense<0.000000e+00> : vector<24x64xf32>
    %169 = tpu.matmul %167, %168, %cst_189 {dimension_numbers = #tpu.dot_dimension_numbers<[1], [0], [0], [1], [0, 0, 1, 1], [], []>} : vector<24x32xbf16>, vector<32x64xbf16>, vector<24x64xf32> -> vector<24x64xf32>
    %c0_190 = arith.constant 0 : index
    %c0_191 = arith.constant 0 : index
    %170 = vector.load %arg19[%c0_190, %c0_191] : memref<1x64xf32, #tpu.memory_space<vmem>>, vector<1x64xf32>
    %171 = vector.broadcast %170 : vector<1x64xf32> to vector<24x64xf32>
    %172 = arith.addf %169, %171 : vector<24x64xf32>
    %173 = arith.addf %166, %172 : vector<24x64xf32>
    %cst_192 = arith.constant 0.000000e+00 : f32
    %174 = vector.broadcast %cst_192 : f32 to vector<24x64xf32>
    %175 = arith.maximumf %173, %174 : vector<24x64xf32>
    %c0_193 = arith.constant 0 : index
    %c0_194 = arith.constant 0 : index
    %176 = vector.load %arg24[%c0_193, %c0_194] : memref<24x1xf32, #tpu.memory_space<vmem>>, vector<24x1xf32>
    %177 = vector.broadcast %176 : vector<24x1xf32> to vector<24x64xf32>
    %178 = arith.mulf %175, %177 : vector<24x64xf32>
    %cst_195 = arith.constant dense<0.000000e+00> : vector<64xf32>
    %179 = vector.multi_reduction <add>, %178, %cst_195 [0] : vector<24x64xf32> to vector<64xf32>
    %180 = vector.shape_cast %179 : vector<64xf32> to vector<1x64xf32>
    %cst_196 = arith.constant 6.250000e-02 : f32
    %181 = vector.broadcast %cst_196 : f32 to vector<1x64xf32>
    %182 = arith.mulf %180, %181 : vector<1x64xf32>
    %c0_197 = arith.constant 0 : index
    %c0_198 = arith.constant 0 : index
    %183 = vector.load %arg25[%c0_197, %c0_198] : memref<64x10xf32, #tpu.memory_space<vmem>>, vector<64x10xf32>
    %cst_199 = arith.constant dense<0.000000e+00> : vector<1x10xf32>
    %184 = tpu.matmul %182, %183, %cst_199 {dimension_numbers = #tpu.dot_dimension_numbers<[1], [0], [0], [1], [0, 0, 1, 1], [], []>} : vector<1x64xf32>, vector<64x10xf32>, vector<1x10xf32> -> vector<1x10xf32>
    %c0_200 = arith.constant 0 : index
    %c0_201 = arith.constant 0 : index
    %185 = vector.load %arg26[%c0_200, %c0_201] : memref<1x10xf32, #tpu.memory_space<vmem>>, vector<1x10xf32>
    %186 = arith.addf %184, %185 : vector<1x10xf32>
    %c0_202 = arith.constant 0 : index
    %c0_203 = arith.constant 0 : index
    %c0_204 = arith.constant 0 : index
    %187 = vector.load %arg27[%c0_202, %c0_203, %c0_204] : memref<1x1x10xf32, #tpu.memory_space<vmem>>, vector<1x1x10xf32>
    %188 = vector.shape_cast %187 : vector<1x1x10xf32> to vector<1x10xf32>
    %189 = vector.shape_cast %186 : vector<1x10xf32> to vector<1x1x10xf32>
    tpu.vector_store %arg27[%c0_202, %c0_203, %c0_204], %189 {strides = array<i32>} : memref<1x1x10xf32, #tpu.memory_space<vmem>>, vector<1x1x10xf32>,
    return
  }
  func.func @transform_0(%arg0: i32) -> (i32, i32, i32) {
    %c0_i32 = arith.constant 0 : i32
    %c0_i32_0 = arith.constant 0 : i32
    %c0_i32_1 = arith.constant 0 : i32
    return %arg0, %c0_i32, %c0_i32_0 : i32, i32, i32
  }
  func.func @transform_1(%arg0: i32) -> (i32, i32) {
    %c0_i32 = arith.constant 0 : i32
    %c0_i32_0 = arith.constant 0 : i32
    %c0_i32_1 = arith.constant 0 : i32
    return %c0_i32, %c0_i32_0 : i32, i32
  }
  func.func @transform_2(%arg0: i32) -> (i32, i32) {
    %c0_i32 = arith.constant 0 : i32
    %c0_i32_0 = arith.constant 0 : i32
    %c0_i32_1 = arith.constant 0 : i32
    return %c0_i32, %c0_i32_0 : i32, i32
  }
  func.func @transform_3(%arg0: i32) -> (i32, i32) {
    %c0_i32 = arith.constant 0 : i32
    %c0_i32_0 = arith.constant 0 : i32
    %c0_i32_1 = arith.constant 0 : i32
    return %c0_i32, %c0_i32_0 : i32, i32
  }
  func.func @transform_4(%arg0: i32) -> (i32, i32) {
    %c0_i32 = arith.constant 0 : i32
    %c0_i32_0 = arith.constant 0 : i32
    %c0_i32_1 = arith.constant 0 : i32
    return %c0_i32, %c0_i32_0 : i32, i32
  }
  func.func @transform_5(%arg0: i32) -> (i32, i32) {
    %c0_i32 = arith.constant 0 : i32
    %c0_i32_0 = arith.constant 0 : i32
    %c0_i32_1 = arith.constant 0 : i32
    return %c0_i32, %c0_i32_0 : i32, i32
  }
  func.func @transform_6(%arg0: i32) -> (i32, i32) {
    %c0_i32 = arith.constant 0 : i32
    %c0_i32_0 = arith.constant 0 : i32
    %c0_i32_1 = arith.constant 0 : i32
    return %c0_i32, %c0_i32_0 : i32, i32
  }
  func.func @transform_7(%arg0: i32) -> (i32, i32) {
    %c0_i32 = arith.constant 0 : i32
    %c0_i32_0 = arith.constant 0 : i32
    %c0_i32_1 = arith.constant 0 : i32
    return %c0_i32, %c0_i32_0 : i32, i32
  }
  func.func @transform_8(%arg0: i32) -> (i32, i32) {
    %c0_i32 = arith.constant 0 : i32
    %c0_i32_0 = arith.constant 0 : i32
    %c0_i32_1 = arith.constant 0 : i32
    return %c0_i32, %c0_i32_0 : i32, i32
  }
  func.func @transform_9(%arg0: i32) -> (i32, i32) {
    %c0_i32 = arith.constant 0 : i32
    %c0_i32_0 = arith.constant 0 : i32
    %c0_i32_1 = arith.constant 0 : i32
    return %c0_i32, %c0_i32_0 : i32, i32
  }
  func.func @transform_10(%arg0: i32) -> (i32, i32) {
    %c0_i32 = arith.constant 0 : i32
    %c0_i32_0 = arith.constant 0 : i32
    %c0_i32_1 = arith.constant 0 : i32
    return %c0_i32, %c0_i32_0 : i32, i32
  }
  func.func @transform_11(%arg0: i32) -> (i32, i32) {
    %c0_i32 = arith.constant 0 : i32
    %c0_i32_0 = arith.constant 0 : i32
    %c0_i32_1 = arith.constant 0 : i32
    return %c0_i32, %c0_i32_0 : i32, i32
  }
  func.func @transform_12(%arg0: i32) -> (i32, i32) {
    %c0_i32 = arith.constant 0 : i32
    %c0_i32_0 = arith.constant 0 : i32
    %c0_i32_1 = arith.constant 0 : i32
    return %c0_i32, %c0_i32_0 : i32, i32
  }
  func.func @transform_13(%arg0: i32) -> (i32, i32) {
    %c0_i32 = arith.constant 0 : i32
    %c0_i32_0 = arith.constant 0 : i32
    %c0_i32_1 = arith.constant 0 : i32
    return %c0_i32, %c0_i32_0 : i32, i32
  }
  func.func @transform_14(%arg0: i32) -> (i32, i32) {
    %c0_i32 = arith.constant 0 : i32
    %c0_i32_0 = arith.constant 0 : i32
    %c0_i32_1 = arith.constant 0 : i32
    return %c0_i32, %c0_i32_0 : i32, i32
  }
  func.func @transform_15(%arg0: i32) -> (i32, i32) {
    %c0_i32 = arith.constant 0 : i32
    %c0_i32_0 = arith.constant 0 : i32
    %c0_i32_1 = arith.constant 0 : i32
    return %c0_i32, %c0_i32_0 : i32, i32
  }
  func.func @transform_16(%arg0: i32) -> (i32, i32) {
    %c0_i32 = arith.constant 0 : i32
    %c0_i32_0 = arith.constant 0 : i32
    %c0_i32_1 = arith.constant 0 : i32
    return %c0_i32, %c0_i32_0 : i32, i32
  }
  func.func @transform_17(%arg0: i32) -> (i32, i32) {
    %c0_i32 = arith.constant 0 : i32
    %c0_i32_0 = arith.constant 0 : i32
    %c0_i32_1 = arith.constant 0 : i32
    return %c0_i32, %c0_i32_0 : i32, i32
  }
  func.func @transform_18(%arg0: i32) -> (i32, i32) {
    %c0_i32 = arith.constant 0 : i32
    %c0_i32_0 = arith.constant 0 : i32
    %c0_i32_1 = arith.constant 0 : i32
    return %c0_i32, %c0_i32_0 : i32, i32
  }
  func.func @transform_19(%arg0: i32) -> (i32, i32) {
    %c0_i32 = arith.constant 0 : i32
    %c0_i32_0 = arith.constant 0 : i32
    %c0_i32_1 = arith.constant 0 : i32
    return %c0_i32, %c0_i32_0 : i32, i32
  }
  func.func @transform_20(%arg0: i32) -> (i32, i32) {
    %c0_i32 = arith.constant 0 : i32
    %c0_i32_0 = arith.constant 0 : i32
    %c0_i32_1 = arith.constant 0 : i32
    return %c0_i32, %c0_i32_0 : i32, i32
  }
  func.func @transform_21(%arg0: i32) -> (i32, i32) {
    %c0_i32 = arith.constant 0 : i32
    %c0_i32_0 = arith.constant 0 : i32
    %c0_i32_1 = arith.constant 0 : i32
    return %c0_i32, %c0_i32_0 : i32, i32
  }
  func.func @transform_22(%arg0: i32) -> (i32, i32) {
    %c0_i32 = arith.constant 0 : i32
    %c0_i32_0 = arith.constant 0 : i32
    %c0_i32_1 = arith.constant 0 : i32
    return %c0_i32, %c0_i32_0 : i32, i32
  }
  func.func @transform_23(%arg0: i32) -> (i32, i32) {
    %c0_i32 = arith.constant 0 : i32
    %c0_i32_0 = arith.constant 0 : i32
    %c0_i32_1 = arith.constant 0 : i32
    return %c0_i32, %c0_i32_0 : i32, i32
  }
  func.func @transform_24(%arg0: i32) -> (i32, i32) {
    %c0_i32 = arith.constant 0 : i32
    %c0_i32_0 = arith.constant 0 : i32
    %c0_i32_1 = arith.constant 0 : i32
    return %c0_i32, %c0_i32_0 : i32, i32
  }
  func.func @transform_25(%arg0: i32) -> (i32, i32) {
    %c0_i32 = arith.constant 0 : i32
    %c0_i32_0 = arith.constant 0 : i32
    %c0_i32_1 = arith.constant 0 : i32
    return %c0_i32, %c0_i32_0 : i32, i32
  }
  func.func @transform_26(%arg0: i32) -> (i32, i32, i32) {
    %c0_i32 = arith.constant 0 : i32
    %c0_i32_0 = arith.constant 0 : i32
    %c0_i32_1 = arith.constant 0 : i32
    return %arg0, %c0_i32, %c0_i32_0 : i32, i32, i32
  }
}

</mosaic_0001>

<llo_original>
// kernel: foldnet_forward.1
$region0: #{foldnet_forward.1}
  #allocation0 [shape = 'u32[]', space=smem, size = 0x4, offset = 0x4, fixed_abs, tag = 'smem constant byte address 0x4 - core index']
  #allocation1 [shape = 'u32[144,128]{1,0:T(1,128)}', space=vmem, size = 0x12000, scoped, tag = 'internal scratch']
  #allocation2 [shape = 'bf16[328,16]{1,0:T(8,128)(2,1)}', space=vmem, size = 0x14800, scoped, tag = 'scratch operand']
  #allocation3 [shape = 'bf16[328,16]{1,0:T(8,128)(2,1)}', space=vmem, size = 0x14800, scoped, tag = 'scratch operand']
  #allocation4 [shape = 'bf16[328,16]{1,0:T(8,128)(2,1)}', space=vmem, size = 0x14800, scoped, tag = 'scratch operand']
  #allocation5 [shape = 'bf16[104,32]{1,0:T(8,128)(2,1)}', space=vmem, size = 0x6800, scoped, tag = 'scratch operand']
  #allocation6 [shape = 'bf16[104,32]{1,0:T(8,128)(2,1)}', space=vmem, size = 0x6800, scoped, tag = 'scratch operand']
  #allocation7 [shape = 'bf16[40,64]{1,0:T(8,128)(2,1)}', space=vmem, size = 0x2800, scoped, tag = 'scratch operand']
  %s0 = inlined_call_operand.vmem [shape: bf16[2,288,27], index: 0, kind: input, shape index: {}]
  %s1 = inlined_call_operand.vmem [shape: bf16[27,16], index: 1, kind: input, shape index: {}]
  %s2 = inlined_call_operand.vmem [shape: f32[1,16], index: 2, kind: input, shape index: {}]
  %s3 = inlined_call_operand.vmem [shape: bf16[144,16], index: 3, kind: input, shape index: {}]
  %s4 = inlined_call_operand.vmem [shape: f32[1,16], index: 4, kind: input, shape index: {}]
  %s5 = inlined_call_operand.vmem [shape: bf16[144,16], index: 5, kind: input, shape index: {}]
  %s6 = inlined_call_operand.vmem [shape: f32[1,16], index: 6, kind: input, shape index: {}]
  %s7 = inlined_call_operand.vmem [shape: bf16[144,32], index: 7, kind: input, shape index: {}]
  %s8 = inlined_call_operand.vmem [shape: f32[1,32], index: 8, kind: input, shape index: {}]
  %s9 = inlined_call_operand.vmem [shape: bf16[288,32], index: 9, kind: input, shape index: {}]
  %s10 = inlined_call_operand.vmem [shape: f32[1,32], index: 10, kind: input, shape index: {}]
  %s11 = inlined_call_operand.vmem [shape: bf16[16,32], index: 11, kind: input, shape index: {}]
  %s12 = inlined_call_operand.vmem [shape: f32[1,32], index: 12, kind: input, shape index: {}]
  %s13 = inlined_call_operand.vmem [shape: bf16[288,64], index: 13, kind: input, shape index: {}]
  %s14 = inlined_call_operand.vmem [shape: f32[1,64], index: 14, kind: input, shape index: {}]
  %s15 = inlined_call_operand.vmem [shape: bf16[576,64], index: 15, kind: input, shape index: {}]
  %s16 = inlined_call_operand.vmem [shape: f32[1,64], index: 16, kind: input, shape index: {}]
  %s17 = inlined_call_operand.vmem [shape: bf16[32,64], index: 17, kind: input, shape index: {}]
  %s18 = inlined_call_operand.vmem [shape: f32[1,64], index: 18, kind: input, shape index: {}]
  %s19 = inlined_call_operand.vmem [shape: bf16[80,288], index: 19, kind: input, shape index: {}]
  %s20 = inlined_call_operand.vmem [shape: bf16[24,80], index: 20, kind: input, shape index: {}]
  %s21 = inlined_call_operand.vmem [shape: f32[288,1], index: 21, kind: input, shape index: {}]
  %s22 = inlined_call_operand.vmem [shape: f32[80,1], index: 22, kind: input, shape index: {}]
  %s23 = inlined_call_operand.vmem [shape: f32[24,1], index: 23, kind: input, shape index: {}]
  %s24 = inlined_call_operand.vmem [shape: f32[64,10], index: 24, kind: input, shape index: {}]
  %s25 = inlined_call_operand.vmem [shape: f32[1,10], index: 25, kind: input, shape index: {}]
  %s26 = inlined_call_operand.hbm [shape: f32[2,1,10], index: 26, kind: output, shape index: {}]
  %s27 = sld [smem:[#allocation0]]
  $region137: #{foldnet_forward.1} parent=0
    _
  %s29 = ssub.s32 1, %s27
  %s30 = scalar_select 0, %s29, %s27
  $region1: #{foldnet_forward.1} parent=0
    #allocation8 [shape = 'u8[1024]{0}', space=vmem, size = 0x400, scoped, tag = 'output window, operand 0']
    #allocation9 [shape = 's32[2]{0}', space=sflag, size = 0x8, scoped, tag = 'scoped memory for foldnet_forward.1']
    %31 = vsyncpa [#allocation9], 0
    %s32 = scalar_lea.sflag [#allocation9], 1
    %33 = vsyncpa %s32, 0
    loop: start=0, step=1, limit=4
    $region2: #{foldnet_forward.1} parent=1 // loop_pre_header
      _
    $region3: #{foldnet_forward.1} parent=1 // loop_header
      %s35 = sphi 0, %s39
      %p36 = scmp.ge.s32.totalorder %s35, 4
      %s45 = sphi 0, %s47
      %s48 = sphi 0, %s45
      %s49 = sphi 0, %s48
      %s65 = sphi 0, %s49
      %s69 = sphi 0, %s69
      %s71 = sphi 0, %s69
      %s72 = sphi 0, %s71
      %s86 = sphi 0, %s72
      %s90 = sphi 0, %s90
      %s92 = sphi 0, %s90
      %s93 = sphi 0, %s92
      %s107 = sphi 0, %s93
      %s111 = sphi 0, %s111
      %s113 = sphi 0, %s111
      %s114 = sphi 0, %s113
      %s128 = sphi 0, %s114
      %s132 = sphi 0, %s132
      %s134 = sphi 0, %s132
      %s135 = sphi 0, %s134
      %s149 = sphi 0, %s135
      %s153 = sphi 0, %s153
      %s155 = sphi 0, %s153
      %s156 = sphi 0, %s155
      %s170 = sphi 0, %s156
      %s174 = sphi 0, %s174
      %s176 = sphi 0, %s174
      %s177 = sphi 0, %s176
      %s191 = sphi 0, %s177
      %s195 = sphi 0, %s195
      %s197 = sphi 0, %s195
      %s198 = sphi 0, %s197
      %s212 = sphi 0, %s198
      %s216 = sphi 0, %s216
      %s218 = sphi 0, %s216
      %s219 = sphi 0, %s218
      %s233 = sphi 0, %s219
      %s237 = sphi 0, %s237
      %s239 = sphi 0, %s237
      %s240 = sphi 0, %s239
      %s254 = sphi 0, %s240
      %s258 = sphi 0, %s258
      %s260 = sphi 0, %s258
      %s261 = sphi 0, %s260
      %s275 = sphi 0, %s261
      %s279 = sphi 0, %s279
      %s281 = sphi 0, %s279
      %s282 = sphi 0, %s281
      %s296 = sphi 0, %s282
      %s300 = sphi 0, %s300
      %s302 = sphi 0, %s300
      %s303 = sphi 0, %s302
      %s317 = sphi 0, %s303
      %s321 = sphi 0, %s321
      %s323 = sphi 0, %s321
      %s324 = sphi 0, %s323
      %s338 = sphi 0, %s324
      %s342 = sphi 0, %s342
      %s344 = sphi 0, %s342
      %s345 = sphi 0, %s344
      %s359 = sphi 0, %s345
      %s363 = sphi 0, %s363
      %s365 = sphi 0, %s363
      %s366 = sphi 0, %s365
      %s380 = sphi 0, %s366
      %s384 = sphi 0, %s384
      %s386 = sphi 0, %s384
      %s387 = sphi 0, %s386
      %s401 = sphi 0, %s387
      %s405 = sphi 0, %s405
      %s407 = sphi 0, %s405
      %s408 = sphi 0, %s407
      %s422 = sphi 0, %s408
      %s426 = sphi 0, %s426
      %s428 = sphi 0, %s426
      %s429 = sphi 0, %s428
      %s443 = sphi 0, %s429
      %s447 = sphi 0, %s447
      %s449 = sphi 0, %s447
      %s450 = sphi 0, %s449
      %s464 = sphi 0, %s450
      %s468 = sphi 0, %s468
      %s470 = sphi 0, %s468
      %s471 = sphi 0, %s470
      %s485 = sphi 0, %s471
      %s489 = sphi 0, %s489
      %s491 = sphi 0, %s489
      %s492 = sphi 0, %s491
      %s506 = sphi 0, %s492
      %s510 = sphi 0, %s510
      %s512 = sphi 0, %s510
      %s513 = sphi 0, %s512
      %s527 = sphi 0, %s513
      %s531 = sphi 0, %s531
      %s533 = sphi 0, %s531
      %s534 = sphi 0, %s533
      %s548 = sphi 0, %s534
      %s552 = sphi 0, %s552
      %s554 = sphi 0, %s552
      %s555 = sphi 0, %s554
      %s569 = sphi 0, %s555
      %s573 = sphi 0, %s573
      %s575 = sphi 0, %s573
      %s576 = sphi 0, %s575
      %s590 = sphi 0, %s576
      %s596 = sphi 0, %s598
      %s599 = sphi 0, %s596
      %s600 = sphi 0, %s599
      %s616 = sphi 0, %s600
    $region4: #{foldnet_forward.1} parent=1 // loop_header_branch
      %38 = sbr.rel (%p36) target = $region8
    $region5: #{foldnet_forward.1} parent=1 // loop_body
      %s40 = ssub.s32 %s35, 1
      %s41 = ssub.s32 %s35, 2
      %s42 = sadd.s32 %s35, 1
      %s43 = ssub.s32 %s35, %s42
      %p44 = scmp.eq.s32.totalorder %s43, 0
      %s46 = sadd.s32 %s45, 1
      %s47 = scalar_select %p44, %s45, %s46
      %p50 = pneg %p44
      %p51 = scmp.eq.s32.totalorder %s35, 1
      %p52 = por %p50, %p51
      %p53 = scmp.ne.s32.totalorder %s45, %s48
      %p54 = scmp.eq.s32.totalorder %s35, 0
      %p55 = por %p53, %p54
      %p56 = scmp.ne.s32.totalorder %s45, %s48
      %p57 = scmp.eq.s32.totalorder %s40, 1
      %p58 = por %p56, %p57
      %p59 = scmp.ne.s32.totalorder %s48, %s49
      %p60 = scmp.eq.s32.totalorder %s40, 0
      %p61 = por %p59, %p60
      %p62 = scmp.ne.s32.totalorder %s48, %s49
      %p63 = scmp.eq.s32.totalorder %s41, 1
      %p64 = por %p62, %p63
      %p66 = scmp.ne.s32.totalorder %s49, %s65
      %p67 = scmp.eq.s32.totalorder %s41, 0
      %p68 = por %p66, %p67
      %s70 = sadd.s32 %s69, 1
      %p73 = scmp.eq.s32.totalorder %s35, 1
      %p74 = scmp.ne.s32.totalorder %s69, %s71
      %p75 = scmp.eq.s32.totalorder %s35, 0
      %p76 = por %p74, %p75
      %p77 = scmp.ne.s32.totalorder %s69, %s71
      %p78 = scmp.eq.s32.totalorder %s40, 1
      %p79 = por %p77, %p78
      %p80 = scmp.ne.s32.totalorder %s71, %s72
      %p81 = scmp.eq.s32.totalorder %s40, 0
      %p82 = por %p80, %p81
      %p83 = scmp.ne.s32.totalorder %s71, %s72
      %p84 = scmp.eq.s32.totalorder %s41, 1
      %p85 = por %p83, %p84
      %p87 = scmp.ne.s32.totalorder %s72, %s86
      %p88 = scmp.eq.s32.totalorder %s41, 0
      %p89 = por %p87, %p88
      %s91 = sadd.s32 %s90, 1
      %p94 = scmp.eq.s32.totalorder %s35, 1
      %p95 = scmp.ne.s32.totalorder %s90, %s92
      %p96 = scmp.eq.s32.totalorder %s35, 0
      %p97 = por %p95, %p96
      %p98 = scmp.ne.s32.totalorder %s90, %s92
      %p99 = scmp.eq.s32.totalorder %s40, 1
      %p100 = por %p98, %p99
      %p101 = scmp.ne.s32.totalorder %s92, %s93
      %p102 = scmp.eq.s32.totalorder %s40, 0
      %p103 = por %p101, %p102
      %p104 = scmp.ne.s32.totalorder %s92, %s93
      %p105 = scmp.eq.s32.totalorder %s41, 1
      %p106 = por %p104, %p105
      %p108 = scmp.ne.s32.totalorder %s93, %s107
      %p109 = scmp.eq.s32.totalorder %s41, 0
      %p110 = por %p108, %p109
      %s112 = sadd.s32 %s111, 1
      %p115 = scmp.eq.s32.totalorder %s35, 1
      %p116 = scmp.ne.s32.totalorder %s111, %s113
      %p117 = scmp.eq.s32.totalorder %s35, 0
      %p118 = por %p116, %p117
      %p119 = scmp.ne.s32.totalorder %s111, %s113
      %p120 = scmp.eq.s32.totalorder %s40, 1
      %p121 = por %p119, %p120
      %p122 = scmp.ne.s32.totalorder %s113, %s114
      %p123 = scmp.eq.s32.totalorder %s40, 0
      %p124 = por %p122, %p123
      %p125 = scmp.ne.s32.totalorder %s113, %s114
      %p126 = scmp.eq.s32.totalorder %s41, 1
      %p127 = por %p125, %p126
      %p129 = scmp.ne.s32.totalorder %s114, %s128
      %p130 = scmp.eq.s32.totalorder %s41, 0
      %p131 = por %p129, %p130
      %s133 = sadd.s32 %s132, 1
      %p136 = scmp.eq.s32.totalorder %s35, 1
      %p137 = scmp.ne.s32.totalorder %s132, %s134
      %p138 = scmp.eq.s32.totalorder %s35, 0
      %p139 = por %p137, %p138
      %p140 = scmp.ne.s32.totalorder %s132, %s134
      %p141 = scmp.eq.s32.totalorder %s40, 1
      %p142 = por %p140, %p141
      %p143 = scmp.ne.s32.totalorder %s134, %s135
      %p144 = scmp.eq.s32.totalorder %s40, 0
      %p145 = por %p143, %p144
      %p146 = scmp.ne.s32.totalorder %s134, %s135
      %p147 = scmp.eq.s32.totalorder %s41, 1
      %p148 = por %p146, %p147
      %p150 = scmp.ne.s32.totalorder %s135, %s149
      %p151 = scmp.eq.s32.totalorder %s41, 0
      %p152 = por %p150, %p151
      %s154 = sadd.s32 %s153, 1
      %p157 = scmp.eq.s32.totalorder %s35, 1
      %p158 = scmp.ne.s32.totalorder %s153, %s155
      %p159 = scmp.eq.s32.totalorder %s35, 0
      %p160 = por %p158, %p159
      %p161 = scmp.ne.s32.totalorder %s153, %s155
      %p162 = scmp.eq.s32.totalorder %s40, 1
      %p163 = por %p161, %p162
      %p164 = scmp.ne.s32.totalorder %s155, %s156
      %p165 = scmp.eq.s32.totalorder %s40, 0
      %p166 = por %p164, %p165
      %p167 = scmp.ne.s32.totalorder %s155, %s156
      %p168 = scmp.eq.s32.totalorder %s41, 1
      %p169 = por %p167, %p168
      %p171 = scmp.ne.s32.totalorder %s156, %s170
      %p172 = scmp.eq.s32.totalorder %s41, 0
      %p173 = por %p171, %p172
      %s175 = sadd.s32 %s174, 1
      %p178 = scmp.eq.s32.totalorder %s35, 1
      %p179 = scmp.ne.s32.totalorder %s174, %s176
      %p180 = scmp.eq.s32.totalorder %s35, 0
      %p181 = por %p179, %p180
      %p182 = scmp.ne.s32.totalorder %s174, %s176
      %p183 = scmp.eq.s32.totalorder %s40, 1
      %p184 = por %p182, %p183
      %p185 = scmp.ne.s32.totalorder %s176, %s177
      %p186 = scmp.eq.s32.totalorder %s40, 0
      %p187 = por %p185, %p186
      %p188 = scmp.ne.s32.totalorder %s176, %s177
      %p189 = scmp.eq.s32.totalorder %s41, 1
      %p190 = por %p188, %p189
      %p192 = scmp.ne.s32.totalorder %s177, %s191
      %p193 = scmp.eq.s32.totalorder %s41, 0
      %p194 = por %p192, %p193
      %s196 = sadd.s32 %s195, 1
      %p199 = scmp.eq.s32.totalorder %s35, 1
      %p200 = scmp.ne.s32.totalorder %s195, %s197
      %p201 = scmp.eq.s32.totalorder %s35, 0
      %p202 = por %p200, %p201
      %p203 = scmp.ne.s32.totalorder %s195, %s197
      %p204 = scmp.eq.s32.totalorder %s40, 1
      %p205 = por %p203, %p204
      %p206 = scmp.ne.s32.totalorder %s197, %s198
      %p207 = scmp.eq.s32.totalorder %s40, 0
      %p208 = por %p206, %p207
      %p209 = scmp.ne.s32.totalorder %s197, %s198
      %p210 = scmp.eq.s32.totalorder %s41, 1
      %p211 = por %p209, %p210
      %p213 = scmp.ne.s32.totalorder %s198, %s212
      %p214 = scmp.eq.s32.totalorder %s41, 0
      %p215 = por %p213, %p214
      %s217 = sadd.s32 %s216, 1
      %p220 = scmp.eq.s32.totalorder %s35, 1
      %p221 = scmp.ne.s32.totalorder %s216, %s218
      %p222 = scmp.eq.s32.totalorder %s35, 0
      %p223 = por %p221, %p222
      %p224 = scmp.ne.s32.totalorder %s216, %s218
      %p225 = scmp.eq.s32.totalorder %s40, 1
      %p226 = por %p224, %p225
      %p227 = scmp.ne.s32.totalorder %s218, %s219
      %p228 = scmp.eq.s32.totalorder %s40, 0
      %p229 = por %p227, %p228
      %p230 = scmp.ne.s32.totalorder %s218, %s219
      %p231 = scmp.eq.s32.totalorder %s41, 1
      %p232 = por %p230, %p231
      %p234 = scmp.ne.s32.totalorder %s219, %s233
      %p235 = scmp.eq.s32.totalorder %s41, 0
      %p236 = por %p234, %p235
      %s238 = sadd.s32 %s237, 1
      %p241 = scmp.eq.s32.totalorder %s35, 1
      %p242 = scmp.ne.s32.totalorder %s237, %s239
      %p243 = scmp.eq.s32.totalorder %s35, 0
      %p244 = por %p242, %p243
      %p245 = scmp.ne.s32.totalorder %s237, %s239
      %p246 = scmp.eq.s32.totalorder %s40, 1
      %p247 = por %p245, %p246
      %p248 = scmp.ne.s32.totalorder %s239, %s240
      %p249 = scmp.eq.s32.totalorder %s40, 0
      %p250 = por %p248, %p249
      %p251 = scmp.ne.s32.totalorder %s239, %s240
      %p252 = scmp.eq.s32.totalorder %s41, 1
      %p253 = por %p251, %p252
      %p255 = scmp.ne.s32.totalorder %s240, %s254
      %p256 = scmp.eq.s32.totalorder %s41, 0
      %p257 = por %p255, %p256
      %s259 = sadd.s32 %s258, 1
      %p262 = scmp.eq.s32.totalorder %s35, 1
      %p263 = scmp.ne.s32.totalorder %s258, %s260
      %p264 = scmp.eq.s32.totalorder %s35, 0
      %p265 = por %p263, %p264
      %p266 = scmp.ne.s32.totalorder %s258, %s260
      %p267 = scmp.eq.s32.totalorder %s40, 1
      %p268 = por %p266, %p267
      %p269 = scmp.ne.s32.totalorder %s260, %s261
      %p270 = scmp.eq.s32.totalorder %s40, 0
      %p271 = por %p269, %p270
      %p272 = scmp.ne.s32.totalorder %s260, %s261
      %p273 = scmp.eq.s32.totalorder %s41, 1
      %p274 = por %p272, %p273
      %p276 = scmp.ne.s32.totalorder %s261, %s275
      %p277 = scmp.eq.s32.totalorder %s41, 0
      %p278 = por %p276, %p277
      %s280 = sadd.s32 %s279, 1
      %p283 = scmp.eq.s32.totalorder %s35, 1
      %p284 = scmp.ne.s32.totalorder %s279, %s281
      %p285 = scmp.eq.s32.totalorder %s35, 0
      %p286 = por %p284, %p285
      %p287 = scmp.ne.s32.totalorder %s279, %s281
      %p288 = scmp.eq.s32.totalorder %s40, 1
      %p289 = por %p287, %p288
      %p290 = scmp.ne.s32.totalorder %s281, %s282
      %p291 = scmp.eq.s32.totalorder %s40, 0
      %p292 = por %p290, %p291
      %p293 = scmp.ne.s32.totalorder %s281, %s282
      %p294 = scmp.eq.s32.totalorder %s41, 1
      %p295 = por %p293, %p294
      %p297 = scmp.ne.s32.totalorder %s282, %s296
      %p298 = scmp.eq.s32.totalorder %s41, 0
      %p299 = por %p297, %p298
      %s301 = sadd.s32 %s300, 1
      %p304 = scmp.eq.s32.totalorder %s35, 1
      %p305 = scmp.ne.s32.totalorder %s300, %s302
      %p306 = scmp.eq.s32.totalorder %s35, 0
      %p307 = por %p305, %p306
      %p308 = scmp.ne.s32.totalorder %s300, %s302
      %p309 = scmp.eq.s32.totalorder %s40, 1
      %p310 = por %p308, %p309
      %p311 = scmp.ne.s32.totalorder %s302, %s303
      %p312 = scmp.eq.s32.totalorder %s40, 0
      %p313 = por %p311, %p312
      %p314 = scmp.ne.s32.totalorder %s302, %s303
      %p315 = scmp.eq.s32.totalorder %s41, 1
      %p316 = por %p314, %p315
      %p318 = scmp.ne.s32.totalorder %s303, %s317
      %p319 = scmp.eq.s32.totalorder %s41, 0
      %p320 = por %p318, %p319
      %s322 = sadd.s32 %s321, 1
      %p325 = scmp.eq.s32.totalorder %s35, 1
      %p326 = scmp.ne.s32.totalorder %s321, %s323
      %p327 = scmp.eq.s32.totalorder %s35, 0
      %p328 = por %p326, %p327
      %p329 = scmp.ne.s32.totalorder %s321, %s323
      %p330 = scmp.eq.s32.totalorder %s40, 1
      %p331 = por %p329, %p330
      %p332 = scmp.ne.s32.totalorder %s323, %s324
      %p333 = scmp.eq.s32.totalorder %s40, 0
      %p334 = por %p332, %p333
      %p335 = scmp.ne.s32.totalorder %s323, %s324
      %p336 = scmp.eq.s32.totalorder %s41, 1
      %p337 = por %p335, %p336
      %p339 = scmp.ne.s32.totalorder %s324, %s338
      %p340 = scmp.eq.s32.totalorder %s41, 0
      %p341 = por %p339, %p340
      %s343 = sadd.s32 %s342, 1
      %p346 = scmp.eq.s32.totalorder %s35, 1
      %p347 = scmp.ne.s32.totalorder %s342, %s344
      %p348 = scmp.eq.s32.totalorder %s35, 0
      %p349 = por %p347, %p348
      %p350 = scmp.ne.s32.totalorder %s342, %s344
      %p351 = scmp.eq.s32.totalorder %s40, 1
      %p352 = por %p350, %p351
      %p353 = scmp.ne.s32.totalorder %s344, %s345
      %p354 = scmp.eq.s32.totalorder %s40, 0
      %p355 = por %p353, %p354
      %p356 = scmp.ne.s32.totalorder %s344, %s345
      %p357 = scmp.eq.s32.totalorder %s41, 1
      %p358 = por %p356, %p357
      %p360 = scmp.ne.s32.totalorder %s345, %s359
      %p361 = scmp.eq.s32.totalorder %s41, 0
      %p362 = por %p360, %p361
      %s364 = sadd.s32 %s363, 1
      %p367 = scmp.eq.s32.totalorder %s35, 1
      %p368 = scmp.ne.s32.totalorder %s363, %s365
      %p369 = scmp.eq.s32.totalorder %s35, 0
      %p370 = por %p368, %p369
      %p371 = scmp.ne.s32.totalorder %s363, %s365
      %p372 = scmp.eq.s32.totalorder %s40, 1
      %p373 = por %p371, %p372
      %p374 = scmp.ne.s32.totalorder %s365, %s366
      %p375 = scmp.eq.s32.totalorder %s40, 0
      %p376 = por %p374, %p375
      %p377 = scmp.ne.s32.totalorder %s365, %s366
      %p378 = scmp.eq.s32.totalorder %s41, 1
      %p379 = por %p377, %p378
      %p381 = scmp.ne.s32.totalorder %s366, %s380
      %p382 = scmp.eq.s32.totalorder %s41, 0
      %p383 = por %p381, %p382
      %s385 = sadd.s32 %s384, 1
      %p388 = scmp.eq.s32.totalorder %s35, 1
      %p389 = scmp.ne.s32.totalorder %s384, %s386
      %p390 = scmp.eq.s32.totalorder %s35, 0
      %p391 = por %p389, %p390
      %p392 = scmp.ne.s32.totalorder %s384, %s386
      %p393 = scmp.eq.s32.totalorder %s40, 1
      %p394 = por %p392, %p393
      %p395 = scmp.ne.s32.totalorder %s386, %s387
      %p396 = scmp.eq.s32.totalorder %s40, 0
      %p397 = por %p395, %p396
      %p398 = scmp.ne.s32.totalorder %s386, %s387
      %p399 = scmp.eq.s32.totalorder %s41, 1
      %p400 = por %p398, %p399
      %p402 = scmp.ne.s32.totalorder %s387, %s401
      %p403 = scmp.eq.s32.totalorder %s41, 0
      %p404 = por %p402, %p403
      %s406 = sadd.s32 %s405, 1
      %p409 = scmp.eq.s32.totalorder %s35, 1
      %p410 = scmp.ne.s32.totalorder %s405, %s407
      %p411 = scmp.eq.s32.totalorder %s35, 0
      %p412 = por %p410, %p411
      %p413 = scmp.ne.s32.totalorder %s405, %s407
      %p414 = scmp.eq.s32.totalorder %s40, 1
      %p415 = por %p413, %p414
      %p416 = scmp.ne.s32.totalorder %s407, %s408
      %p417 = scmp.eq.s32.totalorder %s40, 0
      %p418 = por %p416, %p417
      %p419 = scmp.ne.s32.totalorder %s407, %s408
      %p420 = scmp.eq.s32.totalorder %s41, 1
      %p421 = por %p419, %p420
      %p423 = scmp.ne.s32.totalorder %s408, %s422
      %p424 = scmp.eq.s32.totalorder %s41, 0
      %p425 = por %p423, %p424
      %s427 = sadd.s32 %s426, 1
      %p430 = scmp.eq.s32.totalorder %s35, 1
      %p431 = scmp.ne.s32.totalorder %s426, %s428
      %p432 = scmp.eq.s32.totalorder %s35, 0
      %p433 = por %p431, %p432
      %p434 = scmp.ne.s32.totalorder %s426, %s428
      %p435 = scmp.eq.s32.totalorder %s40, 1
      %p436 = por %p434, %p435
      %p437 = scmp.ne.s32.totalorder %s428, %s429
      %p438 = scmp.eq.s32.totalorder %s40, 0
      %p439 = por %p437, %p438
      %p440 = scmp.ne.s32.totalorder %s428, %s429
      %p441 = scmp.eq.s32.totalorder %s41, 1
      %p442 = por %p440, %p441
      %p444 = scmp.ne.s32.totalorder %s429, %s443
      %p445 = scmp.eq.s32.totalorder %s41, 0
      %p446 = por %p444, %p445
      %s448 = sadd.s32 %s447, 1
      %p451 = scmp.eq.s32.totalorder %s35, 1
      %p452 = scmp.ne.s32.totalorder %s447, %s449
      %p453 = scmp.eq.s32.totalorder %s35, 0
      %p454 = por %p452, %p453
      %p455 = scmp.ne.s32.totalorder %s447, %s449
      %p456 = scmp.eq.s32.totalorder %s40, 1
      %p457 = por %p455, %p456
      %p458 = scmp.ne.s32.totalorder %s449, %s450
      %p459 = scmp.eq.s32.totalorder %s40, 0
      %p460 = por %p458, %p459
      %p461 = scmp.ne.s32.totalorder %s449, %s450
      %p462 = scmp.eq.s32.totalorder %s41, 1
      %p463 = por %p461, %p462
      %p465 = scmp.ne.s32.totalorder %s450, %s464
      %p466 = scmp.eq.s32.totalorder %s41, 0
      %p467 = por %p465, %p466
      %s469 = sadd.s32 %s468, 1
      %p472 = scmp.eq.s32.totalorder %s35, 1
      %p473 = scmp.ne.s32.totalorder %s468, %s470
      %p474 = scmp.eq.s32.totalorder %s35, 0
      %p475 = por %p473, %p474
      %p476 = scmp.ne.s32.totalorder %s468, %s470
      %p477 = scmp.eq.s32.totalorder %s40, 1
      %p478 = por %p476, %p477
      %p479 = scmp.ne.s32.totalorder %s470, %s471
      %p480 = scmp.eq.s32.totalorder %s40, 0
      %p481 = por %p479, %p480
      %p482 = scmp.ne.s32.totalorder %s470, %s471
      %p483 = scmp.eq.s32.totalorder %s41, 1
      %p484 = por %p482, %p483
      %p486 = scmp.ne.s32.totalorder %s471, %s485
      %p487 = scmp.eq.s32.totalorder %s41, 0
      %p488 = por %p486, %p487
      %s490 = sadd.s32 %s489, 1
      %p493 = scmp.eq.s32.totalorder %s35, 1
      %p494 = scmp.ne.s32.totalorder %s489, %s491
      %p495 = scmp.eq.s32.totalorder %s35, 0
      %p496 = por %p494, %p495
      %p497 = scmp.ne.s32.totalorder %s489, %s491
      %p498 = scmp.eq.s32.totalorder %s40, 1
      %p499 = por %p497, %p498
      %p500 = scmp.ne.s32.totalorder %s491, %s492
      %p501 = scmp.eq.s32.totalorder %s40, 0
      %p502 = por %p500, %p501
      %p503 = scmp.ne.s32.totalorder %s491, %s492
      %p504 = scmp.eq.s32.totalorder %s41, 1
      %p505 = por %p503, %p504
      %p507 = scmp.ne.s32.totalorder %s492, %s506
      %p508 = scmp.eq.s32.totalorder %s41, 0
      %p509 = por %p507, %p508
      %s511 = sadd.s32 %s510, 1
      %p514 = scmp.eq.s32.totalorder %s35, 1
      %p515 = scmp.ne.s32.totalorder %s510, %s512
      %p516 = scmp.eq.s32.totalorder %s35, 0
      %p517 = por %p515, %p516
      %p518 = scmp.ne.s32.totalorder %s510, %s512
      %p519 = scmp.eq.s32.totalorder %s40, 1
      %p520 = por %p518, %p519
      %p521 = scmp.ne.s32.totalorder %s512, %s513
      %p522 = scmp.eq.s32.totalorder %s40, 0
      %p523 = por %p521, %p522
      %p524 = scmp.ne.s32.totalorder %s512, %s513
      %p525 = scmp.eq.s32.totalorder %s41, 1
      %p526 = por %p524, %p525
      %p528 = scmp.ne.s32.totalorder %s513, %s527
      %p529 = scmp.eq.s32.totalorder %s41, 0
      %p530 = por %p528, %p529
      %s532 = sadd.s32 %s531, 1
      %p535 = scmp.eq.s32.totalorder %s35, 1
      %p536 = scmp.ne.s32.totalorder %s531, %s533
      %p537 = scmp.eq.s32.totalorder %s35, 0
      %p538 = por %p536, %p537
      %p539 = scmp.ne.s32.totalorder %s531, %s533
      %p540 = scmp.eq.s32.totalorder %s40, 1
      %p541 = por %p539, %p540
      %p542 = scmp.ne.s32.totalorder %s533, %s534
      %p543 = scmp.eq.s32.totalorder %s40, 0
      %p544 = por %p542, %p543
      %p545 = scmp.ne.s32.totalorder %s533, %s534
      %p546 = scmp.eq.s32.totalorder %s41, 1
      %p547 = por %p545, %p546
      %p549 = scmp.ne.s32.totalorder %s534, %s548
      %p550 = scmp.eq.s32.totalorder %s41, 0
      %p551 = por %p549, %p550
      %s553 = sadd.s32 %s552, 1
      %p556 = scmp.eq.s32.totalorder %s35, 1
      %p557 = scmp.ne.s32.totalorder %s552, %s554
      %p558 = scmp.eq.s32.totalorder %s35, 0
      %p559 = por %p557, %p558
      %p560 = scmp.ne.s32.totalorder %s552, %s554
      %p561 = scmp.eq.s32.totalorder %s40, 1
      %p562 = por %p560, %p561
      %p563 = scmp.ne.s32.totalorder %s554, %s555
      %p564 = scmp.eq.s32.totalorder %s40, 0
      %p565 = por %p563, %p564
      %p566 = scmp.ne.s32.totalorder %s554, %s555
      %p567 = scmp.eq.s32.totalorder %s41, 1
      %p568 = por %p566, %p567
      %p570 = scmp.ne.s32.totalorder %s555, %s569
      %p571 = scmp.eq.s32.totalorder %s41, 0
      %p572 = por %p570, %p571
      %s574 = sadd.s32 %s573, 1
      %p577 = scmp.eq.s32.totalorder %s35, 1
      %p578 = scmp.ne.s32.totalorder %s573, %s575
      %p579 = scmp.eq.s32.totalorder %s35, 0
      %p580 = por %p578, %p579
      %p581 = scmp.ne.s32.totalorder %s573, %s575
      %p582 = scmp.eq.s32.totalorder %s40, 1
      %p583 = por %p581, %p582
      %p584 = scmp.ne.s32.totalorder %s575, %s576
      %p585 = scmp.eq.s32.totalorder %s40, 0
      %p586 = por %p584, %p585
      %p587 = scmp.ne.s32.totalorder %s575, %s576
      %p588 = scmp.eq.s32.totalorder %s41, 1
      %p589 = por %p587, %p588
      %p591 = scmp.ne.s32.totalorder %s576, %s590
      %p592 = scmp.eq.s32.totalorder %s41, 0
      %p593 = por %p591, %p592
      %s594 = ssub.s32 %s35, %s42
      %p595 = scmp.eq.s32.totalorder %s594, 0
      %s597 = sadd.s32 %s596, 1
      %s598 = scalar_select %p595, %s596, %s597
      %p601 = pneg %p595
      %p602 = scmp.eq.s32.totalorder %s35, 1
      %p603 = por %p601, %p602
      %p604 = scmp.ne.s32.totalorder %s596, %s599
      %p605 = scmp.eq.s32.totalorder %s35, 0
      %p606 = por %p604, %p605
      %p607 = scmp.ne.s32.totalorder %s596, %s599
      %p608 = scmp.eq.s32.totalorder %s40, 1
      %p609 = por %p607, %p608
      %p610 = scmp.ne.s32.totalorder %s599, %s600
      %p611 = scmp.eq.s32.totalorder %s40, 0
      %p612 = por %p610, %p611
      %p613 = scmp.ne.s32.totalorder %s599, %s600
      %p614 = scmp.eq.s32.totalorder %s41, 1
      %p615 = por %p613, %p614
      %p617 = scmp.ne.s32.totalorder %s600, %s616
      %p618 = scmp.eq.s32.totalorder %s41, 0
      %p619 = por %p617, %p618
      %p620 = scmp.le.s32.totalorder 1, %s35
      %p621 = scmp.lt.s32.totalorder %s35, 3
      %p622 = pnand %p620, %p621
      %p623 = pneg %p622
      // Predicated region
      $region9: #{foldnet_forward.1} parent=5 // pred_check
        _
      $region10: #{foldnet_forward.1} parent=5 // pred_check_branch
        %625 = sbr.rel (%p622) target = $region12
      $region11: #{foldnet_forward.1} parent=5 // pred_region
        %s626 = ssub.s32 %s35, 1
        // Predicated region
        $region13: #{foldnet_forward.1} parent=11 // pred_check
          %p627 = pneg %p82
        $region14: #{foldnet_forward.1} parent=11 // pred_check_branch
          %629 = sbr.rel (%p627) target = $region16
        $region15: #{foldnet_forward.1} parent=11 // pred_region
          _
        $region16: #{foldnet_forward.1} parent=11 // pred_fallthru
          _
        // Predicated region
        $region17: #{foldnet_forward.1} parent=11 // pred_check
          %p630 = pneg %p103
        $region18: #{foldnet_forward.1} parent=11 // pred_check_branch
          %632 = sbr.rel (%p630) target = $region20
        $region19: #{foldnet_forward.1} parent=11 // pred_region
          _
        $region20: #{foldnet_forward.1} parent=11 // pred_fallthru
          _
        // Predicated region
        $region21: #{foldnet_forward.1} parent=11 // pred_check
          %p633 = pneg %p124
        $region22: #{foldnet_forward.1} parent=11 // pred_check_branch
          %635 = sbr.rel (%p633) target = $region24
        $region23: #{foldnet_forward.1} parent=11 // pred_region
          _
        $region24: #{foldnet_forward.1} parent=11 // pred_fallthru
          _
        // Predicated region
        $region25: #{foldnet_forward.1} parent=11 // pred_check
          %p636 = pneg %p145
        $region26: #{foldnet_forward.1} parent=11 // pred_check_branch
          %638 = sbr.rel (%p636) target = $region28
        $region27: #{foldnet_forward.1} parent=11 // pred_region
          _
        $region28: #{foldnet_forward.1} parent=11 // pred_fallthru
          _
        // Predicated region
        $region29: #{foldnet_forward.1} parent=11 // pred_check
          %p639 = pneg %p166
        $region30: #{foldnet_forward.1} parent=11 // pred_check_branch
          %641 = sbr.rel (%p639) target = $region32
        $region31: #{foldnet_forward.1} parent=11 // pred_region
          _
        $region32: #{foldnet_forward.1} parent=11 // pred_fallthru
          _
        // Predicated region
        $region33: #{foldnet_forward.1} parent=11 // pred_check
          %p642 = pneg %p187
        $region34: #{foldnet_forward.1} parent=11 // pred_check_branch
          %644 = sbr.rel (%p642) target = $region36
        $region35: #{foldnet_forward.1} parent=11 // pred_region
          _
        $region36: #{foldnet_forward.1} parent=11 // pred_fallthru
          _
        // Predicated region
        $region37: #{foldnet_forward.1} parent=11 // pred_check
          %p645 = pneg %p208
        $region38: #{foldnet_forward.1} parent=11 // pred_check_branch
          %647 = sbr.rel (%p645) target = $region40
        $region39: #{foldnet_forward.1} parent=11 // pred_region
          _
        $region40: #{foldnet_forward.1} parent=11 // pred_fallthru
          _
        // Predicated region
        $region41: #{foldnet_forward.1} parent=11 // pred_check
          %p648 = pneg %p229
        $region42: #{foldnet_forward.1} parent=11 // pred_check_branch
          %650 = sbr.rel (%p648) target = $region44
        $region43: #{foldnet_forward.1} parent=11 // pred_region
          _
        $region44: #{foldnet_forward.1} parent=11 // pred_fallthru
          _
        // Predicated region
        $region45: #{foldnet_forward.1} parent=11 // pred_check
          %p651 = pneg %p250
        $region46: #{foldnet_forward.1} parent=11 // pred_check_branch
          %653 = sbr.rel (%p651) target = $region48
        $region47: #{foldnet_forward.1} parent=11 // pred_region
          _
        $region48: #{foldnet_forward.1} parent=11 // pred_fallthru
          _
        // Predicated region
        $region49: #{foldnet_forward.1} parent=11 // pred_check
          %p654 = pneg %p271
        $region50: #{foldnet_forward.1} parent=11 // pred_check_branch
          %656 = sbr.rel (%p654) target = $region52
        $region51: #{foldnet_forward.1} parent=11 // pred_region
          _
        $region52: #{foldnet_forward.1} parent=11 // pred_fallthru
          _
        // Predicated region
        $region53: #{foldnet_forward.1} parent=11 // pred_check
          %p657 = pneg %p292
        $region54: #{foldnet_forward.1} parent=11 // pred_check_branch
          %659 = sbr.rel (%p657) target = $region56
        $region55: #{foldnet_forward.1} parent=11 // pred_region
          _
        $region56: #{foldnet_forward.1} parent=11 // pred_fallthru
          _
        // Predicated region
        $region57: #{foldnet_forward.1} parent=11 // pred_check
          %p660 = pneg %p313
        $region58: #{foldnet_forward.1} parent=11 // pred_check_branch
          %662 = sbr.rel (%p660) target = $region60
        $region59: #{foldnet_forward.1} parent=11 // pred_region
          _
        $region60: #{foldnet_forward.1} parent=11 // pred_fallthru
          _
        // Predicated region
        $region61: #{foldnet_forward.1} parent=11 // pred_check
          %p663 = pneg %p334
        $region62: #{foldnet_forward.1} parent=11 // pred_check_branch
          %665 = sbr.rel (%p663) target = $region64
        $region63: #{foldnet_forward.1} parent=11 // pred_region
          _
        $region64: #{foldnet_forward.1} parent=11 // pred_fallthru
          _
        // Predicated region
        $region65: #{foldnet_forward.1} parent=11 // pred_check
          %p666 = pneg %p355
        $region66: #{foldnet_forward.1} parent=11 // pred_check_branch
          %668 = sbr.rel (%p666) target = $region68
        $region67: #{foldnet_forward.1} parent=11 // pred_region
          _
        $region68: #{foldnet_forward.1} parent=11 // pred_fallthru
          _
        // Predicated region
        $region69: #{foldnet_forward.1} parent=11 // pred_check
          %p669 = pneg %p376
        $region70: #{foldnet_forward.1} parent=11 // pred_check_branch
          %671 = sbr.rel (%p669) target = $region72
        $region71: #{foldnet_forward.1} parent=11 // pred_region
          _
        $region72: #{foldnet_forward.1} parent=11 // pred_fallthru
          _
        // Predicated region
        $region73: #{foldnet_forward.1} parent=11 // pred_check
          %p672 = pneg %p397
        $region74: #{foldnet_forward.1} parent=11 // pred_check_branch
          %674 = sbr.rel (%p672) target = $region76
        $region75: #{foldnet_forward.1} parent=11 // pred_region
          _
        $region76: #{foldnet_forward.1} parent=11 // pred_fallthru
          _
        // Predicated region
        $region77: #{foldnet_forward.1} parent=11 // pred_check
          %p675 = pneg %p418
        $region78: #{foldnet_forward.1} parent=11 // pred_check_branch
          %677 = sbr.rel (%p675) target = $region80
        $region79: #{foldnet_forward.1} parent=11 // pred_region
          _
        $region80: #{foldnet_forward.1} parent=11 // pred_fallthru
          _
        // Predicated region
        $region81: #{foldnet_forward.1} parent=11 // pred_check
          %p678 = pneg %p439
        $region82: #{foldnet_forward.1} parent=11 // pred_check_branch
          %680 = sbr.rel (%p678) target = $region84
        $region83: #{foldnet_forward.1} parent=11 // pred_region
          _
        $region84: #{foldnet_forward.1} parent=11 // pred_fallthru
          _
        // Predicated region
        $region85: #{foldnet_forward.1} parent=11 // pred_check
          %p681 = pneg %p460
        $region86: #{foldnet_forward.1} parent=11 // pred_check_branch
          %683 = sbr.rel (%p681) target = $region88
        $region87: #{foldnet_forward.1} parent=11 // pred_region
          _
        $region88: #{foldnet_forward.1} parent=11 // pred_fallthru
          _
        // Predicated region
        $region89: #{foldnet_forward.1} parent=11 // pred_check
          %p684 = pneg %p481
        $region90: #{foldnet_forward.1} parent=11 // pred_check_branch
          %686 = sbr.rel (%p684) target = $region92
        $region91: #{foldnet_forward.1} parent=11 // pred_region
          _
        $region92: #{foldnet_forward.1} parent=11 // pred_fallthru
          _
        // Predicated region
        $region93: #{foldnet_forward.1} parent=11 // pred_check
          %p687 = pneg %p502
        $region94: #{foldnet_forward.1} parent=11 // pred_check_branch
          %689 = sbr.rel (%p687) target = $region96
        $region95: #{foldnet_forward.1} parent=11 // pred_region
          _
        $region96: #{foldnet_forward.1} parent=11 // pred_fallthru
          _
        // Predicated region
        $region97: #{foldnet_forward.1} parent=11 // pred_check
          %p690 = pneg %p523
        $region98: #{foldnet_forward.1} parent=11 // pred_check_branch
          %692 = sbr.rel (%p690) target = $region100
        $region99: #{foldnet_forward.1} parent=11 // pred_region
          _
        $region100: #{foldnet_forward.1} parent=11 // pred_fallthru
          _
        // Predicated region
        $region101: #{foldnet_forward.1} parent=11 // pred_check
          %p693 = pneg %p544
        $region102: #{foldnet_forward.1} parent=11 // pred_check_branch
          %695 = sbr.rel (%p693) target = $region104
        $region103: #{foldnet_forward.1} parent=11 // pred_region
          _
        $region104: #{foldnet_forward.1} parent=11 // pred_fallthru
          _
        // Predicated region
        $region105: #{foldnet_forward.1} parent=11 // pred_check
          %p696 = pneg %p565
        $region106: #{foldnet_forward.1} parent=11 // pred_check_branch
          %698 = sbr.rel (%p696) target = $region108
        $region107: #{foldnet_forward.1} parent=11 // pred_region
          _
        $region108: #{foldnet_forward.1} parent=11 // pred_fallthru
          _
        // Predicated region
        $region109: #{foldnet_forward.1} parent=11 // pred_check
          %p699 = pneg %p586
        $region110: #{foldnet_forward.1} parent=11 // pred_check_branch
          %701 = sbr.rel (%p699) target = $region112
        $region111: #{foldnet_forward.1} parent=11 // pred_region
          _
        $region112: #{foldnet_forward.1} parent=11 // pred_fallthru
          _
      $region12: #{foldnet_forward.1} parent=5 // pred_fallthru
        _
      %p702 = scmp.lt.s32.totalorder %s35, 2
      // Predicated region
      $region113: #{foldnet_forward.1} parent=5 // pred_check
        %p703 = pneg %p702
      $region114: #{foldnet_forward.1} parent=5 // pred_check_branch
        %705 = sbr.rel (%p703) target = $region116
      $region115: #{foldnet_forward.1} parent=5 // pred_region
        // Predicated region
        $region117: #{foldnet_forward.1} parent=115 // pred_check
          %p706 = pneg %p55
        $region118: #{foldnet_forward.1} parent=115 // pred_check_branch
          %708 = sbr.rel (%p706) target = $region120
        $region119: #{foldnet_forward.1} parent=115 // pred_region
          %p709 = scmp.lt.s32.totalorder %s35, 1
          %s710 = scalar_select %p709, %s35, 1
          %s711 = smul.addr %s710, 36
          %s712 = smul.addr %s711, 4
          %s713 = scalar_lea.vmem %s0, %s712
        $region120: #{foldnet_forward.1} parent=115 // pred_fallthru
          _
      $region116: #{foldnet_forward.1} parent=5 // pred_fallthru
        _
      %p714 = scmp.le.s32.totalorder 1, %s35
      %p715 = scmp.lt.s32.totalorder %s35, 3
      %p716 = pnand %p714, %p715
      %p717 = pneg %p716
      // Predicated region
      $region121: #{foldnet_forward.1} parent=5 // pred_check
        _
      $region122: #{foldnet_forward.1} parent=5 // pred_check_branch
        %719 = sbr.rel (%p716) target = $region124
      $region123: #{foldnet_forward.1} parent=5 // pred_region
        %s720 = ssub.s32 %s35, 1
        %p721 = scmp.lt.s32.totalorder %s40, 1
        %s722 = scalar_select %p721, %s40, 1
        %s723 = smul.addr %s722, 36
        %s724 = smul.addr %s723, 4
        %s725 = scalar_lea.vmem %s0, %s724
        %p726 = pneg %p61
        %p727 = pneg %p58
        %p728 = pneg %p82
        %p729 = pneg %p79
        %p730 = pneg %p103
        %p731 = pneg %p100
        %p732 = pneg %p124
        %p733 = pneg %p121
        %p734 = pneg %p145
        %p735 = pneg %p142
        %p736 = pneg %p166
        %p737 = pneg %p163
        %p738 = pneg %p187
        %p739 = pneg %p184
        %p740 = pneg %p208
        %p741 = pneg %p205
        %p742 = pneg %p229
        %p743 = pneg %p226
        %p744 = pneg %p250
        %p745 = pneg %p247
        %p746 = pneg %p271
        %p747 = pneg %p268
        %p748 = pneg %p292
        %p749 = pneg %p289
        %p750 = pneg %p313
        %p751 = pneg %p310
        %p752 = pneg %p334
        %p753 = pneg %p331
        %p754 = pneg %p355
        %p755 = pneg %p352
        %p756 = pneg %p376
        %p757 = pneg %p373
        %p758 = pneg %p397
        %p759 = pneg %p394
        %p760 = pneg %p418
        %p761 = pneg %p415
        %p762 = pneg %p439
        %p763 = pneg %p436
        %p764 = pneg %p460
        %p765 = pneg %p457
        %p766 = pneg %p481
        %p767 = pneg %p478
        %p768 = pneg %p502
        %p769 = pneg %p499
        %p770 = pneg %p523
        %p771 = pneg %p520
        %p772 = pneg %p544
        %p773 = pneg %p541
        %p774 = pneg %p565
        %p775 = pneg %p562
        %p776 = pneg %p586
        %p777 = pneg %p583
        %p778 = pneg %p612
        %p779 = pneg %p609
        %s780 = sand.u32 %s599, 1
        %s781 = scalar_lea.sflag [#allocation9], %s780
        %s782 = sand.u32 %s599, 1
        %s783 = scalar_lea.vmem [#allocation8], %s782
        %p784 = scmp.lt.s32.totalorder %s40, 1
        %s785 = scalar_select %p784, %s40, 1
        %s786 = smul.addr %s785, 36
        %s787 = smul.addr %s786, 4
        %s788 = scalar_lea.vmem %s0, %s787
        %vm790 = vcmask 125952
        %791 = vst.msk [vmem:[#allocation2] sm:$0xf] %vm790, 0
        %792 = vst.msk [vmem:[#allocation2 + $0x4] sm:$0xf] %vm790, 0
        %793 = vst.msk [vmem:[#allocation2 + $0x8] sm:$0xf] %vm790, 0
        %794 = vst.msk [vmem:[#allocation2 + $0xc] sm:$0xf] %vm790, 0
        %795 = vst.msk [vmem:[#allocation2 + $0x10] sm:$0xf] %vm790, 0
        %796 = vst.msk [vmem:[#allocation2 + $0x14] sm:$0xf] %vm790, 0
        %797 = vst.msk [vmem:[#allocation2 + $0x18] sm:$0xf] %vm790, 0
        %798 = vst.msk [vmem:[#allocation2 + $0x1c] sm:$0xf] %vm790, 0
        %799 = vst.msk [vmem:[#allocation2 + $0x20] sm:$0xf] %vm790, 0
        %800 = vst.msk [vmem:[#allocation2 + $0x24] sm:$0xf] %vm790, 0
        %801 = vst.msk [vmem:[#allocation2 + $0x28] sm:$0xf] %vm790, 0
        %802 = vst.msk [vmem:[#allocation2 + $0x2c] sm:$0xf] %vm790, 0
        %803 = vst.msk [vmem:[#allocation2 + $0x30] sm:$0xf] %vm790, 0
        %804 = vst.msk [vmem:[#allocation2 + $0x34] sm:$0xf] %vm790, 0
        %805 = vst.msk [vmem:[#allocation2 + $0x38] sm:$0xf] %vm790, 0
        %806 = vst.msk [vmem:[#allocation2 + $0x3c] sm:$0xf] %vm790, 0
        %807 = vst.msk [vmem:[#allocation2 + $0x40] sm:$0xf] %vm790, 0
        %808 = vst.msk [vmem:[#allocation2 + $0x44] sm:$0xf] %vm790, 0
        %809 = vst.msk [vmem:[#allocation2 + $0x48] sm:$0xf] %vm790, 0
        %810 = vst.msk [vmem:[#allocation2 + $0x4c] sm:$0xf] %vm790, 0
        %811 = vst.msk [vmem:[#allocation2 + $0x50] sm:$0xf] %vm790, 0
        %812 = vst.msk [vmem:[#allocation2 + $0x54] sm:$0xf] %vm790, 0
        %813 = vst.msk [vmem:[#allocation2 + $0x58] sm:$0xf] %vm790, 0
        %814 = vst.msk [vmem:[#allocation2 + $0x5c] sm:$0xf] %vm790, 0
        %815 = vst.msk [vmem:[#allocation2 + $0x60] sm:$0xf] %vm790, 0
        %816 = vst.msk [vmem:[#allocation2 + $0x64] sm:$0xf] %vm790, 0
        %817 = vst.msk [vmem:[#allocation2 + $0x68] sm:$0xf] %vm790, 0
        %818 = vst.msk [vmem:[#allocation2 + $0x6c] sm:$0xf] %vm790, 0
        %819 = vst.msk [vmem:[#allocation2 + $0x70] sm:$0xf] %vm790, 0
        %820 = vst.msk [vmem:[#allocation2 + $0x74] sm:$0xf] %vm790, 0
        %821 = vst.msk [vmem:[#allocation2 + $0x78] sm:$0xf] %vm790, 0
        %822 = vst.msk [vmem:[#allocation2 + $0x7c] sm:$0xf] %vm790, 0
        %823 = vst.msk [vmem:[#allocation2 + $0x80] sm:$0xf] %vm790, 0
        %824 = vst.msk [vmem:[#allocation2 + $0x84] sm:$0xf] %vm790, 0
        %825 = vst.msk [vmem:[#allocation2 + $0x88] sm:$0xf] %vm790, 0
        %826 = vst.msk [vmem:[#allocation2 + $0x8c] sm:$0xf] %vm790, 0
        %827 = vst.msk [vmem:[#allocation2 + $0x90] sm:$0xf] %vm790, 0
        %828 = vst.msk [vmem:[#allocation2 + $0x94] sm:$0xf] %vm790, 0
        %829 = vst.msk [vmem:[#allocation2 + $0x98] sm:$0xf] %vm790, 0
        %830 = vst.msk [vmem:[#allocation2 + $0x9c] sm:$0xf] %vm790, 0
        %831 = vst.msk [vmem:[#allocation2 + $0xa0] sm:$0xf] %vm790, 0
        %832 = vst.msk [vmem:[#allocation3] sm:$0xf] %vm790, 0
        %833 = vst.msk [vmem:[#allocation3 + $0x4] sm:$0xf] %vm790, 0
        %834 = vst.msk [vmem:[#allocation3 + $0x8] sm:$0xf] %vm790, 0
        %835 = vst.msk [vmem:[#allocation3 + $0xc] sm:$0xf] %vm790, 0
        %836 = vst.msk [vmem:[#allocation3 + $0x10] sm:$0xf] %vm790, 0
        %837 = vst.msk [vmem:[#allocation3 + $0x14] sm:$0xf] %vm790, 0
        %838 = vst.msk [vmem:[#allocation3 + $0x18] sm:$0xf] %vm790, 0
        %839 = vst.msk [vmem:[#allocation3 + $0x1c] sm:$0xf] %vm790, 0
        %840 = vst.msk [vmem:[#allocation3 + $0x20] sm:$0xf] %vm790, 0
        %841 = vst.msk [vmem:[#allocation3 + $0x24] sm:$0xf] %vm790, 0
        %842 = vst.msk [vmem:[#allocation3 + $0x28] sm:$0xf] %vm790, 0
        %843 = vst.msk [vmem:[#allocation3 + $0x2c] sm:$0xf] %vm790, 0
        %844 = vst.msk [vmem:[#allocation3 + $0x30] sm:$0xf] %vm790, 0
        %845 = vst.msk [vmem:[#allocation3 + $0x34] sm:$0xf] %vm790, 0
        %846 = vst.msk [vmem:[#allocation3 + $0x38] sm:$0xf] %vm790, 0
        %847 = vst.msk [vmem:[#allocation3 + $0x3c] sm:$0xf] %vm790, 0
        %848 = vst.msk [vmem:[#allocation3 + $0x40] sm:$0xf] %vm790, 0
        %849 = vst.msk [vmem:[#allocation3 + $0x44] sm:$0xf] %vm790, 0
        %850 = vst.msk [vmem:[#allocation3 + $0x48] sm:$0xf] %vm790, 0
        %851 = vst.msk [vmem:[#allocation3 + $0x4c] sm:$0xf] %vm790, 0
        %852 = vst.msk [vmem:[#allocation3 + $0x50] sm:$0xf] %vm790, 0
        %853 = vst.msk [vmem:[#allocation3 + $0x54] sm:$0xf] %vm790, 0
        %854 = vst.msk [vmem:[#allocation3 + $0x58] sm:$0xf] %vm790, 0
        %855 = vst.msk [vmem:[#allocation3 + $0x5c] sm:$0xf] %vm790, 0
        %856 = vst.msk [vmem:[#allocation3 + $0x60] sm:$0xf] %vm790, 0
        %857 = vst.msk [vmem:[#allocation3 + $0x64] sm:$0xf] %vm790, 0
        %858 = vst.msk [vmem:[#allocation3 + $0x68] sm:$0xf] %vm790, 0
        %859 = vst.msk [vmem:[#allocation3 + $0x6c] sm:$0xf] %vm790, 0
        %860 = vst.msk [vmem:[#allocation3 + $0x70] sm:$0xf] %vm790, 0
        %861 = vst.msk [vmem:[#allocation3 + $0x74] sm:$0xf] %vm790, 0
        %862 = vst.msk [vmem:[#allocation3 + $0x78] sm:$0xf] %vm790, 0
        %863 = vst.msk [vmem:[#allocation3 + $0x7c] sm:$0xf] %vm790, 0
        %864 = vst.msk [vmem:[#allocation3 + $0x80] sm:$0xf] %vm790, 0
        %865 = vst.msk [vmem:[#allocation3 + $0x84] sm:$0xf] %vm790, 0
        %866 = vst.msk [vmem:[#allocation3 + $0x88] sm:$0xf] %vm790, 0
        %867 = vst.msk [vmem:[#allocation3 + $0x8c] sm:$0xf] %vm790, 0
        %868 = vst.msk [vmem:[#allocation3 + $0x90] sm:$0xf] %vm790, 0
        %869 = vst.msk [vmem:[#allocation3 + $0x94] sm:$0xf] %vm790, 0
        %870 = vst.msk [vmem:[#allocation3 + $0x98] sm:$0xf] %vm790, 0
        %871 = vst.msk [vmem:[#allocation3 + $0x9c] sm:$0xf] %vm790, 0
        %872 = vst.msk [vmem:[#allocation3 + $0xa0] sm:$0xf] %vm790, 0
        %873 = vst.msk [vmem:[#allocation4] sm:$0xf] %vm790, 0
        %874 = vst.msk [vmem:[#allocation4 + $0x4] sm:$0xf] %vm790, 0
        %875 = vst.msk [vmem:[#allocation4 + $0x8] sm:$0xf] %vm790, 0
        %876 = vst.msk [vmem:[#allocation4 + $0xc] sm:$0xf] %vm790, 0
        %877 = vst.msk [vmem:[#allocation4 + $0x10] sm:$0xf] %vm790, 0
        %878 = vst.msk [vmem:[#allocation4 + $0x14] sm:$0xf] %vm790, 0
        %879 = vst.msk [vmem:[#allocation4 + $0x18] sm:$0xf] %vm790, 0
        %880 = vst.msk [vmem:[#allocation4 + $0x1c] sm:$0xf] %vm790, 0
        %881 = vst.msk [vmem:[#allocation4 + $0x20] sm:$0xf] %vm790, 0
        %882 = vst.msk [vmem:[#allocation4 + $0x24] sm:$0xf] %vm790, 0
        %883 = vst.msk [vmem:[#allocation4 + $0x28] sm:$0xf] %vm790, 0
        %884 = vst.msk [vmem:[#allocation4 + $0x2c] sm:$0xf] %vm790, 0
        %885 = vst.msk [vmem:[#allocation4 + $0x30] sm:$0xf] %vm790, 0
        %886 = vst.msk [vmem:[#allocation4 + $0x34] sm:$0xf] %vm790, 0
        %887 = vst.msk [vmem:[#allocation4 + $0x38] sm:$0xf] %vm790, 0
        %888 = vst.msk [vmem:[#allocation4 + $0x3c] sm:$0xf] %vm790, 0
        %889 = vst.msk [vmem:[#allocation4 + $0x40] sm:$0xf] %vm790, 0
        %890 = vst.msk [vmem:[#allocation4 + $0x44] sm:$0xf] %vm790, 0
        %891 = vst.msk [vmem:[#allocation4 + $0x48] sm:$0xf] %vm790, 0
        %892 = vst.msk [vmem:[#allocation4 + $0x4c] sm:$0xf] %vm790, 0
        %893 = vst.msk [vmem:[#allocation4 + $0x50] sm:$0xf] %vm790, 0
        %894 = vst.msk [vmem:[#allocation4 + $0x54] sm:$0xf] %vm790, 0
        %895 = vst.msk [vmem:[#allocation4 + $0x58] sm:$0xf] %vm790, 0
        %896 = vst.msk [vmem:[#allocation4 + $0x5c] sm:$0xf] %vm790, 0
        %897 = vst.msk [vmem:[#allocation4 + $0x60] sm:$0xf] %vm790, 0
        %898 = vst.msk [vmem:[#allocation4 + $0x64] sm:$0xf] %vm790, 0
        %899 = vst.msk [vmem:[#allocation4 + $0x68] sm:$0xf] %vm790, 0
        %900 = vst.msk [vmem:[#allocation4 + $0x6c] sm:$0xf] %vm790, 0
        %901 = vst.msk [vmem:[#allocation4 + $0x70] sm:$0xf] %vm790, 0
        %902 = vst.msk [vmem:[#allocation4 + $0x74] sm:$0xf] %vm790, 0
        %903 = vst.msk [vmem:[#allocation4 + $0x78] sm:$0xf] %vm790, 0
        %904 = vst.msk [vmem:[#allocation4 + $0x7c] sm:$0xf] %vm790, 0
        %905 = vst.msk [vmem:[#allocation4 + $0x80] sm:$0xf] %vm790, 0
        %906 = vst.msk [vmem:[#allocation4 + $0x84] sm:$0xf] %vm790, 0
        %907 = vst.msk [vmem:[#allocation4 + $0x88] sm:$0xf] %vm790, 0
        %908 = vst.msk [vmem:[#allocation4 + $0x8c] sm:$0xf] %vm790, 0
        %909 = vst.msk [vmem:[#allocation4 + $0x90] sm:$0xf] %vm790, 0
        %910 = vst.msk [vmem:[#allocation4 + $0x94] sm:$0xf] %vm790, 0
        %911 = vst.msk [vmem:[#allocation4 + $0x98] sm:$0xf] %vm790, 0
        %912 = vst.msk [vmem:[#allocation4 + $0x9c] sm:$0xf] %vm790, 0
        %913 = vst.msk [vmem:[#allocation4 + $0xa0] sm:$0xf] %vm790, 0
        %vm914 = vcmask 257024
        %915 = vst.msk [vmem:[#allocation5] sm:$0xf] %vm914, 0
        %916 = vst.msk [vmem:[#allocation5 + $0x4] sm:$0xf] %vm914, 0
        %917 = vst.msk [vmem:[#allocation5 + $0x8] sm:$0xf] %vm914, 0
        %918 = vst.msk [vmem:[#allocation5 + $0xc] sm:$0xf] %vm914, 0
        %919 = vst.msk [vmem:[#allocation5 + $0x10] sm:$0xf] %vm914, 0
        %920 = vst.msk [vmem:[#allocation5 + $0x14] sm:$0xf] %vm914, 0
        %921 = vst.msk [vmem:[#allocation5 + $0x18] sm:$0xf] %vm914, 0
        %922 = vst.msk [vmem:[#allocation5 + $0x1c] sm:$0xf] %vm914, 0
        %923 = vst.msk [vmem:[#allocation5 + $0x20] sm:$0xf] %vm914, 0
        %924 = vst.msk [vmem:[#allocation5 + $0x24] sm:$0xf] %vm914, 0
        %925 = vst.msk [vmem:[#allocation5 + $0x28] sm:$0xf] %vm914, 0
        %926 = vst.msk [vmem:[#allocation5 + $0x2c] sm:$0xf] %vm914, 0
        %927 = vst.msk [vmem:[#allocation5 + $0x30] sm:$0xf] %vm914, 0
        %928 = vst.msk [vmem:[#allocation6] sm:$0xf] %vm914, 0
        %929 = vst.msk [vmem:[#allocation6 + $0x4] sm:$0xf] %vm914, 0
        %930 = vst.msk [vmem:[#allocation6 + $0x8] sm:$0xf] %vm914, 0
        %931 = vst.msk [vmem:[#allocation6 + $0xc] sm:$0xf] %vm914, 0
        %932 = vst.msk [vmem:[#allocation6 + $0x10] sm:$0xf] %vm914, 0
        %933 = vst.msk [vmem:[#allocation6 + $0x14] sm:$0xf] %vm914, 0
        %934 = vst.msk [vmem:[#allocation6 + $0x18] sm:$0xf] %vm914, 0
        %935 = vst.msk [vmem:[#allocation6 + $0x1c] sm:$0xf] %vm914, 0
        %936 = vst.msk [vmem:[#allocation6 + $0x20] sm:$0xf] %vm914, 0
        %937 = vst.msk [vmem:[#allocation6 + $0x24] sm:$0xf] %vm914, 0
        %938 = vst.msk [vmem:[#allocation6 + $0x28] sm:$0xf] %vm914, 0
        %939 = vst.msk [vmem:[#allocation6 + $0x2c] sm:$0xf] %vm914, 0
        %940 = vst.msk [vmem:[#allocation6 + $0x30] sm:$0xf] %vm914, 0
        %vm941 = vcmask 519168
        %942 = vst.msk [vmem:[#allocation7] sm:$0xf] %vm941, 0
        %943 = vst.msk [vmem:[#allocation7 + $0x4] sm:$0xf] %vm941, 0
        %944 = vst.msk [vmem:[#allocation7 + $0x8] sm:$0xf] %vm941, 0
        %945 = vst.msk [vmem:[#allocation7 + $0xc] sm:$0xf] %vm941, 0
        %946 = vst.msk [vmem:[#allocation7 + $0x10] sm:$0xf] %vm941, 0
        %v947 = vld [vmem:[%s788] sm:$0xf]
        %v948 = vld [vmem:[%s788 + $0x4] sm:$0xf]
        %v949 = vld [vmem:[%s788 + $0x8] sm:$0xf]
        %v950 = vld [vmem:[%s788 + $0xc] sm:$0xf]
        %v951 = vld [vmem:[%s788 + $0x10] sm:$0xf]
        %v952 = vld [vmem:[%s788 + $0x14] sm:$0xf]
        %v953 = vld [vmem:[%s788 + $0x18] sm:$0xf]
        %v954 = vld [vmem:[%s788 + $0x1c] sm:$0xf]
        %v955 = vld [vmem:[%s788 + $0x20] sm:$0xf]
        %v956 = vld [vmem:[%s788 + $0x24] sm:$0xf]
        %v957 = vld [vmem:[%s788 + $0x28] sm:$0xf]
        %v958 = vld [vmem:[%s788 + $0x2c] sm:$0xf]
        %v959 = vld [vmem:[%s788 + $0x30] sm:$0xf]
        %v960 = vld [vmem:[%s788 + $0x34] sm:$0xf]
        %v961 = vld [vmem:[%s788 + $0x38] sm:$0xf]
        %v962 = vld [vmem:[%s788 + $0x3c] sm:$0xf]
        %v963 = vld [vmem:[%s788 + $0x40] sm:$0xf]
        %v964 = vld [vmem:[%s788 + $0x44] sm:$0xf]
        %v965 = vld [vmem:[%s788 + $0x48] sm:$0xf]
        %v966 = vld [vmem:[%s788 + $0x4c] sm:$0xf]
        %v967 = vld [vmem:[%s788 + $0x50] sm:$0xf]
        %v968 = vld [vmem:[%s788 + $0x54] sm:$0xf]
        %v969 = vld [vmem:[%s788 + $0x58] sm:$0xf]
        %v970 = vld [vmem:[%s788 + $0x5c] sm:$0xf]
        %v971 = vld [vmem:[%s788 + $0x60] sm:$0xf]
        %v972 = vld [vmem:[%s788 + $0x64] sm:$0xf]
        %v973 = vld [vmem:[%s788 + $0x68] sm:$0xf]
        %v974 = vld [vmem:[%s788 + $0x6c] sm:$0xf]
        %v975 = vld [vmem:[%s788 + $0x70] sm:$0xf]
        %v976 = vld [vmem:[%s788 + $0x74] sm:$0xf]
        %v977 = vld [vmem:[%s788 + $0x78] sm:$0xf]
        %v978 = vld [vmem:[%s788 + $0x7c] sm:$0xf]
        %v979 = vld [vmem:[%s788 + $0x80] sm:$0xf]
        %v980 = vld [vmem:[%s788 + $0x84] sm:$0xf]
        %v981 = vld [vmem:[%s788 + $0x88] sm:$0xf]
        %v982 = vld [vmem:[%s788 + $0x8c] sm:$0xf]
        %v983 = vld [vmem:[%s1] sm:$0xf]
        %v984 = vld [vmem:[%s1 + $0x4] sm:$0xf]
        %v985 = vld [vmem:[%s1 + $0x8] sm:$0xf]
        %v986 = vld [vmem:[%s1 + $0xc] sm:$0x3]
        %v987 = vld [vmem:[%s2] sm:$0x1]
        %v989 = vlaneseq
        %v990 = vshrl.u32 %v989, 7
        %v991 = vsub.s32 0, %v990
        %v992 = vrot.slane %v987, %v991
        %v1030 = vunpack.c.l.b16 %v947
        %v1031 = vunpack.c.l.b16 %v948
        %v1032 = vunpack.c.l.b16 %v949
        %v1033 = vunpack.c.l.b16 %v950
        %v1034 = vunpack.c.l.b16 %v951
        %v1035 = vunpack.c.l.b16 %v952
        %v1036 = vunpack.c.l.b16 %v953
        %v1037 = vunpack.c.l.b16 %v954
        %v1038 = vunpack.c.l.b16 %v955
        %v1039 = vunpack.c.l.b16 %v956
        %v1040 = vunpack.c.l.b16 %v957
        %v1041 = vunpack.c.l.b16 %v958
        %v1042 = vunpack.c.l.b16 %v959
        %v1043 = vunpack.c.l.b16 %v960
        %v1044 = vunpack.c.l.b16 %v961
        %v1045 = vunpack.c.l.b16 %v962
        %v1046 = vunpack.c.l.b16 %v963
        %v1047 = vunpack.c.l.b16 %v964
        %v1048 = vunpack.c.l.b16 %v965
        %v1049 = vunpack.c.l.b16 %v966
        %v1050 = vunpack.c.l.b16 %v967
        %v1051 = vunpack.c.l.b16 %v968
        %v1052 = vunpack.c.l.b16 %v969
        %v1053 = vunpack.c.l.b16 %v970
        %v1054 = vunpack.c.l.b16 %v971
        %v1055 = vunpack.c.l.b16 %v972
        %v1056 = vunpack.c.l.b16 %v973
        %v1057 = vunpack.c.l.b16 %v974
        %v1058 = vunpack.c.l.b16 %v975
        %v1059 = vunpack.c.l.b16 %v976
        %v1060 = vunpack.c.l.b16 %v977
        %v1061 = vunpack.c.l.b16 %v978
        %v1062 = vunpack.c.l.b16 %v979
        %v1063 = vunpack.c.l.b16 %v980
        %v1064 = vunpack.c.l.b16 %v981
        %v1065 = vunpack.c.l.b16 %v982
        %v1066 = vpack.c.b16 %v1031, %v1030
        %v1067 = vpack.c.b16 %v1033, %v1032
        %v1068 = vpack.c.b16 %v1035, %v1034
        %v1069 = vpack.c.b16 %v1037, %v1036
        %v1070 = vpack.c.b16 %v1039, %v1038
        %v1071 = vpack.c.b16 %v1041, %v1040
        %v1072 = vpack.c.b16 %v1043, %v1042
        %v1073 = vpack.c.b16 %v1045, %v1044
        %v1074 = vpack.c.b16 %v1047, %v1046
        %v1075 = vpack.c.b16 %v1049, %v1048
        %v1076 = vpack.c.b16 %v1051, %v1050
        %v1077 = vpack.c.b16 %v1053, %v1052
        %v1078 = vpack.c.b16 %v1055, %v1054
        %v1079 = vpack.c.b16 %v1057, %v1056
        %v1080 = vpack.c.b16 %v1059, %v1058
        %v1081 = vpack.c.b16 %v1061, %v1060
        %v1082 = vpack.c.b16 %v1063, %v1062
        %v1083 = vpack.c.b16 %v1065, %v1064
        %v1088 = vunpack.c.l.b16 %v983
        %v1089 = vunpack.c.l.b16 %v984
        %v1090 = vunpack.c.l.b16 %v985
        %v1091 = vunpack.c.l.b16 %v986
        %v1092 = vpack.c.b16 %v1089, %v1088
        %v1093 = vpack.c.b16 %v1091, %v1090
        %vm1095 = vcmask 220160
        %v1097 = vsel %vm1095, %v1066, 0
        %v1100 = vsel %vm1095, %v1067, 0
        %v1103 = vsel %vm1095, %v1068, 0
        %v1106 = vsel %vm1095, %v1069, 0
        %v1109 = vsel %vm1095, %v1070, 0
        %v1112 = vsel %vm1095, %v1071, 0
        %v1115 = vsel %vm1095, %v1072, 0
        %v1118 = vsel %vm1095, %v1073, 0
        %v1121 = vsel %vm1095, %v1074, 0
        %v1124 = vsel %vm1095, %v1075, 0
        %v1127 = vsel %vm1095, %v1076, 0
        %v1130 = vsel %vm1095, %v1077, 0
        %v1133 = vsel %vm1095, %v1078, 0
        %v1136 = vsel %vm1095, %v1079, 0
        %v1139 = vsel %vm1095, %v1080, 0
        %v1142 = vsel %vm1095, %v1081, 0
        %v1145 = vsel %vm1095, %v1082, 0
        %v1148 = vsel %vm1095, %v1083, 0
        %vm1150 = vcmask 1044480
        %vm1151 = vcmask 1045504
        %v1152 = vsel %vm1150, 4294967295, 65535
        %v1153 = vsel %vm1151, %v1152, 0
        %v1155 = vand.u32 %v1093, %v1153
        %1157 = vmatprep.subr.bf16.mxu0 0
        %1158 = vmatpush1.bf16.msra.mxu0 %v1092
        %1159 = vmatprep.subr.bf16.mxu0 0
        %1160 = vmatpush1.bf16.msra.mxu0 %v1155
        %1161 = vmatprep.subr.bf16.mxu0 0
        %1162 = vmatpush1.bf16.msra.mxu0 0
        %1163 = vmatprep.subr.bf16.mxu0 0
        %1164 = vmatpush1.bf16.msra.mxu0 0
        %1165 = vmatprep.subr.bf16.mxu0 0
        %1166 = vmatpush1.bf16.msra.mxu0 0
        %1167 = vmatprep.subr.bf16.mxu0 0
        %1168 = vmatpush1.bf16.msra.mxu0 0
        %1169 = vmatprep.subr.bf16.mxu0 0
        %1170 = vmatpush1.bf16.msra.mxu0 0
        %1171 = vmatprep.subr.bf16.mxu0 0
        %1172 = vmatpush1.bf16.msra.mxu0 0
        %1173 = vmatprep.subr.bf16.mxu0 0
        %1174 = vmatpush1.bf16.msra.mxu0 0
        %1175 = vmatprep.subr.bf16.mxu0 0
        %1176 = vmatpush1.bf16.msra.mxu0 0
        %1177 = vmatprep.subr.bf16.mxu0 0
        %1178 = vmatpush1.bf16.msra.mxu0 0
        %1179 = vmatprep.subr.bf16.mxu0 0
        %1180 = vmatpush1.bf16.msra.mxu0 0
        %1181 = vmatprep.subr.bf16.mxu0 0
        %1182 = vmatpush1.bf16.msra.mxu0 0
        %1183 = vmatprep.subr.bf16.mxu0 0
        %1184 = vmatpush1.bf16.msra.mxu0 0
        %1185 = vmatprep.subr.bf16.mxu0 0
        %1186 = vmatpush1.bf16.msra.mxu0 0
        %1187 = vmatprep.subr.bf16.mxu0 0
        %1188 = vmatpush1.bf16.msra.mxu0 0
        %1189 = vmatprep.mubr.bf16.mxu0 0
        %1190 = vmatmul.mubr.bf16.gmra.mrb[0].mxu0 %v1097
        %v1191 = vpop.f32.mrb[0].mxu0
        %v1192 = vadd.f32 %v992, %v1191
        %v1193 = vpop.f32.mrb[0].mxu0
        %v1194 = vpop.f32.mrb[0].mxu0
        %v1195 = vadd.f32 %v992, %v1194
        %v1196 = vpop.f32.mrb[0].mxu0
        %1197 = vmatprep.mubr.bf16.mxu0 0
        %1198 = vmatmul.mubr.bf16.gmra.mrb[0].mxu0 %v1100
        %v1199 = vpop.f32.mrb[0].mxu0
        %v1200 = vadd.f32 %v992, %v1199
        %v1201 = vpop.f32.mrb[0].mxu0
        %v1202 = vpop.f32.mrb[0].mxu0
        %v1203 = vadd.f32 %v992, %v1202
        %v1204 = vpop.f32.mrb[0].mxu0
        %1205 = vmatprep.mubr.bf16.mxu0 0
        %1206 = vmatmul.mubr.bf16.gmra.mrb[0].mxu0 %v1103
        %v1207 = vpop.f32.mrb[0].mxu0
        %v1208 = vadd.f32 %v992, %v1207
        %v1209 = vpop.f32.mrb[0].mxu0
        %v1210 = vpop.f32.mrb[0].mxu0
        %v1211 = vadd.f32 %v992, %v1210
        %v1212 = vpop.f32.mrb[0].mxu0
        %1213 = vmatprep.mubr.bf16.mxu0 0
        %1214 = vmatmul.mubr.bf16.gmra.mrb[0].mxu0 %v1106
        %v1215 = vpop.f32.mrb[0].mxu0
        %v1216 = vadd.f32 %v992, %v1215
        %v1217 = vpop.f32.mrb[0].mxu0
        %v1218 = vpop.f32.mrb[0].mxu0
        %v1219 = vadd.f32 %v992, %v1218
        %v1220 = vpop.f32.mrb[0].mxu0
        %1221 = vmatprep.mubr.bf16.mxu0 0
        %1222 = vmatmul.mubr.bf16.gmra.mrb[0].mxu0 %v1109
        %v1223 = vpop.f32.mrb[0].mxu0
        %v1224 = vadd.f32 %v992, %v1223
        %v1225 = vpop.f32.mrb[0].mxu0
        %v1226 = vpop.f32.mrb[0].mxu0
        %v1227 = vadd.f32 %v992, %v1226
        %v1228 = vpop.f32.mrb[0].mxu0
        %1229 = vmatprep.mubr.bf16.mxu0 0
        %1230 = vmatmul.mubr.bf16.gmra.mrb[0].mxu0 %v1112
        %v1231 = vpop.f32.mrb[0].mxu0
        %v1232 = vadd.f32 %v992, %v1231
        %v1233 = vpop.f32.mrb[0].mxu0
        %v1234 = vpop.f32.mrb[0].mxu0
        %v1235 = vadd.f32 %v992, %v1234
        %v1236 = vpop.f32.mrb[0].mxu0
        %1237 = vmatprep.mubr.bf16.mxu0 0
        %1238 = vmatmul.mubr.bf16.gmra.mrb[0].mxu0 %v1115
        %v1239 = vpop.f32.mrb[0].mxu0
        %v1240 = vadd.f32 %v992, %v1239
        %v1241 = vpop.f32.mrb[0].mxu0
        %v1242 = vpop.f32.mrb[0].mxu0
        %v1243 = vadd.f32 %v992, %v1242
        %v1244 = vpop.f32.mrb[0].mxu0
        %1245 = vmatprep.mubr.bf16.mxu0 0
        %1246 = vmatmul.mubr.bf16.gmra.mrb[0].mxu0 %v1118
        %v1247 = vpop.f32.mrb[0].mxu0
        %v1248 = vadd.f32 %v992, %v1247
        %v1249 = vpop.f32.mrb[0].mxu0
        %v1250 = vpop.f32.mrb[0].mxu0
        %v1251 = vadd.f32 %v992, %v1250
        %v1252 = vpop.f32.mrb[0].mxu0
        %1253 = vmatprep.mubr.bf16.mxu0 0
        %1254 = vmatmul.mubr.bf16.gmra.mrb[0].mxu0 %v1121
        %v1255 = vpop.f32.mrb[0].mxu0
        %v1256 = vadd.f32 %v992, %v1255
        %v1257 = vpop.f32.mrb[0].mxu0
        %v1258 = vpop.f32.mrb[0].mxu0
        %v1259 = vadd.f32 %v992, %v1258
        %v1260 = vpop.f32.mrb[0].mxu0
        %1261 = vmatprep.mubr.bf16.mxu0 0
        %1262 = vmatmul.mubr.bf16.gmra.mrb[0].mxu0 %v1124
        %v1263 = vpop.f32.mrb[0].mxu0
        %v1264 = vadd.f32 %v992, %v1263
        %v1265 = vpop.f32.mrb[0].mxu0
        %v1266 = vpop.f32.mrb[0].mxu0
        %v1267 = vadd.f32 %v992, %v1266
        %v1268 = vpop.f32.mrb[0].mxu0
        %1269 = vmatprep.mubr.bf16.mxu0 0
        %1270 = vmatmul.mubr.bf16.gmra.mrb[0].mxu0 %v1127
        %v1271 = vpop.f32.mrb[0].mxu0
        %v1272 = vadd.f32 %v992, %v1271
        %v1273 = vpop.f32.mrb[0].mxu0
        %v1274 = vpop.f32.mrb[0].mxu0
        %v1275 = vadd.f32 %v992, %v1274
        %v1276 = vpop.f32.mrb[0].mxu0
        %1277 = vmatprep.mubr.bf16.mxu0 0
        %1278 = vmatmul.mubr.bf16.gmra.mrb[0].mxu0 %v1130
        %v1279 = vpop.f32.mrb[0].mxu0
        %v1280 = vadd.f32 %v992, %v1279
        %v1281 = vpop.f32.mrb[0].mxu0
        %v1282 = vpop.f32.mrb[0].mxu0
        %v1283 = vadd.f32 %v992, %v1282
        %v1284 = vpop.f32.mrb[0].mxu0
        %1285 = vmatprep.mubr.bf16.mxu0 0
        %1286 = vmatmul.mubr.bf16.gmra.mrb[0].mxu0 %v1133
        %v1287 = vpop.f32.mrb[0].mxu0
        %v1288 = vadd.f32 %v992, %v1287
        %v1289 = vpop.f32.mrb[0].mxu0
        %v1290 = vpop.f32.mrb[0].mxu0
        %v1291 = vadd.f32 %v992, %v1290
        %v1292 = vpop.f32.mrb[0].mxu0
        %1293 = vmatprep.mubr.bf16.mxu0 0
        %1294 = vmatmul.mubr.bf16.gmra.mrb[0].mxu0 %v1136
        %v1295 = vpop.f32.mrb[0].mxu0
        %v1296 = vadd.f32 %v992, %v1295
        %v1297 = vpop.f32.mrb[0].mxu0
        %v1298 = vpop.f32.mrb[0].mxu0
        %v1299 = vadd.f32 %v992, %v1298
        %v1300 = vpop.f32.mrb[0].mxu0
        %1301 = vmatprep.mubr.bf16.mxu0 0
        %1302 = vmatmul.mubr.bf16.gmra.mrb[0].mxu0 %v1139
        %v1303 = vpop.f32.mrb[0].mxu0
        %v1304 = vadd.f32 %v992, %v1303
        %v1305 = vpop.f32.mrb[0].mxu0
        %v1306 = vpop.f32.mrb[0].mxu0
        %v1307 = vadd.f32 %v992, %v1306
        %v1308 = vpop.f32.mrb[0].mxu0
        %1309 = vmatprep.mubr.bf16.mxu0 0
        %1310 = vmatmul.mubr.bf16.gmra.mrb[0].mxu0 %v1142
        %v1311 = vpop.f32.mrb[0].mxu0
        %v1312 = vadd.f32 %v992, %v1311
        %v1313 = vpop.f32.mrb[0].mxu0
        %v1314 = vpop.f32.mrb[0].mxu0
        %v1315 = vadd.f32 %v992, %v1314
        %v1316 = vpop.f32.mrb[0].mxu0
        %1317 = vmatprep.mubr.bf16.mxu0 0
        %1318 = vmatmul.mubr.bf16.gmra.mrb[0].mxu0 %v1145
        %v1319 = vpop.f32.mrb[0].mxu0
        %v1320 = vadd.f32 %v992, %v1319
        %v1321 = vpop.f32.mrb[0].mxu0
        %v1322 = vpop.f32.mrb[0].mxu0
        %v1323 = vadd.f32 %v992, %v1322
        %v1324 = vpop.f32.mrb[0].mxu0
        %1325 = vmatprep.mubr.bf16.mxu0 0
        %1326 = vmatmul.mubr.bf16.gmra.mrb[0].mxu0 %v1148
        %v1327 = vpop.f32.mrb[0].mxu0
        %v1328 = vadd.f32 %v992, %v1327
        %v1329 = vpop.f32.mrb[0].mxu0
        %v1330 = vpop.f32.mrb[0].mxu0
        %v1331 = vadd.f32 %v992, %v1330
        %v1332 = vpop.f32.mrb[0].mxu0
        %1333 = vdwg.mxu0
        %v1334 = vmax.f32 %v1192, 0.0
        %v1335 = vmax.f32 %v1195, 0.0
        %v1336 = vmax.f32 %v1200, 0.0
        %v1337 = vmax.f32 %v1203, 0.0
        %v1338 = vmax.f32 %v1208, 0.0
        %v1339 = vmax.f32 %v1211, 0.0
        %v1340 = vmax.f32 %v1216, 0.0
        %v1341 = vmax.f32 %v1219, 0.0
        %v1342 = vmax.f32 %v1224, 0.0
        %v1343 = vmax.f32 %v1227, 0.0
        %v1344 = vmax.f32 %v1232, 0.0
        %v1345 = vmax.f32 %v1235, 0.0
        %v1346 = vmax.f32 %v1240, 0.0
        %v1347 = vmax.f32 %v1243, 0.0
        %v1348 = vmax.f32 %v1248, 0.0
        %v1349 = vmax.f32 %v1251, 0.0
        %v1350 = vmax.f32 %v1256, 0.0
        %v1351 = vmax.f32 %v1259, 0.0
        %v1352 = vmax.f32 %v1264, 0.0
        %v1353 = vmax.f32 %v1267, 0.0
        %v1354 = vmax.f32 %v1272, 0.0
        %v1355 = vmax.f32 %v1275, 0.0
        %v1356 = vmax.f32 %v1280, 0.0
        %v1357 = vmax.f32 %v1283, 0.0
        %v1358 = vmax.f32 %v1288, 0.0
        %v1359 = vmax.f32 %v1291, 0.0
        %v1360 = vmax.f32 %v1296, 0.0
        %v1361 = vmax.f32 %v1299, 0.0
        %v1362 = vmax.f32 %v1304, 0.0
        %v1363 = vmax.f32 %v1307, 0.0
        %v1364 = vmax.f32 %v1312, 0.0
        %v1365 = vmax.f32 %v1315, 0.0
        %v1366 = vmax.f32 %v1320, 0.0
        %v1367 = vmax.f32 %v1323, 0.0
        %v1368 = vmax.f32 %v1328, 0.0
        %v1369 = vmax.f32 %v1331, 0.0
        %v1370 = vld [vmem:[%s21] sm:$0xff]
        %v1371 = vld [vmem:[%s21 + $0x8] sm:$0xff]
        %v1372 = vld [vmem:[%s21 + $0x10] sm:$0xff]
        %v1373 = vld [vmem:[%s21 + $0x18] sm:$0xff]
        %v1374 = vld [vmem:[%s21 + $0x20] sm:$0xff]
        %v1375 = vld [vmem:[%s21 + $0x28] sm:$0xff]
        %v1376 = vld [vmem:[%s21 + $0x30] sm:$0xff]
        %v1377 = vld [vmem:[%s21 + $0x38] sm:$0xff]
        %v1378 = vld [vmem:[%s21 + $0x40] sm:$0xff]
        %v1379 = vld [vmem:[%s21 + $0x48] sm:$0xff]
        %v1380 = vld [vmem:[%s21 + $0x50] sm:$0xff]
        %v1381 = vld [vmem:[%s21 + $0x58] sm:$0xff]
        %v1382 = vld [vmem:[%s21 + $0x60] sm:$0xff]
        %v1383 = vld [vmem:[%s21 + $0x68] sm:$0xff]
        %v1384 = vld [vmem:[%s21 + $0x70] sm:$0xff]
        %v1385 = vld [vmem:[%s21 + $0x78] sm:$0xff]
        %v1386 = vld [vmem:[%s21 + $0x80] sm:$0xff]
        %v1387 = vld [vmem:[%s21 + $0x88] sm:$0xff]
        %v1388 = vld [vmem:[%s21 + $0x90] sm:$0xff]
        %v1389 = vld [vmem:[%s21 + $0x98] sm:$0xff]
        %v1390 = vld [vmem:[%s21 + $0xa0] sm:$0xff]
        %v1391 = vld [vmem:[%s21 + $0xa8] sm:$0xff]
        %v1392 = vld [vmem:[%s21 + $0xb0] sm:$0xff]
        %v1393 = vld [vmem:[%s21 + $0xb8] sm:$0xff]
        %v1394 = vld [vmem:[%s21 + $0xc0] sm:$0xff]
        %v1395 = vld [vmem:[%s21 + $0xc8] sm:$0xff]
        %v1396 = vld [vmem:[%s21 + $0xd0] sm:$0xff]
        %v1397 = vld [vmem:[%s21 + $0xd8] sm:$0xff]
        %v1398 = vld [vmem:[%s21 + $0xe0] sm:$0xff]
        %v1399 = vld [vmem:[%s21 + $0xe8] sm:$0xff]
        %v1400 = vld [vmem:[%s21 + $0xf0] sm:$0xff]
        %v1401 = vld [vmem:[%s21 + $0xf8] sm:$0xff]
        %v1402 = vld [vmem:[%s21 + $0x100] sm:$0xff]
        %v1403 = vld [vmem:[%s21 + $0x108] sm:$0xff]
        %v1404 = vld [vmem:[%s21 + $0x110] sm:$0xff]
        %v1405 = vld [vmem:[%s21 + $0x118] sm:$0xff]
        %1407 = vset.pattern.permute.xlu0 0
        %1408 = vperm.xlu0 %1407, %v1370
        %v1409 = vpop.permute.xlu0 %1408
        %1412 = vset.pattern.permute.xlu0 0
        %1413 = vperm.xlu0 %1412, %v1371
        %v1414 = vpop.permute.xlu0 %1413
        %1417 = vset.pattern.permute.xlu0 0
        %1418 = vperm.xlu0 %1417, %v1372
        %v1419 = vpop.permute.xlu0 %1418
        %1422 = vset.pattern.permute.xlu0 0
        %1423 = vperm.xlu0 %1422, %v1373
        %v1424 = vpop.permute.xlu0 %1423
        %1427 = vset.pattern.permute.xlu0 0
        %1428 = vperm.xlu0 %1427, %v1374
        %v1429 = vpop.permute.xlu0 %1428
        %1432 = vset.pattern.permute.xlu0 0
        %1433 = vperm.xlu0 %1432, %v1375
        %v1434 = vpop.permute.xlu0 %1433
        %1437 = vset.pattern.permute.xlu0 0
        %1438 = vperm.xlu0 %1437, %v1376
        %v1439 = vpop.permute.xlu0 %1438
        %1442 = vset.pattern.permute.xlu0 0
        %1443 = vperm.xlu0 %1442, %v1377
        %v1444 = vpop.permute.xlu0 %1443
        %1447 = vset.pattern.permute.xlu0 0
        %1448 = vperm.xlu0 %1447, %v1378
        %v1449 = vpop.permute.xlu0 %1448
        %1452 = vset.pattern.permute.xlu0 0
        %1453 = vperm.xlu0 %1452, %v1379
        %v1454 = vpop.permute.xlu0 %1453
        %1457 = vset.pattern.permute.xlu0 0
        %1458 = vperm.xlu0 %1457, %v1380
        %v1459 = vpop.permute.xlu0 %1458
        %1462 = vset.pattern.permute.xlu0 0
        %1463 = vperm.xlu0 %1462, %v1381
        %v1464 = vpop.permute.xlu0 %1463
        %1467 = vset.pattern.permute.xlu0 0
        %1468 = vperm.xlu0 %1467, %v1382
        %v1469 = vpop.permute.xlu0 %1468
        %1472 = vset.pattern.permute.xlu0 0
        %1473 = vperm.xlu0 %1472, %v1383
        %v1474 = vpop.permute.xlu0 %1473
        %1477 = vset.pattern.permute.xlu0 0
        %1478 = vperm.xlu0 %1477, %v1384
        %v1479 = vpop.permute.xlu0 %1478
        %1482 = vset.pattern.permute.xlu0 0
        %1483 = vperm.xlu0 %1482, %v1385
        %v1484 = vpop.permute.xlu0 %1483
        %1487 = vset.pattern.permute.xlu0 0
        %1488 = vperm.xlu0 %1487, %v1386
        %v1489 = vpop.permute.xlu0 %1488
        %1492 = vset.pattern.permute.xlu0 0
        %1493 = vperm.xlu0 %1492, %v1387
        %v1494 = vpop.permute.xlu0 %1493
        %1497 = vset.pattern.permute.xlu0 0
        %1498 = vperm.xlu0 %1497, %v1388
        %v1499 = vpop.permute.xlu0 %1498
        %1502 = vset.pattern.permute.xlu0 0
        %1503 = vperm.xlu0 %1502, %v1389
        %v1504 = vpop.permute.xlu0 %1503
        %1507 = vset.pattern.permute.xlu0 0
        %1508 = vperm.xlu0 %1507, %v1390
        %v1509 = vpop.permute.xlu0 %1508
        %1512 = vset.pattern.permute.xlu0 0
        %1513 = vperm.xlu0 %1512, %v1391
        %v1514 = vpop.permute.xlu0 %1513
        %1517 = vset.pattern.permute.xlu0 0
        %1518 = vperm.xlu0 %1517, %v1392
        %v1519 = vpop.permute.xlu0 %1518
        %1522 = vset.pattern.permute.xlu0 0
        %1523 = vperm.xlu0 %1522, %v1393
        %v1524 = vpop.permute.xlu0 %1523
        %1527 = vset.pattern.permute.xlu0 0
        %1528 = vperm.xlu0 %1527, %v1394
        %v1529 = vpop.permute.xlu0 %1528
        %1532 = vset.pattern.permute.xlu0 0
        %1533 = vperm.xlu0 %1532, %v1395
        %v1534 = vpop.permute.xlu0 %1533
        %1537 = vset.pattern.permute.xlu0 0
        %1538 = vperm.xlu0 %1537, %v1396
        %v1539 = vpop.permute.xlu0 %1538
        %1542 = vset.pattern.permute.xlu0 0
        %1543 = vperm.xlu0 %1542, %v1397
        %v1544 = vpop.permute.xlu0 %1543
        %1547 = vset.pattern.permute.xlu0 0
        %1548 = vperm.xlu0 %1547, %v1398
        %v1549 = vpop.permute.xlu0 %1548
        %1552 = vset.pattern.permute.xlu0 0
        %1553 = vperm.xlu0 %1552, %v1399
        %v1554 = vpop.permute.xlu0 %1553
        %1557 = vset.pattern.permute.xlu0 0
        %1558 = vperm.xlu0 %1557, %v1400
        %v1559 = vpop.permute.xlu0 %1558
        %1562 = vset.pattern.permute.xlu0 0
        %1563 = vperm.xlu0 %1562, %v1401
        %v1564 = vpop.permute.xlu0 %1563
        %1567 = vset.pattern.permute.xlu0 0
        %1568 = vperm.xlu0 %1567, %v1402
        %v1569 = vpop.permute.xlu0 %1568
        %1572 = vset.pattern.permute.xlu0 0
        %1573 = vperm.xlu0 %1572, %v1403
        %v1574 = vpop.permute.xlu0 %1573
        %1577 = vset.pattern.permute.xlu0 0
        %1578 = vperm.xlu0 %1577, %v1404
        %v1579 = vpop.permute.xlu0 %1578
        %1582 = vset.pattern.permute.xlu0 0
        %1583 = vperm.xlu0 %1582, %v1405
        %v1584 = vpop.permute.xlu0 %1583
        %v1586 = vmul.f32 %v1334, %v1409
        %v1587 = vmul.f32 %v1335, %v1414
        %v1588 = vmul.f32 %v1336, %v1419
        %v1589 = vmul.f32 %v1337, %v1424
        %v1590 = vmul.f32 %v1338, %v1429
        %v1591 = vmul.f32 %v1339, %v1434
        %v1592 = vmul.f32 %v1340, %v1439
        %v1593 = vmul.f32 %v1341, %v1444
        %v1594 = vmul.f32 %v1342, %v1449
        %v1595 = vmul.f32 %v1343, %v1454
        %v1596 = vmul.f32 %v1344, %v1459
        %v1597 = vmul.f32 %v1345, %v1464
        %v1598 = vmul.f32 %v1346, %v1469
        %v1599 = vmul.f32 %v1347, %v1474
        %v1600 = vmul.f32 %v1348, %v1479
        %v1601 = vmul.f32 %v1349, %v1484
        %v1602 = vmul.f32 %v1350, %v1489
        %v1603 = vmul.f32 %v1351, %v1494
        %v1604 = vmul.f32 %v1352, %v1499
        %v1605 = vmul.f32 %v1353, %v1504
        %v1606 = vmul.f32 %v1354, %v1509
        %v1607 = vmul.f32 %v1355, %v1514
        %v1608 = vmul.f32 %v1356, %v1519
        %v1609 = vmul.f32 %v1357, %v1524
        %v1610 = vmul.f32 %v1358, %v1529
        %v1611 = vmul.f32 %v1359, %v1534
        %v1612 = vmul.f32 %v1360, %v1539
        %v1613 = vmul.f32 %v1361, %v1544
        %v1614 = vmul.f32 %v1362, %v1549
        %v1615 = vmul.f32 %v1363, %v1554
        %v1616 = vmul.f32 %v1364, %v1559
        %v1617 = vmul.f32 %v1365, %v1564
        %v1618 = vmul.f32 %v1366, %v1569
        %v1619 = vmul.f32 %v1367, %v1574
        %v1620 = vmul.f32 %v1368, %v1579
        %v1621 = vmul.f32 %v1369, %v1584
        %v1622 = vpack.c.bf16 %v1587, %v1586
        %v1623 = vpack.c.bf16 %v1589, %v1588
        %v1624 = vpack.c.bf16 %v1591, %v1590
        %v1625 = vpack.c.bf16 %v1593, %v1592
        %v1626 = vpack.c.bf16 %v1595, %v1594
        %v1627 = vpack.c.bf16 %v1597, %v1596
        %v1628 = vpack.c.bf16 %v1599, %v1598
        %v1629 = vpack.c.bf16 %v1601, %v1600
        %v1630 = vpack.c.bf16 %v1603, %v1602
        %v1631 = vpack.c.bf16 %v1605, %v1604
        %v1632 = vpack.c.bf16 %v1607, %v1606
        %v1633 = vpack.c.bf16 %v1609, %v1608
        %v1634 = vpack.c.bf16 %v1611, %v1610
        %v1635 = vpack.c.bf16 %v1613, %v1612
        %v1636 = vpack.c.bf16 %v1615, %v1614
        %v1637 = vpack.c.bf16 %v1617, %v1616
        %v1638 = vpack.c.bf16 %v1619, %v1618
        %v1639 = vpack.c.bf16 %v1621, %v1620
        %v1658 = vunpack.c.l.b16 %v1622
        %v1659 = vunpack.c.h.b16 %v1622
        %v1660 = vunpack.c.l.b16 %v1623
        %v1661 = vunpack.c.h.b16 %v1623
        %v1662 = vunpack.c.l.b16 %v1624
        %v1663 = vunpack.c.h.b16 %v1624
        %v1664 = vunpack.c.l.b16 %v1625
        %v1665 = vunpack.c.h.b16 %v1625
        %v1666 = vunpack.c.l.b16 %v1626
        %v1667 = vunpack.c.h.b16 %v1626
        %v1668 = vunpack.c.l.b16 %v1627
        %v1669 = vunpack.c.h.b16 %v1627
        %v1670 = vunpack.c.l.b16 %v1628
        %v1671 = vunpack.c.h.b16 %v1628
        %v1672 = vunpack.c.l.b16 %v1629
        %v1673 = vunpack.c.h.b16 %v1629
        %v1674 = vunpack.c.l.b16 %v1630
        %v1675 = vunpack.c.h.b16 %v1630
        %v1676 = vunpack.c.l.b16 %v1631
        %v1677 = vunpack.c.h.b16 %v1631
        %v1678 = vunpack.c.l.b16 %v1632
        %v1679 = vunpack.c.h.b16 %v1632
        %v1680 = vunpack.c.l.b16 %v1633
        %v1681 = vunpack.c.h.b16 %v1633
        %v1682 = vunpack.c.l.b16 %v1634
        %v1683 = vunpack.c.h.b16 %v1634
        %v1684 = vunpack.c.l.b16 %v1635
        %v1685 = vunpack.c.h.b16 %v1635
        %v1686 = vunpack.c.l.b16 %v1636
        %v1687 = vunpack.c.h.b16 %v1636
        %v1688 = vunpack.c.l.b16 %v1637
        %v1689 = vunpack.c.h.b16 %v1637
        %v1690 = vunpack.c.l.b16 %v1638
        %v1691 = vunpack.c.h.b16 %v1638
        %v1692 = vunpack.c.l.b16 %v1639
        %v1693 = vunpack.c.h.b16 %v1639
        %v1694 = vpack.c.b16 %v1658, %v1658
        %v1695 = vpack.c.b16 %v1659, %v1659
        %v1696 = vpack.c.b16 %v1660, %v1660
        %v1697 = vpack.c.b16 %v1661, %v1661
        %v1698 = vpack.c.b16 %v1662, %v1662
        %v1699 = vpack.c.b16 %v1663, %v1663
        %v1700 = vpack.c.b16 %v1664, %v1664
        %v1701 = vpack.c.b16 %v1665, %v1665
        %v1702 = vpack.c.b16 %v1666, %v1666
        %v1703 = vpack.c.b16 %v1667, %v1667
        %v1704 = vpack.c.b16 %v1668, %v1668
        %v1705 = vpack.c.b16 %v1669, %v1669
        %v1706 = vpack.c.b16 %v1670, %v1670
        %v1707 = vpack.c.b16 %v1671, %v1671
        %v1708 = vpack.c.b16 %v1672, %v1672
        %v1709 = vpack.c.b16 %v1673, %v1673
        %v1710 = vpack.c.b16 %v1674, %v1674
        %v1711 = vpack.c.b16 %v1675, %v1675
        %v1712 = vpack.c.b16 %v1676, %v1676
        %v1713 = vpack.c.b16 %v1677, %v1677
        %v1714 = vpack.c.b16 %v1678, %v1678
        %v1715 = vpack.c.b16 %v1679, %v1679
        %v1716 = vpack.c.b16 %v1680, %v1680
        %v1717 = vpack.c.b16 %v1681, %v1681
        %v1718 = vpack.c.b16 %v1682, %v1682
        %v1719 = vpack.c.b16 %v1683, %v1683
        %v1720 = vpack.c.b16 %v1684, %v1684
        %v1721 = vpack.c.b16 %v1685, %v1685
        %v1722 = vpack.c.b16 %v1686, %v1686
        %v1723 = vpack.c.b16 %v1687, %v1687
        %v1724 = vpack.c.b16 %v1688, %v1688
        %v1725 = vpack.c.b16 %v1689, %v1689
        %v1726 = vpack.c.b16 %v1690, %v1690
        %v1727 = vpack.c.b16 %v1691, %v1691
        %v1728 = vpack.c.b16 %v1692, %v1692
        %v1729 = vpack.c.b16 %v1693, %v1693
        %vm1730 = vsmask.f32 1280
        %vm1731 = vsmask.f32 5392
        %vm1732 = vmor %vm1730, %vm1731
        %v1734 = vshrl.u32 %v1694, 16
        %v1736 = vrot.slane %v1734, 6
        %v1737 = vshll.u32 %v1694, 16
        %v1739 = vrot.slane %v1737, 7
        %v1740 = vor.u32 %v1736, %v1739
        %v1741 = vrot.slane %v1740, 4
        %v1743 = vshrl.u32 %v1695, 16
        %v1745 = vrot.slane %v1743, 6
        %v1746 = vshll.u32 %v1695, 16
        %v1748 = vrot.slane %v1746, 7
        %v1749 = vor.u32 %v1745, %v1748
        %v1750 = vsel %vm1732, %v1741, %v1749
        %v1751 = vrot.slane %v1749, 4
        %v1753 = vshrl.u32 %v1696, 16
        %v1755 = vrot.slane %v1753, 6
        %v1756 = vshll.u32 %v1696, 16
        %v1758 = vrot.slane %v1756, 7
        %v1759 = vor.u32 %v1755, %v1758
        %v1760 = vsel %vm1732, %v1751, %v1759
        %v1761 = vrot.slane %v1759, 4
        %v1763 = vshrl.u32 %v1697, 16
        %v1765 = vrot.slane %v1763, 6
        %v1766 = vshll.u32 %v1697, 16
        %v1768 = vrot.slane %v1766, 7
        %v1769 = vor.u32 %v1765, %v1768
        %v1770 = vsel %vm1732, %v1761, %v1769
        %v1771 = vrot.slane %v1769, 4
        %v1773 = vshrl.u32 %v1698, 16
        %v1775 = vrot.slane %v1773, 6
        %v1776 = vshll.u32 %v1698, 16
        %v1778 = vrot.slane %v1776, 7
        %v1779 = vor.u32 %v1775, %v1778
        %v1780 = vsel %vm1732, %v1771, %v1779
        %v1781 = vrot.slane %v1779, 4
        %v1783 = vshrl.u32 %v1699, 16
        %v1785 = vrot.slane %v1783, 6
        %v1786 = vshll.u32 %v1699, 16
        %v1788 = vrot.slane %v1786, 7
        %v1789 = vor.u32 %v1785, %v1788
        %v1790 = vsel %vm1732, %v1781, %v1789
        %v1791 = vrot.slane %v1789, 4
        %v1793 = vshrl.u32 %v1700, 16
        %v1795 = vrot.slane %v1793, 6
        %v1796 = vshll.u32 %v1700, 16
        %v1798 = vrot.slane %v1796, 7
        %v1799 = vor.u32 %v1795, %v1798
        %v1800 = vsel %vm1732, %v1791, %v1799
        %v1801 = vrot.slane %v1799, 4
        %v1803 = vshrl.u32 %v1701, 16
        %v1805 = vrot.slane %v1803, 6
        %v1806 = vshll.u32 %v1701, 16
        %v1808 = vrot.slane %v1806, 7
        %v1809 = vor.u32 %v1805, %v1808
        %v1810 = vsel %vm1732, %v1801, %v1809
        %v1811 = vrot.slane %v1809, 4
        %v1813 = vshrl.u32 %v1702, 16
        %v1815 = vrot.slane %v1813, 6
        %v1816 = vshll.u32 %v1702, 16
        %v1818 = vrot.slane %v1816, 7
        %v1819 = vor.u32 %v1815, %v1818
        %v1820 = vsel %vm1732, %v1811, %v1819
        %v1821 = vrot.slane %v1819, 4
        %v1823 = vshrl.u32 %v1703, 16
        %v1825 = vrot.slane %v1823, 6
        %v1826 = vshll.u32 %v1703, 16
        %v1828 = vrot.slane %v1826, 7
        %v1829 = vor.u32 %v1825, %v1828
        %v1830 = vsel %vm1732, %v1821, %v1829
        %v1831 = vrot.slane %v1829, 4
        %v1833 = vshrl.u32 %v1704, 16
        %v1835 = vrot.slane %v1833, 6
        %v1836 = vshll.u32 %v1704, 16
        %v1838 = vrot.slane %v1836, 7
        %v1839 = vor.u32 %v1835, %v1838
        %v1840 = vsel %vm1732, %v1831, %v1839
        %v1841 = vrot.slane %v1839, 4
        %v1843 = vshrl.u32 %v1705, 16
        %v1845 = vrot.slane %v1843, 6
        %v1846 = vshll.u32 %v1705, 16
        %v1848 = vrot.slane %v1846, 7
        %v1849 = vor.u32 %v1845, %v1848
        %v1850 = vsel %vm1732, %v1841, %v1849
        %v1851 = vrot.slane %v1849, 4
        %v1853 = vshrl.u32 %v1706, 16
        %v1855 = vrot.slane %v1853, 6
        %v1856 = vshll.u32 %v1706, 16
        %v1858 = vrot.slane %v1856, 7
        %v1859 = vor.u32 %v1855, %v1858
        %v1860 = vsel %vm1732, %v1851, %v1859
        %v1861 = vrot.slane %v1859, 4
        %v1863 = vshrl.u32 %v1707, 16
        %v1865 = vrot.slane %v1863, 6
        %v1866 = vshll.u32 %v1707, 16
        %v1868 = vrot.slane %v1866, 7
        %v1869 = vor.u32 %v1865, %v1868
        %v1870 = vsel %vm1732, %v1861, %v1869
        %v1871 = vrot.slane %v1869, 4
        %v1873 = vshrl.u32 %v1708, 16
        %v1875 = vrot.slane %v1873, 6
        %v1876 = vshll.u32 %v1708, 16
        %v1878 = vrot.slane %v1876, 7
        %v1879 = vor.u32 %v1875, %v1878
        %v1880 = vsel %vm1732, %v1871, %v1879
        %v1881 = vrot.slane %v1879, 4
        %v1883 = vshrl.u32 %v1709, 16
        %v1885 = vrot.slane %v1883, 6
        %v1886 = vshll.u32 %v1709, 16
        %v1888 = vrot.slane %v1886, 7
        %v1889 = vor.u32 %v1885, %v1888
        %v1890 = vsel %vm1732, %v1881, %v1889
        %v1891 = vrot.slane %v1889, 4
        %v1893 = vshrl.u32 %v1710, 16
        %v1895 = vrot.slane %v1893, 6
        %v1896 = vshll.u32 %v1710, 16
        %v1898 = vrot.slane %v1896, 7
        %v1899 = vor.u32 %v1895, %v1898
        %v1900 = vsel %vm1732, %v1891, %v1899
        %v1901 = vrot.slane %v1899, 4
        %v1903 = vshrl.u32 %v1711, 16
        %v1905 = vrot.slane %v1903, 6
        %v1906 = vshll.u32 %v1711, 16
        %v1908 = vrot.slane %v1906, 7
        %v1909 = vor.u32 %v1905, %v1908
        %v1910 = vsel %vm1732, %v1901, %v1909
        %v1911 = vrot.slane %v1909, 4
        %v1913 = vshrl.u32 %v1712, 16
        %v1915 = vrot.slane %v1913, 6
        %v1916 = vshll.u32 %v1712, 16
        %v1918 = vrot.slane %v1916, 7
        %v1919 = vor.u32 %v1915, %v1918
        %v1920 = vsel %vm1732, %v1911, %v1919
        %v1921 = vrot.slane %v1919, 4
        %v1923 = vshrl.u32 %v1713, 16
        %v1925 = vrot.slane %v1923, 6
        %v1926 = vshll.u32 %v1713, 16
        %v1928 = vrot.slane %v1926, 7
        %v1929 = vor.u32 %v1925, %v1928
        %v1930 = vsel %vm1732, %v1921, %v1929
        %v1931 = vrot.slane %v1929, 4
        %v1933 = vshrl.u32 %v1714, 16
        %v1935 = vrot.slane %v1933, 6
        %v1936 = vshll.u32 %v1714, 16
        %v1938 = vrot.slane %v1936, 7
        %v1939 = vor.u32 %v1935, %v1938
        %v1940 = vsel %vm1732, %v1931, %v1939
        %v1941 = vrot.slane %v1939, 4
        %v1943 = vshrl.u32 %v1715, 16
        %v1945 = vrot.slane %v1943, 6
        %v1946 = vshll.u32 %v1715, 16
        %v1948 = vrot.slane %v1946, 7
        %v1949 = vor.u32 %v1945, %v1948
        %v1950 = vsel %vm1732, %v1941, %v1949
        %v1951 = vrot.slane %v1949, 4
        %v1953 = vshrl.u32 %v1716, 16
        %v1955 = vrot.slane %v1953, 6
        %v1956 = vshll.u32 %v1716, 16
        %v1958 = vrot.slane %v1956, 7
        %v1959 = vor.u32 %v1955, %v1958
        %v1960 = vsel %vm1732, %v1951, %v1959
        %v1961 = vrot.slane %v1959, 4
        %v1963 = vshrl.u32 %v1717, 16
        %v1965 = vrot.slane %v1963, 6
        %v1966 = vshll.u32 %v1717, 16
        %v1968 = vrot.slane %v1966, 7
        %v1969 = vor.u32 %v1965, %v1968
        %v1970 = vsel %vm1732, %v1961, %v1969
        %v1971 = vrot.slane %v1969, 4
        %v1973 = vshrl.u32 %v1718, 16
        %v1975 = vrot.slane %v1973, 6
        %v1976 = vshll.u32 %v1718, 16
        %v1978 = vrot.slane %v1976, 7
        %v1979 = vor.u32 %v1975, %v1978
        %v1980 = vsel %vm1732, %v1971, %v1979
        %v1981 = vrot.slane %v1979, 4
        %v1983 = vshrl.u32 %v1719, 16
        %v1985 = vrot.slane %v1983, 6
        %v1986 = vshll.u32 %v1719, 16
        %v1988 = vrot.slane %v1986, 7
        %v1989 = vor.u32 %v1985, %v1988
        %v1990 = vsel %vm1732, %v1981, %v1989
        %v1991 = vrot.slane %v1989, 4
        %v1993 = vshrl.u32 %v1720, 16
        %v1995 = vrot.slane %v1993, 6
        %v1996 = vshll.u32 %v1720, 16
        %v1998 = vrot.slane %v1996, 7
        %v1999 = vor.u32 %v1995, %v1998
        %v2000 = vsel %vm1732, %v1991, %v1999
        %v2001 = vrot.slane %v1999, 4
        %v2003 = vshrl.u32 %v1721, 16
        %v2005 = vrot.slane %v2003, 6
        %v2006 = vshll.u32 %v1721, 16
        %v2008 = vrot.slane %v2006, 7
        %v2009 = vor.u32 %v2005, %v2008
        %v2010 = vsel %vm1732, %v2001, %v2009
        %v2011 = vrot.slane %v2009, 4
        %v2013 = vshrl.u32 %v1722, 16
        %v2015 = vrot.slane %v2013, 6
        %v2016 = vshll.u32 %v1722, 16
        %v2018 = vrot.slane %v2016, 7
        %v2019 = vor.u32 %v2015, %v2018
        %v2020 = vsel %vm1732, %v2011, %v2019
        %v2021 = vrot.slane %v2019, 4
        %v2023 = vshrl.u32 %v1723, 16
        %v2025 = vrot.slane %v2023, 6
        %v2026 = vshll.u32 %v1723, 16
        %v2028 = vrot.slane %v2026, 7
        %v2029 = vor.u32 %v2025, %v2028
        %v2030 = vsel %vm1732, %v2021, %v2029
        %v2031 = vrot.slane %v2029, 4
        %v2033 = vshrl.u32 %v1724, 16
        %v2035 = vrot.slane %v2033, 6
        %v2036 = vshll.u32 %v1724, 16
        %v2038 = vrot.slane %v2036, 7
        %v2039 = vor.u32 %v2035, %v2038
        %v2040 = vsel %vm1732, %v2031, %v2039
        %v2041 = vrot.slane %v2039, 4
        %v2043 = vshrl.u32 %v1725, 16
        %v2045 = vrot.slane %v2043, 6
        %v2046 = vshll.u32 %v1725, 16
        %v2048 = vrot.slane %v2046, 7
        %v2049 = vor.u32 %v2045, %v2048
        %v2050 = vsel %vm1732, %v2041, %v2049
        %v2051 = vrot.slane %v2049, 4
        %v2053 = vshrl.u32 %v1726, 16
        %v2055 = vrot.slane %v2053, 6
        %v2056 = vshll.u32 %v1726, 16
        %v2058 = vrot.slane %v2056, 7
        %v2059 = vor.u32 %v2055, %v2058
        %v2060 = vsel %vm1732, %v2051, %v2059
        %v2061 = vrot.slane %v2059, 4
        %v2063 = vshrl.u32 %v1727, 16
        %v2065 = vrot.slane %v2063, 6
        %v2066 = vshll.u32 %v1727, 16
        %v2068 = vrot.slane %v2066, 7
        %v2069 = vor.u32 %v2065, %v2068
        %v2070 = vsel %vm1732, %v2061, %v2069
        %v2071 = vrot.slane %v2069, 4
        %v2073 = vshrl.u32 %v1728, 16
        %v2075 = vrot.slane %v2073, 6
        %v2076 = vshll.u32 %v1728, 16
        %v2078 = vrot.slane %v2076, 7
        %v2079 = vor.u32 %v2075, %v2078
        %v2080 = vsel %vm1732, %v2071, %v2079
        %v2081 = vrot.slane %v2079, 4
        %v2083 = vshrl.u32 %v1729, 16
        %v2085 = vrot.slane %v2083, 6
        %v2086 = vshll.u32 %v1729, 16
        %v2088 = vrot.slane %v2086, 7
        %v2089 = vor.u32 %v2085, %v2088
        %v2090 = vsel %vm1732, %v2081, %v2089
        %v2091 = vrot.slane %v2089, 4
        %vm2129 = vcmask 125953
        %vm2130 = vsmask.f32 7942
        %vm2131 = vmand %vm2129, %vm2130
        %v2132 = vld [vmem:[#allocation2 + $0x8] sm:$0xe]
        %v2133 = vsel %vm2131, %v1740, %v2132
        %2134 = vst [vmem:[#allocation2 + $0x8] sm:$0xe] %v2133
        %2135 = vst.msk [vmem:[#allocation2 + $0xc] sm:$0xf] %vm790, %v1750
        %2136 = vst.msk [vmem:[#allocation2 + $0x10] sm:$0xf] %vm790, %v1760
        %2137 = vst.msk [vmem:[#allocation2 + $0x14] sm:$0xf] %vm790, %v1770
        %2138 = vst.msk [vmem:[#allocation2 + $0x18] sm:$0xf] %vm790, %v1780
        %2139 = vst.msk [vmem:[#allocation2 + $0x1c] sm:$0xf] %vm790, %v1790
        %2140 = vst.msk [vmem:[#allocation2 + $0x20] sm:$0xf] %vm790, %v1800
        %2141 = vst.msk [vmem:[#allocation2 + $0x24] sm:$0xf] %vm790, %v1810
        %2142 = vst.msk [vmem:[#allocation2 + $0x28] sm:$0xf] %vm790, %v1820
        %2143 = vst.msk [vmem:[#allocation2 + $0x2c] sm:$0xf] %vm790, %v1830
        %2144 = vst.msk [vmem:[#allocation2 + $0x30] sm:$0xf] %vm790, %v1840
        %2145 = vst.msk [vmem:[#allocation2 + $0x34] sm:$0xf] %vm790, %v1850
        %2146 = vst.msk [vmem:[#allocation2 + $0x38] sm:$0xf] %vm790, %v1860
        %2147 = vst.msk [vmem:[#allocation2 + $0x3c] sm:$0xf] %vm790, %v1870
        %2148 = vst.msk [vmem:[#allocation2 + $0x40] sm:$0xf] %vm790, %v1880
        %2149 = vst.msk [vmem:[#allocation2 + $0x44] sm:$0xf] %vm790, %v1890
        %2150 = vst.msk [vmem:[#allocation2 + $0x48] sm:$0xf] %vm790, %v1900
        %2151 = vst.msk [vmem:[#allocation2 + $0x4c] sm:$0xf] %vm790, %v1910
        %2152 = vst.msk [vmem:[#allocation2 + $0x50] sm:$0xf] %vm790, %v1920
        %2153 = vst.msk [vmem:[#allocation2 + $0x54] sm:$0xf] %vm790, %v1930
        %2154 = vst.msk [vmem:[#allocation2 + $0x58] sm:$0xf] %vm790, %v1940
        %2155 = vst.msk [vmem:[#allocation2 + $0x5c] sm:$0xf] %vm790, %v1950
        %2156 = vst.msk [vmem:[#allocation2 + $0x60] sm:$0xf] %vm790, %v1960
        %2157 = vst.msk [vmem:[#allocation2 + $0x64] sm:$0xf] %vm790, %v1970
        %2158 = vst.msk [vmem:[#allocation2 + $0x68] sm:$0xf] %vm790, %v1980
        %2159 = vst.msk [vmem:[#allocation2 + $0x6c] sm:$0xf] %vm790, %v1990
        %2160 = vst.msk [vmem:[#allocation2 + $0x70] sm:$0xf] %vm790, %v2000
        %2161 = vst.msk [vmem:[#allocation2 + $0x74] sm:$0xf] %vm790, %v2010
        %2162 = vst.msk [vmem:[#allocation2 + $0x78] sm:$0xf] %vm790, %v2020
        %2163 = vst.msk [vmem:[#allocation2 + $0x7c] sm:$0xf] %vm790, %v2030
        %2164 = vst.msk [vmem:[#allocation2 + $0x80] sm:$0xf] %vm790, %v2040
        %2165 = vst.msk [vmem:[#allocation2 + $0x84] sm:$0xf] %vm790, %v2050
        %2166 = vst.msk [vmem:[#allocation2 + $0x88] sm:$0xf] %vm790, %v2060
        %2167 = vst.msk [vmem:[#allocation2 + $0x8c] sm:$0xf] %vm790, %v2070
        %2168 = vst.msk [vmem:[#allocation2 + $0x90] sm:$0xf] %vm790, %v2080
        %2169 = vst.msk [vmem:[#allocation2 + $0x94] sm:$0xf] %vm790, %v2090
        %vm2170 = vcmask 123904
        %vm2171 = vmand %vm2170, %vm1730
        %v2172 = vld [vmem:[#allocation2 + $0x98] sm:$0x3]
        %v2173 = vsel %vm2171, %v2091, %v2172
        %2174 = vst [vmem:[#allocation2 + $0x98] sm:$0x3] %v2173
        %v2175 = vld [vmem:[#allocation2] sm:$0xf]
        %v2176 = vld [vmem:[#allocation2 + $0x4] sm:$0xf]
        %v2177 = vld [vmem:[#allocation2 + $0x8] sm:$0xf]
        %v2178 = vld [vmem:[#allocation2 + $0xc] sm:$0xf]
        %v2179 = vld [vmem:[#allocation2 + $0x10] sm:$0xf]
        %v2180 = vld [vmem:[#allocation2 + $0x14] sm:$0xf]
        %v2181 = vld [vmem:[#allocation2 + $0x18] sm:$0xf]
        %v2182 = vld [vmem:[#allocation2 + $0x1c] sm:$0xf]
        %v2183 = vld [vmem:[#allocation2 + $0x20] sm:$0xf]
        %v2184 = vld [vmem:[#allocation2 + $0x24] sm:$0xf]
        %v2185 = vld [vmem:[#allocation2 + $0x28] sm:$0xf]
        %v2186 = vld [vmem:[#allocation2 + $0x2c] sm:$0xf]
        %v2187 = vld [vmem:[#allocation2 + $0x30] sm:$0xf]
        %v2188 = vld [vmem:[#allocation2 + $0x34] sm:$0xf]
        %v2189 = vld [vmem:[#allocation2 + $0x38] sm:$0xf]
        %v2190 = vld [vmem:[#allocation2 + $0x3c] sm:$0xf]
        %v2191 = vld [vmem:[#allocation2 + $0x40] sm:$0xf]
        %v2192 = vld [vmem:[#allocation2 + $0x44] sm:$0xf]
        %v2193 = vld [vmem:[#allocation2 + $0x48] sm:$0xf]
        %v2194 = vld [vmem:[#allocation2 + $0x4c] sm:$0xf]
        %v2195 = vld [vmem:[#allocation2 + $0x50] sm:$0xf]
        %v2196 = vld [vmem:[#allocation2 + $0x54] sm:$0xf]
        %v2197 = vld [vmem:[#allocation2 + $0x58] sm:$0xf]
        %v2198 = vld [vmem:[#allocation2 + $0x5c] sm:$0xf]
        %v2199 = vld [vmem:[#allocation2 + $0x60] sm:$0xf]
        %v2200 = vld [vmem:[#allocation2 + $0x64] sm:$0xf]
        %v2201 = vld [vmem:[#allocation2 + $0x68] sm:$0xf]
        %v2202 = vld [vmem:[#allocation2 + $0x6c] sm:$0xf]
        %v2203 = vld [vmem:[#allocation2 + $0x70] sm:$0xf]
        %v2204 = vld [vmem:[#allocation2 + $0x74] sm:$0xf]
        %v2205 = vld [vmem:[#allocation2 + $0x78] sm:$0xf]
        %v2206 = vld [vmem:[#allocation2 + $0x7c] sm:$0xf]
        %v2207 = vld [vmem:[#allocation2 + $0x80] sm:$0xf]
        %v2208 = vld [vmem:[#allocation2 + $0x84] sm:$0xf]
        %v2209 = vld [vmem:[#allocation2 + $0x88] sm:$0xf]
        %v2210 = vld [vmem:[#allocation2 + $0x8c] sm:$0xf]
        %v2211 = vld [vmem:[#allocation2 + $0x90] sm:$0x1]
        %v2212 = vld [vmem:[#allocation2] sm:$0xe]
        %v2213 = vld [vmem:[#allocation2 + $0x8] sm:$0xe]
        %v2214 = vld [vmem:[#allocation2 + $0x90] sm:$0xf]
        %v2215 = vld [vmem:[#allocation2 + $0x94] sm:$0xf]
        %v2216 = vld [vmem:[#allocation2 + $0x98] sm:$0x1]
        %v2217 = vld [vmem:[#allocation2 + $0x98] sm:$0x3]
        %v2218 = vld [vmem:[#allocation2 + $0x8] sm:$0xc]
        %v2219 = vld [vmem:[#allocation2 + $0x10] sm:$0xc]
        %v2220 = vld [vmem:[#allocation2 + $0x98] sm:$0xf]
        %v2221 = vld [vmem:[#allocation2 + $0x9c] sm:$0xf]
        %v2222 = vld [vmem:[#allocation2 + $0xa0] sm:$0x3]
        %v2223 = vld [vmem:[#allocation2 + $0xa0] sm:$0x7]
        %v2224 = vld [vmem:[#allocation2 + $0x10] sm:$0x8]
        %v2261 = vunpack.c.l.b16 %v2175
        %v2262 = vunpack.c.l.b16 %v2176
        %v2263 = vunpack.c.l.b16 %v2177
        %v2264 = vunpack.c.l.b16 %v2178
        %v2265 = vunpack.c.l.b16 %v2179
        %v2266 = vunpack.c.l.b16 %v2180
        %v2267 = vunpack.c.l.b16 %v2181
        %v2268 = vunpack.c.l.b16 %v2182
        %v2269 = vunpack.c.l.b16 %v2183
        %v2270 = vunpack.c.l.b16 %v2184
        %v2271 = vunpack.c.l.b16 %v2185
        %v2272 = vunpack.c.l.b16 %v2186
        %v2273 = vunpack.c.l.b16 %v2187
        %v2274 = vunpack.c.l.b16 %v2188
        %v2275 = vunpack.c.l.b16 %v2189
        %v2276 = vunpack.c.l.b16 %v2190
        %v2277 = vunpack.c.l.b16 %v2191
        %v2278 = vunpack.c.l.b16 %v2192
        %v2279 = vunpack.c.l.b16 %v2193
        %v2280 = vunpack.c.l.b16 %v2194
        %v2281 = vunpack.c.l.b16 %v2195
        %v2282 = vunpack.c.l.b16 %v2196
        %v2283 = vunpack.c.l.b16 %v2197
        %v2284 = vunpack.c.l.b16 %v2198
        %v2285 = vunpack.c.l.b16 %v2199
        %v2286 = vunpack.c.l.b16 %v2200
        %v2287 = vunpack.c.l.b16 %v2201
        %v2288 = vunpack.c.l.b16 %v2202
        %v2289 = vunpack.c.l.b16 %v2203
        %v2290 = vunpack.c.l.b16 %v2204
        %v2291 = vunpack.c.l.b16 %v2205
        %v2292 = vunpack.c.l.b16 %v2206
        %v2293 = vunpack.c.l.b16 %v2207
        %v2294 = vunpack.c.l.b16 %v2208
        %v2295 = vunpack.c.l.b16 %v2209
        %v2296 = vunpack.c.l.b16 %v2210
        %v2297 = vpack.c.b16 %v2262, %v2261
        %v2298 = vpack.c.b16 %v2264, %v2263
        %v2299 = vpack.c.b16 %v2266, %v2265
        %v2300 = vpack.c.b16 %v2268, %v2267
        %v2301 = vpack.c.b16 %v2270, %v2269
        %v2302 = vpack.c.b16 %v2272, %v2271
        %v2303 = vpack.c.b16 %v2274, %v2273
        %v2304 = vpack.c.b16 %v2276, %v2275
        %v2305 = vpack.c.b16 %v2278, %v2277
        %v2306 = vpack.c.b16 %v2280, %v2279
        %v2307 = vpack.c.b16 %v2282, %v2281
        %v2308 = vpack.c.b16 %v2284, %v2283
        %v2309 = vpack.c.b16 %v2286, %v2285
        %v2310 = vpack.c.b16 %v2288, %v2287
        %v2311 = vpack.c.b16 %v2290, %v2289
        %v2312 = vpack.c.b16 %v2292, %v2291
        %v2313 = vpack.c.b16 %v2294, %v2293
        %v2314 = vpack.c.b16 %v2296, %v2295
        %v2316 = vunpack.c.l.b16 %v2211
        %v2317 = vpack.c.b16 %v2316, %v2316
        %vm2318 = vsmask.f32 7424
        %v2320 = vshrl.u32 %v2297, 16
        %v2322 = vshll.u32 %v2297, 16
        %v2324 = vrot.slane %v2322, 1
        %v2325 = vor.u32 %v2320, %v2324
        %v2327 = vshll.u32 %v2298, 16
        %v2329 = vrot.slane %v2327, 1
        %v2330 = vsel %vm2318, %v2325, %v2329
        %v2331 = vshrl.u32 %v2298, 16
        %v2333 = vor.u32 %v2331, %v2329
        %v2335 = vshll.u32 %v2299, 16
        %v2337 = vrot.slane %v2335, 1
        %v2338 = vsel %vm2318, %v2333, %v2337
        %v2339 = vshrl.u32 %v2299, 16
        %v2341 = vor.u32 %v2339, %v2337
        %v2343 = vshll.u32 %v2300, 16
        %v2345 = vrot.slane %v2343, 1
        %v2346 = vsel %vm2318, %v2341, %v2345
        %v2347 = vshrl.u32 %v2300, 16
        %v2349 = vor.u32 %v2347, %v2345
        %v2351 = vshll.u32 %v2301, 16
        %v2353 = vrot.slane %v2351, 1
        %v2354 = vsel %vm2318, %v2349, %v2353
        %v2355 = vshrl.u32 %v2301, 16
        %v2357 = vor.u32 %v2355, %v2353
        %v2359 = vshll.u32 %v2302, 16
        %v2361 = vrot.slane %v2359, 1
        %v2362 = vsel %vm2318, %v2357, %v2361
        %v2363 = vshrl.u32 %v2302, 16
        %v2365 = vor.u32 %v2363, %v2361
        %v2367 = vshll.u32 %v2303, 16
        %v2369 = vrot.slane %v2367, 1
        %v2370 = vsel %vm2318, %v2365, %v2369
        %v2371 = vshrl.u32 %v2303, 16
        %v2373 = vor.u32 %v2371, %v2369
        %v2375 = vshll.u32 %v2304, 16
        %v2377 = vrot.slane %v2375, 1
        %v2378 = vsel %vm2318, %v2373, %v2377
        %v2379 = vshrl.u32 %v2304, 16
        %v2381 = vor.u32 %v2379, %v2377
        %v2383 = vshll.u32 %v2305, 16
        %v2385 = vrot.slane %v2383, 1
        %v2386 = vsel %vm2318, %v2381, %v2385
        %v2387 = vshrl.u32 %v2305, 16
        %v2389 = vor.u32 %v2387, %v2385
        %v2391 = vshll.u32 %v2306, 16
        %v2393 = vrot.slane %v2391, 1
        %v2394 = vsel %vm2318, %v2389, %v2393
        %v2395 = vshrl.u32 %v2306, 16
        %v2397 = vor.u32 %v2395, %v2393
        %v2399 = vshll.u32 %v2307, 16
        %v2401 = vrot.slane %v2399, 1
        %v2402 = vsel %vm2318, %v2397, %v2401
        %v2403 = vshrl.u32 %v2307, 16
        %v2405 = vor.u32 %v2403, %v2401
        %v2407 = vshll.u32 %v2308, 16
        %v2409 = vrot.slane %v2407, 1
        %v2410 = vsel %vm2318, %v2405, %v2409
        %v2411 = vshrl.u32 %v2308, 16
        %v2413 = vor.u32 %v2411, %v2409
        %v2415 = vshll.u32 %v2309, 16
        %v2417 = vrot.slane %v2415, 1
        %v2418 = vsel %vm2318, %v2413, %v2417
        %v2419 = vshrl.u32 %v2309, 16
        %v2421 = vor.u32 %v2419, %v2417
        %v2423 = vshll.u32 %v2310, 16
        %v2425 = vrot.slane %v2423, 1
        %v2426 = vsel %vm2318, %v2421, %v2425
        %v2427 = vshrl.u32 %v2310, 16
        %v2429 = vor.u32 %v2427, %v2425
        %v2431 = vshll.u32 %v2311, 16
        %v2433 = vrot.slane %v2431, 1
        %v2434 = vsel %vm2318, %v2429, %v2433
        %v2435 = vshrl.u32 %v2311, 16
        %v2437 = vor.u32 %v2435, %v2433
        %v2439 = vshll.u32 %v2312, 16
        %v2441 = vrot.slane %v2439, 1
        %v2442 = vsel %vm2318, %v2437, %v2441
        %v2443 = vshrl.u32 %v2312, 16
        %v2445 = vor.u32 %v2443, %v2441
        %v2447 = vshll.u32 %v2313, 16
        %v2449 = vrot.slane %v2447, 1
        %v2450 = vsel %vm2318, %v2445, %v2449
        %v2451 = vshrl.u32 %v2313, 16
        %v2453 = vor.u32 %v2451, %v2449
        %v2455 = vshll.u32 %v2314, 16
        %v2457 = vrot.slane %v2455, 1
        %v2458 = vsel %vm2318, %v2453, %v2457
        %v2459 = vshrl.u32 %v2314, 16
        %v2461 = vor.u32 %v2459, %v2457
        %v2463 = vshll.u32 %v2317, 16
        %v2465 = vrot.slane %v2463, 1
        %v2466 = vsel %vm2318, %v2461, %v2465
        %2467 = vrot.lane.b32.xlu0 %v2330, 16
        %v2468 = vpop.permute.xlu0 %2467
        %2469 = vrot.lane.b32.xlu0 %v2338, 16
        %v2470 = vpop.permute.xlu0 %2469
        %2471 = vrot.lane.b32.xlu0 %v2346, 16
        %v2472 = vpop.permute.xlu0 %2471
        %2473 = vrot.lane.b32.xlu0 %v2354, 16
        %v2474 = vpop.permute.xlu0 %2473
        %2475 = vrot.lane.b32.xlu0 %v2362, 16
        %v2476 = vpop.permute.xlu0 %2475
        %2477 = vrot.lane.b32.xlu0 %v2370, 16
        %v2478 = vpop.permute.xlu0 %2477
        %2479 = vrot.lane.b32.xlu0 %v2378, 16
        %v2480 = vpop.permute.xlu0 %2479
        %2481 = vrot.lane.b32.xlu0 %v2386, 16
        %v2482 = vpop.permute.xlu0 %2481
        %2483 = vrot.lane.b32.xlu0 %v2394, 16
        %v2484 = vpop.permute.xlu0 %2483
        %2485 = vrot.lane.b32.xlu0 %v2402, 16
        %v2486 = vpop.permute.xlu0 %2485
        %2487 = vrot.lane.b32.xlu0 %v2410, 16
        %v2488 = vpop.permute.xlu0 %2487
        %2489 = vrot.lane.b32.xlu0 %v2418, 16
        %v2490 = vpop.permute.xlu0 %2489
        %2491 = vrot.lane.b32.xlu0 %v2426, 16
        %v2492 = vpop.permute.xlu0 %2491
        %2493 = vrot.lane.b32.xlu0 %v2434, 16
        %v2494 = vpop.permute.xlu0 %2493
        %2495 = vrot.lane.b32.xlu0 %v2442, 16
        %v2496 = vpop.permute.xlu0 %2495
        %2497 = vrot.lane.b32.xlu0 %v2450, 16
        %v2498 = vpop.permute.xlu0 %2497
        %2499 = vrot.lane.b32.xlu0 %v2458, 16
        %v2500 = vpop.permute.xlu0 %2499
        %2501 = vrot.lane.b32.xlu0 %v2466, 16
        %v2502 = vpop.permute.xlu0 %2501
        %v2504 = vunpack.c.l.b16 %v2212
        %v2505 = vpack.c.b16 %v2262, %v2504
        %vm2506 = vcmask 1046528
        %v2507 = vrot.slane %v2505, 1
        %v2508 = vrot.slane %v2298, 1
        %v2509 = vsel %vm2506, %v2507, %v2508
        %v2510 = vrot.slane %v2299, 1
        %v2511 = vsel %vm2506, %v2508, %v2510
        %v2512 = vrot.slane %v2300, 1
        %v2513 = vsel %vm2506, %v2510, %v2512
        %v2514 = vrot.slane %v2301, 1
        %v2515 = vsel %vm2506, %v2512, %v2514
        %v2516 = vrot.slane %v2302, 1
        %v2517 = vsel %vm2506, %v2514, %v2516
        %v2518 = vrot.slane %v2303, 1
        %v2519 = vsel %vm2506, %v2516, %v2518
        %v2520 = vrot.slane %v2304, 1
        %v2521 = vsel %vm2506, %v2518, %v2520
        %v2522 = vrot.slane %v2305, 1
        %v2523 = vsel %vm2506, %v2520, %v2522
        %v2524 = vrot.slane %v2306, 1
        %v2525 = vsel %vm2506, %v2522, %v2524
        %v2526 = vrot.slane %v2307, 1
        %v2527 = vsel %vm2506, %v2524, %v2526
        %v2528 = vrot.slane %v2308, 1
        %v2529 = vsel %vm2506, %v2526, %v2528
        %v2530 = vrot.slane %v2309, 1
        %v2531 = vsel %vm2506, %v2528, %v2530
        %v2532 = vrot.slane %v2310, 1
        %v2533 = vsel %vm2506, %v2530, %v2532
        %v2534 = vrot.slane %v2311, 1
        %v2535 = vsel %vm2506, %v2532, %v2534
        %v2536 = vrot.slane %v2312, 1
        %v2537 = vsel %vm2506, %v2534, %v2536
        %v2538 = vrot.slane %v2313, 1
        %v2539 = vsel %vm2506, %v2536, %v2538
        %v2540 = vrot.slane %v2314, 1
        %v2541 = vsel %vm2506, %v2538, %v2540
        %v2542 = vrot.slane %v2317, 1
        %v2543 = vsel %vm2506, %v2540, %v2542
        %2544 = vrot.lane.b32.xlu0 %v2509, 32
        %v2545 = vpop.permute.xlu0 %2544
        %2546 = vrot.lane.b32.xlu0 %v2511, 32
        %v2547 = vpop.permute.xlu0 %2546
        %2548 = vrot.lane.b32.xlu0 %v2513, 32
        %v2549 = vpop.permute.xlu0 %2548
        %2550 = vrot.lane.b32.xlu0 %v2515, 32
        %v2551 = vpop.permute.xlu0 %2550
        %2552 = vrot.lane.b32.xlu0 %v2517, 32
        %v2553 = vpop.permute.xlu0 %2552
        %2554 = vrot.lane.b32.xlu0 %v2519, 32
        %v2555 = vpop.permute.xlu0 %2554
        %2556 = vrot.lane.b32.xlu0 %v2521, 32
        %v2557 = vpop.permute.xlu0 %2556
        %2558 = vrot.lane.b32.xlu0 %v2523, 32
        %v2559 = vpop.permute.xlu0 %2558
        %2560 = vrot.lane.b32.xlu0 %v2525, 32
        %v2561 = vpop.permute.xlu0 %2560
        %2562 = vrot.lane.b32.xlu0 %v2527, 32
        %v2563 = vpop.permute.xlu0 %2562
        %2564 = vrot.lane.b32.xlu0 %v2529, 32
        %v2565 = vpop.permute.xlu0 %2564
        %2566 = vrot.lane.b32.xlu0 %v2531, 32
        %v2567 = vpop.permute.xlu0 %2566
        %2568 = vrot.lane.b32.xlu0 %v2533, 32
        %v2569 = vpop.permute.xlu0 %2568
        %2570 = vrot.lane.b32.xlu0 %v2535, 32
        %v2571 = vpop.permute.xlu0 %2570
        %2572 = vrot.lane.b32.xlu0 %v2537, 32
        %v2573 = vpop.permute.xlu0 %2572
        %2574 = vrot.lane.b32.xlu0 %v2539, 32
        %v2575 = vpop.permute.xlu0 %2574
        %2576 = vrot.lane.b32.xlu0 %v2541, 32
        %v2577 = vpop.permute.xlu0 %2576
        %2578 = vrot.lane.b32.xlu0 %v2543, 32
        %v2579 = vpop.permute.xlu0 %2578
        %v2584 = vunpack.c.l.b16 %v2213
        %v2585 = vunpack.c.l.b16 %v2214
        %v2586 = vunpack.c.l.b16 %v2215
        %v2587 = vunpack.c.l.b16 %v2216
        %v2588 = vpack.c.b16 %v2264, %v2584
        %v2589 = vpack.c.b16 %v2586, %v2585
        %v2590 = vpack.c.b16 %v2587, %v2587
        %v2591 = vrot.slane %v2588, 1
        %v2592 = vsel %vm2506, %v2591, %v2510
        %v2593 = vrot.slane %v2589, 1
        %v2594 = vsel %vm2506, %v2540, %v2593
        %v2595 = vrot.slane %v2590, 1
        %v2596 = vsel %vm2506, %v2593, %v2595
        %2597 = vrot.lane.b32.xlu0 %v2592, 48
        %v2598 = vpop.permute.xlu0 %2597
        %2599 = vrot.lane.b32.xlu0 %v2513, 48
        %v2600 = vpop.permute.xlu0 %2599
        %2601 = vrot.lane.b32.xlu0 %v2515, 48
        %v2602 = vpop.permute.xlu0 %2601
        %2603 = vrot.lane.b32.xlu0 %v2517, 48
        %v2604 = vpop.permute.xlu0 %2603
        %2605 = vrot.lane.b32.xlu0 %v2519, 48
        %v2606 = vpop.permute.xlu0 %2605
        %2607 = vrot.lane.b32.xlu0 %v2521, 48
        %v2608 = vpop.permute.xlu0 %2607
        %2609 = vrot.lane.b32.xlu0 %v2523, 48
        %v2610 = vpop.permute.xlu0 %2609
        %2611 = vrot.lane.b32.xlu0 %v2525, 48
        %v2612 = vpop.permute.xlu0 %2611
        %2613 = vrot.lane.b32.xlu0 %v2527, 48
        %v2614 = vpop.permute.xlu0 %2613
        %2615 = vrot.lane.b32.xlu0 %v2529, 48
        %v2616 = vpop.permute.xlu0 %2615
        %2617 = vrot.lane.b32.xlu0 %v2531, 48
        %v2618 = vpop.permute.xlu0 %2617
        %2619 = vrot.lane.b32.xlu0 %v2533, 48
        %v2620 = vpop.permute.xlu0 %2619
        %2621 = vrot.lane.b32.xlu0 %v2535, 48
        %v2622 = vpop.permute.xlu0 %2621
        %2623 = vrot.lane.b32.xlu0 %v2537, 48
        %v2624 = vpop.permute.xlu0 %2623
        %2625 = vrot.lane.b32.xlu0 %v2539, 48
        %v2626 = vpop.permute.xlu0 %2625
        %2627 = vrot.lane.b32.xlu0 %v2541, 48
        %v2628 = vpop.permute.xlu0 %2627
        %2629 = vrot.lane.b32.xlu0 %v2594, 48
        %v2630 = vpop.permute.xlu0 %2629
        %2631 = vrot.lane.b32.xlu0 %v2596, 48
        %v2632 = vpop.permute.xlu0 %2631
        %v2634 = vunpack.c.l.b16 %v2217
        %v2635 = vpack.c.b16 %v2634, %v2634
        %vm2636 = vsmask.f32 6400
        %v2638 = vshrl.u32 %v2588, 16
        %v2640 = vrot.slane %v2638, 1
        %v2641 = vshll.u32 %v2588, 16
        %v2643 = vrot.slane %v2641, 2
        %v2644 = vor.u32 %v2640, %v2643
        %v2645 = vrot.slane %v2339, 1
        %v2646 = vrot.slane %v2335, 2
        %v2647 = vor.u32 %v2645, %v2646
        %v2648 = vsel %vm2636, %v2644, %v2647
        %v2649 = vrot.slane %v2347, 1
        %v2650 = vrot.slane %v2343, 2
        %v2651 = vor.u32 %v2649, %v2650
        %v2652 = vsel %vm2636, %v2647, %v2651
        %v2653 = vrot.slane %v2355, 1
        %v2654 = vrot.slane %v2351, 2
        %v2655 = vor.u32 %v2653, %v2654
        %v2656 = vsel %vm2636, %v2651, %v2655
        %v2657 = vrot.slane %v2363, 1
        %v2658 = vrot.slane %v2359, 2
        %v2659 = vor.u32 %v2657, %v2658
        %v2660 = vsel %vm2636, %v2655, %v2659
        %v2661 = vrot.slane %v2371, 1
        %v2662 = vrot.slane %v2367, 2
        %v2663 = vor.u32 %v2661, %v2662
        %v2664 = vsel %vm2636, %v2659, %v2663
        %v2665 = vrot.slane %v2379, 1
        %v2666 = vrot.slane %v2375, 2
        %v2667 = vor.u32 %v2665, %v2666
        %v2668 = vsel %vm2636, %v2663, %v2667
        %v2669 = vrot.slane %v2387, 1
        %v2670 = vrot.slane %v2383, 2
        %v2671 = vor.u32 %v2669, %v2670
        %v2672 = vsel %vm2636, %v2667, %v2671
        %v2673 = vrot.slane %v2395, 1
        %v2674 = vrot.slane %v2391, 2
        %v2675 = vor.u32 %v2673, %v2674
        %v2676 = vsel %vm2636, %v2671, %v2675
        %v2677 = vrot.slane %v2403, 1
        %v2678 = vrot.slane %v2399, 2
        %v2679 = vor.u32 %v2677, %v2678
        %v2680 = vsel %vm2636, %v2675, %v2679
        %v2681 = vrot.slane %v2411, 1
        %v2682 = vrot.slane %v2407, 2
        %v2683 = vor.u32 %v2681, %v2682
        %v2684 = vsel %vm2636, %v2679, %v2683
        %v2685 = vrot.slane %v2419, 1
        %v2686 = vrot.slane %v2415, 2
        %v2687 = vor.u32 %v2685, %v2686
        %v2688 = vsel %vm2636, %v2683, %v2687
        %v2689 = vrot.slane %v2427, 1
        %v2690 = vrot.slane %v2423, 2
        %v2691 = vor.u32 %v2689, %v2690
        %v2692 = vsel %vm2636, %v2687, %v2691
        %v2693 = vrot.slane %v2435, 1
        %v2694 = vrot.slane %v2431, 2
        %v2695 = vor.u32 %v2693, %v2694
        %v2696 = vsel %vm2636, %v2691, %v2695
        %v2697 = vrot.slane %v2443, 1
        %v2698 = vrot.slane %v2439, 2
        %v2699 = vor.u32 %v2697, %v2698
        %v2700 = vsel %vm2636, %v2695, %v2699
        %v2701 = vrot.slane %v2451, 1
        %v2702 = vrot.slane %v2447, 2
        %v2703 = vor.u32 %v2701, %v2702
        %v2704 = vsel %vm2636, %v2699, %v2703
        %v2705 = vrot.slane %v2459, 1
        %v2706 = vrot.slane %v2455, 2
        %v2707 = vor.u32 %v2705, %v2706
        %v2708 = vsel %vm2636, %v2703, %v2707
        %v2710 = vshrl.u32 %v2589, 16
        %v2712 = vrot.slane %v2710, 1
        %v2713 = vshll.u32 %v2589, 16
        %v2715 = vrot.slane %v2713, 2
        %v2716 = vor.u32 %v2712, %v2715
        %v2717 = vsel %vm2636, %v2707, %v2716
        %v2719 = vshrl.u32 %v2635, 16
        %v2721 = vrot.slane %v2719, 1
        %v2722 = vshll.u32 %v2635, 16
        %v2724 = vrot.slane %v2722, 2
        %v2725 = vor.u32 %v2721, %v2724
        %v2726 = vsel %vm2636, %v2716, %v2725
        %2727 = vrot.lane.b32.xlu0 %v2648, 64
        %v2728 = vpop.permute.xlu0 %2727
        %2729 = vrot.lane.b32.xlu0 %v2652, 64
        %v2730 = vpop.permute.xlu0 %2729
        %2731 = vrot.lane.b32.xlu0 %v2656, 64
        %v2732 = vpop.permute.xlu0 %2731
        %2733 = vrot.lane.b32.xlu0 %v2660, 64
        %v2734 = vpop.permute.xlu0 %2733
        %2735 = vrot.lane.b32.xlu0 %v2664, 64
        %v2736 = vpop.permute.xlu0 %2735
        %2737 = vrot.lane.b32.xlu0 %v2668, 64
        %v2738 = vpop.permute.xlu0 %2737
        %2739 = vrot.lane.b32.xlu0 %v2672, 64
        %v2740 = vpop.permute.xlu0 %2739
        %2741 = vrot.lane.b32.xlu0 %v2676, 64
        %v2742 = vpop.permute.xlu0 %2741
        %2743 = vrot.lane.b32.xlu0 %v2680, 64
        %v2744 = vpop.permute.xlu0 %2743
        %2745 = vrot.lane.b32.xlu0 %v2684, 64
        %v2746 = vpop.permute.xlu0 %2745
        %2747 = vrot.lane.b32.xlu0 %v2688, 64
        %v2748 = vpop.permute.xlu0 %2747
        %2749 = vrot.lane.b32.xlu0 %v2692, 64
        %v2750 = vpop.permute.xlu0 %2749
        %2751 = vrot.lane.b32.xlu0 %v2696, 64
        %v2752 = vpop.permute.xlu0 %2751
        %2753 = vrot.lane.b32.xlu0 %v2700, 64
        %v2754 = vpop.permute.xlu0 %2753
        %2755 = vrot.lane.b32.xlu0 %v2704, 64
        %v2756 = vpop.permute.xlu0 %2755
        %2757 = vrot.lane.b32.xlu0 %v2708, 64
        %v2758 = vpop.permute.xlu0 %2757
        %2759 = vrot.lane.b32.xlu0 %v2717, 64
        %v2760 = vpop.permute.xlu0 %2759
        %2761 = vrot.lane.b32.xlu0 %v2726, 64
        %v2762 = vpop.permute.xlu0 %2761
        %v2764 = vunpack.c.l.b16 %v2218
        %v2765 = vpack.c.b16 %v2264, %v2764
        %vm2766 = vcmask 1045504
        %v2767 = vrot.slane %v2765, 2
        %v2768 = vrot.slane %v2299, 2
        %v2769 = vsel %vm2766, %v2767, %v2768
        %v2770 = vrot.slane %v2300, 2
        %v2771 = vsel %vm2766, %v2768, %v2770
        %v2772 = vrot.slane %v2301, 2
        %v2773 = vsel %vm2766, %v2770, %v2772
        %v2774 = vrot.slane %v2302, 2
        %v2775 = vsel %vm2766, %v2772, %v2774
        %v2776 = vrot.slane %v2303, 2
        %v2777 = vsel %vm2766, %v2774, %v2776
        %v2778 = vrot.slane %v2304, 2
        %v2779 = vsel %vm2766, %v2776, %v2778
        %v2780 = vrot.slane %v2305, 2
        %v2781 = vsel %vm2766, %v2778, %v2780
        %v2782 = vrot.slane %v2306, 2
        %v2783 = vsel %vm2766, %v2780, %v2782
        %v2784 = vrot.slane %v2307, 2
        %v2785 = vsel %vm2766, %v2782, %v2784
        %v2786 = vrot.slane %v2308, 2
        %v2787 = vsel %vm2766, %v2784, %v2786
        %v2788 = vrot.slane %v2309, 2
        %v2789 = vsel %vm2766, %v2786, %v2788
        %v2790 = vrot.slane %v2310, 2
        %v2791 = vsel %vm2766, %v2788, %v2790
        %v2792 = vrot.slane %v2311, 2
        %v2793 = vsel %vm2766, %v2790, %v2792
        %v2794 = vrot.slane %v2312, 2
        %v2795 = vsel %vm2766, %v2792, %v2794
        %v2796 = vrot.slane %v2313, 2
        %v2797 = vsel %vm2766, %v2794, %v2796
        %v2798 = vrot.slane %v2314, 2
        %v2799 = vsel %vm2766, %v2796, %v2798
        %v2800 = vrot.slane %v2589, 2
        %v2801 = vsel %vm2766, %v2798, %v2800
        %v2802 = vrot.slane %v2635, 2
        %v2803 = vsel %vm2766, %v2800, %v2802
        %2804 = vrot.lane.b32.xlu0 %v2769, 80
        %v2805 = vpop.permute.xlu0 %2804
        %2806 = vrot.lane.b32.xlu0 %v2771, 80
        %v2807 = vpop.permute.xlu0 %2806
        %2808 = vrot.lane.b32.xlu0 %v2773, 80
        %v2809 = vpop.permute.xlu0 %2808
        %2810 = vrot.lane.b32.xlu0 %v2775, 80
        %v2811 = vpop.permute.xlu0 %2810
        %2812 = vrot.lane.b32.xlu0 %v2777, 80
        %v2813 = vpop.permute.xlu0 %2812
        %2814 = vrot.lane.b32.xlu0 %v2779, 80
        %v2815 = vpop.permute.xlu0 %2814
        %2816 = vrot.lane.b32.xlu0 %v2781, 80
        %v2817 = vpop.permute.xlu0 %2816
        %2818 = vrot.lane.b32.xlu0 %v2783, 80
        %v2819 = vpop.permute.xlu0 %2818
        %2820 = vrot.lane.b32.xlu0 %v2785, 80
        %v2821 = vpop.permute.xlu0 %2820
        %2822 = vrot.lane.b32.xlu0 %v2787, 80
        %v2823 = vpop.permute.xlu0 %2822
        %2824 = vrot.lane.b32.xlu0 %v2789, 80
        %v2825 = vpop.permute.xlu0 %2824
        %2826 = vrot.lane.b32.xlu0 %v2791, 80
        %v2827 = vpop.permute.xlu0 %2826
        %2828 = vrot.lane.b32.xlu0 %v2793, 80
        %v2829 = vpop.permute.xlu0 %2828
        %2830 = vrot.lane.b32.xlu0 %v2795, 80
        %v2831 = vpop.permute.xlu0 %2830
        %2832 = vrot.lane.b32.xlu0 %v2797, 80
        %v2833 = vpop.permute.xlu0 %2832
        %2834 = vrot.lane.b32.xlu0 %v2799, 80
        %v2835 = vpop.permute.xlu0 %2834
        %2836 = vrot.lane.b32.xlu0 %v2801, 80
        %v2837 = vpop.permute.xlu0 %2836
        %2838 = vrot.lane.b32.xlu0 %v2803, 80
        %v2839 = vpop.permute.xlu0 %2838
        %v2844 = vunpack.c.l.b16 %v2219
        %v2845 = vunpack.c.l.b16 %v2220
        %v2846 = vunpack.c.l.b16 %v2221
        %v2847 = vunpack.c.l.b16 %v2222
        %v2848 = vpack.c.b16 %v2266, %v2844
        %v2849 = vpack.c.b16 %v2846, %v2845
        %v2850 = vpack.c.b16 %v2847, %v2847
        %v2851 = vrot.slane %v2848, 2
        %v2852 = vsel %vm2766, %v2851, %v2770
        %v2853 = vrot.slane %v2849, 2
        %v2854 = vsel %vm2766, %v2800, %v2853
        %v2855 = vrot.slane %v2850, 2
        %v2856 = vsel %vm2766, %v2853, %v2855
        %2857 = vrot.lane.b32.xlu0 %v2852, 96
        %v2858 = vpop.permute.xlu0 %2857
        %2859 = vrot.lane.b32.xlu0 %v2773, 96
        %v2860 = vpop.permute.xlu0 %2859
        %2861 = vrot.lane.b32.xlu0 %v2775, 96
        %v2862 = vpop.permute.xlu0 %2861
        %2863 = vrot.lane.b32.xlu0 %v2777, 96
        %v2864 = vpop.permute.xlu0 %2863
        %2865 = vrot.lane.b32.xlu0 %v2779, 96
        %v2866 = vpop.permute.xlu0 %2865
        %2867 = vrot.lane.b32.xlu0 %v2781, 96
        %v2868 = vpop.permute.xlu0 %2867
        %2869 = vrot.lane.b32.xlu0 %v2783, 96
        %v2870 = vpop.permute.xlu0 %2869
        %2871 = vrot.lane.b32.xlu0 %v2785, 96
        %v2872 = vpop.permute.xlu0 %2871
        %2873 = vrot.lane.b32.xlu0 %v2787, 96
        %v2874 = vpop.permute.xlu0 %2873
        %2875 = vrot.lane.b32.xlu0 %v2789, 96
        %v2876 = vpop.permute.xlu0 %2875
        %2877 = vrot.lane.b32.xlu0 %v2791, 96
        %v2878 = vpop.permute.xlu0 %2877
        %2879 = vrot.lane.b32.xlu0 %v2793, 96
        %v2880 = vpop.permute.xlu0 %2879
        %2881 = vrot.lane.b32.xlu0 %v2795, 96
        %v2882 = vpop.permute.xlu0 %2881
        %2883 = vrot.lane.b32.xlu0 %v2797, 96
        %v2884 = vpop.permute.xlu0 %2883
        %2885 = vrot.lane.b32.xlu0 %v2799, 96
        %v2886 = vpop.permute.xlu0 %2885
        %2887 = vrot.lane.b32.xlu0 %v2801, 96
        %v2888 = vpop.permute.xlu0 %2887
        %2889 = vrot.lane.b32.xlu0 %v2854, 96
        %v2890 = vpop.permute.xlu0 %2889
        %2891 = vrot.lane.b32.xlu0 %v2856, 96
        %v2892 = vpop.permute.xlu0 %2891
        %v2894 = vunpack.c.l.b16 %v2223
        %v2895 = vpack.c.b16 %v2894, %v2894
        %vm2896 = vsmask.f32 5376
        %v2898 = vshrl.u32 %v2848, 16
        %v2900 = vrot.slane %v2898, 2
        %v2901 = vshll.u32 %v2848, 16
        %v2903 = vrot.slane %v2901, 3
        %v2904 = vor.u32 %v2900, %v2903
        %v2905 = vrot.slane %v2347, 2
        %v2906 = vrot.slane %v2343, 3
        %v2907 = vor.u32 %v2905, %v2906
        %v2908 = vsel %vm2896, %v2904, %v2907
        %v2909 = vrot.slane %v2355, 2
        %v2910 = vrot.slane %v2351, 3
        %v2911 = vor.u32 %v2909, %v2910
        %v2912 = vsel %vm2896, %v2907, %v2911
        %v2913 = vrot.slane %v2363, 2
        %v2914 = vrot.slane %v2359, 3
        %v2915 = vor.u32 %v2913, %v2914
        %v2916 = vsel %vm2896, %v2911, %v2915
        %v2917 = vrot.slane %v2371, 2
        %v2918 = vrot.slane %v2367, 3
        %v2919 = vor.u32 %v2917, %v2918
        %v2920 = vsel %vm2896, %v2915, %v2919
        %v2921 = vrot.slane %v2379, 2
        %v2922 = vrot.slane %v2375, 3
        %v2923 = vor.u32 %v2921, %v2922
        %v2924 = vsel %vm2896, %v2919, %v2923
        %v2925 = vrot.slane %v2387, 2
        %v2926 = vrot.slane %v2383, 3
        %v2927 = vor.u32 %v2925, %v2926
        %v2928 = vsel %vm2896, %v2923, %v2927
        %v2929 = vrot.slane %v2395, 2
        %v2930 = vrot.slane %v2391, 3
        %v2931 = vor.u32 %v2929, %v2930
        %v2932 = vsel %vm2896, %v2927, %v2931
        %v2933 = vrot.slane %v2403, 2
        %v2934 = vrot.slane %v2399, 3
        %v2935 = vor.u32 %v2933, %v2934
        %v2936 = vsel %vm2896, %v2931, %v2935
        %v2937 = vrot.slane %v2411, 2
        %v2938 = vrot.slane %v2407, 3
        %v2939 = vor.u32 %v2937, %v2938
        %v2940 = vsel %vm2896, %v2935, %v2939
        %v2941 = vrot.slane %v2419, 2
        %v2942 = vrot.slane %v2415, 3
        %v2943 = vor.u32 %v2941, %v2942
        %v2944 = vsel %vm2896, %v2939, %v2943
        %v2945 = vrot.slane %v2427, 2
        %v2946 = vrot.slane %v2423, 3
        %v2947 = vor.u32 %v2945, %v2946
        %v2948 = vsel %vm2896, %v2943, %v2947
        %v2949 = vrot.slane %v2435, 2
        %v2950 = vrot.slane %v2431, 3
        %v2951 = vor.u32 %v2949, %v2950
        %v2952 = vsel %vm2896, %v2947, %v2951
        %v2953 = vrot.slane %v2443, 2
        %v2954 = vrot.slane %v2439, 3
        %v2955 = vor.u32 %v2953, %v2954
        %v2956 = vsel %vm2896, %v2951, %v2955
        %v2957 = vrot.slane %v2451, 2
        %v2958 = vrot.slane %v2447, 3
        %v2959 = vor.u32 %v2957, %v2958
        %v2960 = vsel %vm2896, %v2955, %v2959
        %v2961 = vrot.slane %v2459, 2
        %v2962 = vrot.slane %v2455, 3
        %v2963 = vor.u32 %v2961, %v2962
        %v2964 = vsel %vm2896, %v2959, %v2963
        %v2965 = vrot.slane %v2710, 2
        %v2966 = vrot.slane %v2713, 3
        %v2967 = vor.u32 %v2965, %v2966
        %v2968 = vsel %vm2896, %v2963, %v2967
        %v2970 = vshrl.u32 %v2849, 16
        %v2972 = vrot.slane %v2970, 2
        %v2973 = vshll.u32 %v2849, 16
        %v2975 = vrot.slane %v2973, 3
        %v2976 = vor.u32 %v2972, %v2975
        %v2977 = vsel %vm2896, %v2967, %v2976
        %v2979 = vshrl.u32 %v2895, 16
        %v2981 = vrot.slane %v2979, 2
        %v2982 = vshll.u32 %v2895, 16
        %v2984 = vrot.slane %v2982, 3
        %v2985 = vor.u32 %v2981, %v2984
        %v2986 = vsel %vm2896, %v2976, %v2985
        %2987 = vrot.lane.b32.xlu0 %v2908, 112
        %v2988 = vpop.permute.xlu0 %2987
        %2989 = vrot.lane.b32.xlu0 %v2912, 112
        %v2990 = vpop.permute.xlu0 %2989
        %2991 = vrot.lane.b32.xlu0 %v2916, 112
        %v2992 = vpop.permute.xlu0 %2991
        %2993 = vrot.lane.b32.xlu0 %v2920, 112
        %v2994 = vpop.permute.xlu0 %2993
        %2995 = vrot.lane.b32.xlu0 %v2924, 112
        %v2996 = vpop.permute.xlu0 %2995
        %2997 = vrot.lane.b32.xlu0 %v2928, 112
        %v2998 = vpop.permute.xlu0 %2997
        %2999 = vrot.lane.b32.xlu0 %v2932, 112
        %v3000 = vpop.permute.xlu0 %2999
        %3001 = vrot.lane.b32.xlu0 %v2936, 112
        %v3002 = vpop.permute.xlu0 %3001
        %3003 = vrot.lane.b32.xlu0 %v2940, 112
        %v3004 = vpop.permute.xlu0 %3003
        %3005 = vrot.lane.b32.xlu0 %v2944, 112
        %v3006 = vpop.permute.xlu0 %3005
        %3007 = vrot.lane.b32.xlu0 %v2948, 112
        %v3008 = vpop.permute.xlu0 %3007
        %3009 = vrot.lane.b32.xlu0 %v2952, 112
        %v3010 = vpop.permute.xlu0 %3009
        %3011 = vrot.lane.b32.xlu0 %v2956, 112
        %v3012 = vpop.permute.xlu0 %3011
        %3013 = vrot.lane.b32.xlu0 %v2960, 112
        %v3014 = vpop.permute.xlu0 %3013
        %3015 = vrot.lane.b32.xlu0 %v2964, 112
        %v3016 = vpop.permute.xlu0 %3015
        %3017 = vrot.lane.b32.xlu0 %v2968, 112
        %v3018 = vpop.permute.xlu0 %3017
        %3019 = vrot.lane.b32.xlu0 %v2977, 112
        %v3020 = vpop.permute.xlu0 %3019
        %3021 = vrot.lane.b32.xlu0 %v2986, 112
        %v3022 = vpop.permute.xlu0 %3021
        %v3024 = vunpack.c.l.b16 %v2224
        %v3025 = vpack.c.b16 %v2266, %v3024
        %vm3026 = vcmask 1044480
        %v3027 = vrot.slane %v3025, 3
        %v3028 = vrot.slane %v2300, 3
        %v3029 = vsel %vm3026, %v3027, %v3028
        %v3030 = vrot.slane %v2301, 3
        %v3031 = vsel %vm3026, %v3028, %v3030
        %v3032 = vrot.slane %v2302, 3
        %v3033 = vsel %vm3026, %v3030, %v3032
        %v3034 = vrot.slane %v2303, 3
        %v3035 = vsel %vm3026, %v3032, %v3034
        %v3036 = vrot.slane %v2304, 3
        %v3037 = vsel %vm3026, %v3034, %v3036
        %v3038 = vrot.slane %v2305, 3
        %v3039 = vsel %vm3026, %v3036, %v3038
        %v3040 = vrot.slane %v2306, 3
        %v3041 = vsel %vm3026, %v3038, %v3040
        %v3042 = vrot.slane %v2307, 3
        %v3043 = vsel %vm3026, %v3040, %v3042
        %v3044 = vrot.slane %v2308, 3
        %v3045 = vsel %vm3026, %v3042, %v3044
        %v3046 = vrot.slane %v2309, 3
        %v3047 = vsel %vm3026, %v3044, %v3046
        %v3048 = vrot.slane %v2310, 3
        %v3049 = vsel %vm3026, %v3046, %v3048
        %v3050 = vrot.slane %v2311, 3
        %v3051 = vsel %vm3026, %v3048, %v3050
        %v3052 = vrot.slane %v2312, 3
        %v3053 = vsel %vm3026, %v3050, %v3052
        %v3054 = vrot.slane %v2313, 3
        %v3055 = vsel %vm3026, %v3052, %v3054
        %v3056 = vrot.slane %v2314, 3
        %v3057 = vsel %vm3026, %v3054, %v3056
        %v3058 = vrot.slane %v2589, 3
        %v3059 = vsel %vm3026, %v3056, %v3058
        %v3060 = vrot.slane %v2849, 3
        %v3061 = vsel %vm3026, %v3058, %v3060
        %v3062 = vrot.slane %v2895, 3
        %v3063 = vsel %vm3026, %v3060, %v3062
        %vm3064 = vcmask 130048
        %v3066 = vsel %vm3064, %v2297, %v2468
        %v3068 = vsel %vm3064, %v2298, %v2470
        %v3070 = vsel %vm3064, %v2299, %v2472
        %v3072 = vsel %vm3064, %v2300, %v2474
        %v3074 = vsel %vm3064, %v2301, %v2476
        %v3076 = vsel %vm3064, %v2302, %v2478
        %v3078 = vsel %vm3064, %v2303, %v2480
        %v3080 = vsel %vm3064, %v2304, %v2482
        %v3082 = vsel %vm3064, %v2305, %v2484
        %v3084 = vsel %vm3064, %v2306, %v2486
        %v3086 = vsel %vm3064, %v2307, %v2488
        %v3088 = vsel %vm3064, %v2308, %v2490
        %v3090 = vsel %vm3064, %v2309, %v2492
        %v3092 = vsel %vm3064, %v2310, %v2494
        %v3094 = vsel %vm3064, %v2311, %v2496
        %v3096 = vsel %vm3064, %v2312, %v2498
        %v3098 = vsel %vm3064, %v2313, %v2500
        %v3100 = vsel %vm3064, %v2314, %v2502
        %vm3101 = vcmask 261120
        %v3103 = vsel %vm3101, %v3066, %v2545
        %v3105 = vsel %vm3101, %v3068, %v2547
        %v3107 = vsel %vm3101, %v3070, %v2549
        %v3109 = vsel %vm3101, %v3072, %v2551
        %v3111 = vsel %vm3101, %v3074, %v2553
        %v3113 = vsel %vm3101, %v3076, %v2555
        %v3115 = vsel %vm3101, %v3078, %v2557
        %v3117 = vsel %vm3101, %v3080, %v2559
        %v3119 = vsel %vm3101, %v3082, %v2561
        %v3121 = vsel %vm3101, %v3084, %v2563
        %v3123 = vsel %vm3101, %v3086, %v2565
        %v3125 = vsel %vm3101, %v3088, %v2567
        %v3127 = vsel %vm3101, %v3090, %v2569
        %v3129 = vsel %vm3101, %v3092, %v2571
        %v3131 = vsel %vm3101, %v3094, %v2573
        %v3133 = vsel %vm3101, %v3096, %v2575
        %v3135 = vsel %vm3101, %v3098, %v2577
        %v3137 = vsel %vm3101, %v3100, %v2579
        %vm3138 = vcmask 392192
        %v3140 = vsel %vm3138, %v3103, %v2598
        %v3142 = vsel %vm3138, %v3105, %v2600
        %v3144 = vsel %vm3138, %v3107, %v2602
        %v3146 = vsel %vm3138, %v3109, %v2604
        %v3148 = vsel %vm3138, %v3111, %v2606
        %v3150 = vsel %vm3138, %v3113, %v2608
        %v3152 = vsel %vm3138, %v3115, %v2610
        %v3154 = vsel %vm3138, %v3117, %v2612
        %v3156 = vsel %vm3138, %v3119, %v2614
        %v3158 = vsel %vm3138, %v3121, %v2616
        %v3160 = vsel %vm3138, %v3123, %v2618
        %v3162 = vsel %vm3138, %v3125, %v2620
        %v3164 = vsel %vm3138, %v3127, %v2622
        %v3166 = vsel %vm3138, %v3129, %v2624
        %v3168 = vsel %vm3138, %v3131, %v2626
        %v3170 = vsel %vm3138, %v3133, %v2628
        %v3172 = vsel %vm3138, %v3135, %v2630
        %v3174 = vsel %vm3138, %v3137, %v2632
        %vm3175 = vcmask 523264
        %v3177 = vsel %vm3175, %v3140, %v2728
        %v3179 = vsel %vm3175, %v3142, %v2730
        %v3181 = vsel %vm3175, %v3144, %v2732
        %v3183 = vsel %vm3175, %v3146, %v2734
        %v3185 = vsel %vm3175, %v3148, %v2736
        %v3187 = vsel %vm3175, %v3150, %v2738
        %v3189 = vsel %vm3175, %v3152, %v2740
        %v3191 = vsel %vm3175, %v3154, %v2742
        %v3193 = vsel %vm3175, %v3156, %v2744
        %v3195 = vsel %vm3175, %v3158, %v2746
        %v3197 = vsel %vm3175, %v3160, %v2748
        %v3199 = vsel %vm3175, %v3162, %v2750
        %v3201 = vsel %vm3175, %v3164, %v2752
        %v3203 = vsel %vm3175, %v3166, %v2754
        %v3205 = vsel %vm3175, %v3168, %v2756
        %v3207 = vsel %vm3175, %v3170, %v2758
        %v3209 = vsel %vm3175, %v3172, %v2760
        %v3211 = vsel %vm3175, %v3174, %v2762
        %vm3212 = vcmask 654336
        %v3214 = vsel %vm3212, %v3177, %v2805
        %v3216 = vsel %vm3212, %v3179, %v2807
        %v3218 = vsel %vm3212, %v3181, %v2809
        %v3220 = vsel %vm3212, %v3183, %v2811
        %v3222 = vsel %vm3212, %v3185, %v2813
        %v3224 = vsel %vm3212, %v3187, %v2815
        %v3226 = vsel %vm3212, %v3189, %v2817
        %v3228 = vsel %vm3212, %v3191, %v2819
        %v3230 = vsel %vm3212, %v3193, %v2821
        %v3232 = vsel %vm3212, %v3195, %v2823
        %v3234 = vsel %vm3212, %v3197, %v2825
        %v3236 = vsel %vm3212, %v3199, %v2827
        %v3238 = vsel %vm3212, %v3201, %v2829
        %v3240 = vsel %vm3212, %v3203, %v2831
        %v3242 = vsel %vm3212, %v3205, %v2833
        %v3244 = vsel %vm3212, %v3207, %v2835
        %v3246 = vsel %vm3212, %v3209, %v2837
        %v3248 = vsel %vm3212, %v3211, %v2839
        %vm3249 = vcmask 785408
        %v3251 = vsel %vm3249, %v3214, %v2858
        %v3253 = vsel %vm3249, %v3216, %v2860
        %v3255 = vsel %vm3249, %v3218, %v2862
        %v3257 = vsel %vm3249, %v3220, %v2864
        %v3259 = vsel %vm3249, %v3222, %v2866
        %v3261 = vsel %vm3249, %v3224, %v2868
        %v3263 = vsel %vm3249, %v3226, %v2870
        %v3265 = vsel %vm3249, %v3228, %v2872
        %v3267 = vsel %vm3249, %v3230, %v2874
        %v3269 = vsel %vm3249, %v3232, %v2876
        %v3271 = vsel %vm3249, %v3234, %v2878
        %v3273 = vsel %vm3249, %v3236, %v2880
        %v3275 = vsel %vm3249, %v3238, %v2882
        %v3277 = vsel %vm3249, %v3240, %v2884
        %v3279 = vsel %vm3249, %v3242, %v2886
        %v3281 = vsel %vm3249, %v3244, %v2888
        %v3283 = vsel %vm3249, %v3246, %v2890
        %v3285 = vsel %vm3249, %v3248, %v2892
        %vm3286 = vcmask 916480
        %v3288 = vsel %vm3286, %v3251, %v2988
        %v3291 = vsel %vm3286, %v3253, %v2990
        %v3294 = vsel %vm3286, %v3255, %v2992
        %v3297 = vsel %vm3286, %v3257, %v2994
        %v3300 = vsel %vm3286, %v3259, %v2996
        %v3303 = vsel %vm3286, %v3261, %v2998
        %v3306 = vsel %vm3286, %v3263, %v3000
        %v3309 = vsel %vm3286, %v3265, %v3002
        %v3312 = vsel %vm3286, %v3267, %v3004
        %v3315 = vsel %vm3286, %v3269, %v3006
        %v3318 = vsel %vm3286, %v3271, %v3008
        %v3321 = vsel %vm3286, %v3273, %v3010
        %v3324 = vsel %vm3286, %v3275, %v3012
        %v3327 = vsel %vm3286, %v3277, %v3014
        %v3330 = vsel %vm3286, %v3279, %v3016
        %v3333 = vsel %vm3286, %v3281, %v3018
        %v3336 = vsel %vm3286, %v3283, %v3020
        %v3339 = vsel %vm3286, %v3285, %v3022
        %v3341 = vld [vmem:[%s3] sm:$0xf]
        %v3342 = vld [vmem:[%s3 + $0x4] sm:$0xf]
        %v3343 = vld [vmem:[%s3 + $0x8] sm:$0xf]
        %v3344 = vld [vmem:[%s3 + $0xc] sm:$0xf]
        %v3345 = vld [vmem:[%s3 + $0x10] sm:$0xf]
        %v3346 = vld [vmem:[%s3 + $0x14] sm:$0xf]
        %v3347 = vld [vmem:[%s3 + $0x18] sm:$0xf]
        %v3348 = vld [vmem:[%s3 + $0x1c] sm:$0xf]
        %v3349 = vld [vmem:[%s3 + $0x20] sm:$0xf]
        %v3350 = vld [vmem:[%s3 + $0x24] sm:$0xf]
        %v3351 = vld [vmem:[%s3 + $0x28] sm:$0xf]
        %v3352 = vld [vmem:[%s3 + $0x2c] sm:$0xf]
        %v3353 = vld [vmem:[%s3 + $0x30] sm:$0xf]
        %v3354 = vld [vmem:[%s3 + $0x34] sm:$0xf]
        %v3355 = vld [vmem:[%s3 + $0x38] sm:$0xf]
        %v3356 = vld [vmem:[%s3 + $0x3c] sm:$0xf]
        %v3357 = vld [vmem:[%s3 + $0x40] sm:$0xf]
        %v3358 = vld [vmem:[%s3 + $0x44] sm:$0xf]
        %v3359 = vld [vmem:[%s4] sm:$0x1]
        %v3361 = vlaneseq
        %v3362 = vshrl.u32 %v3361, 7
        %v3363 = vsub.s32 0, %v3362
        %v3364 = vrot.slane %v3359, %v3363
        %v3384 = vunpack.c.l.b16 %v3341
        %v3385 = vunpack.c.l.b16 %v3342
        %v3386 = vunpack.c.l.b16 %v3343
        %v3387 = vunpack.c.l.b16 %v3344
        %v3388 = vunpack.c.l.b16 %v3345
        %v3389 = vunpack.c.l.b16 %v3346
        %v3390 = vunpack.c.l.b16 %v3347
        %v3391 = vunpack.c.l.b16 %v3348
        %v3392 = vunpack.c.l.b16 %v3349
        %v3393 = vunpack.c.l.b16 %v3350
        %v3394 = vunpack.c.l.b16 %v3351
        %v3395 = vunpack.c.l.b16 %v3352
        %v3396 = vunpack.c.l.b16 %v3353
        %v3397 = vunpack.c.l.b16 %v3354
        %v3398 = vunpack.c.l.b16 %v3355
        %v3399 = vunpack.c.l.b16 %v3356
        %v3400 = vunpack.c.l.b16 %v3357
        %v3401 = vunpack.c.l.b16 %v3358
        %v3402 = vpack.c.b16 %v3385, %v3384
        %v3403 = vpack.c.b16 %v3387, %v3386
        %v3404 = vpack.c.b16 %v3389, %v3388
        %v3405 = vpack.c.b16 %v3391, %v3390
        %v3406 = vpack.c.b16 %v3393, %v3392
        %v3407 = vpack.c.b16 %v3395, %v3394
        %v3408 = vpack.c.b16 %v3397, %v3396
        %v3409 = vpack.c.b16 %v3399, %v3398
        %v3410 = vpack.c.b16 %v3401, %v3400
        %v3421 = vsel %vm3064, %v3029, 0
        %v3424 = vsel %vm3064, %v3031, 0
        %v3427 = vsel %vm3064, %v3033, 0
        %v3430 = vsel %vm3064, %v3035, 0
        %v3433 = vsel %vm3064, %v3037, 0
        %v3436 = vsel %vm3064, %v3039, 0
        %v3439 = vsel %vm3064, %v3041, 0
        %v3442 = vsel %vm3064, %v3043, 0
        %v3445 = vsel %vm3064, %v3045, 0
        %v3448 = vsel %vm3064, %v3047, 0
        %v3451 = vsel %vm3064, %v3049, 0
        %v3454 = vsel %vm3064, %v3051, 0
        %v3457 = vsel %vm3064, %v3053, 0
        %v3460 = vsel %vm3064, %v3055, 0
        %v3463 = vsel %vm3064, %v3057, 0
        %v3466 = vsel %vm3064, %v3059, 0
        %v3469 = vsel %vm3064, %v3061, 0
        %v3472 = vsel %vm3064, %v3063, 0
        %3474 = vmatprep.subr.bf16.mxu0 0
        %3475 = vmatpush1.bf16.msra.mxu0 %v3402
        %3476 = vmatprep.subr.bf16.mxu0 0
        %3477 = vmatpush1.bf16.msra.mxu0 %v3403
        %3478 = vmatprep.subr.bf16.mxu0 0
        %3479 = vmatpush1.bf16.msra.mxu0 %v3404
        %3480 = vmatprep.subr.bf16.mxu0 0
        %3481 = vmatpush1.bf16.msra.mxu0 %v3405
        %3482 = vmatprep.subr.bf16.mxu0 0
        %3483 = vmatpush1.bf16.msra.mxu0 %v3406
        %3484 = vmatprep.subr.bf16.mxu0 0
        %3485 = vmatpush1.bf16.msra.mxu0 %v3407
        %3486 = vmatprep.subr.bf16.mxu0 0
        %3487 = vmatpush1.bf16.msra.mxu0 %v3408
        %3488 = vmatprep.subr.bf16.mxu0 0
        %3489 = vmatpush1.bf16.msra.mxu0 %v3409
        %3490 = vmatprep.subr.bf16.mxu0 0
        %3491 = vmatpush1.bf16.msra.mxu0 %v3410
        %3492 = vmatprep.subr.bf16.mxu0 0
        %3493 = vmatpush1.bf16.msra.mxu0 0
        %3494 = vmatprep.subr.bf16.mxu0 0
        %3495 = vmatpush1.bf16.msra.mxu0 0
        %3496 = vmatprep.subr.bf16.mxu0 0
        %3497 = vmatpush1.bf16.msra.mxu0 0
        %3498 = vmatprep.subr.bf16.mxu0 0
        %3499 = vmatpush1.bf16.msra.mxu0 0
        %3500 = vmatprep.subr.bf16.mxu0 0
        %3501 = vmatpush1.bf16.msra.mxu0 0
        %3502 = vmatprep.subr.bf16.mxu0 0
        %3503 = vmatpush1.bf16.msra.mxu0 0
        %3504 = vmatprep.subr.bf16.mxu0 0
        %3505 = vmatpush1.bf16.msra.mxu0 0
        %3506 = vmatprep.mubr.bf16.mxu0 %v3421
        %3507 = vmatmul.mubr.bf16.gmra.mrb[0].mxu0 %v3288
        %v3508 = vpop.f32.mrb[0].mxu0
        %v3509 = vadd.f32 %v3364, %v3508
        %v3510 = vpop.f32.mrb[0].mxu0
        %v3511 = vpop.f32.mrb[0].mxu0
        %v3512 = vadd.f32 %v3364, %v3511
        %v3513 = vpop.f32.mrb[0].mxu0
        %3514 = vmatprep.mubr.bf16.mxu0 %v3424
        %3515 = vmatmul.mubr.bf16.gmra.mrb[0].mxu0 %v3291
        %v3516 = vpop.f32.mrb[0].mxu0
        %v3517 = vadd.f32 %v3364, %v3516
        %v3518 = vpop.f32.mrb[0].mxu0
        %v3519 = vpop.f32.mrb[0].mxu0
        %v3520 = vadd.f32 %v3364, %v3519
        %v3521 = vpop.f32.mrb[0].mxu0
        %3522 = vmatprep.mubr.bf16.mxu0 %v3427
        %3523 = vmatmul.mubr.bf16.gmra.mrb[0].mxu0 %v3294
        %v3524 = vpop.f32.mrb[0].mxu0
        %v3525 = vadd.f32 %v3364, %v3524
        %v3526 = vpop.f32.mrb[0].mxu0
        %v3527 = vpop.f32.mrb[0].mxu0
        %v3528 = vadd.f32 %v3364, %v3527
        %v3529 = vpop.f32.mrb[0].mxu0
        %3530 = vmatprep.mubr.bf16.mxu0 %v3430
        %3531 = vmatmul.mubr.bf16.gmra.mrb[0].mxu0 %v3297
        %v3532 = vpop.f32.mrb[0].mxu0
        %v3533 = vadd.f32 %v3364, %v3532
        %v3534 = vpop.f32.mrb[0].mxu0
        %v3535 = vpop.f32.mrb[0].mxu0
        %v3536 = vadd.f32 %v3364, %v3535
        %v3537 = vpop.f32.mrb[0].mxu0
        %3538 = vmatprep.mubr.bf16.mxu0 %v3433
        %3539 = vmatmul.mubr.bf16.gmra.mrb[0].mxu0 %v3300
        %v3540 = vpop.f32.mrb[0].mxu0
        %v3541 = vadd.f32 %v3364, %v3540
        %v3542 = vpop.f32.mrb[0].mxu0
        %v3543 = vpop.f32.mrb[0].mxu0
        %v3544 = vadd.f32 %v3364, %v3543
        %v3545 = vpop.f32.mrb[0].mxu0
        %3546 = vmatprep.mubr.bf16.mxu0 %v3436
        %3547 = vmatmul.mubr.bf16.gmra.mrb[0].mxu0 %v3303
        %v3548 = vpop.f32.mrb[0].mxu0
        %v3549 = vadd.f32 %v3364, %v3548
        %v3550 = vpop.f32.mrb[0].mxu0
        %v3551 = vpop.f32.mrb[0].mxu0
        %v3552 = vadd.f32 %v3364, %v3551
        %v3553 = vpop.f32.mrb[0].mxu0
        %3554 = vmatprep.mubr.bf16.mxu0 %v3439
        %3555 = vmatmul.mubr.bf16.gmra.mrb[0].mxu0 %v3306
        %v3556 = vpop.f32.mrb[0].mxu0
        %v3557 = vadd.f32 %v3364, %v3556
        %v3558 = vpop.f32.mrb[0].mxu0
        %v3559 = vpop.f32.mrb[0].mxu0
        %v3560 = vadd.f32 %v3364, %v3559
        %v3561 = vpop.f32.mrb[0].mxu0
        %3562 = vmatprep.mubr.bf16.mxu0 %v3442
        %3563 = vmatmul.mubr.bf16.gmra.mrb[0].mxu0 %v3309
        %v3564 = vpop.f32.mrb[0].mxu0
        %v3565 = vadd.f32 %v3364, %v3564
        %v3566 = vpop.f32.mrb[0].mxu0
        %v3567 = vpop.f32.mrb[0].mxu0
        %v3568 = vadd.f32 %v3364, %v3567
        %v3569 = vpop.f32.mrb[0].mxu0
        %3570 = vmatprep.mubr.bf16.mxu0 %v3445
        %3571 = vmatmul.mubr.bf16.gmra.mrb[0].mxu0 %v3312
        %v3572 = vpop.f32.mrb[0].mxu0
        %v3573 = vadd.f32 %v3364, %v3572
        %v3574 = vpop.f32.mrb[0].mxu0
        %v3575 = vpop.f32.mrb[0].mxu0
        %v3576 = vadd.f32 %v3364, %v3575
        %v3577 = vpop.f32.mrb[0].mxu0
        %3578 = vmatprep.mubr.bf16.mxu0 %v3448
        %3579 = vmatmul.mubr.bf16.gmra.mrb[0].mxu0 %v3315
        %v3580 = vpop.f32.mrb[0].mxu0
        %v3581 = vadd.f32 %v3364, %v3580
        %v3582 = vpop.f32.mrb[0].mxu0
        %v3583 = vpop.f32.mrb[0].mxu0
        %v3584 = vadd.f32 %v3364, %v3583
        %v3585 = vpop.f32.mrb[0].mxu0
        %3586 = vmatprep.mubr.bf16.mxu0 %v3451
        %3587 = vmatmul.mubr.bf16.gmra.mrb[0].mxu0 %v3318
        %v3588 = vpop.f32.mrb[0].mxu0
        %v3589 = vadd.f32 %v3364, %v3588
        %v3590 = vpop.f32.mrb[0].mxu0
        %v3591 = vpop.f32.mrb[0].mxu0
        %v3592 = vadd.f32 %v3364, %v3591
        %v3593 = vpop.f32.mrb[0].mxu0
        %3594 = vmatprep.mubr.bf16.mxu0 %v3454
        %3595 = vmatmul.mubr.bf16.gmra.mrb[0].mxu0 %v3321
        %v3596 = vpop.f32.mrb[0].mxu0
        %v3597 = vadd.f32 %v3364, %v3596
        %v3598 = vpop.f32.mrb[0].mxu0
        %v3599 = vpop.f32.mrb[0].mxu0
        %v3600 = vadd.f32 %v3364, %v3599
        %v3601 = vpop.f32.mrb[0].mxu0
        %3602 = vmatprep.mubr.bf16.mxu0 %v3457
        %3603 = vmatmul.mubr.bf16.gmra.mrb[0].mxu0 %v3324
        %v3604 = vpop.f32.mrb[0].mxu0
        %v3605 = vadd.f32 %v3364, %v3604
        %v3606 = vpop.f32.mrb[0].mxu0
        %v3607 = vpop.f32.mrb[0].mxu0
        %v3608 = vadd.f32 %v3364, %v3607
        %v3609 = vpop.f32.mrb[0].mxu0
        %3610 = vmatprep.mubr.bf16.mxu0 %v3460
        %3611 = vmatmul.mubr.bf16.gmra.mrb[0].mxu0 %v3327
        %v3612 = vpop.f32.mrb[0].mxu0
        %v3613 = vadd.f32 %v3364, %v3612
        %v3614 = vpop.f32.mrb[0].mxu0
        %v3615 = vpop.f32.mrb[0].mxu0
        %v3616 = vadd.f32 %v3364, %v3615
        %v3617 = vpop.f32.mrb[0].mxu0
        %3618 = vmatprep.mubr.bf16.mxu0 %v3463
        %3619 = vmatmul.mubr.bf16.gmra.mrb[0].mxu0 %v3330
        %v3620 = vpop.f32.mrb[0].mxu0
        %v3621 = vadd.f32 %v3364, %v3620
        %v3622 = vpop.f32.mrb[0].mxu0
        %v3623 = vpop.f32.mrb[0].mxu0
        %v3624 = vadd.f32 %v3364, %v3623
        %v3625 = vpop.f32.mrb[0].mxu0
        %3626 = vmatprep.mubr.bf16.mxu0 %v3466
        %3627 = vmatmul.mubr.bf16.gmra.mrb[0].mxu0 %v3333
        %v3628 = vpop.f32.mrb[0].mxu0
        %v3629 = vadd.f32 %v3364, %v3628
        %v3630 = vpop.f32.mrb[0].mxu0
        %v3631 = vpop.f32.mrb[0].mxu0
        %v3632 = vadd.f32 %v3364, %v3631
        %v3633 = vpop.f32.mrb[0].mxu0
        %3634 = vmatprep.mubr.bf16.mxu0 %v3469
        %3635 = vmatmul.mubr.bf16.gmra.mrb[0].mxu0 %v3336
        %v3636 = vpop.f32.mrb[0].mxu0
        %v3637 = vadd.f32 %v3364, %v3636
        %v3638 = vpop.f32.mrb[0].mxu0
        %v3639 = vpop.f32.mrb[0].mxu0
        %v3640 = vadd.f32 %v3364, %v3639
        %v3641 = vpop.f32.mrb[0].mxu0
        %3642 = vmatprep.mubr.bf16.mxu0 %v3472
        %3643 = vmatmul.mubr.bf16.gmra.mrb[0].mxu0 %v3339
        %v3644 = vpop.f32.mrb[0].mxu0
        %v3645 = vadd.f32 %v3364, %v3644
        %v3646 = vpop.f32.mrb[0].mxu0
        %v3647 = vpop.f32.mrb[0].mxu0
        %v3648 = vadd.f32 %v3364, %v3647
        %v3649 = vpop.f32.mrb[0].mxu0
        %3650 = vdwg.mxu0
        %v3651 = vmax.f32 %v3509, 0.0
        %v3652 = vmax.f32 %v3512, 0.0
        %v3653 = vmax.f32 %v3517, 0.0
        %v3654 = vmax.f32 %v3520, 0.0
        %v3655 = vmax.f32 %v3525, 0.0
        %v3656 = vmax.f32 %v3528, 0.0
        %v3657 = vmax.f32 %v3533, 0.0
        %v3658 = vmax.f32 %v3536, 0.0
        %v3659 = vmax.f32 %v3541, 0.0
        %v3660 = vmax.f32 %v3544, 0.0
        %v3661 = vmax.f32 %v3549, 0.0
        %v3662 = vmax.f32 %v3552, 0.0
        %v3663 = vmax.f32 %v3557, 0.0
        %v3664 = vmax.f32 %v3560, 0.0
        %v3665 = vmax.f32 %v3565, 0.0
        %v3666 = vmax.f32 %v3568, 0.0
        %v3667 = vmax.f32 %v3573, 0.0
        %v3668 = vmax.f32 %v3576, 0.0
        %v3669 = vmax.f32 %v3581, 0.0
        %v3670 = vmax.f32 %v3584, 0.0
        %v3671 = vmax.f32 %v3589, 0.0
        %v3672 = vmax.f32 %v3592, 0.0
        %v3673 = vmax.f32 %v3597, 0.0
        %v3674 = vmax.f32 %v3600, 0.0
        %v3675 = vmax.f32 %v3605, 0.0
        %v3676 = vmax.f32 %v3608, 0.0
        %v3677 = vmax.f32 %v3613, 0.0
        %v3678 = vmax.f32 %v3616, 0.0
        %v3679 = vmax.f32 %v3621, 0.0
        %v3680 = vmax.f32 %v3624, 0.0
        %v3681 = vmax.f32 %v3629, 0.0
        %v3682 = vmax.f32 %v3632, 0.0
        %v3683 = vmax.f32 %v3637, 0.0
        %v3684 = vmax.f32 %v3640, 0.0
        %v3685 = vmax.f32 %v3645, 0.0
        %v3686 = vmax.f32 %v3648, 0.0
        %v3687 = vld [vmem:[%s21] sm:$0xff]
        %v3688 = vld [vmem:[%s21 + $0x8] sm:$0xff]
        %v3689 = vld [vmem:[%s21 + $0x10] sm:$0xff]
        %v3690 = vld [vmem:[%s21 + $0x18] sm:$0xff]
        %v3691 = vld [vmem:[%s21 + $0x20] sm:$0xff]
        %v3692 = vld [vmem:[%s21 + $0x28] sm:$0xff]
        %v3693 = vld [vmem:[%s21 + $0x30] sm:$0xff]
        %v3694 = vld [vmem:[%s21 + $0x38] sm:$0xff]
        %v3695 = vld [vmem:[%s21 + $0x40] sm:$0xff]
        %v3696 = vld [vmem:[%s21 + $0x48] sm:$0xff]
        %v3697 = vld [vmem:[%s21 + $0x50] sm:$0xff]
        %v3698 = vld [vmem:[%s21 + $0x58] sm:$0xff]
        %v3699 = vld [vmem:[%s21 + $0x60] sm:$0xff]
        %v3700 = vld [vmem:[%s21 + $0x68] sm:$0xff]
        %v3701 = vld [vmem:[%s21 + $0x70] sm:$0xff]
        %v3702 = vld [vmem:[%s21 + $0x78] sm:$0xff]
        %v3703 = vld [vmem:[%s21 + $0x80] sm:$0xff]
        %v3704 = vld [vmem:[%s21 + $0x88] sm:$0xff]
        %v3705 = vld [vmem:[%s21 + $0x90] sm:$0xff]
        %v3706 = vld [vmem:[%s21 + $0x98] sm:$0xff]
        %v3707 = vld [vmem:[%s21 + $0xa0] sm:$0xff]
        %v3708 = vld [vmem:[%s21 + $0xa8] sm:$0xff]
        %v3709 = vld [vmem:[%s21 + $0xb0] sm:$0xff]
        %v3710 = vld [vmem:[%s21 + $0xb8] sm:$0xff]
        %v3711 = vld [vmem:[%s21 + $0xc0] sm:$0xff]
        %v3712 = vld [vmem:[%s21 + $0xc8] sm:$0xff]
        %v3713 = vld [vmem:[%s21 + $0xd0] sm:$0xff]
        %v3714 = vld [vmem:[%s21 + $0xd8] sm:$0xff]
        %v3715 = vld [vmem:[%s21 + $0xe0] sm:$0xff]
        %v3716 = vld [vmem:[%s21 + $0xe8] sm:$0xff]
        %v3717 = vld [vmem:[%s21 + $0xf0] sm:$0xff]
        %v3718 = vld [vmem:[%s21 + $0xf8] sm:$0xff]
        %v3719 = vld [vmem:[%s21 + $0x100] sm:$0xff]
        %v3720 = vld [vmem:[%s21 + $0x108] sm:$0xff]
        %v3721 = vld [vmem:[%s21 + $0x110] sm:$0xff]
        %v3722 = vld [vmem:[%s21 + $0x118] sm:$0xff]
        %3724 = vset.pattern.permute.xlu0 0
        %3725 = vperm.xlu0 %3724, %v3687
        %v3726 = vpop.permute.xlu0 %3725
        %3729 = vset.pattern.permute.xlu0 0
        %3730 = vperm.xlu0 %3729, %v3688
        %v3731 = vpop.permute.xlu0 %3730
        %3734 = vset.pattern.permute.xlu0 0
        %3735 = vperm.xlu0 %3734, %v3689
        %v3736 = vpop.permute.xlu0 %3735
        %3739 = vset.pattern.permute.xlu0 0
        %3740 = vperm.xlu0 %3739, %v3690
        %v3741 = vpop.permute.xlu0 %3740
        %3744 = vset.pattern.permute.xlu0 0
        %3745 = vperm.xlu0 %3744, %v3691
        %v3746 = vpop.permute.xlu0 %3745
        %3749 = vset.pattern.permute.xlu0 0
        %3750 = vperm.xlu0 %3749, %v3692
        %v3751 = vpop.permute.xlu0 %3750
        %3754 = vset.pattern.permute.xlu0 0
        %3755 = vperm.xlu0 %3754, %v3693
        %v3756 = vpop.permute.xlu0 %3755
        %3759 = vset.pattern.permute.xlu0 0
        %3760 = vperm.xlu0 %3759, %v3694
        %v3761 = vpop.permute.xlu0 %3760
        %3764 = vset.pattern.permute.xlu0 0
        %3765 = vperm.xlu0 %3764, %v3695
        %v3766 = vpop.permute.xlu0 %3765
        %3769 = vset.pattern.permute.xlu0 0
        %3770 = vperm.xlu0 %3769, %v3696
        %v3771 = vpop.permute.xlu0 %3770
        %3774 = vset.pattern.permute.xlu0 0
        %3775 = vperm.xlu0 %3774, %v3697
        %v3776 = vpop.permute.xlu0 %3775
        %3779 = vset.pattern.permute.xlu0 0
        %3780 = vperm.xlu0 %3779, %v3698
        %v3781 = vpop.permute.xlu0 %3780
        %3784 = vset.pattern.permute.xlu0 0
        %3785 = vperm.xlu0 %3784, %v3699
        %v3786 = vpop.permute.xlu0 %3785
        %3789 = vset.pattern.permute.xlu0 0
        %3790 = vperm.xlu0 %3789, %v3700
        %v3791 = vpop.permute.xlu0 %3790
        %3794 = vset.pattern.permute.xlu0 0
        %3795 = vperm.xlu0 %3794, %v3701
        %v3796 = vpop.permute.xlu0 %3795
        %3799 = vset.pattern.permute.xlu0 0
        %3800 = vperm.xlu0 %3799, %v3702
        %v3801 = vpop.permute.xlu0 %3800
        %3804 = vset.pattern.permute.xlu0 0
        %3805 = vperm.xlu0 %3804, %v3703
        %v3806 = vpop.permute.xlu0 %3805
        %3809 = vset.pattern.permute.xlu0 0
        %3810 = vperm.xlu0 %3809, %v3704
        %v3811 = vpop.permute.xlu0 %3810
        %3814 = vset.pattern.permute.xlu0 0
        %3815 = vperm.xlu0 %3814, %v3705
        %v3816 = vpop.permute.xlu0 %3815
        %3819 = vset.pattern.permute.xlu0 0
        %3820 = vperm.xlu0 %3819, %v3706
        %v3821 = vpop.permute.xlu0 %3820
        %3824 = vset.pattern.permute.xlu0 0
        %3825 = vperm.xlu0 %3824, %v3707
        %v3826 = vpop.permute.xlu0 %3825
        %3829 = vset.pattern.permute.xlu0 0
        %3830 = vperm.xlu0 %3829, %v3708
        %v3831 = vpop.permute.xlu0 %3830
        %3834 = vset.pattern.permute.xlu0 0
        %3835 = vperm.xlu0 %3834, %v3709
        %v3836 = vpop.permute.xlu0 %3835
        %3839 = vset.pattern.permute.xlu0 0
        %3840 = vperm.xlu0 %3839, %v3710
        %v3841 = vpop.permute.xlu0 %3840
        %3844 = vset.pattern.permute.xlu0 0
        %3845 = vperm.xlu0 %3844, %v3711
        %v3846 = vpop.permute.xlu0 %3845
        %3849 = vset.pattern.permute.xlu0 0
        %3850 = vperm.xlu0 %3849, %v3712
        %v3851 = vpop.permute.xlu0 %3850
        %3854 = vset.pattern.permute.xlu0 0
        %3855 = vperm.xlu0 %3854, %v3713
        %v3856 = vpop.permute.xlu0 %3855
        %3859 = vset.pattern.permute.xlu0 0
        %3860 = vperm.xlu0 %3859, %v3714
        %v3861 = vpop.permute.xlu0 %3860
        %3864 = vset.pattern.permute.xlu0 0
        %3865 = vperm.xlu0 %3864, %v3715
        %v3866 = vpop.permute.xlu0 %3865
        %3869 = vset.pattern.permute.xlu0 0
        %3870 = vperm.xlu0 %3869, %v3716
        %v3871 = vpop.permute.xlu0 %3870
        %3874 = vset.pattern.permute.xlu0 0
        %3875 = vperm.xlu0 %3874, %v3717
        %v3876 = vpop.permute.xlu0 %3875
        %3879 = vset.pattern.permute.xlu0 0
        %3880 = vperm.xlu0 %3879, %v3718
        %v3881 = vpop.permute.xlu0 %3880
        %3884 = vset.pattern.permute.xlu0 0
        %3885 = vperm.xlu0 %3884, %v3719
        %v3886 = vpop.permute.xlu0 %3885
        %3889 = vset.pattern.permute.xlu0 0
        %3890 = vperm.xlu0 %3889, %v3720
        %v3891 = vpop.permute.xlu0 %3890
        %3894 = vset.pattern.permute.xlu0 0
        %3895 = vperm.xlu0 %3894, %v3721
        %v3896 = vpop.permute.xlu0 %3895
        %3899 = vset.pattern.permute.xlu0 0
        %3900 = vperm.xlu0 %3899, %v3722
        %v3901 = vpop.permute.xlu0 %3900
        %v3903 = vmul.f32 %v3651, %v3726
        %v3904 = vmul.f32 %v3652, %v3731
        %v3905 = vmul.f32 %v3653, %v3736
        %v3906 = vmul.f32 %v3654, %v3741
        %v3907 = vmul.f32 %v3655, %v3746
        %v3908 = vmul.f32 %v3656, %v3751
        %v3909 = vmul.f32 %v3657, %v3756
        %v3910 = vmul.f32 %v3658, %v3761
        %v3911 = vmul.f32 %v3659, %v3766
        %v3912 = vmul.f32 %v3660, %v3771
        %v3913 = vmul.f32 %v3661, %v3776
        %v3914 = vmul.f32 %v3662, %v3781
        %v3915 = vmul.f32 %v3663, %v3786
        %v3916 = vmul.f32 %v3664, %v3791
        %v3917 = vmul.f32 %v3665, %v3796
        %v3918 = vmul.f32 %v3666, %v3801
        %v3919 = vmul.f32 %v3667, %v3806
        %v3920 = vmul.f32 %v3668, %v3811
        %v3921 = vmul.f32 %v3669, %v3816
        %v3922 = vmul.f32 %v3670, %v3821
        %v3923 = vmul.f32 %v3671, %v3826
        %v3924 = vmul.f32 %v3672, %v3831
        %v3925 = vmul.f32 %v3673, %v3836
        %v3926 = vmul.f32 %v3674, %v3841
        %v3927 = vmul.f32 %v3675, %v3846
        %v3928 = vmul.f32 %v3676, %v3851
        %v3929 = vmul.f32 %v3677, %v3856
        %v3930 = vmul.f32 %v3678, %v3861
        %v3931 = vmul.f32 %v3679, %v3866
        %v3932 = vmul.f32 %v3680, %v3871
        %v3933 = vmul.f32 %v3681, %v3876
        %v3934 = vmul.f32 %v3682, %v3881
        %v3935 = vmul.f32 %v3683, %v3886
        %v3936 = vmul.f32 %v3684, %v3891
        %v3937 = vmul.f32 %v3685, %v3896
        %v3938 = vmul.f32 %v3686, %v3901
        %v3939 = vpack.c.bf16 %v3904, %v3903
        %v3940 = vpack.c.bf16 %v3906, %v3905
        %v3941 = vpack.c.bf16 %v3908, %v3907
        %v3942 = vpack.c.bf16 %v3910, %v3909
        %v3943 = vpack.c.bf16 %v3912, %v3911
        %v3944 = vpack.c.bf16 %v3914, %v3913
        %v3945 = vpack.c.bf16 %v3916, %v3915
        %v3946 = vpack.c.bf16 %v3918, %v3917
        %v3947 = vpack.c.bf16 %v3920, %v3919
        %v3948 = vpack.c.bf16 %v3922, %v3921
        %v3949 = vpack.c.bf16 %v3924, %v3923
        %v3950 = vpack.c.bf16 %v3926, %v3925
        %v3951 = vpack.c.bf16 %v3928, %v3927
        %v3952 = vpack.c.bf16 %v3930, %v3929
        %v3953 = vpack.c.bf16 %v3932, %v3931
        %v3954 = vpack.c.bf16 %v3934, %v3933
        %v3955 = vpack.c.bf16 %v3936, %v3935
        %v3956 = vpack.c.bf16 %v3938, %v3937
        %v3975 = vunpack.c.l.b16 %v3939
        %v3976 = vunpack.c.h.b16 %v3939
        %v3977 = vunpack.c.l.b16 %v3940
        %v3978 = vunpack.c.h.b16 %v3940
        %v3979 = vunpack.c.l.b16 %v3941
        %v3980 = vunpack.c.h.b16 %v3941
        %v3981 = vunpack.c.l.b16 %v3942
        %v3982 = vunpack.c.h.b16 %v3942
        %v3983 = vunpack.c.l.b16 %v3943
        %v3984 = vunpack.c.h.b16 %v3943
        %v3985 = vunpack.c.l.b16 %v3944
        %v3986 = vunpack.c.h.b16 %v3944
        %v3987 = vunpack.c.l.b16 %v3945
        %v3988 = vunpack.c.h.b16 %v3945
        %v3989 = vunpack.c.l.b16 %v3946
        %v3990 = vunpack.c.h.b16 %v3946
        %v3991 = vunpack.c.l.b16 %v3947
        %v3992 = vunpack.c.h.b16 %v3947
        %v3993 = vunpack.c.l.b16 %v3948
        %v3994 = vunpack.c.h.b16 %v3948
        %v3995 = vunpack.c.l.b16 %v3949
        %v3996 = vunpack.c.h.b16 %v3949
        %v3997 = vunpack.c.l.b16 %v3950
        %v3998 = vunpack.c.h.b16 %v3950
        %v3999 = vunpack.c.l.b16 %v3951
        %v4000 = vunpack.c.h.b16 %v3951
        %v4001 = vunpack.c.l.b16 %v3952
        %v4002 = vunpack.c.h.b16 %v3952
        %v4003 = vunpack.c.l.b16 %v3953
        %v4004 = vunpack.c.h.b16 %v3953
        %v4005 = vunpack.c.l.b16 %v3954
        %v4006 = vunpack.c.h.b16 %v3954
        %v4007 = vunpack.c.l.b16 %v3955
        %v4008 = vunpack.c.h.b16 %v3955
        %v4009 = vunpack.c.l.b16 %v3956
        %v4010 = vunpack.c.h.b16 %v3956
        %v4011 = vpack.c.b16 %v3975, %v3975
        %v4012 = vpack.c.b16 %v3976, %v3976
        %v4013 = vpack.c.b16 %v3977, %v3977
        %v4014 = vpack.c.b16 %v3978, %v3978
        %v4015 = vpack.c.b16 %v3979, %v3979
        %v4016 = vpack.c.b16 %v3980, %v3980
        %v4017 = vpack.c.b16 %v3981, %v3981
        %v4018 = vpack.c.b16 %v3982, %v3982
        %v4019 = vpack.c.b16 %v3983, %v3983
        %v4020 = vpack.c.b16 %v3984, %v3984
        %v4021 = vpack.c.b16 %v3985, %v3985
        %v4022 = vpack.c.b16 %v3986, %v3986
        %v4023 = vpack.c.b16 %v3987, %v3987
        %v4024 = vpack.c.b16 %v3988, %v3988
        %v4025 = vpack.c.b16 %v3989, %v3989
        %v4026 = vpack.c.b16 %v3990, %v3990
        %v4027 = vpack.c.b16 %v3991, %v3991
        %v4028 = vpack.c.b16 %v3992, %v3992
        %v4029 = vpack.c.b16 %v3993, %v3993
        %v4030 = vpack.c.b16 %v3994, %v3994
        %v4031 = vpack.c.b16 %v3995, %v3995
        %v4032 = vpack.c.b16 %v3996, %v3996
        %v4033 = vpack.c.b16 %v3997, %v3997
        %v4034 = vpack.c.b16 %v3998, %v3998
        %v4035 = vpack.c.b16 %v3999, %v3999
        %v4036 = vpack.c.b16 %v4000, %v4000
        %v4037 = vpack.c.b16 %v4001, %v4001
        %v4038 = vpack.c.b16 %v4002, %v4002
        %v4039 = vpack.c.b16 %v4003, %v4003
        %v4040 = vpack.c.b16 %v4004, %v4004
        %v4041 = vpack.c.b16 %v4005, %v4005
        %v4042 = vpack.c.b16 %v4006, %v4006
        %v4043 = vpack.c.b16 %v4007, %v4007
        %v4044 = vpack.c.b16 %v4008, %v4008
        %v4045 = vpack.c.b16 %v4009, %v4009
        %v4046 = vpack.c.b16 %v4010, %v4010
        %v4048 = vshrl.u32 %v4011, 16
        %v4050 = vrot.slane %v4048, 6
        %v4051 = vshll.u32 %v4011, 16
        %v4053 = vrot.slane %v4051, 7
        %v4054 = vor.u32 %v4050, %v4053
        %v4055 = vrot.slane %v4054, 4
        %v4057 = vshrl.u32 %v4012, 16
        %v4059 = vrot.slane %v4057, 6
        %v4060 = vshll.u32 %v4012, 16
        %v4062 = vrot.slane %v4060, 7
        %v4063 = vor.u32 %v4059, %v4062
        %v4064 = vsel %vm1732, %v4055, %v4063
        %v4065 = vrot.slane %v4063, 4
        %v4067 = vshrl.u32 %v4013, 16
        %v4069 = vrot.slane %v4067, 6
        %v4070 = vshll.u32 %v4013, 16
        %v4072 = vrot.slane %v4070, 7
        %v4073 = vor.u32 %v4069, %v4072
        %v4074 = vsel %vm1732, %v4065, %v4073
        %v4075 = vrot.slane %v4073, 4
        %v4077 = vshrl.u32 %v4014, 16
        %v4079 = vrot.slane %v4077, 6
        %v4080 = vshll.u32 %v4014, 16
        %v4082 = vrot.slane %v4080, 7
        %v4083 = vor.u32 %v4079, %v4082
        %v4084 = vsel %vm1732, %v4075, %v4083
        %v4085 = vrot.slane %v4083, 4
        %v4087 = vshrl.u32 %v4015, 16
        %v4089 = vrot.slane %v4087, 6
        %v4090 = vshll.u32 %v4015, 16
        %v4092 = vrot.slane %v4090, 7
        %v4093 = vor.u32 %v4089, %v4092
        %v4094 = vsel %vm1732, %v4085, %v4093
        %v4095 = vrot.slane %v4093, 4
        %v4097 = vshrl.u32 %v4016, 16
        %v4099 = vrot.slane %v4097, 6
        %v4100 = vshll.u32 %v4016, 16
        %v4102 = vrot.slane %v4100, 7
        %v4103 = vor.u32 %v4099, %v4102
        %v4104 = vsel %vm1732, %v4095, %v4103
        %v4105 = vrot.slane %v4103, 4
        %v4107 = vshrl.u32 %v4017, 16
        %v4109 = vrot.slane %v4107, 6
        %v4110 = vshll.u32 %v4017, 16
        %v4112 = vrot.slane %v4110, 7
        %v4113 = vor.u32 %v4109, %v4112
        %v4114 = vsel %vm1732, %v4105, %v4113
        %v4115 = vrot.slane %v4113, 4
        %v4117 = vshrl.u32 %v4018, 16
        %v4119 = vrot.slane %v4117, 6
        %v4120 = vshll.u32 %v4018, 16
        %v4122 = vrot.slane %v4120, 7
        %v4123 = vor.u32 %v4119, %v4122
        %v4124 = vsel %vm1732, %v4115, %v4123
        %v4125 = vrot.slane %v4123, 4
        %v4127 = vshrl.u32 %v4019, 16
        %v4129 = vrot.slane %v4127, 6
        %v4130 = vshll.u32 %v4019, 16
        %v4132 = vrot.slane %v4130, 7
        %v4133 = vor.u32 %v4129, %v4132
        %v4134 = vsel %vm1732, %v4125, %v4133
        %v4135 = vrot.slane %v4133, 4
        %v4137 = vshrl.u32 %v4020, 16
        %v4139 = vrot.slane %v4137, 6
        %v4140 = vshll.u32 %v4020, 16
        %v4142 = vrot.slane %v4140, 7
        %v4143 = vor.u32 %v4139, %v4142
        %v4144 = vsel %vm1732, %v4135, %v4143
        %v4145 = vrot.slane %v4143, 4
        %v4147 = vshrl.u32 %v4021, 16
        %v4149 = vrot.slane %v4147, 6
        %v4150 = vshll.u32 %v4021, 16
        %v4152 = vrot.slane %v4150, 7
        %v4153 = vor.u32 %v4149, %v4152
        %v4154 = vsel %vm1732, %v4145, %v4153
        %v4155 = vrot.slane %v4153, 4
        %v4157 = vshrl.u32 %v4022, 16
        %v4159 = vrot.slane %v4157, 6
        %v4160 = vshll.u32 %v4022, 16
        %v4162 = vrot.slane %v4160, 7
        %v4163 = vor.u32 %v4159, %v4162
        %v4164 = vsel %vm1732, %v4155, %v4163
        %v4165 = vrot.slane %v4163, 4
        %v4167 = vshrl.u32 %v4023, 16
        %v4169 = vrot.slane %v4167, 6
        %v4170 = vshll.u32 %v4023, 16
        %v4172 = vrot.slane %v4170, 7
        %v4173 = vor.u32 %v4169, %v4172
        %v4174 = vsel %vm1732, %v4165, %v4173
        %v4175 = vrot.slane %v4173, 4
        %v4177 = vshrl.u32 %v4024, 16
        %v4179 = vrot.slane %v4177, 6
        %v4180 = vshll.u32 %v4024, 16
        %v4182 = vrot.slane %v4180, 7
        %v4183 = vor.u32 %v4179, %v4182
        %v4184 = vsel %vm1732, %v4175, %v4183
        %v4185 = vrot.slane %v4183, 4
        %v4187 = vshrl.u32 %v4025, 16
        %v4189 = vrot.slane %v4187, 6
        %v4190 = vshll.u32 %v4025, 16
        %v4192 = vrot.slane %v4190, 7
        %v4193 = vor.u32 %v4189, %v4192
        %v4194 = vsel %vm1732, %v4185, %v4193
        %v4195 = vrot.slane %v4193, 4
        %v4197 = vshrl.u32 %v4026, 16
        %v4199 = vrot.slane %v4197, 6
        %v4200 = vshll.u32 %v4026, 16
        %v4202 = vrot.slane %v4200, 7
        %v4203 = vor.u32 %v4199, %v4202
        %v4204 = vsel %vm1732, %v4195, %v4203
        %v4205 = vrot.slane %v4203, 4
        %v4207 = vshrl.u32 %v4027, 16
        %v4209 = vrot.slane %v4207, 6
        %v4210 = vshll.u32 %v4027, 16
        %v4212 = vrot.slane %v4210, 7
        %v4213 = vor.u32 %v4209, %v4212
        %v4214 = vsel %vm1732, %v4205, %v4213
        %v4215 = vrot.slane %v4213, 4
        %v4217 = vshrl.u32 %v4028, 16
        %v4219 = vrot.slane %v4217, 6
        %v4220 = vshll.u32 %v4028, 16
        %v4222 = vrot.slane %v4220, 7
        %v4223 = vor.u32 %v4219, %v4222
        %v4224 = vsel %vm1732, %v4215, %v4223
        %v4225 = vrot.slane %v4223, 4
        %v4227 = vshrl.u32 %v4029, 16
        %v4229 = vrot.slane %v4227, 6
        %v4230 = vshll.u32 %v4029, 16
        %v4232 = vrot.slane %v4230, 7
        %v4233 = vor.u32 %v4229, %v4232
        %v4234 = vsel %vm1732, %v4225, %v4233
        %v4235 = vrot.slane %v4233, 4
        %v4237 = vshrl.u32 %v4030, 16
        %v4239 = vrot.slane %v4237, 6
        %v4240 = vshll.u32 %v4030, 16
        %v4242 = vrot.slane %v4240, 7
        %v4243 = vor.u32 %v4239, %v4242
        %v4244 = vsel %vm1732, %v4235, %v4243
        %v4245 = vrot.slane %v4243, 4
        %v4247 = vshrl.u32 %v4031, 16
        %v4249 = vrot.slane %v4247, 6
        %v4250 = vshll.u32 %v4031, 16
        %v4252 = vrot.slane %v4250, 7
        %v4253 = vor.u32 %v4249, %v4252
        %v4254 = vsel %vm1732, %v4245, %v4253
        %v4255 = vrot.slane %v4253, 4
        %v4257 = vshrl.u32 %v4032, 16
        %v4259 = vrot.slane %v4257, 6
        %v4260 = vshll.u32 %v4032, 16
        %v4262 = vrot.slane %v4260, 7
        %v4263 = vor.u32 %v4259, %v4262
        %v4264 = vsel %vm1732, %v4255, %v4263
        %v4265 = vrot.slane %v4263, 4
        %v4267 = vshrl.u32 %v4033, 16
        %v4269 = vrot.slane %v4267, 6
        %v4270 = vshll.u32 %v4033, 16
        %v4272 = vrot.slane %v4270, 7
        %v4273 = vor.u32 %v4269, %v4272
        %v4274 = vsel %vm1732, %v4265, %v4273
        %v4275 = vrot.slane %v4273, 4
        %v4277 = vshrl.u32 %v4034, 16
        %v4279 = vrot.slane %v4277, 6
        %v4280 = vshll.u32 %v4034, 16
        %v4282 = vrot.slane %v4280, 7
        %v4283 = vor.u32 %v4279, %v4282
        %v4284 = vsel %vm1732, %v4275, %v4283
        %v4285 = vrot.slane %v4283, 4
        %v4287 = vshrl.u32 %v4035, 16
        %v4289 = vrot.slane %v4287, 6
        %v4290 = vshll.u32 %v4035, 16
        %v4292 = vrot.slane %v4290, 7
        %v4293 = vor.u32 %v4289, %v4292
        %v4294 = vsel %vm1732, %v4285, %v4293
        %v4295 = vrot.slane %v4293, 4
        %v4297 = vshrl.u32 %v4036, 16
        %v4299 = vrot.slane %v4297, 6
        %v4300 = vshll.u32 %v4036, 16
        %v4302 = vrot.slane %v4300, 7
        %v4303 = vor.u32 %v4299, %v4302
        %v4304 = vsel %vm1732, %v4295, %v4303
        %v4305 = vrot.slane %v4303, 4
        %v4307 = vshrl.u32 %v4037, 16
        %v4309 = vrot.slane %v4307, 6
        %v4310 = vshll.u32 %v4037, 16
        %v4312 = vrot.slane %v4310, 7
        %v4313 = vor.u32 %v4309, %v4312
        %v4314 = vsel %vm1732, %v4305, %v4313
        %v4315 = vrot.slane %v4313, 4
        %v4317 = vshrl.u32 %v4038, 16
        %v4319 = vrot.slane %v4317, 6
        %v4320 = vshll.u32 %v4038, 16
        %v4322 = vrot.slane %v4320, 7
        %v4323 = vor.u32 %v4319, %v4322
        %v4324 = vsel %vm1732, %v4315, %v4323
        %v4325 = vrot.slane %v4323, 4
        %v4327 = vshrl.u32 %v4039, 16
        %v4329 = vrot.slane %v4327, 6
        %v4330 = vshll.u32 %v4039, 16
        %v4332 = vrot.slane %v4330, 7
        %v4333 = vor.u32 %v4329, %v4332
        %v4334 = vsel %vm1732, %v4325, %v4333
        %v4335 = vrot.slane %v4333, 4
        %v4337 = vshrl.u32 %v4040, 16
        %v4339 = vrot.slane %v4337, 6
        %v4340 = vshll.u32 %v4040, 16
        %v4342 = vrot.slane %v4340, 7
        %v4343 = vor.u32 %v4339, %v4342
        %v4344 = vsel %vm1732, %v4335, %v4343
        %v4345 = vrot.slane %v4343, 4
        %v4347 = vshrl.u32 %v4041, 16
        %v4349 = vrot.slane %v4347, 6
        %v4350 = vshll.u32 %v4041, 16
        %v4352 = vrot.slane %v4350, 7
        %v4353 = vor.u32 %v4349, %v4352
        %v4354 = vsel %vm1732, %v4345, %v4353
        %v4355 = vrot.slane %v4353, 4
        %v4357 = vshrl.u32 %v4042, 16
        %v4359 = vrot.slane %v4357, 6
        %v4360 = vshll.u32 %v4042, 16
        %v4362 = vrot.slane %v4360, 7
        %v4363 = vor.u32 %v4359, %v4362
        %v4364 = vsel %vm1732, %v4355, %v4363
        %v4365 = vrot.slane %v4363, 4
        %v4367 = vshrl.u32 %v4043, 16
        %v4369 = vrot.slane %v4367, 6
        %v4370 = vshll.u32 %v4043, 16
        %v4372 = vrot.slane %v4370, 7
        %v4373 = vor.u32 %v4369, %v4372
        %v4374 = vsel %vm1732, %v4365, %v4373
        %v4375 = vrot.slane %v4373, 4
        %v4377 = vshrl.u32 %v4044, 16
        %v4379 = vrot.slane %v4377, 6
        %v4380 = vshll.u32 %v4044, 16
        %v4382 = vrot.slane %v4380, 7
        %v4383 = vor.u32 %v4379, %v4382
        %v4384 = vsel %vm1732, %v4375, %v4383
        %v4385 = vrot.slane %v4383, 4
        %v4387 = vshrl.u32 %v4045, 16
        %v4389 = vrot.slane %v4387, 6
        %v4390 = vshll.u32 %v4045, 16
        %v4392 = vrot.slane %v4390, 7
        %v4393 = vor.u32 %v4389, %v4392
        %v4394 = vsel %vm1732, %v4385, %v4393
        %v4395 = vrot.slane %v4393, 4
        %v4397 = vshrl.u32 %v4046, 16
        %v4399 = vrot.slane %v4397, 6
        %v4400 = vshll.u32 %v4046, 16
        %v4402 = vrot.slane %v4400, 7
        %v4403 = vor.u32 %v4399, %v4402
        %v4404 = vsel %vm1732, %v4395, %v4403
        %v4405 = vrot.slane %v4403, 4
        %v4443 = vld [vmem:[#allocation3 + $0x8] sm:$0xe]
        %v4444 = vsel %vm2131, %v4054, %v4443
        %4445 = vst [vmem:[#allocation3 + $0x8] sm:$0xe] %v4444
        %4446 = vst.msk [vmem:[#allocation3 + $0xc] sm:$0xf] %vm790, %v4064
        %4447 = vst.msk [vmem:[#allocation3 + $0x10] sm:$0xf] %vm790, %v4074
        %4448 = vst.msk [vmem:[#allocation3 + $0x14] sm:$0xf] %vm790, %v4084
        %4449 = vst.msk [vmem:[#allocation3 + $0x18] sm:$0xf] %vm790, %v4094
        %4450 = vst.msk [vmem:[#allocation3 + $0x1c] sm:$0xf] %vm790, %v4104
        %4451 = vst.msk [vmem:[#allocation3 + $0x20] sm:$0xf] %vm790, %v4114
        %4452 = vst.msk [vmem:[#allocation3 + $0x24] sm:$0xf] %vm790, %v4124
        %4453 = vst.msk [vmem:[#allocation3 + $0x28] sm:$0xf] %vm790, %v4134
        %4454 = vst.msk [vmem:[#allocation3 + $0x2c] sm:$0xf] %vm790, %v4144
        %4455 = vst.msk [vmem:[#allocation3 + $0x30] sm:$0xf] %vm790, %v4154
        %4456 = vst.msk [vmem:[#allocation3 + $0x34] sm:$0xf] %vm790, %v4164
        %4457 = vst.msk [vmem:[#allocation3 + $0x38] sm:$0xf] %vm790, %v4174
        %4458 = vst.msk [vmem:[#allocation3 + $0x3c] sm:$0xf] %vm790, %v4184
        %4459 = vst.msk [vmem:[#allocation3 + $0x40] sm:$0xf] %vm790, %v4194
        %4460 = vst.msk [vmem:[#allocation3 + $0x44] sm:$0xf] %vm790, %v4204
        %4461 = vst.msk [vmem:[#allocation3 + $0x48] sm:$0xf] %vm790, %v4214
        %4462 = vst.msk [vmem:[#allocation3 + $0x4c] sm:$0xf] %vm790, %v4224
        %4463 = vst.msk [vmem:[#allocation3 + $0x50] sm:$0xf] %vm790, %v4234
        %4464 = vst.msk [vmem:[#allocation3 + $0x54] sm:$0xf] %vm790, %v4244
        %4465 = vst.msk [vmem:[#allocation3 + $0x58] sm:$0xf] %vm790, %v4254
        %4466 = vst.msk [vmem:[#allocation3 + $0x5c] sm:$0xf] %vm790, %v4264
        %4467 = vst.msk [vmem:[#allocation3 + $0x60] sm:$0xf] %vm790, %v4274
        %4468 = vst.msk [vmem:[#allocation3 + $0x64] sm:$0xf] %vm790, %v4284
        %4469 = vst.msk [vmem:[#allocation3 + $0x68] sm:$0xf] %vm790, %v4294
        %4470 = vst.msk [vmem:[#allocation3 + $0x6c] sm:$0xf] %vm790, %v4304
        %4471 = vst.msk [vmem:[#allocation3 + $0x70] sm:$0xf] %vm790, %v4314
        %4472 = vst.msk [vmem:[#allocation3 + $0x74] sm:$0xf] %vm790, %v4324
        %4473 = vst.msk [vmem:[#allocation3 + $0x78] sm:$0xf] %vm790, %v4334
        %4474 = vst.msk [vmem:[#allocation3 + $0x7c] sm:$0xf] %vm790, %v4344
        %4475 = vst.msk [vmem:[#allocation3 + $0x80] sm:$0xf] %vm790, %v4354
        %4476 = vst.msk [vmem:[#allocation3 + $0x84] sm:$0xf] %vm790, %v4364
        %4477 = vst.msk [vmem:[#allocation3 + $0x88] sm:$0xf] %vm790, %v4374
        %4478 = vst.msk [vmem:[#allocation3 + $0x8c] sm:$0xf] %vm790, %v4384
        %4479 = vst.msk [vmem:[#allocation3 + $0x90] sm:$0xf] %vm790, %v4394
        %4480 = vst.msk [vmem:[#allocation3 + $0x94] sm:$0xf] %vm790, %v4404
        %v4481 = vld [vmem:[#allocation3 + $0x98] sm:$0x3]
        %v4482 = vsel %vm2171, %v4405, %v4481
        %4483 = vst [vmem:[#allocation3 + $0x98] sm:$0x3] %v4482
        %v4484 = vld [vmem:[#allocation3] sm:$0xf]
        %v4485 = vld [vmem:[#allocation3 + $0x4] sm:$0xf]
        %v4486 = vld [vmem:[#allocation3 + $0x8] sm:$0xf]
        %v4487 = vld [vmem:[#allocation3 + $0xc] sm:$0xf]
        %v4488 = vld [vmem:[#allocation3 + $0x10] sm:$0xf]
        %v4489 = vld [vmem:[#allocation3 + $0x14] sm:$0xf]
        %v4490 = vld [vmem:[#allocation3 + $0x18] sm:$0xf]
        %v4491 = vld [vmem:[#allocation3 + $0x1c] sm:$0xf]
        %v4492 = vld [vmem:[#allocation3 + $0x20] sm:$0xf]
        %v4493 = vld [vmem:[#allocation3 + $0x24] sm:$0xf]
        %v4494 = vld [vmem:[#allocation3 + $0x28] sm:$0xf]
        %v4495 = vld [vmem:[#allocation3 + $0x2c] sm:$0xf]
        %v4496 = vld [vmem:[#allocation3 + $0x30] sm:$0xf]
        %v4497 = vld [vmem:[#allocation3 + $0x34] sm:$0xf]
        %v4498 = vld [vmem:[#allocation3 + $0x38] sm:$0xf]
        %v4499 = vld [vmem:[#allocation3 + $0x3c] sm:$0xf]
        %v4500 = vld [vmem:[#allocation3 + $0x40] sm:$0xf]
        %v4501 = vld [vmem:[#allocation3 + $0x44] sm:$0xf]
        %v4502 = vld [vmem:[#allocation3 + $0x48] sm:$0xf]
        %v4503 = vld [vmem:[#allocation3 + $0x4c] sm:$0xf]
        %v4504 = vld [vmem:[#allocation3 + $0x50] sm:$0xf]
        %v4505 = vld [vmem:[#allocation3 + $0x54] sm:$0xf]
        %v4506 = vld [vmem:[#allocation3 + $0x58] sm:$0xf]
        %v4507 = vld [vmem:[#allocation3 + $0x5c] sm:$0xf]
        %v4508 = vld [vmem:[#allocation3 + $0x60] sm:$0xf]
        %v4509 = vld [vmem:[#allocation3 + $0x64] sm:$0xf]
        %v4510 = vld [vmem:[#allocation3 + $0x68] sm:$0xf]
        %v4511 = vld [vmem:[#allocation3 + $0x6c] sm:$0xf]
        %v4512 = vld [vmem:[#allocation3 + $0x70] sm:$0xf]
        %v4513 = vld [vmem:[#allocation3 + $0x74] sm:$0xf]
        %v4514 = vld [vmem:[#allocation3 + $0x78] sm:$0xf]
        %v4515 = vld [vmem:[#allocation3 + $0x7c] sm:$0xf]
        %v4516 = vld [vmem:[#allocation3 + $0x80] sm:$0xf]
        %v4517 = vld [vmem:[#allocation3 + $0x84] sm:$0xf]
        %v4518 = vld [vmem:[#allocation3 + $0x88] sm:$0xf]
        %v4519 = vld [vmem:[#allocation3 + $0x8c] sm:$0xf]
        %v4520 = vld [vmem:[#allocation3 + $0x90] sm:$0x1]
        %v4521 = vld [vmem:[#allocation3] sm:$0xe]
        %v4522 = vld [vmem:[#allocation3 + $0x8] sm:$0xe]
        %v4523 = vld [vmem:[#allocation3 + $0x90] sm:$0xf]
        %v4524 = vld [vmem:[#allocation3 + $0x94] sm:$0xf]
        %v4525 = vld [vmem:[#allocation3 + $0x98] sm:$0x1]
        %v4526 = vld [vmem:[#allocation3 + $0x98] sm:$0x3]
        %v4527 = vld [vmem:[#allocation3 + $0x8] sm:$0xc]
        %v4528 = vld [vmem:[#allocation3 + $0x10] sm:$0xc]
        %v4529 = vld [vmem:[#allocation3 + $0x98] sm:$0xf]
        %v4530 = vld [vmem:[#allocation3 + $0x9c] sm:$0xf]
        %v4531 = vld [vmem:[#allocation3 + $0xa0] sm:$0x3]
        %v4532 = vld [vmem:[#allocation3 + $0xa0] sm:$0x7]
        %v4533 = vld [vmem:[#allocation3 + $0x10] sm:$0x8]
        %v4570 = vunpack.c.l.b16 %v4484
        %v4571 = vunpack.c.l.b16 %v4485
        %v4572 = vunpack.c.l.b16 %v4486
        %v4573 = vunpack.c.l.b16 %v4487
        %v4574 = vunpack.c.l.b16 %v4488
        %v4575 = vunpack.c.l.b16 %v4489
        %v4576 = vunpack.c.l.b16 %v4490
        %v4577 = vunpack.c.l.b16 %v4491
        %v4578 = vunpack.c.l.b16 %v4492
        %v4579 = vunpack.c.l.b16 %v4493
        %v4580 = vunpack.c.l.b16 %v4494
        %v4581 = vunpack.c.l.b16 %v4495
        %v4582 = vunpack.c.l.b16 %v4496
        %v4583 = vunpack.c.l.b16 %v4497
        %v4584 = vunpack.c.l.b16 %v4498
        %v4585 = vunpack.c.l.b16 %v4499
        %v4586 = vunpack.c.l.b16 %v4500
        %v4587 = vunpack.c.l.b16 %v4501
        %v4588 = vunpack.c.l.b16 %v4502
        %v4589 = vunpack.c.l.b16 %v4503
        %v4590 = vunpack.c.l.b16 %v4504
        %v4591 = vunpack.c.l.b16 %v4505
        %v4592 = vunpack.c.l.b16 %v4506
        %v4593 = vunpack.c.l.b16 %v4507
        %v4594 = vunpack.c.l.b16 %v4508
        %v4595 = vunpack.c.l.b16 %v4509
        %v4596 = vunpack.c.l.b16 %v4510
        %v4597 = vunpack.c.l.b16 %v4511
        %v4598 = vunpack.c.l.b16 %v4512
        %v4599 = vunpack.c.l.b16 %v4513
        %v4600 = vunpack.c.l.b16 %v4514
        %v4601 = vunpack.c.l.b16 %v4515
        %v4602 = vunpack.c.l.b16 %v4516
        %v4603 = vunpack.c.l.b16 %v4517
        %v4604 = vunpack.c.l.b16 %v4518
        %v4605 = vunpack.c.l.b16 %v4519
        %v4606 = vpack.c.b16 %v4571, %v4570
        %v4607 = vpack.c.b16 %v4573, %v4572
        %v4608 = vpack.c.b16 %v4575, %v4574
        %v4609 = vpack.c.b16 %v4577, %v4576
        %v4610 = vpack.c.b16 %v4579, %v4578
        %v4611 = vpack.c.b16 %v4581, %v4580
        %v4612 = vpack.c.b16 %v4583, %v4582
        %v4613 = vpack.c.b16 %v4585, %v4584
        %v4614 = vpack.c.b16 %v4587, %v4586
        %v4615 = vpack.c.b16 %v4589, %v4588
        %v4616 = vpack.c.b16 %v4591, %v4590
        %v4617 = vpack.c.b16 %v4593, %v4592
        %v4618 = vpack.c.b16 %v4595, %v4594
        %v4619 = vpack.c.b16 %v4597, %v4596
        %v4620 = vpack.c.b16 %v4599, %v4598
        %v4621 = vpack.c.b16 %v4601, %v4600
        %v4622 = vpack.c.b16 %v4603, %v4602
        %v4623 = vpack.c.b16 %v4605, %v4604
        %v4625 = vunpack.c.l.b16 %v4520
        %v4626 = vpack.c.b16 %v4625, %v4625
        %v4628 = vshrl.u32 %v4606, 16
        %v4630 = vshll.u32 %v4606, 16
        %v4632 = vrot.slane %v4630, 1
        %v4633 = vor.u32 %v4628, %v4632
        %v4635 = vshll.u32 %v4607, 16
        %v4637 = vrot.slane %v4635, 1
        %v4638 = vsel %vm2318, %v4633, %v4637
        %v4639 = vshrl.u32 %v4607, 16
        %v4641 = vor.u32 %v4639, %v4637
        %v4643 = vshll.u32 %v4608, 16
        %v4645 = vrot.slane %v4643, 1
        %v4646 = vsel %vm2318, %v4641, %v4645
        %v4647 = vshrl.u32 %v4608, 16
        %v4649 = vor.u32 %v4647, %v4645
        %v4651 = vshll.u32 %v4609, 16
        %v4653 = vrot.slane %v4651, 1
        %v4654 = vsel %vm2318, %v4649, %v4653
        %v4655 = vshrl.u32 %v4609, 16
        %v4657 = vor.u32 %v4655, %v4653
        %v4659 = vshll.u32 %v4610, 16
        %v4661 = vrot.slane %v4659, 1
        %v4662 = vsel %vm2318, %v4657, %v4661
        %v4663 = vshrl.u32 %v4610, 16
        %v4665 = vor.u32 %v4663, %v4661
        %v4667 = vshll.u32 %v4611, 16
        %v4669 = vrot.slane %v4667, 1
        %v4670 = vsel %vm2318, %v4665, %v4669
        %v4671 = vshrl.u32 %v4611, 16
        %v4673 = vor.u32 %v4671, %v4669
        %v4675 = vshll.u32 %v4612, 16
        %v4677 = vrot.slane %v4675, 1
        %v4678 = vsel %vm2318, %v4673, %v4677
        %v4679 = vshrl.u32 %v4612, 16
        %v4681 = vor.u32 %v4679, %v4677
        %v4683 = vshll.u32 %v4613, 16
        %v4685 = vrot.slane %v4683, 1
        %v4686 = vsel %vm2318, %v4681, %v4685
        %v4687 = vshrl.u32 %v4613, 16
        %v4689 = vor.u32 %v4687, %v4685
        %v4691 = vshll.u32 %v4614, 16
        %v4693 = vrot.slane %v4691, 1
        %v4694 = vsel %vm2318, %v4689, %v4693
        %v4695 = vshrl.u32 %v4614, 16
        %v4697 = vor.u32 %v4695, %v4693
        %v4699 = vshll.u32 %v4615, 16
        %v4701 = vrot.slane %v4699, 1
        %v4702 = vsel %vm2318, %v4697, %v4701
        %v4703 = vshrl.u32 %v4615, 16
        %v4705 = vor.u32 %v4703, %v4701
        %v4707 = vshll.u32 %v4616, 16
        %v4709 = vrot.slane %v4707, 1
        %v4710 = vsel %vm2318, %v4705, %v4709
        %v4711 = vshrl.u32 %v4616, 16
        %v4713 = vor.u32 %v4711, %v4709
        %v4715 = vshll.u32 %v4617, 16
        %v4717 = vrot.slane %v4715, 1
        %v4718 = vsel %vm2318, %v4713, %v4717
        %v4719 = vshrl.u32 %v4617, 16
        %v4721 = vor.u32 %v4719, %v4717
        %v4723 = vshll.u32 %v4618, 16
        %v4725 = vrot.slane %v4723, 1
        %v4726 = vsel %vm2318, %v4721, %v4725
        %v4727 = vshrl.u32 %v4618, 16
        %v4729 = vor.u32 %v4727, %v4725
        %v4731 = vshll.u32 %v4619, 16
        %v4733 = vrot.slane %v4731, 1
        %v4734 = vsel %vm2318, %v4729, %v4733
        %v4735 = vshrl.u32 %v4619, 16
        %v4737 = vor.u32 %v4735, %v4733
        %v4739 = vshll.u32 %v4620, 16
        %v4741 = vrot.slane %v4739, 1
        %v4742 = vsel %vm2318, %v4737, %v4741
        %v4743 = vshrl.u32 %v4620, 16
        %v4745 = vor.u32 %v4743, %v4741
        %v4747 = vshll.u32 %v4621, 16
        %v4749 = vrot.slane %v4747, 1
        %v4750 = vsel %vm2318, %v4745, %v4749
        %v4751 = vshrl.u32 %v4621, 16
        %v4753 = vor.u32 %v4751, %v4749
        %v4755 = vshll.u32 %v4622, 16
        %v4757 = vrot.slane %v4755, 1
        %v4758 = vsel %vm2318, %v4753, %v4757
        %v4759 = vshrl.u32 %v4622, 16
        %v4761 = vor.u32 %v4759, %v4757
        %v4763 = vshll.u32 %v4623, 16
        %v4765 = vrot.slane %v4763, 1
        %v4766 = vsel %vm2318, %v4761, %v4765
        %v4767 = vshrl.u32 %v4623, 16
        %v4769 = vor.u32 %v4767, %v4765
        %v4771 = vshll.u32 %v4626, 16
        %v4773 = vrot.slane %v4771, 1
        %v4774 = vsel %vm2318, %v4769, %v4773
        %4775 = vrot.lane.b32.xlu0 %v4638, 16
        %v4776 = vpop.permute.xlu0 %4775
        %4777 = vrot.lane.b32.xlu0 %v4646, 16
        %v4778 = vpop.permute.xlu0 %4777
        %4779 = vrot.lane.b32.xlu0 %v4654, 16
        %v4780 = vpop.permute.xlu0 %4779
        %4781 = vrot.lane.b32.xlu0 %v4662, 16
        %v4782 = vpop.permute.xlu0 %4781
        %4783 = vrot.lane.b32.xlu0 %v4670, 16
        %v4784 = vpop.permute.xlu0 %4783
        %4785 = vrot.lane.b32.xlu0 %v4678, 16
        %v4786 = vpop.permute.xlu0 %4785
        %4787 = vrot.lane.b32.xlu0 %v4686, 16
        %v4788 = vpop.permute.xlu0 %4787
        %4789 = vrot.lane.b32.xlu0 %v4694, 16
        %v4790 = vpop.permute.xlu0 %4789
        %4791 = vrot.lane.b32.xlu0 %v4702, 16
        %v4792 = vpop.permute.xlu0 %4791
        %4793 = vrot.lane.b32.xlu0 %v4710, 16
        %v4794 = vpop.permute.xlu0 %4793
        %4795 = vrot.lane.b32.xlu0 %v4718, 16
        %v4796 = vpop.permute.xlu0 %4795
        %4797 = vrot.lane.b32.xlu0 %v4726, 16
        %v4798 = vpop.permute.xlu0 %4797
        %4799 = vrot.lane.b32.xlu0 %v4734, 16
        %v4800 = vpop.permute.xlu0 %4799
        %4801 = vrot.lane.b32.xlu0 %v4742, 16
        %v4802 = vpop.permute.xlu0 %4801
        %4803 = vrot.lane.b32.xlu0 %v4750, 16
        %v4804 = vpop.permute.xlu0 %4803
        %4805 = vrot.lane.b32.xlu0 %v4758, 16
        %v4806 = vpop.permute.xlu0 %4805
        %4807 = vrot.lane.b32.xlu0 %v4766, 16
        %v4808 = vpop.permute.xlu0 %4807
        %4809 = vrot.lane.b32.xlu0 %v4774, 16
        %v4810 = vpop.permute.xlu0 %4809
        %v4812 = vunpack.c.l.b16 %v4521
        %v4813 = vpack.c.b16 %v4571, %v4812
        %v4814 = vrot.slane %v4813, 1
        %v4815 = vrot.slane %v4607, 1
        %v4816 = vsel %vm2506, %v4814, %v4815
        %v4817 = vrot.slane %v4608, 1
        %v4818 = vsel %vm2506, %v4815, %v4817
        %v4819 = vrot.slane %v4609, 1
        %v4820 = vsel %vm2506, %v4817, %v4819
        %v4821 = vrot.slane %v4610, 1
        %v4822 = vsel %vm2506, %v4819, %v4821
        %v4823 = vrot.slane %v4611, 1
        %v4824 = vsel %vm2506, %v4821, %v4823
        %v4825 = vrot.slane %v4612, 1
        %v4826 = vsel %vm2506, %v4823, %v4825
        %v4827 = vrot.slane %v4613, 1
        %v4828 = vsel %vm2506, %v4825, %v4827
        %v4829 = vrot.slane %v4614, 1
        %v4830 = vsel %vm2506, %v4827, %v4829
        %v4831 = vrot.slane %v4615, 1
        %v4832 = vsel %vm2506, %v4829, %v4831
        %v4833 = vrot.slane %v4616, 1
        %v4834 = vsel %vm2506, %v4831, %v4833
        %v4835 = vrot.slane %v4617, 1
        %v4836 = vsel %vm2506, %v4833, %v4835
        %v4837 = vrot.slane %v4618, 1
        %v4838 = vsel %vm2506, %v4835, %v4837
        %v4839 = vrot.slane %v4619, 1
        %v4840 = vsel %vm2506, %v4837, %v4839
        %v4841 = vrot.slane %v4620, 1
        %v4842 = vsel %vm2506, %v4839, %v4841
        %v4843 = vrot.slane %v4621, 1
        %v4844 = vsel %vm2506, %v4841, %v4843
        %v4845 = vrot.slane %v4622, 1
        %v4846 = vsel %vm2506, %v4843, %v4845
        %v4847 = vrot.slane %v4623, 1
        %v4848 = vsel %vm2506, %v4845, %v4847
        %v4849 = vrot.slane %v4626, 1
        %v4850 = vsel %vm2506, %v4847, %v4849
        %4851 = vrot.lane.b32.xlu0 %v4816, 32
        %v4852 = vpop.permute.xlu0 %4851
        %4853 = vrot.lane.b32.xlu0 %v4818, 32
        %v4854 = vpop.permute.xlu0 %4853
        %4855 = vrot.lane.b32.xlu0 %v4820, 32
        %v4856 = vpop.permute.xlu0 %4855
        %4857 = vrot.lane.b32.xlu0 %v4822, 32
        %v4858 = vpop.permute.xlu0 %4857
        %4859 = vrot.lane.b32.xlu0 %v4824, 32
        %v4860 = vpop.permute.xlu0 %4859
        %4861 = vrot.lane.b32.xlu0 %v4826, 32
        %v4862 = vpop.permute.xlu0 %4861
        %4863 = vrot.lane.b32.xlu0 %v4828, 32
        %v4864 = vpop.permute.xlu0 %4863
        %4865 = vrot.lane.b32.xlu0 %v4830, 32
        %v4866 = vpop.permute.xlu0 %4865
        %4867 = vrot.lane.b32.xlu0 %v4832, 32
        %v4868 = vpop.permute.xlu0 %4867
        %4869 = vrot.lane.b32.xlu0 %v4834, 32
        %v4870 = vpop.permute.xlu0 %4869
        %4871 = vrot.lane.b32.xlu0 %v4836, 32
        %v4872 = vpop.permute.xlu0 %4871
        %4873 = vrot.lane.b32.xlu0 %v4838, 32
        %v4874 = vpop.permute.xlu0 %4873
        %4875 = vrot.lane.b32.xlu0 %v4840, 32
        %v4876 = vpop.permute.xlu0 %4875
        %4877 = vrot.lane.b32.xlu0 %v4842, 32
        %v4878 = vpop.permute.xlu0 %4877
        %4879 = vrot.lane.b32.xlu0 %v4844, 32
        %v4880 = vpop.permute.xlu0 %4879
        %4881 = vrot.lane.b32.xlu0 %v4846, 32
        %v4882 = vpop.permute.xlu0 %4881
        %4883 = vrot.lane.b32.xlu0 %v4848, 32
        %v4884 = vpop.permute.xlu0 %4883
        %4885 = vrot.lane.b32.xlu0 %v4850, 32
        %v4886 = vpop.permute.xlu0 %4885
        %v4891 = vunpack.c.l.b16 %v4522
        %v4892 = vunpack.c.l.b16 %v4523
        %v4893 = vunpack.c.l.b16 %v4524
        %v4894 = vunpack.c.l.b16 %v4525
        %v4895 = vpack.c.b16 %v4573, %v4891
        %v4896 = vpack.c.b16 %v4893, %v4892
        %v4897 = vpack.c.b16 %v4894, %v4894
        %v4898 = vrot.slane %v4895, 1
        %v4899 = vsel %vm2506, %v4898, %v4817
        %v4900 = vrot.slane %v4896, 1
        %v4901 = vsel %vm2506, %v4847, %v4900
        %v4902 = vrot.slane %v4897, 1
        %v4903 = vsel %vm2506, %v4900, %v4902
        %4904 = vrot.lane.b32.xlu0 %v4899, 48
        %v4905 = vpop.permute.xlu0 %4904
        %4906 = vrot.lane.b32.xlu0 %v4820, 48
        %v4907 = vpop.permute.xlu0 %4906
        %4908 = vrot.lane.b32.xlu0 %v4822, 48
        %v4909 = vpop.permute.xlu0 %4908
        %4910 = vrot.lane.b32.xlu0 %v4824, 48
        %v4911 = vpop.permute.xlu0 %4910
        %4912 = vrot.lane.b32.xlu0 %v4826, 48
        %v4913 = vpop.permute.xlu0 %4912
        %4914 = vrot.lane.b32.xlu0 %v4828, 48
        %v4915 = vpop.permute.xlu0 %4914
        %4916 = vrot.lane.b32.xlu0 %v4830, 48
        %v4917 = vpop.permute.xlu0 %4916
        %4918 = vrot.lane.b32.xlu0 %v4832, 48
        %v4919 = vpop.permute.xlu0 %4918
        %4920 = vrot.lane.b32.xlu0 %v4834, 48
        %v4921 = vpop.permute.xlu0 %4920
        %4922 = vrot.lane.b32.xlu0 %v4836, 48
        %v4923 = vpop.permute.xlu0 %4922
        %4924 = vrot.lane.b32.xlu0 %v4838, 48
        %v4925 = vpop.permute.xlu0 %4924
        %4926 = vrot.lane.b32.xlu0 %v4840, 48
        %v4927 = vpop.permute.xlu0 %4926
        %4928 = vrot.lane.b32.xlu0 %v4842, 48
        %v4929 = vpop.permute.xlu0 %4928
        %4930 = vrot.lane.b32.xlu0 %v4844, 48
        %v4931 = vpop.permute.xlu0 %4930
        %4932 = vrot.lane.b32.xlu0 %v4846, 48
        %v4933 = vpop.permute.xlu0 %4932
        %4934 = vrot.lane.b32.xlu0 %v4848, 48
        %v4935 = vpop.permute.xlu0 %4934
        %4936 = vrot.lane.b32.xlu0 %v4901, 48
        %v4937 = vpop.permute.xlu0 %4936
        %4938 = vrot.lane.b32.xlu0 %v4903, 48
        %v4939 = vpop.permute.xlu0 %4938
        %v4941 = vunpack.c.l.b16 %v4526
        %v4942 = vpack.c.b16 %v4941, %v4941
        %v4944 = vshrl.u32 %v4895, 16
        %v4946 = vrot.slane %v4944, 1
        %v4947 = vshll.u32 %v4895, 16
        %v4949 = vrot.slane %v4947, 2
        %v4950 = vor.u32 %v4946, %v4949
        %v4951 = vrot.slane %v4647, 1
        %v4952 = vrot.slane %v4643, 2
        %v4953 = vor.u32 %v4951, %v4952
        %v4954 = vsel %vm2636, %v4950, %v4953
        %v4955 = vrot.slane %v4655, 1
        %v4956 = vrot.slane %v4651, 2
        %v4957 = vor.u32 %v4955, %v4956
        %v4958 = vsel %vm2636, %v4953, %v4957
        %v4959 = vrot.slane %v4663, 1
        %v4960 = vrot.slane %v4659, 2
        %v4961 = vor.u32 %v4959, %v4960
        %v4962 = vsel %vm2636, %v4957, %v4961
        %v4963 = vrot.slane %v4671, 1
        %v4964 = vrot.slane %v4667, 2
        %v4965 = vor.u32 %v4963, %v4964
        %v4966 = vsel %vm2636, %v4961, %v4965
        %v4967 = vrot.slane %v4679, 1
        %v4968 = vrot.slane %v4675, 2
        %v4969 = vor.u32 %v4967, %v4968
        %v4970 = vsel %vm2636, %v4965, %v4969
        %v4971 = vrot.slane %v4687, 1
        %v4972 = vrot.slane %v4683, 2
        %v4973 = vor.u32 %v4971, %v4972
        %v4974 = vsel %vm2636, %v4969, %v4973
        %v4975 = vrot.slane %v4695, 1
        %v4976 = vrot.slane %v4691, 2
        %v4977 = vor.u32 %v4975, %v4976
        %v4978 = vsel %vm2636, %v4973, %v4977
        %v4979 = vrot.slane %v4703, 1
        %v4980 = vrot.slane %v4699, 2
        %v4981 = vor.u32 %v4979, %v4980
        %v4982 = vsel %vm2636, %v4977, %v4981
        %v4983 = vrot.slane %v4711, 1
        %v4984 = vrot.slane %v4707, 2
        %v4985 = vor.u32 %v4983, %v4984
        %v4986 = vsel %vm2636, %v4981, %v4985
        %v4987 = vrot.slane %v4719, 1
        %v4988 = vrot.slane %v4715, 2
        %v4989 = vor.u32 %v4987, %v4988
        %v4990 = vsel %vm2636, %v4985, %v4989
        %v4991 = vrot.slane %v4727, 1
        %v4992 = vrot.slane %v4723, 2
        %v4993 = vor.u32 %v4991, %v4992
        %v4994 = vsel %vm2636, %v4989, %v4993
        %v4995 = vrot.slane %v4735, 1
        %v4996 = vrot.slane %v4731, 2
        %v4997 = vor.u32 %v4995, %v4996
        %v4998 = vsel %vm2636, %v4993, %v4997
        %v4999 = vrot.slane %v4743, 1
        %v5000 = vrot.slane %v4739, 2
        %v5001 = vor.u32 %v4999, %v5000
        %v5002 = vsel %vm2636, %v4997, %v5001
        %v5003 = vrot.slane %v4751, 1
        %v5004 = vrot.slane %v4747, 2
        %v5005 = vor.u32 %v5003, %v5004
        %v5006 = vsel %vm2636, %v5001, %v5005
        %v5007 = vrot.slane %v4759, 1
        %v5008 = vrot.slane %v4755, 2
        %v5009 = vor.u32 %v5007, %v5008
        %v5010 = vsel %vm2636, %v5005, %v5009
        %v5011 = vrot.slane %v4767, 1
        %v5012 = vrot.slane %v4763, 2
        %v5013 = vor.u32 %v5011, %v5012
        %v5014 = vsel %vm2636, %v5009, %v5013
        %v5016 = vshrl.u32 %v4896, 16
        %v5018 = vrot.slane %v5016, 1
        %v5019 = vshll.u32 %v4896, 16
        %v5021 = vrot.slane %v5019, 2
        %v5022 = vor.u32 %v5018, %v5021
        %v5023 = vsel %vm2636, %v5013, %v5022
        %v5025 = vshrl.u32 %v4942, 16
        %v5027 = vrot.slane %v5025, 1
        %v5028 = vshll.u32 %v4942, 16
        %v5030 = vrot.slane %v5028, 2
        %v5031 = vor.u32 %v5027, %v5030
        %v5032 = vsel %vm2636, %v5022, %v5031
        %5033 = vrot.lane.b32.xlu0 %v4954, 64
        %v5034 = vpop.permute.xlu0 %5033
        %5035 = vrot.lane.b32.xlu0 %v4958, 64
        %v5036 = vpop.permute.xlu0 %5035
        %5037 = vrot.lane.b32.xlu0 %v4962, 64
        %v5038 = vpop.permute.xlu0 %5037
        %5039 = vrot.lane.b32.xlu0 %v4966, 64
        %v5040 = vpop.permute.xlu0 %5039
        %5041 = vrot.lane.b32.xlu0 %v4970, 64
        %v5042 = vpop.permute.xlu0 %5041
        %5043 = vrot.lane.b32.xlu0 %v4974, 64
        %v5044 = vpop.permute.xlu0 %5043
        %5045 = vrot.lane.b32.xlu0 %v4978, 64
        %v5046 = vpop.permute.xlu0 %5045
        %5047 = vrot.lane.b32.xlu0 %v4982, 64
        %v5048 = vpop.permute.xlu0 %5047
        %5049 = vrot.lane.b32.xlu0 %v4986, 64
        %v5050 = vpop.permute.xlu0 %5049
        %5051 = vrot.lane.b32.xlu0 %v4990, 64
        %v5052 = vpop.permute.xlu0 %5051
        %5053 = vrot.lane.b32.xlu0 %v4994, 64
        %v5054 = vpop.permute.xlu0 %5053
        %5055 = vrot.lane.b32.xlu0 %v4998, 64
        %v5056 = vpop.permute.xlu0 %5055
        %5057 = vrot.lane.b32.xlu0 %v5002, 64
        %v5058 = vpop.permute.xlu0 %5057
        %5059 = vrot.lane.b32.xlu0 %v5006, 64
        %v5060 = vpop.permute.xlu0 %5059
        %5061 = vrot.lane.b32.xlu0 %v5010, 64
        %v5062 = vpop.permute.xlu0 %5061
        %5063 = vrot.lane.b32.xlu0 %v5014, 64
        %v5064 = vpop.permute.xlu0 %5063
        %5065 = vrot.lane.b32.xlu0 %v5023, 64
        %v5066 = vpop.permute.xlu0 %5065
        %5067 = vrot.lane.b32.xlu0 %v5032, 64
        %v5068 = vpop.permute.xlu0 %5067
        %v5070 = vunpack.c.l.b16 %v4527
        %v5071 = vpack.c.b16 %v4573, %v5070
        %v5072 = vrot.slane %v5071, 2
        %v5073 = vrot.slane %v4608, 2
        %v5074 = vsel %vm2766, %v5072, %v5073
        %v5075 = vrot.slane %v4609, 2
        %v5076 = vsel %vm2766, %v5073, %v5075
        %v5077 = vrot.slane %v4610, 2
        %v5078 = vsel %vm2766, %v5075, %v5077
        %v5079 = vrot.slane %v4611, 2
        %v5080 = vsel %vm2766, %v5077, %v5079
        %v5081 = vrot.slane %v4612, 2
        %v5082 = vsel %vm2766, %v5079, %v5081
        %v5083 = vrot.slane %v4613, 2
        %v5084 = vsel %vm2766, %v5081, %v5083
        %v5085 = vrot.slane %v4614, 2
        %v5086 = vsel %vm2766, %v5083, %v5085
        %v5087 = vrot.slane %v4615, 2
        %v5088 = vsel %vm2766, %v5085, %v5087
        %v5089 = vrot.slane %v4616, 2
        %v5090 = vsel %vm2766, %v5087, %v5089
        %v5091 = vrot.slane %v4617, 2
        %v5092 = vsel %vm2766, %v5089, %v5091
        %v5093 = vrot.slane %v4618, 2
        %v5094 = vsel %vm2766, %v5091, %v5093
        %v5095 = vrot.slane %v4619, 2
        %v5096 = vsel %vm2766, %v5093, %v5095
        %v5097 = vrot.slane %v4620, 2
        %v5098 = vsel %vm2766, %v5095, %v5097
        %v5099 = vrot.slane %v4621, 2
        %v5100 = vsel %vm2766, %v5097, %v5099
        %v5101 = vrot.slane %v4622, 2
        %v5102 = vsel %vm2766, %v5099, %v5101
        %v5103 = vrot.slane %v4623, 2
        %v5104 = vsel %vm2766, %v5101, %v5103
        %v5105 = vrot.slane %v4896, 2
        %v5106 = vsel %vm2766, %v5103, %v5105
        %v5107 = vrot.slane %v4942, 2
        %v5108 = vsel %vm2766, %v5105, %v5107
        %5109 = vrot.lane.b32.xlu0 %v5074, 80
        %v5110 = vpop.permute.xlu0 %5109
        %5111 = vrot.lane.b32.xlu0 %v5076, 80
        %v5112 = vpop.permute.xlu0 %5111
        %5113 = vrot.lane.b32.xlu0 %v5078, 80
        %v5114 = vpop.permute.xlu0 %5113
        %5115 = vrot.lane.b32.xlu0 %v5080, 80
        %v5116 = vpop.permute.xlu0 %5115
        %5117 = vrot.lane.b32.xlu0 %v5082, 80
        %v5118 = vpop.permute.xlu0 %5117
        %5119 = vrot.lane.b32.xlu0 %v5084, 80
        %v5120 = vpop.permute.xlu0 %5119
        %5121 = vrot.lane.b32.xlu0 %v5086, 80
        %v5122 = vpop.permute.xlu0 %5121
        %5123 = vrot.lane.b32.xlu0 %v5088, 80
        %v5124 = vpop.permute.xlu0 %5123
        %5125 = vrot.lane.b32.xlu0 %v5090, 80
        %v5126 = vpop.permute.xlu0 %5125
        %5127 = vrot.lane.b32.xlu0 %v5092, 80
        %v5128 = vpop.permute.xlu0 %5127
        %5129 = vrot.lane.b32.xlu0 %v5094, 80
        %v5130 = vpop.permute.xlu0 %5129
        %5131 = vrot.lane.b32.xlu0 %v5096, 80
        %v5132 = vpop.permute.xlu0 %5131
        %5133 = vrot.lane.b32.xlu0 %v5098, 80
        %v5134 = vpop.permute.xlu0 %5133
        %5135 = vrot.lane.b32.xlu0 %v5100, 80
        %v5136 = vpop.permute.xlu0 %5135
        %5137 = vrot.lane.b32.xlu0 %v5102, 80
        %v5138 = vpop.permute.xlu0 %5137
        %5139 = vrot.lane.b32.xlu0 %v5104, 80
        %v5140 = vpop.permute.xlu0 %5139
        %5141 = vrot.lane.b32.xlu0 %v5106, 80
        %v5142 = vpop.permute.xlu0 %5141
        %5143 = vrot.lane.b32.xlu0 %v5108, 80
        %v5144 = vpop.permute.xlu0 %5143
        %v5149 = vunpack.c.l.b16 %v4528
        %v5150 = vunpack.c.l.b16 %v4529
        %v5151 = vunpack.c.l.b16 %v4530
        %v5152 = vunpack.c.l.b16 %v4531
        %v5153 = vpack.c.b16 %v4575, %v5149
        %v5154 = vpack.c.b16 %v5151, %v5150
        %v5155 = vpack.c.b16 %v5152, %v5152
        %v5156 = vrot.slane %v5153, 2
        %v5157 = vsel %vm2766, %v5156, %v5075
        %v5158 = vrot.slane %v5154, 2
        %v5159 = vsel %vm2766, %v5105, %v5158
        %v5160 = vrot.slane %v5155, 2
        %v5161 = vsel %vm2766, %v5158, %v5160
        %5162 = vrot.lane.b32.xlu0 %v5157, 96
        %v5163 = vpop.permute.xlu0 %5162
        %5164 = vrot.lane.b32.xlu0 %v5078, 96
        %v5165 = vpop.permute.xlu0 %5164
        %5166 = vrot.lane.b32.xlu0 %v5080, 96
        %v5167 = vpop.permute.xlu0 %5166
        %5168 = vrot.lane.b32.xlu0 %v5082, 96
        %v5169 = vpop.permute.xlu0 %5168
        %5170 = vrot.lane.b32.xlu0 %v5084, 96
        %v5171 = vpop.permute.xlu0 %5170
        %5172 = vrot.lane.b32.xlu0 %v5086, 96
        %v5173 = vpop.permute.xlu0 %5172
        %5174 = vrot.lane.b32.xlu0 %v5088, 96
        %v5175 = vpop.permute.xlu0 %5174
        %5176 = vrot.lane.b32.xlu0 %v5090, 96
        %v5177 = vpop.permute.xlu0 %5176
        %5178 = vrot.lane.b32.xlu0 %v5092, 96
        %v5179 = vpop.permute.xlu0 %5178
        %5180 = vrot.lane.b32.xlu0 %v5094, 96
        %v5181 = vpop.permute.xlu0 %5180
        %5182 = vrot.lane.b32.xlu0 %v5096, 96
        %v5183 = vpop.permute.xlu0 %5182
        %5184 = vrot.lane.b32.xlu0 %v5098, 96
        %v5185 = vpop.permute.xlu0 %5184
        %5186 = vrot.lane.b32.xlu0 %v5100, 96
        %v5187 = vpop.permute.xlu0 %5186
        %5188 = vrot.lane.b32.xlu0 %v5102, 96
        %v5189 = vpop.permute.xlu0 %5188
        %5190 = vrot.lane.b32.xlu0 %v5104, 96
        %v5191 = vpop.permute.xlu0 %5190
        %5192 = vrot.lane.b32.xlu0 %v5106, 96
        %v5193 = vpop.permute.xlu0 %5192
        %5194 = vrot.lane.b32.xlu0 %v5159, 96
        %v5195 = vpop.permute.xlu0 %5194
        %5196 = vrot.lane.b32.xlu0 %v5161, 96
        %v5197 = vpop.permute.xlu0 %5196
        %v5199 = vunpack.c.l.b16 %v4532
        %v5200 = vpack.c.b16 %v5199, %v5199
        %v5202 = vshrl.u32 %v5153, 16
        %v5204 = vrot.slane %v5202, 2
        %v5205 = vshll.u32 %v5153, 16
        %v5207 = vrot.slane %v5205, 3
        %v5208 = vor.u32 %v5204, %v5207
        %v5209 = vrot.slane %v4655, 2
        %v5210 = vrot.slane %v4651, 3
        %v5211 = vor.u32 %v5209, %v5210
        %v5212 = vsel %vm2896, %v5208, %v5211
        %v5213 = vrot.slane %v4663, 2
        %v5214 = vrot.slane %v4659, 3
        %v5215 = vor.u32 %v5213, %v5214
        %v5216 = vsel %vm2896, %v5211, %v5215
        %v5217 = vrot.slane %v4671, 2
        %v5218 = vrot.slane %v4667, 3
        %v5219 = vor.u32 %v5217, %v5218
        %v5220 = vsel %vm2896, %v5215, %v5219
        %v5221 = vrot.slane %v4679, 2
        %v5222 = vrot.slane %v4675, 3
        %v5223 = vor.u32 %v5221, %v5222
        %v5224 = vsel %vm2896, %v5219, %v5223
        %v5225 = vrot.slane %v4687, 2
        %v5226 = vrot.slane %v4683, 3
        %v5227 = vor.u32 %v5225, %v5226
        %v5228 = vsel %vm2896, %v5223, %v5227
        %v5229 = vrot.slane %v4695, 2
        %v5230 = vrot.slane %v4691, 3
        %v5231 = vor.u32 %v5229, %v5230
        %v5232 = vsel %vm2896, %v5227, %v5231
        %v5233 = vrot.slane %v4703, 2
        %v5234 = vrot.slane %v4699, 3
        %v5235 = vor.u32 %v5233, %v5234
        %v5236 = vsel %vm2896, %v5231, %v5235
        %v5237 = vrot.slane %v4711, 2
        %v5238 = vrot.slane %v4707, 3
        %v5239 = vor.u32 %v5237, %v5238
        %v5240 = vsel %vm2896, %v5235, %v5239
        %v5241 = vrot.slane %v4719, 2
        %v5242 = vrot.slane %v4715, 3
        %v5243 = vor.u32 %v5241, %v5242
        %v5244 = vsel %vm2896, %v5239, %v5243
        %v5245 = vrot.slane %v4727, 2
        %v5246 = vrot.slane %v4723, 3
        %v5247 = vor.u32 %v5245, %v5246
        %v5248 = vsel %vm2896, %v5243, %v5247
        %v5249 = vrot.slane %v4735, 2
        %v5250 = vrot.slane %v4731, 3
        %v5251 = vor.u32 %v5249, %v5250
        %v5252 = vsel %vm2896, %v5247, %v5251
        %v5253 = vrot.slane %v4743, 2
        %v5254 = vrot.slane %v4739, 3
        %v5255 = vor.u32 %v5253, %v5254
        %v5256 = vsel %vm2896, %v5251, %v5255
        %v5257 = vrot.slane %v4751, 2
        %v5258 = vrot.slane %v4747, 3
        %v5259 = vor.u32 %v5257, %v5258
        %v5260 = vsel %vm2896, %v5255, %v5259
        %v5261 = vrot.slane %v4759, 2
        %v5262 = vrot.slane %v4755, 3
        %v5263 = vor.u32 %v5261, %v5262
        %v5264 = vsel %vm2896, %v5259, %v5263
        %v5265 = vrot.slane %v4767, 2
        %v5266 = vrot.slane %v4763, 3
        %v5267 = vor.u32 %v5265, %v5266
        %v5268 = vsel %vm2896, %v5263, %v5267
        %v5269 = vrot.slane %v5016, 2
        %v5270 = vrot.slane %v5019, 3
        %v5271 = vor.u32 %v5269, %v5270
        %v5272 = vsel %vm2896, %v5267, %v5271
        %v5274 = vshrl.u32 %v5154, 16
        %v5276 = vrot.slane %v5274, 2
        %v5277 = vshll.u32 %v5154, 16
        %v5279 = vrot.slane %v5277, 3
        %v5280 = vor.u32 %v5276, %v5279
        %v5281 = vsel %vm2896, %v5271, %v5280
        %v5283 = vshrl.u32 %v5200, 16
        %v5285 = vrot.slane %v5283, 2
        %v5286 = vshll.u32 %v5200, 16
        %v5288 = vrot.slane %v5286, 3
        %v5289 = vor.u32 %v5285, %v5288
        %v5290 = vsel %vm2896, %v5280, %v5289
        %5291 = vrot.lane.b32.xlu0 %v5212, 112
        %v5292 = vpop.permute.xlu0 %5291
        %5293 = vrot.lane.b32.xlu0 %v5216, 112
        %v5294 = vpop.permute.xlu0 %5293
        %5295 = vrot.lane.b32.xlu0 %v5220, 112
        %v5296 = vpop.permute.xlu0 %5295
        %5297 = vrot.lane.b32.xlu0 %v5224, 112
        %v5298 = vpop.permute.xlu0 %5297
        %5299 = vrot.lane.b32.xlu0 %v5228, 112
        %v5300 = vpop.permute.xlu0 %5299
        %5301 = vrot.lane.b32.xlu0 %v5232, 112
        %v5302 = vpop.permute.xlu0 %5301
        %5303 = vrot.lane.b32.xlu0 %v5236, 112
        %v5304 = vpop.permute.xlu0 %5303
        %5305 = vrot.lane.b32.xlu0 %v5240, 112
        %v5306 = vpop.permute.xlu0 %5305
        %5307 = vrot.lane.b32.xlu0 %v5244, 112
        %v5308 = vpop.permute.xlu0 %5307
        %5309 = vrot.lane.b32.xlu0 %v5248, 112
        %v5310 = vpop.permute.xlu0 %5309
        %5311 = vrot.lane.b32.xlu0 %v5252, 112
        %v5312 = vpop.permute.xlu0 %5311
        %5313 = vrot.lane.b32.xlu0 %v5256, 112
        %v5314 = vpop.permute.xlu0 %5313
        %5315 = vrot.lane.b32.xlu0 %v5260, 112
        %v5316 = vpop.permute.xlu0 %5315
        %5317 = vrot.lane.b32.xlu0 %v5264, 112
        %v5318 = vpop.permute.xlu0 %5317
        %5319 = vrot.lane.b32.xlu0 %v5268, 112
        %v5320 = vpop.permute.xlu0 %5319
        %5321 = vrot.lane.b32.xlu0 %v5272, 112
        %v5322 = vpop.permute.xlu0 %5321
        %5323 = vrot.lane.b32.xlu0 %v5281, 112
        %v5324 = vpop.permute.xlu0 %5323
        %5325 = vrot.lane.b32.xlu0 %v5290, 112
        %v5326 = vpop.permute.xlu0 %5325
        %v5328 = vunpack.c.l.b16 %v4533
        %v5329 = vpack.c.b16 %v4575, %v5328
        %v5330 = vrot.slane %v5329, 3
        %v5331 = vrot.slane %v4609, 3
        %v5332 = vsel %vm3026, %v5330, %v5331
        %v5333 = vrot.slane %v4610, 3
        %v5334 = vsel %vm3026, %v5331, %v5333
        %v5335 = vrot.slane %v4611, 3
        %v5336 = vsel %vm3026, %v5333, %v5335
        %v5337 = vrot.slane %v4612, 3
        %v5338 = vsel %vm3026, %v5335, %v5337
        %v5339 = vrot.slane %v4613, 3
        %v5340 = vsel %vm3026, %v5337, %v5339
        %v5341 = vrot.slane %v4614, 3
        %v5342 = vsel %vm3026, %v5339, %v5341
        %v5343 = vrot.slane %v4615, 3
        %v5344 = vsel %vm3026, %v5341, %v5343
        %v5345 = vrot.slane %v4616, 3
        %v5346 = vsel %vm3026, %v5343, %v5345
        %v5347 = vrot.slane %v4617, 3
        %v5348 = vsel %vm3026, %v5345, %v5347
        %v5349 = vrot.slane %v4618, 3
        %v5350 = vsel %vm3026, %v5347, %v5349
        %v5351 = vrot.slane %v4619, 3
        %v5352 = vsel %vm3026, %v5349, %v5351
        %v5353 = vrot.slane %v4620, 3
        %v5354 = vsel %vm3026, %v5351, %v5353
        %v5355 = vrot.slane %v4621, 3
        %v5356 = vsel %vm3026, %v5353, %v5355
        %v5357 = vrot.slane %v4622, 3
        %v5358 = vsel %vm3026, %v5355, %v5357
        %v5359 = vrot.slane %v4623, 3
        %v5360 = vsel %vm3026, %v5357, %v5359
        %v5361 = vrot.slane %v4896, 3
        %v5362 = vsel %vm3026, %v5359, %v5361
        %v5363 = vrot.slane %v5154, 3
        %v5364 = vsel %vm3026, %v5361, %v5363
        %v5365 = vrot.slane %v5200, 3
        %v5366 = vsel %vm3026, %v5363, %v5365
        %v5368 = vsel %vm3064, %v4606, %v4776
        %v5370 = vsel %vm3064, %v4607, %v4778
        %v5372 = vsel %vm3064, %v4608, %v4780
        %v5374 = vsel %vm3064, %v4609, %v4782
        %v5376 = vsel %vm3064, %v4610, %v4784
        %v5378 = vsel %vm3064, %v4611, %v4786
        %v5380 = vsel %vm3064, %v4612, %v4788
        %v5382 = vsel %vm3064, %v4613, %v4790
        %v5384 = vsel %vm3064, %v4614, %v4792
        %v5386 = vsel %vm3064, %v4615, %v4794
        %v5388 = vsel %vm3064, %v4616, %v4796
        %v5390 = vsel %vm3064, %v4617, %v4798
        %v5392 = vsel %vm3064, %v4618, %v4800
        %v5394 = vsel %vm3064, %v4619, %v4802
        %v5396 = vsel %vm3064, %v4620, %v4804
        %v5398 = vsel %vm3064, %v4621, %v4806
        %v5400 = vsel %vm3064, %v4622, %v4808
        %v5402 = vsel %vm3064, %v4623, %v4810
        %v5404 = vsel %vm3101, %v5368, %v4852
        %v5406 = vsel %vm3101, %v5370, %v4854
        %v5408 = vsel %vm3101, %v5372, %v4856
        %v5410 = vsel %vm3101, %v5374, %v4858
        %v5412 = vsel %vm3101, %v5376, %v4860
        %v5414 = vsel %vm3101, %v5378, %v4862
        %v5416 = vsel %vm3101, %v5380, %v4864
        %v5418 = vsel %vm3101, %v5382, %v4866
        %v5420 = vsel %vm3101, %v5384, %v4868
        %v5422 = vsel %vm3101, %v5386, %v4870
        %v5424 = vsel %vm3101, %v5388, %v4872
        %v5426 = vsel %vm3101, %v5390, %v4874
        %v5428 = vsel %vm3101, %v5392, %v4876
        %v5430 = vsel %vm3101, %v5394, %v4878
        %v5432 = vsel %vm3101, %v5396, %v4880
        %v5434 = vsel %vm3101, %v5398, %v4882
        %v5436 = vsel %vm3101, %v5400, %v4884
        %v5438 = vsel %vm3101, %v5402, %v4886
        %v5440 = vsel %vm3138, %v5404, %v4905
        %v5442 = vsel %vm3138, %v5406, %v4907
        %v5444 = vsel %vm3138, %v5408, %v4909
        %v5446 = vsel %vm3138, %v5410, %v4911
        %v5448 = vsel %vm3138, %v5412, %v4913
        %v5450 = vsel %vm3138, %v5414, %v4915
        %v5452 = vsel %vm3138, %v5416, %v4917
        %v5454 = vsel %vm3138, %v5418, %v4919
        %v5456 = vsel %vm3138, %v5420, %v4921
        %v5458 = vsel %vm3138, %v5422, %v4923
        %v5460 = vsel %vm3138, %v5424, %v4925
        %v5462 = vsel %vm3138, %v5426, %v4927
        %v5464 = vsel %vm3138, %v5428, %v4929
        %v5466 = vsel %vm3138, %v5430, %v4931
        %v5468 = vsel %vm3138, %v5432, %v4933
        %v5470 = vsel %vm3138, %v5434, %v4935
        %v5472 = vsel %vm3138, %v5436, %v4937
        %v5474 = vsel %vm3138, %v5438, %v4939
        %v5476 = vsel %vm3175, %v5440, %v5034
        %v5478 = vsel %vm3175, %v5442, %v5036
        %v5480 = vsel %vm3175, %v5444, %v5038
        %v5482 = vsel %vm3175, %v5446, %v5040
        %v5484 = vsel %vm3175, %v5448, %v5042
        %v5486 = vsel %vm3175, %v5450, %v5044
        %v5488 = vsel %vm3175, %v5452, %v5046
        %v5490 = vsel %vm3175, %v5454, %v5048
        %v5492 = vsel %vm3175, %v5456, %v5050
        %v5494 = vsel %vm3175, %v5458, %v5052
        %v5496 = vsel %vm3175, %v5460, %v5054
        %v5498 = vsel %vm3175, %v5462, %v5056
        %v5500 = vsel %vm3175, %v5464, %v5058
        %v5502 = vsel %vm3175, %v5466, %v5060
        %v5504 = vsel %vm3175, %v5468, %v5062
        %v5506 = vsel %vm3175, %v5470, %v5064
        %v5508 = vsel %vm3175, %v5472, %v5066
        %v5510 = vsel %vm3175, %v5474, %v5068
        %v5512 = vsel %vm3212, %v5476, %v5110
        %v5514 = vsel %vm3212, %v5478, %v5112
        %v5516 = vsel %vm3212, %v5480, %v5114
        %v5518 = vsel %vm3212, %v5482, %v5116
        %v5520 = vsel %vm3212, %v5484, %v5118
        %v5522 = vsel %vm3212, %v5486, %v5120
        %v5524 = vsel %vm3212, %v5488, %v5122
        %v5526 = vsel %vm3212, %v5490, %v5124
        %v5528 = vsel %vm3212, %v5492, %v5126
        %v5530 = vsel %vm3212, %v5494, %v5128
        %v5532 = vsel %vm3212, %v5496, %v5130
        %v5534 = vsel %vm3212, %v5498, %v5132
        %v5536 = vsel %vm3212, %v5500, %v5134
        %v5538 = vsel %vm3212, %v5502, %v5136
        %v5540 = vsel %vm3212, %v5504, %v5138
        %v5542 = vsel %vm3212, %v5506, %v5140
        %v5544 = vsel %vm3212, %v5508, %v5142
        %v5546 = vsel %vm3212, %v5510, %v5144
        %v5548 = vsel %vm3249, %v5512, %v5163
        %v5550 = vsel %vm3249, %v5514, %v5165
        %v5552 = vsel %vm3249, %v5516, %v5167
        %v5554 = vsel %vm3249, %v5518, %v5169
        %v5556 = vsel %vm3249, %v5520, %v5171
        %v5558 = vsel %vm3249, %v5522, %v5173
        %v5560 = vsel %vm3249, %v5524, %v5175
        %v5562 = vsel %vm3249, %v5526, %v5177
        %v5564 = vsel %vm3249, %v5528, %v5179
        %v5566 = vsel %vm3249, %v5530, %v5181
        %v5568 = vsel %vm3249, %v5532, %v5183
        %v5570 = vsel %vm3249, %v5534, %v5185
        %v5572 = vsel %vm3249, %v5536, %v5187
        %v5574 = vsel %vm3249, %v5538, %v5189
        %v5576 = vsel %vm3249, %v5540, %v5191
        %v5578 = vsel %vm3249, %v5542, %v5193
        %v5580 = vsel %vm3249, %v5544, %v5195
        %v5582 = vsel %vm3249, %v5546, %v5197
        %v5584 = vsel %vm3286, %v5548, %v5292
        %v5587 = vsel %vm3286, %v5550, %v5294
        %v5590 = vsel %vm3286, %v5552, %v5296
        %v5593 = vsel %vm3286, %v5554, %v5298
        %v5596 = vsel %vm3286, %v5556, %v5300
        %v5599 = vsel %vm3286, %v5558, %v5302
        %v5602 = vsel %vm3286, %v5560, %v5304
        %v5605 = vsel %vm3286, %v5562, %v5306
        %v5608 = vsel %vm3286, %v5564, %v5308
        %v5611 = vsel %vm3286, %v5566, %v5310
        %v5614 = vsel %vm3286, %v5568, %v5312
        %v5617 = vsel %vm3286, %v5570, %v5314
        %v5620 = vsel %vm3286, %v5572, %v5316
        %v5623 = vsel %vm3286, %v5574, %v5318
        %v5626 = vsel %vm3286, %v5576, %v5320
        %v5629 = vsel %vm3286, %v5578, %v5322
        %v5632 = vsel %vm3286, %v5580, %v5324
        %v5635 = vsel %vm3286, %v5582, %v5326
        %v5637 = vld [vmem:[%s5] sm:$0xf]
        %v5638 = vld [vmem:[%s5 + $0x4] sm:$0xf]
        %v5639 = vld [vmem:[%s5 + $0x8] sm:$0xf]
        %v5640 = vld [vmem:[%s5 + $0xc] sm:$0xf]
        %v5641 = vld [vmem:[%s5 + $0x10] sm:$0xf]
        %v5642 = vld [vmem:[%s5 + $0x14] sm:$0xf]
        %v5643 = vld [vmem:[%s5 + $0x18] sm:$0xf]
        %v5644 = vld [vmem:[%s5 + $0x1c] sm:$0xf]
        %v5645 = vld [vmem:[%s5 + $0x20] sm:$0xf]
        %v5646 = vld [vmem:[%s5 + $0x24] sm:$0xf]
        %v5647 = vld [vmem:[%s5 + $0x28] sm:$0xf]
        %v5648 = vld [vmem:[%s5 + $0x2c] sm:$0xf]
        %v5649 = vld [vmem:[%s5 + $0x30] sm:$0xf]
        %v5650 = vld [vmem:[%s5 + $0x34] sm:$0xf]
        %v5651 = vld [vmem:[%s5 + $0x38] sm:$0xf]
        %v5652 = vld [vmem:[%s5 + $0x3c] sm:$0xf]
        %v5653 = vld [vmem:[%s5 + $0x40] sm:$0xf]
        %v5654 = vld [vmem:[%s5 + $0x44] sm:$0xf]
        %v5655 = vld [vmem:[%s6] sm:$0x1]
        %v5657 = vlaneseq
        %v5658 = vshrl.u32 %v5657, 7
        %v5659 = vsub.s32 0, %v5658
        %v5660 = vrot.slane %v5655, %v5659
        %v5680 = vunpack.c.l.b16 %v5637
        %v5681 = vunpack.c.l.b16 %v5638
        %v5682 = vunpack.c.l.b16 %v5639
        %v5683 = vunpack.c.l.b16 %v5640
        %v5684 = vunpack.c.l.b16 %v5641
        %v5685 = vunpack.c.l.b16 %v5642
        %v5686 = vunpack.c.l.b16 %v5643
        %v5687 = vunpack.c.l.b16 %v5644
        %v5688 = vunpack.c.l.b16 %v5645
        %v5689 = vunpack.c.l.b16 %v5646
        %v5690 = vunpack.c.l.b16 %v5647
        %v5691 = vunpack.c.l.b16 %v5648
        %v5692 = vunpack.c.l.b16 %v5649
        %v5693 = vunpack.c.l.b16 %v5650
        %v5694 = vunpack.c.l.b16 %v5651
        %v5695 = vunpack.c.l.b16 %v5652
        %v5696 = vunpack.c.l.b16 %v5653
        %v5697 = vunpack.c.l.b16 %v5654
        %v5698 = vpack.c.b16 %v5681, %v5680
        %v5699 = vpack.c.b16 %v5683, %v5682
        %v5700 = vpack.c.b16 %v5685, %v5684
        %v5701 = vpack.c.b16 %v5687, %v5686
        %v5702 = vpack.c.b16 %v5689, %v5688
        %v5703 = vpack.c.b16 %v5691, %v5690
        %v5704 = vpack.c.b16 %v5693, %v5692
        %v5705 = vpack.c.b16 %v5695, %v5694
        %v5706 = vpack.c.b16 %v5697, %v5696
        %v5717 = vsel %vm3064, %v5332, 0
        %v5720 = vsel %vm3064, %v5334, 0
        %v5723 = vsel %vm3064, %v5336, 0
        %v5726 = vsel %vm3064, %v5338, 0
        %v5729 = vsel %vm3064, %v5340, 0
        %v5732 = vsel %vm3064, %v5342, 0
        %v5735 = vsel %vm3064, %v5344, 0
        %v5738 = vsel %vm3064, %v5346, 0
        %v5741 = vsel %vm3064, %v5348, 0
        %v5744 = vsel %vm3064, %v5350, 0
        %v5747 = vsel %vm3064, %v5352, 0
        %v5750 = vsel %vm3064, %v5354, 0
        %v5753 = vsel %vm3064, %v5356, 0
        %v5756 = vsel %vm3064, %v5358, 0
        %v5759 = vsel %vm3064, %v5360, 0
        %v5762 = vsel %vm3064, %v5362, 0
        %v5765 = vsel %vm3064, %v5364, 0
        %v5768 = vsel %vm3064, %v5366, 0
        %5770 = vmatprep.subr.bf16.mxu0 0
        %5771 = vmatpush1.bf16.msra.mxu0 %v5698
        %5772 = vmatprep.subr.bf16.mxu0 0
        %5773 = vmatpush1.bf16.msra.mxu0 %v5699
        %5774 = vmatprep.subr.bf16.mxu0 0
        %5775 = vmatpush1.bf16.msra.mxu0 %v5700
        %5776 = vmatprep.subr.bf16.mxu0 0
        %5777 = vmatpush1.bf16.msra.mxu0 %v5701
        %5778 = vmatprep.subr.bf16.mxu0 0
        %5779 = vmatpush1.bf16.msra.mxu0 %v5702
        %5780 = vmatprep.subr.bf16.mxu0 0
        %5781 = vmatpush1.bf16.msra.mxu0 %v5703
        %5782 = vmatprep.subr.bf16.mxu0 0
        %5783 = vmatpush1.bf16.msra.mxu0 %v5704
        %5784 = vmatprep.subr.bf16.mxu0 0
        %5785 = vmatpush1.bf16.msra.mxu0 %v5705
        %5786 = vmatprep.subr.bf16.mxu0 0
        %5787 = vmatpush1.bf16.msra.mxu0 %v5706
        %5788 = vmatprep.subr.bf16.mxu0 0
        %5789 = vmatpush1.bf16.msra.mxu0 0
        %5790 = vmatprep.subr.bf16.mxu0 0
        %5791 = vmatpush1.bf16.msra.mxu0 0
        %5792 = vmatprep.subr.bf16.mxu0 0
        %5793 = vmatpush1.bf16.msra.mxu0 0
        %5794 = vmatprep.subr.bf16.mxu0 0
        %5795 = vmatpush1.bf16.msra.mxu0 0
        %5796 = vmatprep.subr.bf16.mxu0 0
        %5797 = vmatpush1.bf16.msra.mxu0 0
        %5798 = vmatprep.subr.bf16.mxu0 0
        %5799 = vmatpush1.bf16.msra.mxu0 0
        %5800 = vmatprep.subr.bf16.mxu0 0
        %5801 = vmatpush1.bf16.msra.mxu0 0
        %5802 = vmatprep.mubr.bf16.mxu0 %v5717
        %5803 = vmatmul.mubr.bf16.gmra.mrb[0].mxu0 %v5584
        %v5804 = vpop.f32.mrb[0].mxu0
        %v5805 = vadd.f32 %v5660, %v5804
        %v5806 = vpop.f32.mrb[0].mxu0
        %v5807 = vpop.f32.mrb[0].mxu0
        %v5808 = vadd.f32 %v5660, %v5807
        %v5809 = vpop.f32.mrb[0].mxu0
        %5810 = vmatprep.mubr.bf16.mxu0 %v5720
        %5811 = vmatmul.mubr.bf16.gmra.mrb[0].mxu0 %v5587
        %v5812 = vpop.f32.mrb[0].mxu0
        %v5813 = vadd.f32 %v5660, %v5812
        %v5814 = vpop.f32.mrb[0].mxu0
        %v5815 = vpop.f32.mrb[0].mxu0
        %v5816 = vadd.f32 %v5660, %v5815
        %v5817 = vpop.f32.mrb[0].mxu0
        %5818 = vmatprep.mubr.bf16.mxu0 %v5723
        %5819 = vmatmul.mubr.bf16.gmra.mrb[0].mxu0 %v5590
        %v5820 = vpop.f32.mrb[0].mxu0
        %v5821 = vadd.f32 %v5660, %v5820
        %v5822 = vpop.f32.mrb[0].mxu0
        %v5823 = vpop.f32.mrb[0].mxu0
        %v5824 = vadd.f32 %v5660, %v5823
        %v5825 = vpop.f32.mrb[0].mxu0
        %5826 = vmatprep.mubr.bf16.mxu0 %v5726
        %5827 = vmatmul.mubr.bf16.gmra.mrb[0].mxu0 %v5593
        %v5828 = vpop.f32.mrb[0].mxu0
        %v5829 = vadd.f32 %v5660, %v5828
        %v5830 = vpop.f32.mrb[0].mxu0
        %v5831 = vpop.f32.mrb[0].mxu0
        %v5832 = vadd.f32 %v5660, %v5831
        %v5833 = vpop.f32.mrb[0].mxu0
        %5834 = vmatprep.mubr.bf16.mxu0 %v5729
        %5835 = vmatmul.mubr.bf16.gmra.mrb[0].mxu0 %v5596
        %v5836 = vpop.f32.mrb[0].mxu0
        %v5837 = vadd.f32 %v5660, %v5836
        %v5838 = vpop.f32.mrb[0].mxu0
        %v5839 = vpop.f32.mrb[0].mxu0
        %v5840 = vadd.f32 %v5660, %v5839
        %v5841 = vpop.f32.mrb[0].mxu0
        %5842 = vmatprep.mubr.bf16.mxu0 %v5732
        %5843 = vmatmul.mubr.bf16.gmra.mrb[0].mxu0 %v5599
        %v5844 = vpop.f32.mrb[0].mxu0
        %v5845 = vadd.f32 %v5660, %v5844
        %v5846 = vpop.f32.mrb[0].mxu0
        %v5847 = vpop.f32.mrb[0].mxu0
        %v5848 = vadd.f32 %v5660, %v5847
        %v5849 = vpop.f32.mrb[0].mxu0
        %5850 = vmatprep.mubr.bf16.mxu0 %v5735
        %5851 = vmatmul.mubr.bf16.gmra.mrb[0].mxu0 %v5602
        %v5852 = vpop.f32.mrb[0].mxu0
        %v5853 = vadd.f32 %v5660, %v5852
        %v5854 = vpop.f32.mrb[0].mxu0
        %v5855 = vpop.f32.mrb[0].mxu0
        %v5856 = vadd.f32 %v5660, %v5855
        %v5857 = vpop.f32.mrb[0].mxu0
        %5858 = vmatprep.mubr.bf16.mxu0 %v5738
        %5859 = vmatmul.mubr.bf16.gmra.mrb[0].mxu0 %v5605
        %v5860 = vpop.f32.mrb[0].mxu0
        %v5861 = vadd.f32 %v5660, %v5860
        %v5862 = vpop.f32.mrb[0].mxu0
        %v5863 = vpop.f32.mrb[0].mxu0
        %v5864 = vadd.f32 %v5660, %v5863
        %v5865 = vpop.f32.mrb[0].mxu0
        %5866 = vmatprep.mubr.bf16.mxu0 %v5741
        %5867 = vmatmul.mubr.bf16.gmra.mrb[0].mxu0 %v5608
        %v5868 = vpop.f32.mrb[0].mxu0
        %v5869 = vadd.f32 %v5660, %v5868
        %v5870 = vpop.f32.mrb[0].mxu0
        %v5871 = vpop.f32.mrb[0].mxu0
        %v5872 = vadd.f32 %v5660, %v5871
        %v5873 = vpop.f32.mrb[0].mxu0
        %5874 = vmatprep.mubr.bf16.mxu0 %v5744
        %5875 = vmatmul.mubr.bf16.gmra.mrb[0].mxu0 %v5611
        %v5876 = vpop.f32.mrb[0].mxu0
        %v5877 = vadd.f32 %v5660, %v5876
        %v5878 = vpop.f32.mrb[0].mxu0
        %v5879 = vpop.f32.mrb[0].mxu0
        %v5880 = vadd.f32 %v5660, %v5879
        %v5881 = vpop.f32.mrb[0].mxu0
        %5882 = vmatprep.mubr.bf16.mxu0 %v5747
        %5883 = vmatmul.mubr.bf16.gmra.mrb[0].mxu0 %v5614
        %v5884 = vpop.f32.mrb[0].mxu0
        %v5885 = vadd.f32 %v5660, %v5884
        %v5886 = vpop.f32.mrb[0].mxu0
        %v5887 = vpop.f32.mrb[0].mxu0
        %v5888 = vadd.f32 %v5660, %v5887
        %v5889 = vpop.f32.mrb[0].mxu0
        %5890 = vmatprep.mubr.bf16.mxu0 %v5750
        %5891 = vmatmul.mubr.bf16.gmra.mrb[0].mxu0 %v5617
        %v5892 = vpop.f32.mrb[0].mxu0
        %v5893 = vadd.f32 %v5660, %v5892
        %v5894 = vpop.f32.mrb[0].mxu0
        %v5895 = vpop.f32.mrb[0].mxu0
        %v5896 = vadd.f32 %v5660, %v5895
        %v5897 = vpop.f32.mrb[0].mxu0
        %5898 = vmatprep.mubr.bf16.mxu0 %v5753
        %5899 = vmatmul.mubr.bf16.gmra.mrb[0].mxu0 %v5620
        %v5900 = vpop.f32.mrb[0].mxu0
        %v5901 = vadd.f32 %v5660, %v5900
        %v5902 = vpop.f32.mrb[0].mxu0
        %v5903 = vpop.f32.mrb[0].mxu0
        %v5904 = vadd.f32 %v5660, %v5903
        %v5905 = vpop.f32.mrb[0].mxu0
        %5906 = vmatprep.mubr.bf16.mxu0 %v5756
        %5907 = vmatmul.mubr.bf16.gmra.mrb[0].mxu0 %v5623
        %v5908 = vpop.f32.mrb[0].mxu0
        %v5909 = vadd.f32 %v5660, %v5908
        %v5910 = vpop.f32.mrb[0].mxu0
        %v5911 = vpop.f32.mrb[0].mxu0
        %v5912 = vadd.f32 %v5660, %v5911
        %v5913 = vpop.f32.mrb[0].mxu0
        %5914 = vmatprep.mubr.bf16.mxu0 %v5759
        %5915 = vmatmul.mubr.bf16.gmra.mrb[0].mxu0 %v5626
        %v5916 = vpop.f32.mrb[0].mxu0
        %v5917 = vadd.f32 %v5660, %v5916
        %v5918 = vpop.f32.mrb[0].mxu0
        %v5919 = vpop.f32.mrb[0].mxu0
        %v5920 = vadd.f32 %v5660, %v5919
        %v5921 = vpop.f32.mrb[0].mxu0
        %5922 = vmatprep.mubr.bf16.mxu0 %v5762
        %5923 = vmatmul.mubr.bf16.gmra.mrb[0].mxu0 %v5629
        %v5924 = vpop.f32.mrb[0].mxu0
        %v5925 = vadd.f32 %v5660, %v5924
        %v5926 = vpop.f32.mrb[0].mxu0
        %v5927 = vpop.f32.mrb[0].mxu0
        %v5928 = vadd.f32 %v5660, %v5927
        %v5929 = vpop.f32.mrb[0].mxu0
        %5930 = vmatprep.mubr.bf16.mxu0 %v5765
        %5931 = vmatmul.mubr.bf16.gmra.mrb[0].mxu0 %v5632
        %v5932 = vpop.f32.mrb[0].mxu0
        %v5933 = vadd.f32 %v5660, %v5932
        %v5934 = vpop.f32.mrb[0].mxu0
        %v5935 = vpop.f32.mrb[0].mxu0
        %v5936 = vadd.f32 %v5660, %v5935
        %v5937 = vpop.f32.mrb[0].mxu0
        %5938 = vmatprep.mubr.bf16.mxu0 %v5768
        %5939 = vmatmul.mubr.bf16.gmra.mrb[0].mxu0 %v5635
        %v5940 = vpop.f32.mrb[0].mxu0
        %v5941 = vadd.f32 %v5660, %v5940
        %v5942 = vpop.f32.mrb[0].mxu0
        %v5943 = vpop.f32.mrb[0].mxu0
        %v5944 = vadd.f32 %v5660, %v5943
        %v5945 = vpop.f32.mrb[0].mxu0
        %5946 = vdwg.mxu0
        %v5947 = vld [vmem:[#allocation2 + $0x8] sm:$0xe]
        %v5948 = vld [vmem:[#allocation2 + $0xc] sm:$0xf]
        %v5949 = vld [vmem:[#allocation2 + $0x10] sm:$0xf]
        %v5950 = vld [vmem:[#allocation2 + $0x14] sm:$0xf]
        %v5951 = vld [vmem:[#allocation2 + $0x18] sm:$0xf]
        %v5952 = vld [vmem:[#allocation2 + $0x1c] sm:$0xf]
        %v5953 = vld [vmem:[#allocation2 + $0x20] sm:$0xf]
        %v5954 = vld [vmem:[#allocation2 + $0x24] sm:$0xf]
        %v5955 = vld [vmem:[#allocation2 + $0x28] sm:$0xf]
        %v5956 = vld [vmem:[#allocation2 + $0x2c] sm:$0xf]
        %v5957 = vld [vmem:[#allocation2 + $0x30] sm:$0xf]
        %v5958 = vld [vmem:[#allocation2 + $0x34] sm:$0xf]
        %v5959 = vld [vmem:[#allocation2 + $0x38] sm:$0xf]
        %v5960 = vld [vmem:[#allocation2 + $0x3c] sm:$0xf]
        %v5961 = vld [vmem:[#allocation2 + $0x40] sm:$0xf]
        %v5962 = vld [vmem:[#allocation2 + $0x44] sm:$0xf]
        %v5963 = vld [vmem:[#allocation2 + $0x48] sm:$0xf]
        %v5964 = vld [vmem:[#allocation2 + $0x4c] sm:$0xf]
        %v5965 = vld [vmem:[#allocation2 + $0x50] sm:$0xf]
        %v5966 = vld [vmem:[#allocation2 + $0x54] sm:$0xf]
        %v5967 = vld [vmem:[#allocation2 + $0x58] sm:$0xf]
        %v5968 = vld [vmem:[#allocation2 + $0x5c] sm:$0xf]
        %v5969 = vld [vmem:[#allocation2 + $0x60] sm:$0xf]
        %v5970 = vld [vmem:[#allocation2 + $0x64] sm:$0xf]
        %v5971 = vld [vmem:[#allocation2 + $0x68] sm:$0xf]
        %v5972 = vld [vmem:[#allocation2 + $0x6c] sm:$0xf]
        %v5973 = vld [vmem:[#allocation2 + $0x70] sm:$0xf]
        %v5974 = vld [vmem:[#allocation2 + $0x74] sm:$0xf]
        %v5975 = vld [vmem:[#allocation2 + $0x78] sm:$0xf]
        %v5976 = vld [vmem:[#allocation2 + $0x7c] sm:$0xf]
        %v5977 = vld [vmem:[#allocation2 + $0x80] sm:$0xf]
        %v5978 = vld [vmem:[#allocation2 + $0x84] sm:$0xf]
        %v5979 = vld [vmem:[#allocation2 + $0x88] sm:$0xf]
        %v5980 = vld [vmem:[#allocation2 + $0x8c] sm:$0xf]
        %v5981 = vld [vmem:[#allocation2 + $0x90] sm:$0xf]
        %v5982 = vld [vmem:[#allocation2 + $0x94] sm:$0xf]
        %v5983 = vld [vmem:[#allocation2 + $0x98] sm:$0x3]
        %v5984 = vunpack.c.l.bf16 %v5947
        %v5985 = vunpack.c.l.bf16 %v5948
        %v5986 = vunpack.c.l.bf16 %v5949
        %v5987 = vunpack.c.l.bf16 %v5950
        %v5988 = vunpack.c.l.bf16 %v5951
        %v5989 = vunpack.c.l.bf16 %v5952
        %v5990 = vunpack.c.l.bf16 %v5953
        %v5991 = vunpack.c.l.bf16 %v5954
        %v5992 = vunpack.c.l.bf16 %v5955
        %v5993 = vunpack.c.l.bf16 %v5956
        %v5994 = vunpack.c.l.bf16 %v5957
        %v5995 = vunpack.c.l.bf16 %v5958
        %v5996 = vunpack.c.l.bf16 %v5959
        %v5997 = vunpack.c.l.bf16 %v5960
        %v5998 = vunpack.c.l.bf16 %v5961
        %v5999 = vunpack.c.l.bf16 %v5962
        %v6000 = vunpack.c.l.bf16 %v5963
        %v6001 = vunpack.c.l.bf16 %v5964
        %v6002 = vunpack.c.l.bf16 %v5965
        %v6003 = vunpack.c.l.bf16 %v5966
        %v6004 = vunpack.c.l.bf16 %v5967
        %v6005 = vunpack.c.l.bf16 %v5968
        %v6006 = vunpack.c.l.bf16 %v5969
        %v6007 = vunpack.c.l.bf16 %v5970
        %v6008 = vunpack.c.l.bf16 %v5971
        %v6009 = vunpack.c.l.bf16 %v5972
        %v6010 = vunpack.c.l.bf16 %v5973
        %v6011 = vunpack.c.l.bf16 %v5974
        %v6012 = vunpack.c.l.bf16 %v5975
        %v6013 = vunpack.c.l.bf16 %v5976
        %v6014 = vunpack.c.l.bf16 %v5977
        %v6015 = vunpack.c.l.bf16 %v5978
        %v6016 = vunpack.c.l.bf16 %v5979
        %v6017 = vunpack.c.l.bf16 %v5980
        %v6018 = vunpack.c.l.bf16 %v5981
        %v6019 = vunpack.c.l.bf16 %v5982
        %v6020 = vunpack.c.l.bf16 %v5983
        %v6058 = vrot.slane %v5984, 3
        %v6059 = vrot.slane %v5985, 3
        %v6060 = vsel %vm1150, %v6058, %v6059
        %v6061 = vrot.slane %v5986, 3
        %v6062 = vsel %vm1150, %v6059, %v6061
        %v6063 = vrot.slane %v5987, 3
        %v6064 = vsel %vm1150, %v6061, %v6063
        %v6065 = vrot.slane %v5988, 3
        %v6066 = vsel %vm1150, %v6063, %v6065
        %v6067 = vrot.slane %v5989, 3
        %v6068 = vsel %vm1150, %v6065, %v6067
        %v6069 = vrot.slane %v5990, 3
        %v6070 = vsel %vm1150, %v6067, %v6069
        %v6071 = vrot.slane %v5991, 3
        %v6072 = vsel %vm1150, %v6069, %v6071
        %v6073 = vrot.slane %v5992, 3
        %v6074 = vsel %vm1150, %v6071, %v6073
        %v6075 = vrot.slane %v5993, 3
        %v6076 = vsel %vm1150, %v6073, %v6075
        %v6077 = vrot.slane %v5994, 3
        %v6078 = vsel %vm1150, %v6075, %v6077
        %v6079 = vrot.slane %v5995, 3
        %v6080 = vsel %vm1150, %v6077, %v6079
        %v6081 = vrot.slane %v5996, 3
        %v6082 = vsel %vm1150, %v6079, %v6081
        %v6083 = vrot.slane %v5997, 3
        %v6084 = vsel %vm1150, %v6081, %v6083
        %v6085 = vrot.slane %v5998, 3
        %v6086 = vsel %vm1150, %v6083, %v6085
        %v6087 = vrot.slane %v5999, 3
        %v6088 = vsel %vm1150, %v6085, %v6087
        %v6089 = vrot.slane %v6000, 3
        %v6090 = vsel %vm1150, %v6087, %v6089
        %v6091 = vrot.slane %v6001, 3
        %v6092 = vsel %vm1150, %v6089, %v6091
        %v6093 = vrot.slane %v6002, 3
        %v6094 = vsel %vm1150, %v6091, %v6093
        %v6095 = vrot.slane %v6003, 3
        %v6096 = vsel %vm1150, %v6093, %v6095
        %v6097 = vrot.slane %v6004, 3
        %v6098 = vsel %vm1150, %v6095, %v6097
        %v6099 = vrot.slane %v6005, 3
        %v6100 = vsel %vm1150, %v6097, %v6099
        %v6101 = vrot.slane %v6006, 3
        %v6102 = vsel %vm1150, %v6099, %v6101
        %v6103 = vrot.slane %v6007, 3
        %v6104 = vsel %vm1150, %v6101, %v6103
        %v6105 = vrot.slane %v6008, 3
        %v6106 = vsel %vm1150, %v6103, %v6105
        %v6107 = vrot.slane %v6009, 3
        %v6108 = vsel %vm1150, %v6105, %v6107
        %v6109 = vrot.slane %v6010, 3
        %v6110 = vsel %vm1150, %v6107, %v6109
        %v6111 = vrot.slane %v6011, 3
        %v6112 = vsel %vm1150, %v6109, %v6111
        %v6113 = vrot.slane %v6012, 3
        %v6114 = vsel %vm1150, %v6111, %v6113
        %v6115 = vrot.slane %v6013, 3
        %v6116 = vsel %vm1150, %v6113, %v6115
        %v6117 = vrot.slane %v6014, 3
        %v6118 = vsel %vm1150, %v6115, %v6117
        %v6119 = vrot.slane %v6015, 3
        %v6120 = vsel %vm1150, %v6117, %v6119
        %v6121 = vrot.slane %v6016, 3
        %v6122 = vsel %vm1150, %v6119, %v6121
        %v6123 = vrot.slane %v6017, 3
        %v6124 = vsel %vm1150, %v6121, %v6123
        %v6125 = vrot.slane %v6018, 3
        %v6126 = vsel %vm1150, %v6123, %v6125
        %v6127 = vrot.slane %v6019, 3
        %v6128 = vsel %vm1150, %v6125, %v6127
        %v6129 = vrot.slane %v6020, 3
        %v6130 = vsel %vm1150, %v6127, %v6129
        %v6167 = vadd.f32 %v5805, %v6060
        %v6168 = vadd.f32 %v5808, %v6062
        %v6169 = vadd.f32 %v5813, %v6064
        %v6170 = vadd.f32 %v5816, %v6066
        %v6171 = vadd.f32 %v5821, %v6068
        %v6172 = vadd.f32 %v5824, %v6070
        %v6173 = vadd.f32 %v5829, %v6072
        %v6174 = vadd.f32 %v5832, %v6074
        %v6175 = vadd.f32 %v5837, %v6076
        %v6176 = vadd.f32 %v5840, %v6078
        %v6177 = vadd.f32 %v5845, %v6080
        %v6178 = vadd.f32 %v5848, %v6082
        %v6179 = vadd.f32 %v5853, %v6084
        %v6180 = vadd.f32 %v5856, %v6086
        %v6181 = vadd.f32 %v5861, %v6088
        %v6182 = vadd.f32 %v5864, %v6090
        %v6183 = vadd.f32 %v5869, %v6092
        %v6184 = vadd.f32 %v5872, %v6094
        %v6185 = vadd.f32 %v5877, %v6096
        %v6186 = vadd.f32 %v5880, %v6098
        %v6187 = vadd.f32 %v5885, %v6100
        %v6188 = vadd.f32 %v5888, %v6102
        %v6189 = vadd.f32 %v5893, %v6104
        %v6190 = vadd.f32 %v5896, %v6106
        %v6191 = vadd.f32 %v5901, %v6108
        %v6192 = vadd.f32 %v5904, %v6110
        %v6193 = vadd.f32 %v5909, %v6112
        %v6194 = vadd.f32 %v5912, %v6114
        %v6195 = vadd.f32 %v5917, %v6116
        %v6196 = vadd.f32 %v5920, %v6118
        %v6197 = vadd.f32 %v5925, %v6120
        %v6198 = vadd.f32 %v5928, %v6122
        %v6199 = vadd.f32 %v5933, %v6124
        %v6200 = vadd.f32 %v5936, %v6126
        %v6201 = vadd.f32 %v5941, %v6128
        %v6202 = vadd.f32 %v5944, %v6130
        %v6203 = vmax.f32 %v6167, 0.0
        %v6204 = vmax.f32 %v6168, 0.0
        %v6205 = vmax.f32 %v6169, 0.0
        %v6206 = vmax.f32 %v6170, 0.0
        %v6207 = vmax.f32 %v6171, 0.0
        %v6208 = vmax.f32 %v6172, 0.0
        %v6209 = vmax.f32 %v6173, 0.0
        %v6210 = vmax.f32 %v6174, 0.0
        %v6211 = vmax.f32 %v6175, 0.0
        %v6212 = vmax.f32 %v6176, 0.0
        %v6213 = vmax.f32 %v6177, 0.0
        %v6214 = vmax.f32 %v6178, 0.0
        %v6215 = vmax.f32 %v6179, 0.0
        %v6216 = vmax.f32 %v6180, 0.0
        %v6217 = vmax.f32 %v6181, 0.0
        %v6218 = vmax.f32 %v6182, 0.0
        %v6219 = vmax.f32 %v6183, 0.0
        %v6220 = vmax.f32 %v6184, 0.0
        %v6221 = vmax.f32 %v6185, 0.0
        %v6222 = vmax.f32 %v6186, 0.0
        %v6223 = vmax.f32 %v6187, 0.0
        %v6224 = vmax.f32 %v6188, 0.0
        %v6225 = vmax.f32 %v6189, 0.0
        %v6226 = vmax.f32 %v6190, 0.0
        %v6227 = vmax.f32 %v6191, 0.0
        %v6228 = vmax.f32 %v6192, 0.0
        %v6229 = vmax.f32 %v6193, 0.0
        %v6230 = vmax.f32 %v6194, 0.0
        %v6231 = vmax.f32 %v6195, 0.0
        %v6232 = vmax.f32 %v6196, 0.0
        %v6233 = vmax.f32 %v6197, 0.0
        %v6234 = vmax.f32 %v6198, 0.0
        %v6235 = vmax.f32 %v6199, 0.0
        %v6236 = vmax.f32 %v6200, 0.0
        %v6237 = vmax.f32 %v6201, 0.0
        %v6238 = vmax.f32 %v6202, 0.0
        %v6239 = vld [vmem:[%s21] sm:$0xff]
        %v6240 = vld [vmem:[%s21 + $0x8] sm:$0xff]
        %v6241 = vld [vmem:[%s21 + $0x10] sm:$0xff]
        %v6242 = vld [vmem:[%s21 + $0x18] sm:$0xff]
        %v6243 = vld [vmem:[%s21 + $0x20] sm:$0xff]
        %v6244 = vld [vmem:[%s21 + $0x28] sm:$0xff]
        %v6245 = vld [vmem:[%s21 + $0x30] sm:$0xff]
        %v6246 = vld [vmem:[%s21 + $0x38] sm:$0xff]
        %v6247 = vld [vmem:[%s21 + $0x40] sm:$0xff]
        %v6248 = vld [vmem:[%s21 + $0x48] sm:$0xff]
        %v6249 = vld [vmem:[%s21 + $0x50] sm:$0xff]
        %v6250 = vld [vmem:[%s21 + $0x58] sm:$0xff]
        %v6251 = vld [vmem:[%s21 + $0x60] sm:$0xff]
        %v6252 = vld [vmem:[%s21 + $0x68] sm:$0xff]
        %v6253 = vld [vmem:[%s21 + $0x70] sm:$0xff]
        %v6254 = vld [vmem:[%s21 + $0x78] sm:$0xff]
        %v6255 = vld [vmem:[%s21 + $0x80] sm:$0xff]
        %v6256 = vld [vmem:[%s21 + $0x88] sm:$0xff]
        %v6257 = vld [vmem:[%s21 + $0x90] sm:$0xff]
        %v6258 = vld [vmem:[%s21 + $0x98] sm:$0xff]
        %v6259 = vld [vmem:[%s21 + $0xa0] sm:$0xff]
        %v6260 = vld [vmem:[%s21 + $0xa8] sm:$0xff]
        %v6261 = vld [vmem:[%s21 + $0xb0] sm:$0xff]
        %v6262 = vld [vmem:[%s21 + $0xb8] sm:$0xff]
        %v6263 = vld [vmem:[%s21 + $0xc0] sm:$0xff]
        %v6264 = vld [vmem:[%s21 + $0xc8] sm:$0xff]
        %v6265 = vld [vmem:[%s21 + $0xd0] sm:$0xff]
        %v6266 = vld [vmem:[%s21 + $0xd8] sm:$0xff]
        %v6267 = vld [vmem:[%s21 + $0xe0] sm:$0xff]
        %v6268 = vld [vmem:[%s21 + $0xe8] sm:$0xff]
        %v6269 = vld [vmem:[%s21 + $0xf0] sm:$0xff]
        %v6270 = vld [vmem:[%s21 + $0xf8] sm:$0xff]
        %v6271 = vld [vmem:[%s21 + $0x100] sm:$0xff]
        %v6272 = vld [vmem:[%s21 + $0x108] sm:$0xff]
        %v6273 = vld [vmem:[%s21 + $0x110] sm:$0xff]
        %v6274 = vld [vmem:[%s21 + $0x118] sm:$0xff]
        %6276 = vset.pattern.permute.xlu0 0
        %6277 = vperm.xlu0 %6276, %v6239
        %v6278 = vpop.permute.xlu0 %6277
        %6281 = vset.pattern.permute.xlu0 0
        %6282 = vperm.xlu0 %6281, %v6240
        %v6283 = vpop.permute.xlu0 %6282
        %6286 = vset.pattern.permute.xlu0 0
        %6287 = vperm.xlu0 %6286, %v6241
        %v6288 = vpop.permute.xlu0 %6287
        %6291 = vset.pattern.permute.xlu0 0
        %6292 = vperm.xlu0 %6291, %v6242
        %v6293 = vpop.permute.xlu0 %6292
        %6296 = vset.pattern.permute.xlu0 0
        %6297 = vperm.xlu0 %6296, %v6243
        %v6298 = vpop.permute.xlu0 %6297
        %6301 = vset.pattern.permute.xlu0 0
        %6302 = vperm.xlu0 %6301, %v6244
        %v6303 = vpop.permute.xlu0 %6302
        %6306 = vset.pattern.permute.xlu0 0
        %6307 = vperm.xlu0 %6306, %v6245
        %v6308 = vpop.permute.xlu0 %6307
        %6311 = vset.pattern.permute.xlu0 0
        %6312 = vperm.xlu0 %6311, %v6246
        %v6313 = vpop.permute.xlu0 %6312
        %6316 = vset.pattern.permute.xlu0 0
        %6317 = vperm.xlu0 %6316, %v6247
        %v6318 = vpop.permute.xlu0 %6317
        %6321 = vset.pattern.permute.xlu0 0
        %6322 = vperm.xlu0 %6321, %v6248
        %v6323 = vpop.permute.xlu0 %6322
        %6326 = vset.pattern.permute.xlu0 0
        %6327 = vperm.xlu0 %6326, %v6249
        %v6328 = vpop.permute.xlu0 %6327
        %6331 = vset.pattern.permute.xlu0 0
        %6332 = vperm.xlu0 %6331, %v6250
        %v6333 = vpop.permute.xlu0 %6332
        %6336 = vset.pattern.permute.xlu0 0
        %6337 = vperm.xlu0 %6336, %v6251
        %v6338 = vpop.permute.xlu0 %6337
        %6341 = vset.pattern.permute.xlu0 0
        %6342 = vperm.xlu0 %6341, %v6252
        %v6343 = vpop.permute.xlu0 %6342
        %6346 = vset.pattern.permute.xlu0 0
        %6347 = vperm.xlu0 %6346, %v6253
        %v6348 = vpop.permute.xlu0 %6347
        %6351 = vset.pattern.permute.xlu0 0
        %6352 = vperm.xlu0 %6351, %v6254
        %v6353 = vpop.permute.xlu0 %6352
        %6356 = vset.pattern.permute.xlu0 0
        %6357 = vperm.xlu0 %6356, %v6255
        %v6358 = vpop.permute.xlu0 %6357
        %6361 = vset.pattern.permute.xlu0 0
        %6362 = vperm.xlu0 %6361, %v6256
        %v6363 = vpop.permute.xlu0 %6362
        %6366 = vset.pattern.permute.xlu0 0
        %6367 = vperm.xlu0 %6366, %v6257
        %v6368 = vpop.permute.xlu0 %6367
        %6371 = vset.pattern.permute.xlu0 0
        %6372 = vperm.xlu0 %6371, %v6258
        %v6373 = vpop.permute.xlu0 %6372
        %6376 = vset.pattern.permute.xlu0 0
        %6377 = vperm.xlu0 %6376, %v6259
        %v6378 = vpop.permute.xlu0 %6377
        %6381 = vset.pattern.permute.xlu0 0
        %6382 = vperm.xlu0 %6381, %v6260
        %v6383 = vpop.permute.xlu0 %6382
        %6386 = vset.pattern.permute.xlu0 0
        %6387 = vperm.xlu0 %6386, %v6261
        %v6388 = vpop.permute.xlu0 %6387
        %6391 = vset.pattern.permute.xlu0 0
        %6392 = vperm.xlu0 %6391, %v6262
        %v6393 = vpop.permute.xlu0 %6392
        %6396 = vset.pattern.permute.xlu0 0
        %6397 = vperm.xlu0 %6396, %v6263
        %v6398 = vpop.permute.xlu0 %6397
        %6401 = vset.pattern.permute.xlu0 0
        %6402 = vperm.xlu0 %6401, %v6264
        %v6403 = vpop.permute.xlu0 %6402
        %6406 = vset.pattern.permute.xlu0 0
        %6407 = vperm.xlu0 %6406, %v6265
        %v6408 = vpop.permute.xlu0 %6407
        %6411 = vset.pattern.permute.xlu0 0
        %6412 = vperm.xlu0 %6411, %v6266
        %v6413 = vpop.permute.xlu0 %6412
        %6416 = vset.pattern.permute.xlu0 0
        %6417 = vperm.xlu0 %6416, %v6267
        %v6418 = vpop.permute.xlu0 %6417
        %6421 = vset.pattern.permute.xlu0 0
        %6422 = vperm.xlu0 %6421, %v6268
        %v6423 = vpop.permute.xlu0 %6422
        %6426 = vset.pattern.permute.xlu0 0
        %6427 = vperm.xlu0 %6426, %v6269
        %v6428 = vpop.permute.xlu0 %6427
        %6431 = vset.pattern.permute.xlu0 0
        %6432 = vperm.xlu0 %6431, %v6270
        %v6433 = vpop.permute.xlu0 %6432
        %6436 = vset.pattern.permute.xlu0 0
        %6437 = vperm.xlu0 %6436, %v6271
        %v6438 = vpop.permute.xlu0 %6437
        %6441 = vset.pattern.permute.xlu0 0
        %6442 = vperm.xlu0 %6441, %v6272
        %v6443 = vpop.permute.xlu0 %6442
        %6446 = vset.pattern.permute.xlu0 0
        %6447 = vperm.xlu0 %6446, %v6273
        %v6448 = vpop.permute.xlu0 %6447
        %6451 = vset.pattern.permute.xlu0 0
        %6452 = vperm.xlu0 %6451, %v6274
        %v6453 = vpop.permute.xlu0 %6452
        %v6455 = vmul.f32 %v6203, %v6278
        %v6456 = vmul.f32 %v6204, %v6283
        %v6457 = vmul.f32 %v6205, %v6288
        %v6458 = vmul.f32 %v6206, %v6293
        %v6459 = vmul.f32 %v6207, %v6298
        %v6460 = vmul.f32 %v6208, %v6303
        %v6461 = vmul.f32 %v6209, %v6308
        %v6462 = vmul.f32 %v6210, %v6313
        %v6463 = vmul.f32 %v6211, %v6318
        %v6464 = vmul.f32 %v6212, %v6323
        %v6465 = vmul.f32 %v6213, %v6328
        %v6466 = vmul.f32 %v6214, %v6333
        %v6467 = vmul.f32 %v6215, %v6338
        %v6468 = vmul.f32 %v6216, %v6343
        %v6469 = vmul.f32 %v6217, %v6348
        %v6470 = vmul.f32 %v6218, %v6353
        %v6471 = vmul.f32 %v6219, %v6358
        %v6472 = vmul.f32 %v6220, %v6363
        %v6473 = vmul.f32 %v6221, %v6368
        %v6474 = vmul.f32 %v6222, %v6373
        %v6475 = vmul.f32 %v6223, %v6378
        %v6476 = vmul.f32 %v6224, %v6383
        %v6477 = vmul.f32 %v6225, %v6388
        %v6478 = vmul.f32 %v6226, %v6393
        %v6479 = vmul.f32 %v6227, %v6398
        %v6480 = vmul.f32 %v6228, %v6403
        %v6481 = vmul.f32 %v6229, %v6408
        %v6482 = vmul.f32 %v6230, %v6413
        %v6483 = vmul.f32 %v6231, %v6418
        %v6484 = vmul.f32 %v6232, %v6423
        %v6485 = vmul.f32 %v6233, %v6428
        %v6486 = vmul.f32 %v6234, %v6433
        %v6487 = vmul.f32 %v6235, %v6438
        %v6488 = vmul.f32 %v6236, %v6443
        %v6489 = vmul.f32 %v6237, %v6448
        %v6490 = vmul.f32 %v6238, %v6453
        %v6491 = vpack.c.bf16 %v6456, %v6455
        %v6492 = vpack.c.bf16 %v6458, %v6457
        %v6493 = vpack.c.bf16 %v6460, %v6459
        %v6494 = vpack.c.bf16 %v6462, %v6461
        %v6495 = vpack.c.bf16 %v6464, %v6463
        %v6496 = vpack.c.bf16 %v6466, %v6465
        %v6497 = vpack.c.bf16 %v6468, %v6467
        %v6498 = vpack.c.bf16 %v6470, %v6469
        %v6499 = vpack.c.bf16 %v6472, %v6471
        %v6500 = vpack.c.bf16 %v6474, %v6473
        %v6501 = vpack.c.bf16 %v6476, %v6475
        %v6502 = vpack.c.bf16 %v6478, %v6477
        %v6503 = vpack.c.bf16 %v6480, %v6479
        %v6504 = vpack.c.bf16 %v6482, %v6481
        %v6505 = vpack.c.bf16 %v6484, %v6483
        %v6506 = vpack.c.bf16 %v6486, %v6485
        %v6507 = vpack.c.bf16 %v6488, %v6487
        %v6508 = vpack.c.bf16 %v6490, %v6489
        %v6527 = vunpack.c.l.b16 %v6491
        %v6528 = vunpack.c.h.b16 %v6491
        %v6529 = vunpack.c.l.b16 %v6492
        %v6530 = vunpack.c.h.b16 %v6492
        %v6531 = vunpack.c.l.b16 %v6493
        %v6532 = vunpack.c.h.b16 %v6493
        %v6533 = vunpack.c.l.b16 %v6494
        %v6534 = vunpack.c.h.b16 %v6494
        %v6535 = vunpack.c.l.b16 %v6495
        %v6536 = vunpack.c.h.b16 %v6495
        %v6537 = vunpack.c.l.b16 %v6496
        %v6538 = vunpack.c.h.b16 %v6496
        %v6539 = vunpack.c.l.b16 %v6497
        %v6540 = vunpack.c.h.b16 %v6497
        %v6541 = vunpack.c.l.b16 %v6498
        %v6542 = vunpack.c.h.b16 %v6498
        %v6543 = vunpack.c.l.b16 %v6499
        %v6544 = vunpack.c.h.b16 %v6499
        %v6545 = vunpack.c.l.b16 %v6500
        %v6546 = vunpack.c.h.b16 %v6500
        %v6547 = vunpack.c.l.b16 %v6501
        %v6548 = vunpack.c.h.b16 %v6501
        %v6549 = vunpack.c.l.b16 %v6502
        %v6550 = vunpack.c.h.b16 %v6502
        %v6551 = vunpack.c.l.b16 %v6503
        %v6552 = vunpack.c.h.b16 %v6503
        %v6553 = vunpack.c.l.b16 %v6504
        %v6554 = vunpack.c.h.b16 %v6504
        %v6555 = vunpack.c.l.b16 %v6505
        %v6556 = vunpack.c.h.b16 %v6505
        %v6557 = vunpack.c.l.b16 %v6506
        %v6558 = vunpack.c.h.b16 %v6506
        %v6559 = vunpack.c.l.b16 %v6507
        %v6560 = vunpack.c.h.b16 %v6507
        %v6561 = vunpack.c.l.b16 %v6508
        %v6562 = vunpack.c.h.b16 %v6508
        %v6563 = vpack.c.b16 %v6527, %v6527
        %v6564 = vpack.c.b16 %v6528, %v6528
        %v6565 = vpack.c.b16 %v6529, %v6529
        %v6566 = vpack.c.b16 %v6530, %v6530
        %v6567 = vpack.c.b16 %v6531, %v6531
        %v6568 = vpack.c.b16 %v6532, %v6532
        %v6569 = vpack.c.b16 %v6533, %v6533
        %v6570 = vpack.c.b16 %v6534, %v6534
        %v6571 = vpack.c.b16 %v6535, %v6535
        %v6572 = vpack.c.b16 %v6536, %v6536
        %v6573 = vpack.c.b16 %v6537, %v6537
        %v6574 = vpack.c.b16 %v6538, %v6538
        %v6575 = vpack.c.b16 %v6539, %v6539
        %v6576 = vpack.c.b16 %v6540, %v6540
        %v6577 = vpack.c.b16 %v6541, %v6541
        %v6578 = vpack.c.b16 %v6542, %v6542
        %v6579 = vpack.c.b16 %v6543, %v6543
        %v6580 = vpack.c.b16 %v6544, %v6544
        %v6581 = vpack.c.b16 %v6545, %v6545
        %v6582 = vpack.c.b16 %v6546, %v6546
        %v6583 = vpack.c.b16 %v6547, %v6547
        %v6584 = vpack.c.b16 %v6548, %v6548
        %v6585 = vpack.c.b16 %v6549, %v6549
        %v6586 = vpack.c.b16 %v6550, %v6550
        %v6587 = vpack.c.b16 %v6551, %v6551
        %v6588 = vpack.c.b16 %v6552, %v6552
        %v6589 = vpack.c.b16 %v6553, %v6553
        %v6590 = vpack.c.b16 %v6554, %v6554
        %v6591 = vpack.c.b16 %v6555, %v6555
        %v6592 = vpack.c.b16 %v6556, %v6556
        %v6593 = vpack.c.b16 %v6557, %v6557
        %v6594 = vpack.c.b16 %v6558, %v6558
        %v6595 = vpack.c.b16 %v6559, %v6559
        %v6596 = vpack.c.b16 %v6560, %v6560
        %v6597 = vpack.c.b16 %v6561, %v6561
        %v6598 = vpack.c.b16 %v6562, %v6562
        %v6600 = vshrl.u32 %v6563, 16
        %v6602 = vrot.slane %v6600, 6
        %v6603 = vshll.u32 %v6563, 16
        %v6605 = vrot.slane %v6603, 7
        %v6606 = vor.u32 %v6602, %v6605
        %v6607 = vrot.slane %v6606, 4
        %v6609 = vshrl.u32 %v6564, 16
        %v6611 = vrot.slane %v6609, 6
        %v6612 = vshll.u32 %v6564, 16
        %v6614 = vrot.slane %v6612, 7
        %v6615 = vor.u32 %v6611, %v6614
        %v6616 = vsel %vm1732, %v6607, %v6615
        %v6617 = vrot.slane %v6615, 4
        %v6619 = vshrl.u32 %v6565, 16
        %v6621 = vrot.slane %v6619, 6
        %v6622 = vshll.u32 %v6565, 16
        %v6624 = vrot.slane %v6622, 7
        %v6625 = vor.u32 %v6621, %v6624
        %v6626 = vsel %vm1732, %v6617, %v6625
        %v6627 = vrot.slane %v6625, 4
        %v6629 = vshrl.u32 %v6566, 16
        %v6631 = vrot.slane %v6629, 6
        %v6632 = vshll.u32 %v6566, 16
        %v6634 = vrot.slane %v6632, 7
        %v6635 = vor.u32 %v6631, %v6634
        %v6636 = vsel %vm1732, %v6627, %v6635
        %v6637 = vrot.slane %v6635, 4
        %v6639 = vshrl.u32 %v6567, 16
        %v6641 = vrot.slane %v6639, 6
        %v6642 = vshll.u32 %v6567, 16
        %v6644 = vrot.slane %v6642, 7
        %v6645 = vor.u32 %v6641, %v6644
        %v6646 = vsel %vm1732, %v6637, %v6645
        %v6647 = vrot.slane %v6645, 4
        %v6649 = vshrl.u32 %v6568, 16
        %v6651 = vrot.slane %v6649, 6
        %v6652 = vshll.u32 %v6568, 16
        %v6654 = vrot.slane %v6652, 7
        %v6655 = vor.u32 %v6651, %v6654
        %v6656 = vsel %vm1732, %v6647, %v6655
        %v6657 = vrot.slane %v6655, 4
        %v6659 = vshrl.u32 %v6569, 16
        %v6661 = vrot.slane %v6659, 6
        %v6662 = vshll.u32 %v6569, 16
        %v6664 = vrot.slane %v6662, 7
        %v6665 = vor.u32 %v6661, %v6664
        %v6666 = vsel %vm1732, %v6657, %v6665
        %v6667 = vrot.slane %v6665, 4
        %v6669 = vshrl.u32 %v6570, 16
        %v6671 = vrot.slane %v6669, 6
        %v6672 = vshll.u32 %v6570, 16
        %v6674 = vrot.slane %v6672, 7
        %v6675 = vor.u32 %v6671, %v6674
        %v6676 = vsel %vm1732, %v6667, %v6675
        %v6677 = vrot.slane %v6675, 4
        %v6679 = vshrl.u32 %v6571, 16
        %v6681 = vrot.slane %v6679, 6
        %v6682 = vshll.u32 %v6571, 16
        %v6684 = vrot.slane %v6682, 7
        %v6685 = vor.u32 %v6681, %v6684
        %v6686 = vsel %vm1732, %v6677, %v6685
        %v6687 = vrot.slane %v6685, 4
        %v6689 = vshrl.u32 %v6572, 16
        %v6691 = vrot.slane %v6689, 6
        %v6692 = vshll.u32 %v6572, 16
        %v6694 = vrot.slane %v6692, 7
        %v6695 = vor.u32 %v6691, %v6694
        %v6696 = vsel %vm1732, %v6687, %v6695
        %v6697 = vrot.slane %v6695, 4
        %v6699 = vshrl.u32 %v6573, 16
        %v6701 = vrot.slane %v6699, 6
        %v6702 = vshll.u32 %v6573, 16
        %v6704 = vrot.slane %v6702, 7
        %v6705 = vor.u32 %v6701, %v6704
        %v6706 = vsel %vm1732, %v6697, %v6705
        %v6707 = vrot.slane %v6705, 4
        %v6709 = vshrl.u32 %v6574, 16
        %v6711 = vrot.slane %v6709, 6
        %v6712 = vshll.u32 %v6574, 16
        %v6714 = vrot.slane %v6712, 7
        %v6715 = vor.u32 %v6711, %v6714
        %v6716 = vsel %vm1732, %v6707, %v6715
        %v6717 = vrot.slane %v6715, 4
        %v6719 = vshrl.u32 %v6575, 16
        %v6721 = vrot.slane %v6719, 6
        %v6722 = vshll.u32 %v6575, 16
        %v6724 = vrot.slane %v6722, 7
        %v6725 = vor.u32 %v6721, %v6724
        %v6726 = vsel %vm1732, %v6717, %v6725
        %v6727 = vrot.slane %v6725, 4
        %v6729 = vshrl.u32 %v6576, 16
        %v6731 = vrot.slane %v6729, 6
        %v6732 = vshll.u32 %v6576, 16
        %v6734 = vrot.slane %v6732, 7
        %v6735 = vor.u32 %v6731, %v6734
        %v6736 = vsel %vm1732, %v6727, %v6735
        %v6737 = vrot.slane %v6735, 4
        %v6739 = vshrl.u32 %v6577, 16
        %v6741 = vrot.slane %v6739, 6
        %v6742 = vshll.u32 %v6577, 16
        %v6744 = vrot.slane %v6742, 7
        %v6745 = vor.u32 %v6741, %v6744
        %v6746 = vsel %vm1732, %v6737, %v6745
        %v6747 = vrot.slane %v6745, 4
        %v6749 = vshrl.u32 %v6578, 16
        %v6751 = vrot.slane %v6749, 6
        %v6752 = vshll.u32 %v6578, 16
        %v6754 = vrot.slane %v6752, 7
        %v6755 = vor.u32 %v6751, %v6754
        %v6756 = vsel %vm1732, %v6747, %v6755
        %v6757 = vrot.slane %v6755, 4
        %v6759 = vshrl.u32 %v6579, 16
        %v6761 = vrot.slane %v6759, 6
        %v6762 = vshll.u32 %v6579, 16
        %v6764 = vrot.slane %v6762, 7
        %v6765 = vor.u32 %v6761, %v6764
        %v6766 = vsel %vm1732, %v6757, %v6765
        %v6767 = vrot.slane %v6765, 4
        %v6769 = vshrl.u32 %v6580, 16
        %v6771 = vrot.slane %v6769, 6
        %v6772 = vshll.u32 %v6580, 16
        %v6774 = vrot.slane %v6772, 7
        %v6775 = vor.u32 %v6771, %v6774
        %v6776 = vsel %vm1732, %v6767, %v6775
        %v6777 = vrot.slane %v6775, 4
        %v6779 = vshrl.u32 %v6581, 16
        %v6781 = vrot.slane %v6779, 6
        %v6782 = vshll.u32 %v6581, 16
        %v6784 = vrot.slane %v6782, 7
        %v6785 = vor.u32 %v6781, %v6784
        %v6786 = vsel %vm1732, %v6777, %v6785
        %v6787 = vrot.slane %v6785, 4
        %v6789 = vshrl.u32 %v6582, 16
        %v6791 = vrot.slane %v6789, 6
        %v6792 = vshll.u32 %v6582, 16
        %v6794 = vrot.slane %v6792, 7
        %v6795 = vor.u32 %v6791, %v6794
        %v6796 = vsel %vm1732, %v6787, %v6795
        %v6797 = vrot.slane %v6795, 4
        %v6799 = vshrl.u32 %v6583, 16
        %v6801 = vrot.slane %v6799, 6
        %v6802 = vshll.u32 %v6583, 16
        %v6804 = vrot.slane %v6802, 7
        %v6805 = vor.u32 %v6801, %v6804
        %v6806 = vsel %vm1732, %v6797, %v6805
        %v6807 = vrot.slane %v6805, 4
        %v6809 = vshrl.u32 %v6584, 16
        %v6811 = vrot.slane %v6809, 6
        %v6812 = vshll.u32 %v6584, 16
        %v6814 = vrot.slane %v6812, 7
        %v6815 = vor.u32 %v6811, %v6814
        %v6816 = vsel %vm1732, %v6807, %v6815
        %v6817 = vrot.slane %v6815, 4
        %v6819 = vshrl.u32 %v6585, 16
        %v6821 = vrot.slane %v6819, 6
        %v6822 = vshll.u32 %v6585, 16
        %v6824 = vrot.slane %v6822, 7
        %v6825 = vor.u32 %v6821, %v6824
        %v6826 = vsel %vm1732, %v6817, %v6825
        %v6827 = vrot.slane %v6825, 4
        %v6829 = vshrl.u32 %v6586, 16
        %v6831 = vrot.slane %v6829, 6
        %v6832 = vshll.u32 %v6586, 16
        %v6834 = vrot.slane %v6832, 7
        %v6835 = vor.u32 %v6831, %v6834
        %v6836 = vsel %vm1732, %v6827, %v6835
        %v6837 = vrot.slane %v6835, 4
        %v6839 = vshrl.u32 %v6587, 16
        %v6841 = vrot.slane %v6839, 6
        %v6842 = vshll.u32 %v6587, 16
        %v6844 = vrot.slane %v6842, 7
        %v6845 = vor.u32 %v6841, %v6844
        %v6846 = vsel %vm1732, %v6837, %v6845
        %v6847 = vrot.slane %v6845, 4
        %v6849 = vshrl.u32 %v6588, 16
        %v6851 = vrot.slane %v6849, 6
        %v6852 = vshll.u32 %v6588, 16
        %v6854 = vrot.slane %v6852, 7
        %v6855 = vor.u32 %v6851, %v6854
        %v6856 = vsel %vm1732, %v6847, %v6855
        %v6857 = vrot.slane %v6855, 4
        %v6859 = vshrl.u32 %v6589, 16
        %v6861 = vrot.slane %v6859, 6
        %v6862 = vshll.u32 %v6589, 16
        %v6864 = vrot.slane %v6862, 7
        %v6865 = vor.u32 %v6861, %v6864
        %v6866 = vsel %vm1732, %v6857, %v6865
        %v6867 = vrot.slane %v6865, 4
        %v6869 = vshrl.u32 %v6590, 16
        %v6871 = vrot.slane %v6869, 6
        %v6872 = vshll.u32 %v6590, 16
        %v6874 = vrot.slane %v6872, 7
        %v6875 = vor.u32 %v6871, %v6874
        %v6876 = vsel %vm1732, %v6867, %v6875
        %v6877 = vrot.slane %v6875, 4
        %v6879 = vshrl.u32 %v6591, 16
        %v6881 = vrot.slane %v6879, 6
        %v6882 = vshll.u32 %v6591, 16
        %v6884 = vrot.slane %v6882, 7
        %v6885 = vor.u32 %v6881, %v6884
        %v6886 = vsel %vm1732, %v6877, %v6885
        %v6887 = vrot.slane %v6885, 4
        %v6889 = vshrl.u32 %v6592, 16
        %v6891 = vrot.slane %v6889, 6
        %v6892 = vshll.u32 %v6592, 16
        %v6894 = vrot.slane %v6892, 7
        %v6895 = vor.u32 %v6891, %v6894
        %v6896 = vsel %vm1732, %v6887, %v6895
        %v6897 = vrot.slane %v6895, 4
        %v6899 = vshrl.u32 %v6593, 16
        %v6901 = vrot.slane %v6899, 6
        %v6902 = vshll.u32 %v6593, 16
        %v6904 = vrot.slane %v6902, 7
        %v6905 = vor.u32 %v6901, %v6904
        %v6906 = vsel %vm1732, %v6897, %v6905
        %v6907 = vrot.slane %v6905, 4
        %v6909 = vshrl.u32 %v6594, 16
        %v6911 = vrot.slane %v6909, 6
        %v6912 = vshll.u32 %v6594, 16
        %v6914 = vrot.slane %v6912, 7
        %v6915 = vor.u32 %v6911, %v6914
        %v6916 = vsel %vm1732, %v6907, %v6915
        %v6917 = vrot.slane %v6915, 4
        %v6919 = vshrl.u32 %v6595, 16
        %v6921 = vrot.slane %v6919, 6
        %v6922 = vshll.u32 %v6595, 16
        %v6924 = vrot.slane %v6922, 7
        %v6925 = vor.u32 %v6921, %v6924
        %v6926 = vsel %vm1732, %v6917, %v6925
        %v6927 = vrot.slane %v6925, 4
        %v6929 = vshrl.u32 %v6596, 16
        %v6931 = vrot.slane %v6929, 6
        %v6932 = vshll.u32 %v6596, 16
        %v6934 = vrot.slane %v6932, 7
        %v6935 = vor.u32 %v6931, %v6934
        %v6936 = vsel %vm1732, %v6927, %v6935
        %v6937 = vrot.slane %v6935, 4
        %v6939 = vshrl.u32 %v6597, 16
        %v6941 = vrot.slane %v6939, 6
        %v6942 = vshll.u32 %v6597, 16
        %v6944 = vrot.slane %v6942, 7
        %v6945 = vor.u32 %v6941, %v6944
        %v6946 = vsel %vm1732, %v6937, %v6945
        %v6947 = vrot.slane %v6945, 4
        %v6949 = vshrl.u32 %v6598, 16
        %v6951 = vrot.slane %v6949, 6
        %v6952 = vshll.u32 %v6598, 16
        %v6954 = vrot.slane %v6952, 7
        %v6955 = vor.u32 %v6951, %v6954
        %v6956 = vsel %vm1732, %v6947, %v6955
        %v6957 = vrot.slane %v6955, 4
        %v6995 = vld [vmem:[#allocation4 + $0x8] sm:$0xe]
        %v6996 = vsel %vm2131, %v6606, %v6995
        %6997 = vst [vmem:[#allocation4 + $0x8] sm:$0xe] %v6996
        %6998 = vst.msk [vmem:[#allocation4 + $0xc] sm:$0xf] %vm790, %v6616
        %6999 = vst.msk [vmem:[#allocation4 + $0x10] sm:$0xf] %vm790, %v6626
        %7000 = vst.msk [vmem:[#allocation4 + $0x14] sm:$0xf] %vm790, %v6636
        %7001 = vst.msk [vmem:[#allocation4 + $0x18] sm:$0xf] %vm790, %v6646
        %7002 = vst.msk [vmem:[#allocation4 + $0x1c] sm:$0xf] %vm790, %v6656
        %7003 = vst.msk [vmem:[#allocation4 + $0x20] sm:$0xf] %vm790, %v6666
        %7004 = vst.msk [vmem:[#allocation4 + $0x24] sm:$0xf] %vm790, %v6676
        %7005 = vst.msk [vmem:[#allocation4 + $0x28] sm:$0xf] %vm790, %v6686
        %7006 = vst.msk [vmem:[#allocation4 + $0x2c] sm:$0xf] %vm790, %v6696
        %7007 = vst.msk [vmem:[#allocation4 + $0x30] sm:$0xf] %vm790, %v6706
        %7008 = vst.msk [vmem:[#allocation4 + $0x34] sm:$0xf] %vm790, %v6716
        %7009 = vst.msk [vmem:[#allocation4 + $0x38] sm:$0xf] %vm790, %v6726
        %7010 = vst.msk [vmem:[#allocation4 + $0x3c] sm:$0xf] %vm790, %v6736
        %7011 = vst.msk [vmem:[#allocation4 + $0x40] sm:$0xf] %vm790, %v6746
        %7012 = vst.msk [vmem:[#allocation4 + $0x44] sm:$0xf] %vm790, %v6756
        %7013 = vst.msk [vmem:[#allocation4 + $0x48] sm:$0xf] %vm790, %v6766
        %7014 = vst.msk [vmem:[#allocation4 + $0x4c] sm:$0xf] %vm790, %v6776
        %7015 = vst.msk [vmem:[#allocation4 + $0x50] sm:$0xf] %vm790, %v6786
        %7016 = vst.msk [vmem:[#allocation4 + $0x54] sm:$0xf] %vm790, %v6796
        %7017 = vst.msk [vmem:[#allocation4 + $0x58] sm:$0xf] %vm790, %v6806
        %7018 = vst.msk [vmem:[#allocation4 + $0x5c] sm:$0xf] %vm790, %v6816
        %7019 = vst.msk [vmem:[#allocation4 + $0x60] sm:$0xf] %vm790, %v6826
        %7020 = vst.msk [vmem:[#allocation4 + $0x64] sm:$0xf] %vm790, %v6836
        %7021 = vst.msk [vmem:[#allocation4 + $0x68] sm:$0xf] %vm790, %v6846
        %7022 = vst.msk [vmem:[#allocation4 + $0x6c] sm:$0xf] %vm790, %v6856
        %7023 = vst.msk [vmem:[#allocation4 + $0x70] sm:$0xf] %vm790, %v6866
        %7024 = vst.msk [vmem:[#allocation4 + $0x74] sm:$0xf] %vm790, %v6876
        %7025 = vst.msk [vmem:[#allocation4 + $0x78] sm:$0xf] %vm790, %v6886
        %7026 = vst.msk [vmem:[#allocation4 + $0x7c] sm:$0xf] %vm790, %v6896
        %7027 = vst.msk [vmem:[#allocation4 + $0x80] sm:$0xf] %vm790, %v6906
        %7028 = vst.msk [vmem:[#allocation4 + $0x84] sm:$0xf] %vm790, %v6916
        %7029 = vst.msk [vmem:[#allocation4 + $0x88] sm:$0xf] %vm790, %v6926
        %7030 = vst.msk [vmem:[#allocation4 + $0x8c] sm:$0xf] %vm790, %v6936
        %7031 = vst.msk [vmem:[#allocation4 + $0x90] sm:$0xf] %vm790, %v6946
        %7032 = vst.msk [vmem:[#allocation4 + $0x94] sm:$0xf] %vm790, %v6956
        %v7033 = vld [vmem:[#allocation4 + $0x98] sm:$0x3]
        %v7034 = vsel %vm2171, %v6957, %v7033
        %7035 = vst [vmem:[#allocation4 + $0x98] sm:$0x3] %v7034
        %v7036 = vld [vmem:[%s19] sm:$0xff]
        %v7037 = vld [vmem:[%s19 + $0x8] sm:$0xf]
        %v7038 = vld [vmem:[%s19 + $0xc] sm:$0xff]
        %v7039 = vld [vmem:[%s19 + $0x14] sm:$0xf]
        %v7040 = vld [vmem:[%s19 + $0x18] sm:$0xff]
        %v7041 = vld [vmem:[%s19 + $0x20] sm:$0xf]
        %v7042 = vld [vmem:[%s19 + $0x24] sm:$0xff]
        %v7043 = vld [vmem:[%s19 + $0x2c] sm:$0xf]
        %v7044 = vld [vmem:[%s19 + $0x30] sm:$0xff]
        %v7045 = vld [vmem:[%s19 + $0x38] sm:$0xf]
        %v7046 = vld [vmem:[%s19 + $0x3c] sm:$0xff]
        %v7047 = vld [vmem:[%s19 + $0x44] sm:$0xf]
        %v7048 = vld [vmem:[%s19 + $0x48] sm:$0xff]
        %v7049 = vld [vmem:[%s19 + $0x50] sm:$0xf]
        %v7050 = vld [vmem:[%s19 + $0x54] sm:$0xff]
        %v7051 = vld [vmem:[%s19 + $0x5c] sm:$0xf]
        %v7052 = vld [vmem:[%s19 + $0x60] sm:$0xff]
        %v7053 = vld [vmem:[%s19 + $0x68] sm:$0xf]
        %v7054 = vld [vmem:[%s19 + $0x6c] sm:$0xff]
        %v7055 = vld [vmem:[%s19 + $0x74] sm:$0xf]
        %v7056 = vld [vmem:[#allocation4] sm:$0xf]
        %v7057 = vld [vmem:[#allocation4 + $0x4] sm:$0xf]
        %v7058 = vld [vmem:[#allocation4 + $0x8] sm:$0xf]
        %v7059 = vld [vmem:[#allocation4 + $0xc] sm:$0xf]
        %v7060 = vld [vmem:[#allocation4 + $0x10] sm:$0xf]
        %v7061 = vld [vmem:[#allocation4 + $0x14] sm:$0xf]
        %v7062 = vld [vmem:[#allocation4 + $0x18] sm:$0xf]
        %v7063 = vld [vmem:[#allocation4 + $0x1c] sm:$0xf]
        %v7064 = vld [vmem:[#allocation4 + $0x20] sm:$0xf]
        %v7065 = vld [vmem:[#allocation4 + $0x24] sm:$0xf]
        %v7066 = vld [vmem:[#allocation4 + $0x28] sm:$0xf]
        %v7067 = vld [vmem:[#allocation4 + $0x2c] sm:$0xf]
        %v7068 = vld [vmem:[#allocation4 + $0x30] sm:$0xf]
        %v7069 = vld [vmem:[#allocation4 + $0x34] sm:$0xf]
        %v7070 = vld [vmem:[#allocation4 + $0x38] sm:$0xf]
        %v7071 = vld [vmem:[#allocation4 + $0x3c] sm:$0xf]
        %v7072 = vld [vmem:[#allocation4 + $0x40] sm:$0xf]
        %v7073 = vld [vmem:[#allocation4 + $0x44] sm:$0xf]
        %v7074 = vld [vmem:[#allocation4 + $0x48] sm:$0xf]
        %v7075 = vld [vmem:[#allocation4 + $0x4c] sm:$0xf]
        %v7076 = vld [vmem:[#allocation4 + $0x50] sm:$0xf]
        %v7077 = vld [vmem:[#allocation4 + $0x54] sm:$0xf]
        %v7078 = vld [vmem:[#allocation4 + $0x58] sm:$0xf]
        %v7079 = vld [vmem:[#allocation4 + $0x5c] sm:$0xf]
        %v7080 = vld [vmem:[#allocation4 + $0x60] sm:$0xf]
        %v7081 = vld [vmem:[#allocation4 + $0x64] sm:$0xf]
        %v7082 = vld [vmem:[#allocation4 + $0x68] sm:$0xf]
        %v7083 = vld [vmem:[#allocation4 + $0x6c] sm:$0xf]
        %v7084 = vld [vmem:[#allocation4 + $0x70] sm:$0xf]
        %v7085 = vld [vmem:[#allocation4 + $0x74] sm:$0xf]
        %v7086 = vld [vmem:[#allocation4 + $0x78] sm:$0xf]
        %v7087 = vld [vmem:[#allocation4 + $0x7c] sm:$0xf]
        %v7088 = vld [vmem:[#allocation4 + $0x80] sm:$0xf]
        %v7089 = vld [vmem:[#allocation4 + $0x84] sm:$0xf]
        %v7090 = vld [vmem:[#allocation4 + $0x88] sm:$0xf]
        %v7091 = vld [vmem:[#allocation4 + $0x8c] sm:$0xf]
        %v7092 = vld [vmem:[#allocation4 + $0x90] sm:$0x1]
        %v7093 = vld [vmem:[#allocation4] sm:$0xe]
        %v7094 = vld [vmem:[#allocation4 + $0x8] sm:$0xe]
        %v7095 = vld [vmem:[#allocation4 + $0x90] sm:$0xf]
        %v7096 = vld [vmem:[#allocation4 + $0x94] sm:$0xf]
        %v7097 = vld [vmem:[#allocation4 + $0x98] sm:$0x1]
        %v7098 = vld [vmem:[#allocation4 + $0x98] sm:$0x3]
        %v7099 = vld [vmem:[#allocation4 + $0x8] sm:$0xc]
        %v7100 = vld [vmem:[#allocation4 + $0x10] sm:$0xc]
        %v7101 = vld [vmem:[#allocation4 + $0x98] sm:$0xf]
        %v7102 = vld [vmem:[#allocation4 + $0x9c] sm:$0xf]
        %v7103 = vld [vmem:[#allocation4 + $0xa0] sm:$0x3]
        %v7104 = vld [vmem:[#allocation4 + $0xa0] sm:$0x7]
        %v7105 = vld [vmem:[#allocation4 + $0x10] sm:$0x8]
        %v7142 = vunpack.c.l.b16 %v7056
        %v7143 = vunpack.c.l.b16 %v7057
        %v7144 = vunpack.c.l.b16 %v7058
        %v7145 = vunpack.c.l.b16 %v7059
        %v7146 = vunpack.c.l.b16 %v7060
        %v7147 = vunpack.c.l.b16 %v7061
        %v7148 = vunpack.c.l.b16 %v7062
        %v7149 = vunpack.c.l.b16 %v7063
        %v7150 = vunpack.c.l.b16 %v7064
        %v7151 = vunpack.c.l.b16 %v7065
        %v7152 = vunpack.c.l.b16 %v7066
        %v7153 = vunpack.c.l.b16 %v7067
        %v7154 = vunpack.c.l.b16 %v7068
        %v7155 = vunpack.c.l.b16 %v7069
        %v7156 = vunpack.c.l.b16 %v7070
        %v7157 = vunpack.c.l.b16 %v7071
        %v7158 = vunpack.c.l.b16 %v7072
        %v7159 = vunpack.c.l.b16 %v7073
        %v7160 = vunpack.c.l.b16 %v7074
        %v7161 = vunpack.c.l.b16 %v7075
        %v7162 = vunpack.c.l.b16 %v7076
        %v7163 = vunpack.c.l.b16 %v7077
        %v7164 = vunpack.c.l.b16 %v7078
        %v7165 = vunpack.c.l.b16 %v7079
        %v7166 = vunpack.c.l.b16 %v7080
        %v7167 = vunpack.c.l.b16 %v7081
        %v7168 = vunpack.c.l.b16 %v7082
        %v7169 = vunpack.c.l.b16 %v7083
        %v7170 = vunpack.c.l.b16 %v7084
        %v7171 = vunpack.c.l.b16 %v7085
        %v7172 = vunpack.c.l.b16 %v7086
        %v7173 = vunpack.c.l.b16 %v7087
        %v7174 = vunpack.c.l.b16 %v7088
        %v7175 = vunpack.c.l.b16 %v7089
        %v7176 = vunpack.c.l.b16 %v7090
        %v7177 = vunpack.c.l.b16 %v7091
        %v7178 = vpack.c.b16 %v7143, %v7142
        %v7179 = vpack.c.b16 %v7145, %v7144
        %v7180 = vpack.c.b16 %v7147, %v7146
        %v7181 = vpack.c.b16 %v7149, %v7148
        %v7182 = vpack.c.b16 %v7151, %v7150
        %v7183 = vpack.c.b16 %v7153, %v7152
        %v7184 = vpack.c.b16 %v7155, %v7154
        %v7185 = vpack.c.b16 %v7157, %v7156
        %v7186 = vpack.c.b16 %v7159, %v7158
        %v7187 = vpack.c.b16 %v7161, %v7160
        %v7188 = vpack.c.b16 %v7163, %v7162
        %v7189 = vpack.c.b16 %v7165, %v7164
        %v7190 = vpack.c.b16 %v7167, %v7166
        %v7191 = vpack.c.b16 %v7169, %v7168
        %v7192 = vpack.c.b16 %v7171, %v7170
        %v7193 = vpack.c.b16 %v7173, %v7172
        %v7194 = vpack.c.b16 %v7175, %v7174
        %v7195 = vpack.c.b16 %v7177, %v7176
        %v7197 = vunpack.c.l.b16 %v7092
        %v7198 = vpack.c.b16 %v7197, %v7197
        %v7200 = vshrl.u32 %v7178, 16
        %v7202 = vshll.u32 %v7178, 16
        %v7204 = vrot.slane %v7202, 1
        %v7205 = vor.u32 %v7200, %v7204
        %v7207 = vshll.u32 %v7179, 16
        %v7209 = vrot.slane %v7207, 1
        %v7210 = vsel %vm2318, %v7205, %v7209
        %v7211 = vshrl.u32 %v7179, 16
        %v7213 = vor.u32 %v7211, %v7209
        %v7215 = vshll.u32 %v7180, 16
        %v7217 = vrot.slane %v7215, 1
        %v7218 = vsel %vm2318, %v7213, %v7217
        %v7219 = vshrl.u32 %v7180, 16
        %v7221 = vor.u32 %v7219, %v7217
        %v7223 = vshll.u32 %v7181, 16
        %v7225 = vrot.slane %v7223, 1
        %v7226 = vsel %vm2318, %v7221, %v7225
        %v7227 = vshrl.u32 %v7181, 16
        %v7229 = vor.u32 %v7227, %v7225
        %v7231 = vshll.u32 %v7182, 16
        %v7233 = vrot.slane %v7231, 1
        %v7234 = vsel %vm2318, %v7229, %v7233
        %v7235 = vshrl.u32 %v7182, 16
        %v7237 = vor.u32 %v7235, %v7233
        %v7239 = vshll.u32 %v7183, 16
        %v7241 = vrot.slane %v7239, 1
        %v7242 = vsel %vm2318, %v7237, %v7241
        %v7243 = vshrl.u32 %v7183, 16
        %v7245 = vor.u32 %v7243, %v7241
        %v7247 = vshll.u32 %v7184, 16
        %v7249 = vrot.slane %v7247, 1
        %v7250 = vsel %vm2318, %v7245, %v7249
        %v7251 = vshrl.u32 %v7184, 16
        %v7253 = vor.u32 %v7251, %v7249
        %v7255 = vshll.u32 %v7185, 16
        %v7257 = vrot.slane %v7255, 1
        %v7258 = vsel %vm2318, %v7253, %v7257
        %v7259 = vshrl.u32 %v7185, 16
        %v7261 = vor.u32 %v7259, %v7257
        %v7263 = vshll.u32 %v7186, 16
        %v7265 = vrot.slane %v7263, 1
        %v7266 = vsel %vm2318, %v7261, %v7265
        %v7267 = vshrl.u32 %v7186, 16
        %v7269 = vor.u32 %v7267, %v7265
        %v7271 = vshll.u32 %v7187, 16
        %v7273 = vrot.slane %v7271, 1
        %v7274 = vsel %vm2318, %v7269, %v7273
        %v7275 = vshrl.u32 %v7187, 16
        %v7277 = vor.u32 %v7275, %v7273
        %v7279 = vshll.u32 %v7188, 16
        %v7281 = vrot.slane %v7279, 1
        %v7282 = vsel %vm2318, %v7277, %v7281
        %v7283 = vshrl.u32 %v7188, 16
        %v7285 = vor.u32 %v7283, %v7281
        %v7287 = vshll.u32 %v7189, 16
        %v7289 = vrot.slane %v7287, 1
        %v7290 = vsel %vm2318, %v7285, %v7289
        %v7291 = vshrl.u32 %v7189, 16
        %v7293 = vor.u32 %v7291, %v7289
        %v7295 = vshll.u32 %v7190, 16
        %v7297 = vrot.slane %v7295, 1
        %v7298 = vsel %vm2318, %v7293, %v7297
        %v7299 = vshrl.u32 %v7190, 16
        %v7301 = vor.u32 %v7299, %v7297
        %v7303 = vshll.u32 %v7191, 16
        %v7305 = vrot.slane %v7303, 1
        %v7306 = vsel %vm2318, %v7301, %v7305
        %v7307 = vshrl.u32 %v7191, 16
        %v7309 = vor.u32 %v7307, %v7305
        %v7311 = vshll.u32 %v7192, 16
        %v7313 = vrot.slane %v7311, 1
        %v7314 = vsel %vm2318, %v7309, %v7313
        %v7315 = vshrl.u32 %v7192, 16
        %v7317 = vor.u32 %v7315, %v7313
        %v7319 = vshll.u32 %v7193, 16
        %v7321 = vrot.slane %v7319, 1
        %v7322 = vsel %vm2318, %v7317, %v7321
        %v7323 = vshrl.u32 %v7193, 16
        %v7325 = vor.u32 %v7323, %v7321
        %v7327 = vshll.u32 %v7194, 16
        %v7329 = vrot.slane %v7327, 1
        %v7330 = vsel %vm2318, %v7325, %v7329
        %v7331 = vshrl.u32 %v7194, 16
        %v7333 = vor.u32 %v7331, %v7329
        %v7335 = vshll.u32 %v7195, 16
        %v7337 = vrot.slane %v7335, 1
        %v7338 = vsel %vm2318, %v7333, %v7337
        %v7339 = vshrl.u32 %v7195, 16
        %v7341 = vor.u32 %v7339, %v7337
        %v7343 = vshll.u32 %v7198, 16
        %v7345 = vrot.slane %v7343, 1
        %v7346 = vsel %vm2318, %v7341, %v7345
        %7347 = vrot.lane.b32.xlu0 %v7210, 16
        %v7348 = vpop.permute.xlu0 %7347
        %7349 = vrot.lane.b32.xlu0 %v7218, 16
        %v7350 = vpop.permute.xlu0 %7349
        %7351 = vrot.lane.b32.xlu0 %v7226, 16
        %v7352 = vpop.permute.xlu0 %7351
        %7353 = vrot.lane.b32.xlu0 %v7234, 16
        %v7354 = vpop.permute.xlu0 %7353
        %7355 = vrot.lane.b32.xlu0 %v7242, 16
        %v7356 = vpop.permute.xlu0 %7355
        %7357 = vrot.lane.b32.xlu0 %v7250, 16
        %v7358 = vpop.permute.xlu0 %7357
        %7359 = vrot.lane.b32.xlu0 %v7258, 16
        %v7360 = vpop.permute.xlu0 %7359
        %7361 = vrot.lane.b32.xlu0 %v7266, 16
        %v7362 = vpop.permute.xlu0 %7361
        %7363 = vrot.lane.b32.xlu0 %v7274, 16
        %v7364 = vpop.permute.xlu0 %7363
        %7365 = vrot.lane.b32.xlu0 %v7282, 16
        %v7366 = vpop.permute.xlu0 %7365
        %7367 = vrot.lane.b32.xlu0 %v7290, 16
        %v7368 = vpop.permute.xlu0 %7367
        %7369 = vrot.lane.b32.xlu0 %v7298, 16
        %v7370 = vpop.permute.xlu0 %7369
        %7371 = vrot.lane.b32.xlu0 %v7306, 16
        %v7372 = vpop.permute.xlu0 %7371
        %7373 = vrot.lane.b32.xlu0 %v7314, 16
        %v7374 = vpop.permute.xlu0 %7373
        %7375 = vrot.lane.b32.xlu0 %v7322, 16
        %v7376 = vpop.permute.xlu0 %7375
        %7377 = vrot.lane.b32.xlu0 %v7330, 16
        %v7378 = vpop.permute.xlu0 %7377
        %7379 = vrot.lane.b32.xlu0 %v7338, 16
        %v7380 = vpop.permute.xlu0 %7379
        %7381 = vrot.lane.b32.xlu0 %v7346, 16
        %v7382 = vpop.permute.xlu0 %7381
        %v7384 = vunpack.c.l.b16 %v7093
        %v7385 = vpack.c.b16 %v7143, %v7384
        %v7386 = vrot.slane %v7385, 1
        %v7387 = vrot.slane %v7179, 1
        %v7388 = vsel %vm2506, %v7386, %v7387
        %v7389 = vrot.slane %v7180, 1
        %v7390 = vsel %vm2506, %v7387, %v7389
        %v7391 = vrot.slane %v7181, 1
        %v7392 = vsel %vm2506, %v7389, %v7391
        %v7393 = vrot.slane %v7182, 1
        %v7394 = vsel %vm2506, %v7391, %v7393
        %v7395 = vrot.slane %v7183, 1
        %v7396 = vsel %vm2506, %v7393, %v7395
        %v7397 = vrot.slane %v7184, 1
        %v7398 = vsel %vm2506, %v7395, %v7397
        %v7399 = vrot.slane %v7185, 1
        %v7400 = vsel %vm2506, %v7397, %v7399
        %v7401 = vrot.slane %v7186, 1
        %v7402 = vsel %vm2506, %v7399, %v7401
        %v7403 = vrot.slane %v7187, 1
        %v7404 = vsel %vm2506, %v7401, %v7403
        %v7405 = vrot.slane %v7188, 1
        %v7406 = vsel %vm2506, %v7403, %v7405
        %v7407 = vrot.slane %v7189, 1
        %v7408 = vsel %vm2506, %v7405, %v7407
        %v7409 = vrot.slane %v7190, 1
        %v7410 = vsel %vm2506, %v7407, %v7409
        %v7411 = vrot.slane %v7191, 1
        %v7412 = vsel %vm2506, %v7409, %v7411
        %v7413 = vrot.slane %v7192, 1
        %v7414 = vsel %vm2506, %v7411, %v7413
        %v7415 = vrot.slane %v7193, 1
        %v7416 = vsel %vm2506, %v7413, %v7415
        %v7417 = vrot.slane %v7194, 1
        %v7418 = vsel %vm2506, %v7415, %v7417
        %v7419 = vrot.slane %v7195, 1
        %v7420 = vsel %vm2506, %v7417, %v7419
        %v7421 = vrot.slane %v7198, 1
        %v7422 = vsel %vm2506, %v7419, %v7421
        %7423 = vrot.lane.b32.xlu0 %v7388, 32
        %v7424 = vpop.permute.xlu0 %7423
        %7425 = vrot.lane.b32.xlu0 %v7390, 32
        %v7426 = vpop.permute.xlu0 %7425
        %7427 = vrot.lane.b32.xlu0 %v7392, 32
        %v7428 = vpop.permute.xlu0 %7427
        %7429 = vrot.lane.b32.xlu0 %v7394, 32
        %v7430 = vpop.permute.xlu0 %7429
        %7431 = vrot.lane.b32.xlu0 %v7396, 32
        %v7432 = vpop.permute.xlu0 %7431
        %7433 = vrot.lane.b32.xlu0 %v7398, 32
        %v7434 = vpop.permute.xlu0 %7433
        %7435 = vrot.lane.b32.xlu0 %v7400, 32
        %v7436 = vpop.permute.xlu0 %7435
        %7437 = vrot.lane.b32.xlu0 %v7402, 32
        %v7438 = vpop.permute.xlu0 %7437
        %7439 = vrot.lane.b32.xlu0 %v7404, 32
        %v7440 = vpop.permute.xlu0 %7439
        %7441 = vrot.lane.b32.xlu0 %v7406, 32
        %v7442 = vpop.permute.xlu0 %7441
        %7443 = vrot.lane.b32.xlu0 %v7408, 32
        %v7444 = vpop.permute.xlu0 %7443
        %7445 = vrot.lane.b32.xlu0 %v7410, 32
        %v7446 = vpop.permute.xlu0 %7445
        %7447 = vrot.lane.b32.xlu0 %v7412, 32
        %v7448 = vpop.permute.xlu0 %7447
        %7449 = vrot.lane.b32.xlu0 %v7414, 32
        %v7450 = vpop.permute.xlu0 %7449
        %7451 = vrot.lane.b32.xlu0 %v7416, 32
        %v7452 = vpop.permute.xlu0 %7451
        %7453 = vrot.lane.b32.xlu0 %v7418, 32
        %v7454 = vpop.permute.xlu0 %7453
        %7455 = vrot.lane.b32.xlu0 %v7420, 32
        %v7456 = vpop.permute.xlu0 %7455
        %7457 = vrot.lane.b32.xlu0 %v7422, 32
        %v7458 = vpop.permute.xlu0 %7457
        %v7463 = vunpack.c.l.b16 %v7094
        %v7464 = vunpack.c.l.b16 %v7095
        %v7465 = vunpack.c.l.b16 %v7096
        %v7466 = vunpack.c.l.b16 %v7097
        %v7467 = vpack.c.b16 %v7145, %v7463
        %v7468 = vpack.c.b16 %v7465, %v7464
        %v7469 = vpack.c.b16 %v7466, %v7466
        %v7470 = vrot.slane %v7467, 1
        %v7471 = vsel %vm2506, %v7470, %v7389
        %v7472 = vrot.slane %v7468, 1
        %v7473 = vsel %vm2506, %v7419, %v7472
        %v7474 = vrot.slane %v7469, 1
        %v7475 = vsel %vm2506, %v7472, %v7474
        %7476 = vrot.lane.b32.xlu0 %v7471, 48
        %v7477 = vpop.permute.xlu0 %7476
        %7478 = vrot.lane.b32.xlu0 %v7392, 48
        %v7479 = vpop.permute.xlu0 %7478
        %7480 = vrot.lane.b32.xlu0 %v7394, 48
        %v7481 = vpop.permute.xlu0 %7480
        %7482 = vrot.lane.b32.xlu0 %v7396, 48
        %v7483 = vpop.permute.xlu0 %7482
        %7484 = vrot.lane.b32.xlu0 %v7398, 48
        %v7485 = vpop.permute.xlu0 %7484
        %7486 = vrot.lane.b32.xlu0 %v7400, 48
        %v7487 = vpop.permute.xlu0 %7486
        %7488 = vrot.lane.b32.xlu0 %v7402, 48
        %v7489 = vpop.permute.xlu0 %7488
        %7490 = vrot.lane.b32.xlu0 %v7404, 48
        %v7491 = vpop.permute.xlu0 %7490
        %7492 = vrot.lane.b32.xlu0 %v7406, 48
        %v7493 = vpop.permute.xlu0 %7492
        %7494 = vrot.lane.b32.xlu0 %v7408, 48
        %v7495 = vpop.permute.xlu0 %7494
        %7496 = vrot.lane.b32.xlu0 %v7410, 48
        %v7497 = vpop.permute.xlu0 %7496
        %7498 = vrot.lane.b32.xlu0 %v7412, 48
        %v7499 = vpop.permute.xlu0 %7498
        %7500 = vrot.lane.b32.xlu0 %v7414, 48
        %v7501 = vpop.permute.xlu0 %7500
        %7502 = vrot.lane.b32.xlu0 %v7416, 48
        %v7503 = vpop.permute.xlu0 %7502
        %7504 = vrot.lane.b32.xlu0 %v7418, 48
        %v7505 = vpop.permute.xlu0 %7504
        %7506 = vrot.lane.b32.xlu0 %v7420, 48
        %v7507 = vpop.permute.xlu0 %7506
        %7508 = vrot.lane.b32.xlu0 %v7473, 48
        %v7509 = vpop.permute.xlu0 %7508
        %7510 = vrot.lane.b32.xlu0 %v7475, 48
        %v7511 = vpop.permute.xlu0 %7510
        %v7513 = vunpack.c.l.b16 %v7098
        %v7514 = vpack.c.b16 %v7513, %v7513
        %v7516 = vshrl.u32 %v7467, 16
        %v7518 = vrot.slane %v7516, 1
        %v7519 = vshll.u32 %v7467, 16
        %v7521 = vrot.slane %v7519, 2
        %v7522 = vor.u32 %v7518, %v7521
        %v7523 = vrot.slane %v7219, 1
        %v7524 = vrot.slane %v7215, 2
        %v7525 = vor.u32 %v7523, %v7524
        %v7526 = vsel %vm2636, %v7522, %v7525
        %v7527 = vrot.slane %v7227, 1
        %v7528 = vrot.slane %v7223, 2
        %v7529 = vor.u32 %v7527, %v7528
        %v7530 = vsel %vm2636, %v7525, %v7529
        %v7531 = vrot.slane %v7235, 1
        %v7532 = vrot.slane %v7231, 2
        %v7533 = vor.u32 %v7531, %v7532
        %v7534 = vsel %vm2636, %v7529, %v7533
        %v7535 = vrot.slane %v7243, 1
        %v7536 = vrot.slane %v7239, 2
        %v7537 = vor.u32 %v7535, %v7536
        %v7538 = vsel %vm2636, %v7533, %v7537
        %v7539 = vrot.slane %v7251, 1
        %v7540 = vrot.slane %v7247, 2
        %v7541 = vor.u32 %v7539, %v7540
        %v7542 = vsel %vm2636, %v7537, %v7541
        %v7543 = vrot.slane %v7259, 1
        %v7544 = vrot.slane %v7255, 2
        %v7545 = vor.u32 %v7543, %v7544
        %v7546 = vsel %vm2636, %v7541, %v7545
        %v7547 = vrot.slane %v7267, 1
        %v7548 = vrot.slane %v7263, 2
        %v7549 = vor.u32 %v7547, %v7548
        %v7550 = vsel %vm2636, %v7545, %v7549
        %v7551 = vrot.slane %v7275, 1
        %v7552 = vrot.slane %v7271, 2
        %v7553 = vor.u32 %v7551, %v7552
        %v7554 = vsel %vm2636, %v7549, %v7553
        %v7555 = vrot.slane %v7283, 1
        %v7556 = vrot.slane %v7279, 2
        %v7557 = vor.u32 %v7555, %v7556
        %v7558 = vsel %vm2636, %v7553, %v7557
        %v7559 = vrot.slane %v7291, 1
        %v7560 = vrot.slane %v7287, 2
        %v7561 = vor.u32 %v7559, %v7560
        %v7562 = vsel %vm2636, %v7557, %v7561
        %v7563 = vrot.slane %v7299, 1
        %v7564 = vrot.slane %v7295, 2
        %v7565 = vor.u32 %v7563, %v7564
        %v7566 = vsel %vm2636, %v7561, %v7565
        %v7567 = vrot.slane %v7307, 1
        %v7568 = vrot.slane %v7303, 2
        %v7569 = vor.u32 %v7567, %v7568
        %v7570 = vsel %vm2636, %v7565, %v7569
        %v7571 = vrot.slane %v7315, 1
        %v7572 = vrot.slane %v7311, 2
        %v7573 = vor.u32 %v7571, %v7572
        %v7574 = vsel %vm2636, %v7569, %v7573
        %v7575 = vrot.slane %v7323, 1
        %v7576 = vrot.slane %v7319, 2
        %v7577 = vor.u32 %v7575, %v7576
        %v7578 = vsel %vm2636, %v7573, %v7577
        %v7579 = vrot.slane %v7331, 1
        %v7580 = vrot.slane %v7327, 2
        %v7581 = vor.u32 %v7579, %v7580
        %v7582 = vsel %vm2636, %v7577, %v7581
        %v7583 = vrot.slane %v7339, 1
        %v7584 = vrot.slane %v7335, 2
        %v7585 = vor.u32 %v7583, %v7584
        %v7586 = vsel %vm2636, %v7581, %v7585
        %v7588 = vshrl.u32 %v7468, 16
        %v7590 = vrot.slane %v7588, 1
        %v7591 = vshll.u32 %v7468, 16
        %v7593 = vrot.slane %v7591, 2
        %v7594 = vor.u32 %v7590, %v7593
        %v7595 = vsel %vm2636, %v7585, %v7594
        %v7597 = vshrl.u32 %v7514, 16
        %v7599 = vrot.slane %v7597, 1
        %v7600 = vshll.u32 %v7514, 16
        %v7602 = vrot.slane %v7600, 2
        %v7603 = vor.u32 %v7599, %v7602
        %v7604 = vsel %vm2636, %v7594, %v7603
        %7605 = vrot.lane.b32.xlu0 %v7526, 64
        %v7606 = vpop.permute.xlu0 %7605
        %7607 = vrot.lane.b32.xlu0 %v7530, 64
        %v7608 = vpop.permute.xlu0 %7607
        %7609 = vrot.lane.b32.xlu0 %v7534, 64
        %v7610 = vpop.permute.xlu0 %7609
        %7611 = vrot.lane.b32.xlu0 %v7538, 64
        %v7612 = vpop.permute.xlu0 %7611
        %7613 = vrot.lane.b32.xlu0 %v7542, 64
        %v7614 = vpop.permute.xlu0 %7613
        %7615 = vrot.lane.b32.xlu0 %v7546, 64
        %v7616 = vpop.permute.xlu0 %7615
        %7617 = vrot.lane.b32.xlu0 %v7550, 64
        %v7618 = vpop.permute.xlu0 %7617
        %7619 = vrot.lane.b32.xlu0 %v7554, 64
        %v7620 = vpop.permute.xlu0 %7619
        %7621 = vrot.lane.b32.xlu0 %v7558, 64
        %v7622 = vpop.permute.xlu0 %7621
        %7623 = vrot.lane.b32.xlu0 %v7562, 64
        %v7624 = vpop.permute.xlu0 %7623
        %7625 = vrot.lane.b32.xlu0 %v7566, 64
        %v7626 = vpop.permute.xlu0 %7625
        %7627 = vrot.lane.b32.xlu0 %v7570, 64
        %v7628 = vpop.permute.xlu0 %7627
        %7629 = vrot.lane.b32.xlu0 %v7574, 64
        %v7630 = vpop.permute.xlu0 %7629
        %7631 = vrot.lane.b32.xlu0 %v7578, 64
        %v7632 = vpop.permute.xlu0 %7631
        %7633 = vrot.lane.b32.xlu0 %v7582, 64
        %v7634 = vpop.permute.xlu0 %7633
        %7635 = vrot.lane.b32.xlu0 %v7586, 64
        %v7636 = vpop.permute.xlu0 %7635
        %7637 = vrot.lane.b32.xlu0 %v7595, 64
        %v7638 = vpop.permute.xlu0 %7637
        %7639 = vrot.lane.b32.xlu0 %v7604, 64
        %v7640 = vpop.permute.xlu0 %7639
        %v7642 = vunpack.c.l.b16 %v7099
        %v7643 = vpack.c.b16 %v7145, %v7642
        %v7644 = vrot.slane %v7643, 2
        %v7645 = vrot.slane %v7180, 2
        %v7646 = vsel %vm2766, %v7644, %v7645
        %v7647 = vrot.slane %v7181, 2
        %v7648 = vsel %vm2766, %v7645, %v7647
        %v7649 = vrot.slane %v7182, 2
        %v7650 = vsel %vm2766, %v7647, %v7649
        %v7651 = vrot.slane %v7183, 2
        %v7652 = vsel %vm2766, %v7649, %v7651
        %v7653 = vrot.slane %v7184, 2
        %v7654 = vsel %vm2766, %v7651, %v7653
        %v7655 = vrot.slane %v7185, 2
        %v7656 = vsel %vm2766, %v7653, %v7655
        %v7657 = vrot.slane %v7186, 2
        %v7658 = vsel %vm2766, %v7655, %v7657
        %v7659 = vrot.slane %v7187, 2
        %v7660 = vsel %vm2766, %v7657, %v7659
        %v7661 = vrot.slane %v7188, 2
        %v7662 = vsel %vm2766, %v7659, %v7661
        %v7663 = vrot.slane %v7189, 2
        %v7664 = vsel %vm2766, %v7661, %v7663
        %v7665 = vrot.slane %v7190, 2
        %v7666 = vsel %vm2766, %v7663, %v7665
        %v7667 = vrot.slane %v7191, 2
        %v7668 = vsel %vm2766, %v7665, %v7667
        %v7669 = vrot.slane %v7192, 2
        %v7670 = vsel %vm2766, %v7667, %v7669
        %v7671 = vrot.slane %v7193, 2
        %v7672 = vsel %vm2766, %v7669, %v7671
        %v7673 = vrot.slane %v7194, 2
        %v7674 = vsel %vm2766, %v7671, %v7673
        %v7675 = vrot.slane %v7195, 2
        %v7676 = vsel %vm2766, %v7673, %v7675
        %v7677 = vrot.slane %v7468, 2
        %v7678 = vsel %vm2766, %v7675, %v7677
        %v7679 = vrot.slane %v7514, 2
        %v7680 = vsel %vm2766, %v7677, %v7679
        %7681 = vrot.lane.b32.xlu0 %v7646, 80
        %v7682 = vpop.permute.xlu0 %7681
        %7683 = vrot.lane.b32.xlu0 %v7648, 80
        %v7684 = vpop.permute.xlu0 %7683
        %7685 = vrot.lane.b32.xlu0 %v7650, 80
        %v7686 = vpop.permute.xlu0 %7685
        %7687 = vrot.lane.b32.xlu0 %v7652, 80
        %v7688 = vpop.permute.xlu0 %7687
        %7689 = vrot.lane.b32.xlu0 %v7654, 80
        %v7690 = vpop.permute.xlu0 %7689
        %7691 = vrot.lane.b32.xlu0 %v7656, 80
        %v7692 = vpop.permute.xlu0 %7691
        %7693 = vrot.lane.b32.xlu0 %v7658, 80
        %v7694 = vpop.permute.xlu0 %7693
        %7695 = vrot.lane.b32.xlu0 %v7660, 80
        %v7696 = vpop.permute.xlu0 %7695
        %7697 = vrot.lane.b32.xlu0 %v7662, 80
        %v7698 = vpop.permute.xlu0 %7697
        %7699 = vrot.lane.b32.xlu0 %v7664, 80
        %v7700 = vpop.permute.xlu0 %7699
        %7701 = vrot.lane.b32.xlu0 %v7666, 80
        %v7702 = vpop.permute.xlu0 %7701
        %7703 = vrot.lane.b32.xlu0 %v7668, 80
        %v7704 = vpop.permute.xlu0 %7703
        %7705 = vrot.lane.b32.xlu0 %v7670, 80
        %v7706 = vpop.permute.xlu0 %7705
        %7707 = vrot.lane.b32.xlu0 %v7672, 80
        %v7708 = vpop.permute.xlu0 %7707
        %7709 = vrot.lane.b32.xlu0 %v7674, 80
        %v7710 = vpop.permute.xlu0 %7709
        %7711 = vrot.lane.b32.xlu0 %v7676, 80
        %v7712 = vpop.permute.xlu0 %7711
        %7713 = vrot.lane.b32.xlu0 %v7678, 80
        %v7714 = vpop.permute.xlu0 %7713
        %7715 = vrot.lane.b32.xlu0 %v7680, 80
        %v7716 = vpop.permute.xlu0 %7715
        %v7721 = vunpack.c.l.b16 %v7100
        %v7722 = vunpack.c.l.b16 %v7101
        %v7723 = vunpack.c.l.b16 %v7102
        %v7724 = vunpack.c.l.b16 %v7103
        %v7725 = vpack.c.b16 %v7147, %v7721
        %v7726 = vpack.c.b16 %v7723, %v7722
        %v7727 = vpack.c.b16 %v7724, %v7724
        %v7728 = vrot.slane %v7725, 2
        %v7729 = vsel %vm2766, %v7728, %v7647
        %v7730 = vrot.slane %v7726, 2
        %v7731 = vsel %vm2766, %v7677, %v7730
        %v7732 = vrot.slane %v7727, 2
        %v7733 = vsel %vm2766, %v7730, %v7732
        %7734 = vrot.lane.b32.xlu0 %v7729, 96
        %v7735 = vpop.permute.xlu0 %7734
        %7736 = vrot.lane.b32.xlu0 %v7650, 96
        %v7737 = vpop.permute.xlu0 %7736
        %7738 = vrot.lane.b32.xlu0 %v7652, 96
        %v7739 = vpop.permute.xlu0 %7738
        %7740 = vrot.lane.b32.xlu0 %v7654, 96
        %v7741 = vpop.permute.xlu0 %7740
        %7742 = vrot.lane.b32.xlu0 %v7656, 96
        %v7743 = vpop.permute.xlu0 %7742
        %7744 = vrot.lane.b32.xlu0 %v7658, 96
        %v7745 = vpop.permute.xlu0 %7744
        %7746 = vrot.lane.b32.xlu0 %v7660, 96
        %v7747 = vpop.permute.xlu0 %7746
        %7748 = vrot.lane.b32.xlu0 %v7662, 96
        %v7749 = vpop.permute.xlu0 %7748
        %7750 = vrot.lane.b32.xlu0 %v7664, 96
        %v7751 = vpop.permute.xlu0 %7750
        %7752 = vrot.lane.b32.xlu0 %v7666, 96
        %v7753 = vpop.permute.xlu0 %7752
        %7754 = vrot.lane.b32.xlu0 %v7668, 96
        %v7755 = vpop.permute.xlu0 %7754
        %7756 = vrot.lane.b32.xlu0 %v7670, 96
        %v7757 = vpop.permute.xlu0 %7756
        %7758 = vrot.lane.b32.xlu0 %v7672, 96
        %v7759 = vpop.permute.xlu0 %7758
        %7760 = vrot.lane.b32.xlu0 %v7674, 96
        %v7761 = vpop.permute.xlu0 %7760
        %7762 = vrot.lane.b32.xlu0 %v7676, 96
        %v7763 = vpop.permute.xlu0 %7762
        %7764 = vrot.lane.b32.xlu0 %v7678, 96
        %v7765 = vpop.permute.xlu0 %7764
        %7766 = vrot.lane.b32.xlu0 %v7731, 96
        %v7767 = vpop.permute.xlu0 %7766
        %7768 = vrot.lane.b32.xlu0 %v7733, 96
        %v7769 = vpop.permute.xlu0 %7768
        %v7771 = vunpack.c.l.b16 %v7104
        %v7772 = vpack.c.b16 %v7771, %v7771
        %v7774 = vshrl.u32 %v7725, 16
        %v7776 = vrot.slane %v7774, 2
        %v7777 = vshll.u32 %v7725, 16
        %v7779 = vrot.slane %v7777, 3
        %v7780 = vor.u32 %v7776, %v7779
        %v7781 = vrot.slane %v7227, 2
        %v7782 = vrot.slane %v7223, 3
        %v7783 = vor.u32 %v7781, %v7782
        %v7784 = vsel %vm2896, %v7780, %v7783
        %v7785 = vrot.slane %v7235, 2
        %v7786 = vrot.slane %v7231, 3
        %v7787 = vor.u32 %v7785, %v7786
        %v7788 = vsel %vm2896, %v7783, %v7787
        %v7789 = vrot.slane %v7243, 2
        %v7790 = vrot.slane %v7239, 3
        %v7791 = vor.u32 %v7789, %v7790
        %v7792 = vsel %vm2896, %v7787, %v7791
        %v7793 = vrot.slane %v7251, 2
        %v7794 = vrot.slane %v7247, 3
        %v7795 = vor.u32 %v7793, %v7794
        %v7796 = vsel %vm2896, %v7791, %v7795
        %v7797 = vrot.slane %v7259, 2
        %v7798 = vrot.slane %v7255, 3
        %v7799 = vor.u32 %v7797, %v7798
        %v7800 = vsel %vm2896, %v7795, %v7799
        %v7801 = vrot.slane %v7267, 2
        %v7802 = vrot.slane %v7263, 3
        %v7803 = vor.u32 %v7801, %v7802
        %v7804 = vsel %vm2896, %v7799, %v7803
        %v7805 = vrot.slane %v7275, 2
        %v7806 = vrot.slane %v7271, 3
        %v7807 = vor.u32 %v7805, %v7806
        %v7808 = vsel %vm2896, %v7803, %v7807
        %v7809 = vrot.slane %v7283, 2
        %v7810 = vrot.slane %v7279, 3
        %v7811 = vor.u32 %v7809, %v7810
        %v7812 = vsel %vm2896, %v7807, %v7811
        %v7813 = vrot.slane %v7291, 2
        %v7814 = vrot.slane %v7287, 3
        %v7815 = vor.u32 %v7813, %v7814
        %v7816 = vsel %vm2896, %v7811, %v7815
        %v7817 = vrot.slane %v7299, 2
        %v7818 = vrot.slane %v7295, 3
        %v7819 = vor.u32 %v7817, %v7818
        %v7820 = vsel %vm2896, %v7815, %v7819
        %v7821 = vrot.slane %v7307, 2
        %v7822 = vrot.slane %v7303, 3
        %v7823 = vor.u32 %v7821, %v7822
        %v7824 = vsel %vm2896, %v7819, %v7823
        %v7825 = vrot.slane %v7315, 2
        %v7826 = vrot.slane %v7311, 3
        %v7827 = vor.u32 %v7825, %v7826
        %v7828 = vsel %vm2896, %v7823, %v7827
        %v7829 = vrot.slane %v7323, 2
        %v7830 = vrot.slane %v7319, 3
        %v7831 = vor.u32 %v7829, %v7830
        %v7832 = vsel %vm2896, %v7827, %v7831
        %v7833 = vrot.slane %v7331, 2
        %v7834 = vrot.slane %v7327, 3
        %v7835 = vor.u32 %v7833, %v7834
        %v7836 = vsel %vm2896, %v7831, %v7835
        %v7837 = vrot.slane %v7339, 2
        %v7838 = vrot.slane %v7335, 3
        %v7839 = vor.u32 %v7837, %v7838
        %v7840 = vsel %vm2896, %v7835, %v7839
        %v7841 = vrot.slane %v7588, 2
        %v7842 = vrot.slane %v7591, 3
        %v7843 = vor.u32 %v7841, %v7842
        %v7844 = vsel %vm2896, %v7839, %v7843
        %v7846 = vshrl.u32 %v7726, 16
        %v7848 = vrot.slane %v7846, 2
        %v7849 = vshll.u32 %v7726, 16
        %v7851 = vrot.slane %v7849, 3
        %v7852 = vor.u32 %v7848, %v7851
        %v7853 = vsel %vm2896, %v7843, %v7852
        %v7855 = vshrl.u32 %v7772, 16
        %v7857 = vrot.slane %v7855, 2
        %v7858 = vshll.u32 %v7772, 16
        %v7860 = vrot.slane %v7858, 3
        %v7861 = vor.u32 %v7857, %v7860
        %v7862 = vsel %vm2896, %v7852, %v7861
        %7863 = vrot.lane.b32.xlu0 %v7784, 112
        %v7864 = vpop.permute.xlu0 %7863
        %7865 = vrot.lane.b32.xlu0 %v7788, 112
        %v7866 = vpop.permute.xlu0 %7865
        %7867 = vrot.lane.b32.xlu0 %v7792, 112
        %v7868 = vpop.permute.xlu0 %7867
        %7869 = vrot.lane.b32.xlu0 %v7796, 112
        %v7870 = vpop.permute.xlu0 %7869
        %7871 = vrot.lane.b32.xlu0 %v7800, 112
        %v7872 = vpop.permute.xlu0 %7871
        %7873 = vrot.lane.b32.xlu0 %v7804, 112
        %v7874 = vpop.permute.xlu0 %7873
        %7875 = vrot.lane.b32.xlu0 %v7808, 112
        %v7876 = vpop.permute.xlu0 %7875
        %7877 = vrot.lane.b32.xlu0 %v7812, 112
        %v7878 = vpop.permute.xlu0 %7877
        %7879 = vrot.lane.b32.xlu0 %v7816, 112
        %v7880 = vpop.permute.xlu0 %7879
        %7881 = vrot.lane.b32.xlu0 %v7820, 112
        %v7882 = vpop.permute.xlu0 %7881
        %7883 = vrot.lane.b32.xlu0 %v7824, 112
        %v7884 = vpop.permute.xlu0 %7883
        %7885 = vrot.lane.b32.xlu0 %v7828, 112
        %v7886 = vpop.permute.xlu0 %7885
        %7887 = vrot.lane.b32.xlu0 %v7832, 112
        %v7888 = vpop.permute.xlu0 %7887
        %7889 = vrot.lane.b32.xlu0 %v7836, 112
        %v7890 = vpop.permute.xlu0 %7889
        %7891 = vrot.lane.b32.xlu0 %v7840, 112
        %v7892 = vpop.permute.xlu0 %7891
        %7893 = vrot.lane.b32.xlu0 %v7844, 112
        %v7894 = vpop.permute.xlu0 %7893
        %7895 = vrot.lane.b32.xlu0 %v7853, 112
        %v7896 = vpop.permute.xlu0 %7895
        %7897 = vrot.lane.b32.xlu0 %v7862, 112
        %v7898 = vpop.permute.xlu0 %7897
        %v7900 = vunpack.c.l.b16 %v7105
        %v7901 = vpack.c.b16 %v7147, %v7900
        %v7902 = vrot.slane %v7901, 3
        %v7903 = vrot.slane %v7181, 3
        %v7904 = vsel %vm3026, %v7902, %v7903
        %v7905 = vrot.slane %v7182, 3
        %v7906 = vsel %vm3026, %v7903, %v7905
        %v7907 = vrot.slane %v7183, 3
        %v7908 = vsel %vm3026, %v7905, %v7907
        %v7909 = vrot.slane %v7184, 3
        %v7910 = vsel %vm3026, %v7907, %v7909
        %v7911 = vrot.slane %v7185, 3
        %v7912 = vsel %vm3026, %v7909, %v7911
        %v7913 = vrot.slane %v7186, 3
        %v7914 = vsel %vm3026, %v7911, %v7913
        %v7915 = vrot.slane %v7187, 3
        %v7916 = vsel %vm3026, %v7913, %v7915
        %v7917 = vrot.slane %v7188, 3
        %v7918 = vsel %vm3026, %v7915, %v7917
        %v7919 = vrot.slane %v7189, 3
        %v7920 = vsel %vm3026, %v7917, %v7919
        %v7921 = vrot.slane %v7190, 3
        %v7922 = vsel %vm3026, %v7919, %v7921
        %v7923 = vrot.slane %v7191, 3
        %v7924 = vsel %vm3026, %v7921, %v7923
        %v7925 = vrot.slane %v7192, 3
        %v7926 = vsel %vm3026, %v7923, %v7925
        %v7927 = vrot.slane %v7193, 3
        %v7928 = vsel %vm3026, %v7925, %v7927
        %v7929 = vrot.slane %v7194, 3
        %v7930 = vsel %vm3026, %v7927, %v7929
        %v7931 = vrot.slane %v7195, 3
        %v7932 = vsel %vm3026, %v7929, %v7931
        %v7933 = vrot.slane %v7468, 3
        %v7934 = vsel %vm3026, %v7931, %v7933
        %v7935 = vrot.slane %v7726, 3
        %v7936 = vsel %vm3026, %v7933, %v7935
        %v7937 = vrot.slane %v7772, 3
        %v7938 = vsel %vm3026, %v7935, %v7937
        %v7958 = vsel %vm3064, %v7178, %v7348
        %v7960 = vsel %vm3064, %v7179, %v7350
        %v7962 = vsel %vm3064, %v7180, %v7352
        %v7964 = vsel %vm3064, %v7181, %v7354
        %v7966 = vsel %vm3064, %v7182, %v7356
        %v7968 = vsel %vm3064, %v7183, %v7358
        %v7970 = vsel %vm3064, %v7184, %v7360
        %v7972 = vsel %vm3064, %v7185, %v7362
        %v7974 = vsel %vm3064, %v7186, %v7364
        %v7976 = vsel %vm3064, %v7187, %v7366
        %v7978 = vsel %vm3064, %v7188, %v7368
        %v7980 = vsel %vm3064, %v7189, %v7370
        %v7982 = vsel %vm3064, %v7190, %v7372
        %v7984 = vsel %vm3064, %v7191, %v7374
        %v7986 = vsel %vm3064, %v7192, %v7376
        %v7988 = vsel %vm3064, %v7193, %v7378
        %v7990 = vsel %vm3064, %v7194, %v7380
        %v7992 = vsel %vm3064, %v7195, %v7382
        %v7994 = vsel %vm3101, %v7958, %v7424
        %v7996 = vsel %vm3101, %v7960, %v7426
        %v7998 = vsel %vm3101, %v7962, %v7428
        %v8000 = vsel %vm3101, %v7964, %v7430
        %v8002 = vsel %vm3101, %v7966, %v7432
        %v8004 = vsel %vm3101, %v7968, %v7434
        %v8006 = vsel %vm3101, %v7970, %v7436
        %v8008 = vsel %vm3101, %v7972, %v7438
        %v8010 = vsel %vm3101, %v7974, %v7440
        %v8012 = vsel %vm3101, %v7976, %v7442
        %v8014 = vsel %vm3101, %v7978, %v7444
        %v8016 = vsel %vm3101, %v7980, %v7446
        %v8018 = vsel %vm3101, %v7982, %v7448
        %v8020 = vsel %vm3101, %v7984, %v7450
        %v8022 = vsel %vm3101, %v7986, %v7452
        %v8024 = vsel %vm3101, %v7988, %v7454
        %v8026 = vsel %vm3101, %v7990, %v7456
        %v8028 = vsel %vm3101, %v7992, %v7458
        %v8030 = vsel %vm3138, %v7994, %v7477
        %v8032 = vsel %vm3138, %v7996, %v7479
        %v8034 = vsel %vm3138, %v7998, %v7481
        %v8036 = vsel %vm3138, %v8000, %v7483
        %v8038 = vsel %vm3138, %v8002, %v7485
        %v8040 = vsel %vm3138, %v8004, %v7487
        %v8042 = vsel %vm3138, %v8006, %v7489
        %v8044 = vsel %vm3138, %v8008, %v7491
        %v8046 = vsel %vm3138, %v8010, %v7493
        %v8048 = vsel %vm3138, %v8012, %v7495
        %v8050 = vsel %vm3138, %v8014, %v7497
        %v8052 = vsel %vm3138, %v8016, %v7499
        %v8054 = vsel %vm3138, %v8018, %v7501
        %v8056 = vsel %vm3138, %v8020, %v7503
        %v8058 = vsel %vm3138, %v8022, %v7505
        %v8060 = vsel %vm3138, %v8024, %v7507
        %v8062 = vsel %vm3138, %v8026, %v7509
        %v8064 = vsel %vm3138, %v8028, %v7511
        %v8066 = vsel %vm3175, %v8030, %v7606
        %v8068 = vsel %vm3175, %v8032, %v7608
        %v8070 = vsel %vm3175, %v8034, %v7610
        %v8072 = vsel %vm3175, %v8036, %v7612
        %v8074 = vsel %vm3175, %v8038, %v7614
        %v8076 = vsel %vm3175, %v8040, %v7616
        %v8078 = vsel %vm3175, %v8042, %v7618
        %v8080 = vsel %vm3175, %v8044, %v7620
        %v8082 = vsel %vm3175, %v8046, %v7622
        %v8084 = vsel %vm3175, %v8048, %v7624
        %v8086 = vsel %vm3175, %v8050, %v7626
        %v8088 = vsel %vm3175, %v8052, %v7628
        %v8090 = vsel %vm3175, %v8054, %v7630
        %v8092 = vsel %vm3175, %v8056, %v7632
        %v8094 = vsel %vm3175, %v8058, %v7634
        %v8096 = vsel %vm3175, %v8060, %v7636
        %v8098 = vsel %vm3175, %v8062, %v7638
        %v8100 = vsel %vm3175, %v8064, %v7640
        %v8102 = vsel %vm3212, %v8066, %v7682
        %v8104 = vsel %vm3212, %v8068, %v7684
        %v8106 = vsel %vm3212, %v8070, %v7686
        %v8108 = vsel %vm3212, %v8072, %v7688
        %v8110 = vsel %vm3212, %v8074, %v7690
        %v8112 = vsel %vm3212, %v8076, %v7692
        %v8114 = vsel %vm3212, %v8078, %v7694
        %v8116 = vsel %vm3212, %v8080, %v7696
        %v8118 = vsel %vm3212, %v8082, %v7698
        %v8120 = vsel %vm3212, %v8084, %v7700
        %v8122 = vsel %vm3212, %v8086, %v7702
        %v8124 = vsel %vm3212, %v8088, %v7704
        %v8126 = vsel %vm3212, %v8090, %v7706
        %v8128 = vsel %vm3212, %v8092, %v7708
        %v8130 = vsel %vm3212, %v8094, %v7710
        %v8132 = vsel %vm3212, %v8096, %v7712
        %v8134 = vsel %vm3212, %v8098, %v7714
        %v8136 = vsel %vm3212, %v8100, %v7716
        %v8138 = vsel %vm3249, %v8102, %v7735
        %v8140 = vsel %vm3249, %v8104, %v7737
        %v8142 = vsel %vm3249, %v8106, %v7739
        %v8144 = vsel %vm3249, %v8108, %v7741
        %v8146 = vsel %vm3249, %v8110, %v7743
        %v8148 = vsel %vm3249, %v8112, %v7745
        %v8150 = vsel %vm3249, %v8114, %v7747
        %v8152 = vsel %vm3249, %v8116, %v7749
        %v8154 = vsel %vm3249, %v8118, %v7751
        %v8156 = vsel %vm3249, %v8120, %v7753
        %v8158 = vsel %vm3249, %v8122, %v7755
        %v8160 = vsel %vm3249, %v8124, %v7757
        %v8162 = vsel %vm3249, %v8126, %v7759
        %v8164 = vsel %vm3249, %v8128, %v7761
        %v8166 = vsel %vm3249, %v8130, %v7763
        %v8168 = vsel %vm3249, %v8132, %v7765
        %v8170 = vsel %vm3249, %v8134, %v7767
        %v8172 = vsel %vm3249, %v8136, %v7769
        %v8174 = vsel %vm3286, %v8138, %v7864
        %v8177 = vsel %vm3286, %v8140, %v7866
        %v8180 = vsel %vm3286, %v8142, %v7868
        %v8183 = vsel %vm3286, %v8144, %v7870
        %v8186 = vsel %vm3286, %v8146, %v7872
        %v8189 = vsel %vm3286, %v8148, %v7874
        %v8192 = vsel %vm3286, %v8150, %v7876
        %v8195 = vsel %vm3286, %v8152, %v7878
        %v8198 = vsel %vm3286, %v8154, %v7880
        %v8201 = vsel %vm3286, %v8156, %v7882
        %v8204 = vsel %vm3286, %v8158, %v7884
        %v8207 = vsel %vm3286, %v8160, %v7886
        %v8210 = vsel %vm3286, %v8162, %v7888
        %v8213 = vsel %vm3286, %v8164, %v7890
        %v8216 = vsel %vm3286, %v8166, %v7892
        %v8219 = vsel %vm3286, %v8168, %v7894
        %v8222 = vsel %vm3286, %v8170, %v7896
        %v8225 = vsel %vm3286, %v8172, %v7898
        %v8247 = vunpack.c.l.b16 %v7036
        %v8248 = vunpack.c.h.b16 %v7036
        %v8249 = vunpack.c.l.b16 %v7037
        %v8250 = vunpack.c.l.b16 %v7038
        %v8251 = vunpack.c.h.b16 %v7038
        %v8252 = vunpack.c.l.b16 %v7039
        %v8253 = vunpack.c.l.b16 %v7040
        %v8254 = vunpack.c.h.b16 %v7040
        %v8255 = vunpack.c.l.b16 %v7041
        %v8256 = vunpack.c.l.b16 %v7042
        %v8257 = vunpack.c.h.b16 %v7042
        %v8258 = vunpack.c.l.b16 %v7043
        %v8259 = vunpack.c.l.b16 %v7044
        %v8260 = vunpack.c.h.b16 %v7044
        %v8261 = vunpack.c.l.b16 %v7045
        %v8262 = vunpack.c.l.b16 %v7046
        %v8263 = vunpack.c.h.b16 %v7046
        %v8264 = vunpack.c.l.b16 %v7047
        %v8265 = vunpack.c.l.b16 %v7048
        %v8266 = vunpack.c.h.b16 %v7048
        %v8267 = vunpack.c.l.b16 %v7049
        %v8268 = vunpack.c.l.b16 %v7050
        %v8269 = vunpack.c.h.b16 %v7050
        %v8270 = vunpack.c.l.b16 %v7051
        %v8271 = vunpack.c.l.b16 %v7052
        %v8272 = vunpack.c.h.b16 %v7052
        %v8273 = vunpack.c.l.b16 %v7053
        %v8274 = vunpack.c.l.b16 %v7054
        %v8275 = vunpack.c.h.b16 %v7054
        %v8276 = vunpack.c.l.b16 %v7055
        %v8277 = vpack.c.b16 %v8250, %v8247
        %v8278 = vpack.c.b16 %v8251, %v8248
        %v8279 = vpack.c.b16 %v8252, %v8249
        %v8280 = vpack.c.b16 %v8256, %v8253
        %v8281 = vpack.c.b16 %v8257, %v8254
        %v8282 = vpack.c.b16 %v8258, %v8255
        %v8283 = vpack.c.b16 %v8262, %v8259
        %v8284 = vpack.c.b16 %v8263, %v8260
        %v8285 = vpack.c.b16 %v8264, %v8261
        %v8286 = vpack.c.b16 %v8268, %v8265
        %v8287 = vpack.c.b16 %v8269, %v8266
        %v8288 = vpack.c.b16 %v8270, %v8267
        %v8289 = vpack.c.b16 %v8274, %v8271
        %v8290 = vpack.c.b16 %v8275, %v8272
        %v8291 = vpack.c.b16 %v8276, %v8273
        %v8303 = vsel %vm3101, %v8279, 0
        %v8306 = vsel %vm3101, %v8282, 0
        %v8309 = vsel %vm3101, %v8285, 0
        %v8312 = vsel %vm3101, %v8288, 0
        %v8315 = vsel %vm3101, %v8291, 0
        %8317 = vmatprep.subr.bf16.mxu0 %v7904
        %8318 = vmatpush1.bf16.msra.mxu0 %v8174
        %8319 = vmatprep.subr.bf16.mxu0 %v7906
        %8320 = vmatpush1.bf16.msra.mxu0 %v8177
        %8321 = vmatprep.subr.bf16.mxu0 %v7908
        %8322 = vmatpush1.bf16.msra.mxu0 %v8180
        %8323 = vmatprep.subr.bf16.mxu0 %v7910
        %8324 = vmatpush1.bf16.msra.mxu0 %v8183
        %8325 = vmatprep.subr.bf16.mxu0 %v7912
        %8326 = vmatpush1.bf16.msra.mxu0 %v8186
        %8327 = vmatprep.subr.bf16.mxu0 %v7914
        %8328 = vmatpush1.bf16.msra.mxu0 %v8189
        %8329 = vmatprep.subr.bf16.mxu0 %v7916
        %8330 = vmatpush1.bf16.msra.mxu0 %v8192
        %8331 = vmatprep.subr.bf16.mxu0 %v7918
        %8332 = vmatpush1.bf16.msra.mxu0 %v8195
        %8333 = vmatprep.subr.bf16.mxu0 %v7920
        %8334 = vmatpush1.bf16.msra.mxu0 %v8198
        %8335 = vmatprep.subr.bf16.mxu0 %v7922
        %8336 = vmatpush1.bf16.msra.mxu0 %v8201
        %8337 = vmatprep.subr.bf16.mxu0 %v7924
        %8338 = vmatpush1.bf16.msra.mxu0 %v8204
        %8339 = vmatprep.subr.bf16.mxu0 %v7926
        %8340 = vmatpush1.bf16.msra.mxu0 %v8207
        %8341 = vmatprep.subr.bf16.mxu0 %v7928
        %8342 = vmatpush1.bf16.msra.mxu0 %v8210
        %8343 = vmatprep.subr.bf16.mxu0 %v7930
        %8344 = vmatpush1.bf16.msra.mxu0 %v8213
        %8345 = vmatprep.subr.bf16.mxu0 %v7932
        %8346 = vmatpush1.bf16.msra.mxu0 %v8216
        %8347 = vmatprep.subr.bf16.mxu0 %v7934
        %8348 = vmatpush1.bf16.msra.mxu0 %v8219
        %8349 = vmatprep.mubr.bf16.mxu0 %v8278
        %8350 = vmatmul.mubr.bf16.gmra.mrb[0].mxu0 %v8277
        %v8351 = vpop.f32.mrb[0].mxu0
        %v8352 = vadd.f32 0.0, %v8351
        %v8353 = vpop.f32.mrb[0].mxu0
        %v8354 = vadd.f32 0.0, %v8353
        %v8355 = vpop.f32.mrb[0].mxu0
        %v8356 = vadd.f32 0.0, %v8355
        %v8357 = vpop.f32.mrb[0].mxu0
        %v8358 = vadd.f32 0.0, %v8357
        %8359 = vmatprep.mubr.bf16.mxu0 %v8281
        %8360 = vmatmul.mubr.bf16.gmra.mrb[0].mxu0 %v8280
        %v8361 = vpop.f32.mrb[0].mxu0
        %v8362 = vadd.f32 0.0, %v8361
        %v8363 = vpop.f32.mrb[0].mxu0
        %v8364 = vadd.f32 0.0, %v8363
        %v8365 = vpop.f32.mrb[0].mxu0
        %v8366 = vadd.f32 0.0, %v8365
        %v8367 = vpop.f32.mrb[0].mxu0
        %v8368 = vadd.f32 0.0, %v8367
        %8369 = vmatprep.mubr.bf16.mxu0 %v8284
        %8370 = vmatmul.mubr.bf16.gmra.mrb[0].mxu0 %v8283
        %v8371 = vpop.f32.mrb[0].mxu0
        %v8372 = vadd.f32 0.0, %v8371
        %v8373 = vpop.f32.mrb[0].mxu0
        %v8374 = vadd.f32 0.0, %v8373
        %v8375 = vpop.f32.mrb[0].mxu0
        %v8376 = vadd.f32 0.0, %v8375
        %v8377 = vpop.f32.mrb[0].mxu0
        %v8378 = vadd.f32 0.0, %v8377
        %8379 = vmatprep.mubr.bf16.mxu0 %v8287
        %8380 = vmatmul.mubr.bf16.gmra.mrb[0].mxu0 %v8286
        %v8381 = vpop.f32.mrb[0].mxu0
        %v8382 = vadd.f32 0.0, %v8381
        %v8383 = vpop.f32.mrb[0].mxu0
        %v8384 = vadd.f32 0.0, %v8383
        %v8385 = vpop.f32.mrb[0].mxu0
        %v8386 = vadd.f32 0.0, %v8385
        %v8387 = vpop.f32.mrb[0].mxu0
        %v8388 = vadd.f32 0.0, %v8387
        %8389 = vmatprep.mubr.bf16.mxu0 %v8290
        %8390 = vmatmul.mubr.bf16.gmra.mrb[0].mxu0 %v8289
        %v8391 = vpop.f32.mrb[0].mxu0
        %v8392 = vadd.f32 0.0, %v8391
        %v8393 = vpop.f32.mrb[0].mxu0
        %v8394 = vadd.f32 0.0, %v8393
        %v8395 = vpop.f32.mrb[0].mxu0
        %v8396 = vadd.f32 0.0, %v8395
        %v8397 = vpop.f32.mrb[0].mxu0
        %v8398 = vadd.f32 0.0, %v8397
        %8399 = vdwg.mxu0
        %8400 = vmatprep.subr.bf16.mxu0 %v7936
        %8401 = vmatpush1.bf16.msra.mxu0 %v8222
        %8402 = vmatprep.subr.bf16.mxu0 %v7938
        %8403 = vmatpush1.bf16.msra.mxu0 %v8225
        %8404 = vmatprep.subr.bf16.mxu0 0
        %8405 = vmatpush1.bf16.msra.mxu0 0
        %8406 = vmatprep.subr.bf16.mxu0 0
        %8407 = vmatpush1.bf16.msra.mxu0 0
        %8408 = vmatprep.subr.bf16.mxu0 0
        %8409 = vmatpush1.bf16.msra.mxu0 0
        %8410 = vmatprep.subr.bf16.mxu0 0
        %8411 = vmatpush1.bf16.msra.mxu0 0
        %8412 = vmatprep.subr.bf16.mxu0 0
        %8413 = vmatpush1.bf16.msra.mxu0 0
        %8414 = vmatprep.subr.bf16.mxu0 0
        %8415 = vmatpush1.bf16.msra.mxu0 0
        %8416 = vmatprep.subr.bf16.mxu0 0
        %8417 = vmatpush1.bf16.msra.mxu0 0
        %8418 = vmatprep.subr.bf16.mxu0 0
        %8419 = vmatpush1.bf16.msra.mxu0 0
        %8420 = vmatprep.subr.bf16.mxu0 0
        %8421 = vmatpush1.bf16.msra.mxu0 0
        %8422 = vmatprep.subr.bf16.mxu0 0
        %8423 = vmatpush1.bf16.msra.mxu0 0
        %8424 = vmatprep.subr.bf16.mxu0 0
        %8425 = vmatpush1.bf16.msra.mxu0 0
        %8426 = vmatprep.subr.bf16.mxu0 0
        %8427 = vmatpush1.bf16.msra.mxu0 0
        %8428 = vmatprep.subr.bf16.mxu0 0
        %8429 = vmatpush1.bf16.msra.mxu0 0
        %8430 = vmatprep.subr.bf16.mxu0 0
        %8431 = vmatpush1.bf16.msra.mxu0 0
        %8432 = vmatprep.mubr.bf16.mxu0 0
        %8433 = vmatmul.mubr.bf16.gmra.mrb[0].mxu0 %v8303
        %v8434 = vpop.f32.mrb[0].mxu0
        %v8435 = vadd.f32 %v8352, %v8434
        %v8436 = vpop.f32.mrb[0].mxu0
        %v8437 = vadd.f32 %v8354, %v8436
        %v8438 = vpop.f32.mrb[0].mxu0
        %v8439 = vadd.f32 %v8356, %v8438
        %v8440 = vpop.f32.mrb[0].mxu0
        %v8441 = vadd.f32 %v8358, %v8440
        %8442 = vmatprep.mubr.bf16.mxu0 0
        %8443 = vmatmul.mubr.bf16.gmra.mrb[0].mxu0 %v8306
        %v8444 = vpop.f32.mrb[0].mxu0
        %v8445 = vadd.f32 %v8362, %v8444
        %v8446 = vpop.f32.mrb[0].mxu0
        %v8447 = vadd.f32 %v8364, %v8446
        %v8448 = vpop.f32.mrb[0].mxu0
        %v8449 = vadd.f32 %v8366, %v8448
        %v8450 = vpop.f32.mrb[0].mxu0
        %v8451 = vadd.f32 %v8368, %v8450
        %8452 = vmatprep.mubr.bf16.mxu0 0
        %8453 = vmatmul.mubr.bf16.gmra.mrb[0].mxu0 %v8309
        %v8454 = vpop.f32.mrb[0].mxu0
        %v8455 = vadd.f32 %v8372, %v8454
        %v8456 = vpop.f32.mrb[0].mxu0
        %v8457 = vadd.f32 %v8374, %v8456
        %v8458 = vpop.f32.mrb[0].mxu0
        %v8459 = vadd.f32 %v8376, %v8458
        %v8460 = vpop.f32.mrb[0].mxu0
        %v8461 = vadd.f32 %v8378, %v8460
        %8462 = vmatprep.mubr.bf16.mxu0 0
        %8463 = vmatmul.mubr.bf16.gmra.mrb[0].mxu0 %v8312
        %v8464 = vpop.f32.mrb[0].mxu0
        %v8465 = vadd.f32 %v8382, %v8464
        %v8466 = vpop.f32.mrb[0].mxu0
        %v8467 = vadd.f32 %v8384, %v8466
        %v8468 = vpop.f32.mrb[0].mxu0
        %v8469 = vadd.f32 %v8386, %v8468
        %v8470 = vpop.f32.mrb[0].mxu0
        %v8471 = vadd.f32 %v8388, %v8470
        %8472 = vmatprep.mubr.bf16.mxu0 0
        %8473 = vmatmul.mubr.bf16.gmra.mrb[0].mxu0 %v8315
        %v8474 = vpop.f32.mrb[0].mxu0
        %v8475 = vadd.f32 %v8392, %v8474
        %v8476 = vpop.f32.mrb[0].mxu0
        %v8477 = vadd.f32 %v8394, %v8476
        %v8478 = vpop.f32.mrb[0].mxu0
        %v8479 = vadd.f32 %v8396, %v8478
        %v8480 = vpop.f32.mrb[0].mxu0
        %v8481 = vadd.f32 %v8398, %v8480
        %8482 = vdwg.mxu0
        %v8483 = vpack.c.bf16 %v8439, %v8435
        %v8484 = vpack.c.bf16 %v8441, %v8437
        %v8485 = vpack.c.bf16 %v8449, %v8445
        %v8486 = vpack.c.bf16 %v8451, %v8447
        %v8487 = vpack.c.bf16 %v8459, %v8455
        %v8488 = vpack.c.bf16 %v8461, %v8457
        %v8489 = vpack.c.bf16 %v8469, %v8465
        %v8490 = vpack.c.bf16 %v8471, %v8467
        %v8491 = vpack.c.bf16 %v8479, %v8475
        %v8492 = vpack.c.bf16 %v8481, %v8477
        %v8493 = vld [vmem:[%s7] sm:$0xf]
        %v8494 = vld [vmem:[%s7 + $0x4] sm:$0xf]
        %v8495 = vld [vmem:[%s7 + $0x8] sm:$0xf]
        %v8496 = vld [vmem:[%s7 + $0xc] sm:$0xf]
        %v8497 = vld [vmem:[%s7 + $0x10] sm:$0xf]
        %v8498 = vld [vmem:[%s7 + $0x14] sm:$0xf]
        %v8499 = vld [vmem:[%s7 + $0x18] sm:$0xf]
        %v8500 = vld [vmem:[%s7 + $0x1c] sm:$0xf]
        %v8501 = vld [vmem:[%s7 + $0x20] sm:$0xf]
        %v8502 = vld [vmem:[%s7 + $0x24] sm:$0xf]
        %v8503 = vld [vmem:[%s7 + $0x28] sm:$0xf]
        %v8504 = vld [vmem:[%s7 + $0x2c] sm:$0xf]
        %v8505 = vld [vmem:[%s7 + $0x30] sm:$0xf]
        %v8506 = vld [vmem:[%s7 + $0x34] sm:$0xf]
        %v8507 = vld [vmem:[%s7 + $0x38] sm:$0xf]
        %v8508 = vld [vmem:[%s7 + $0x3c] sm:$0xf]
        %v8509 = vld [vmem:[%s7 + $0x40] sm:$0xf]
        %v8510 = vld [vmem:[%s7 + $0x44] sm:$0xf]
        %v8511 = vld [vmem:[%s8] sm:$0x1]
        %v8513 = vlaneseq
        %v8514 = vshrl.u32 %v8513, 7
        %v8515 = vsub.s32 0, %v8514
        %v8516 = vrot.slane %v8511, %v8515
        %v8536 = vunpack.c.l.b16 %v8493
        %v8537 = vunpack.c.l.b16 %v8494
        %v8538 = vunpack.c.l.b16 %v8495
        %v8539 = vunpack.c.l.b16 %v8496
        %v8540 = vunpack.c.l.b16 %v8497
        %v8541 = vunpack.c.l.b16 %v8498
        %v8542 = vunpack.c.l.b16 %v8499
        %v8543 = vunpack.c.l.b16 %v8500
        %v8544 = vunpack.c.l.b16 %v8501
        %v8545 = vunpack.c.l.b16 %v8502
        %v8546 = vunpack.c.l.b16 %v8503
        %v8547 = vunpack.c.l.b16 %v8504
        %v8548 = vunpack.c.l.b16 %v8505
        %v8549 = vunpack.c.l.b16 %v8506
        %v8550 = vunpack.c.l.b16 %v8507
        %v8551 = vunpack.c.l.b16 %v8508
        %v8552 = vunpack.c.l.b16 %v8509
        %v8553 = vunpack.c.l.b16 %v8510
        %v8554 = vpack.c.b16 %v8537, %v8536
        %v8555 = vpack.c.b16 %v8539, %v8538
        %v8556 = vpack.c.b16 %v8541, %v8540
        %v8557 = vpack.c.b16 %v8543, %v8542
        %v8558 = vpack.c.b16 %v8545, %v8544
        %v8559 = vpack.c.b16 %v8547, %v8546
        %v8560 = vpack.c.b16 %v8549, %v8548
        %v8561 = vpack.c.b16 %v8551, %v8550
        %v8562 = vpack.c.b16 %v8553, %v8552
        %v8573 = vsel %vm3064, %v8484, 0
        %v8576 = vsel %vm3064, %v8486, 0
        %v8579 = vsel %vm3064, %v8488, 0
        %v8582 = vsel %vm3064, %v8490, 0
        %v8585 = vsel %vm3064, %v8492, 0
        %8587 = vmatprep.subr.bf16.mxu0 0
        %8588 = vmatpush1.bf16.msra.mxu0 %v8554
        %8589 = vmatprep.subr.bf16.mxu0 0
        %8590 = vmatpush1.bf16.msra.mxu0 %v8555
        %8591 = vmatprep.subr.bf16.mxu0 0
        %8592 = vmatpush1.bf16.msra.mxu0 %v8556
        %8593 = vmatprep.subr.bf16.mxu0 0
        %8594 = vmatpush1.bf16.msra.mxu0 %v8557
        %8595 = vmatprep.subr.bf16.mxu0 0
        %8596 = vmatpush1.bf16.msra.mxu0 %v8558
        %8597 = vmatprep.subr.bf16.mxu0 0
        %8598 = vmatpush1.bf16.msra.mxu0 %v8559
        %8599 = vmatprep.subr.bf16.mxu0 0
        %8600 = vmatpush1.bf16.msra.mxu0 %v8560
        %8601 = vmatprep.subr.bf16.mxu0 0
        %8602 = vmatpush1.bf16.msra.mxu0 %v8561
        %8603 = vmatprep.subr.bf16.mxu0 0
        %8604 = vmatpush1.bf16.msra.mxu0 %v8562
        %8605 = vmatprep.subr.bf16.mxu0 0
        %8606 = vmatpush1.bf16.msra.mxu0 0
        %8607 = vmatprep.subr.bf16.mxu0 0
        %8608 = vmatpush1.bf16.msra.mxu0 0
        %8609 = vmatprep.subr.bf16.mxu0 0
        %8610 = vmatpush1.bf16.msra.mxu0 0
        %8611 = vmatprep.subr.bf16.mxu0 0
        %8612 = vmatpush1.bf16.msra.mxu0 0
        %8613 = vmatprep.subr.bf16.mxu0 0
        %8614 = vmatpush1.bf16.msra.mxu0 0
        %8615 = vmatprep.subr.bf16.mxu0 0
        %8616 = vmatpush1.bf16.msra.mxu0 0
        %8617 = vmatprep.subr.bf16.mxu0 0
        %8618 = vmatpush1.bf16.msra.mxu0 0
        %8619 = vmatprep.mubr.bf16.mxu0 %v8573
        %8620 = vmatmul.mubr.bf16.gmra.mrb[0].mxu0 %v8483
        %v8621 = vpop.f32.mrb[0].mxu0
        %v8622 = vadd.f32 %v8516, %v8621
        %v8623 = vpop.f32.mrb[0].mxu0
        %v8624 = vpop.f32.mrb[0].mxu0
        %v8625 = vadd.f32 %v8516, %v8624
        %v8626 = vpop.f32.mrb[0].mxu0
        %8627 = vmatprep.mubr.bf16.mxu0 %v8576
        %8628 = vmatmul.mubr.bf16.gmra.mrb[0].mxu0 %v8485
        %v8629 = vpop.f32.mrb[0].mxu0
        %v8630 = vadd.f32 %v8516, %v8629
        %v8631 = vpop.f32.mrb[0].mxu0
        %v8632 = vpop.f32.mrb[0].mxu0
        %v8633 = vadd.f32 %v8516, %v8632
        %v8634 = vpop.f32.mrb[0].mxu0
        %8635 = vmatprep.mubr.bf16.mxu0 %v8579
        %8636 = vmatmul.mubr.bf16.gmra.mrb[0].mxu0 %v8487
        %v8637 = vpop.f32.mrb[0].mxu0
        %v8638 = vadd.f32 %v8516, %v8637
        %v8639 = vpop.f32.mrb[0].mxu0
        %v8640 = vpop.f32.mrb[0].mxu0
        %v8641 = vadd.f32 %v8516, %v8640
        %v8642 = vpop.f32.mrb[0].mxu0
        %8643 = vmatprep.mubr.bf16.mxu0 %v8582
        %8644 = vmatmul.mubr.bf16.gmra.mrb[0].mxu0 %v8489
        %v8645 = vpop.f32.mrb[0].mxu0
        %v8646 = vadd.f32 %v8516, %v8645
        %v8647 = vpop.f32.mrb[0].mxu0
        %v8648 = vpop.f32.mrb[0].mxu0
        %v8649 = vadd.f32 %v8516, %v8648
        %v8650 = vpop.f32.mrb[0].mxu0
        %8651 = vmatprep.mubr.bf16.mxu0 %v8585
        %8652 = vmatmul.mubr.bf16.gmra.mrb[0].mxu0 %v8491
        %v8653 = vpop.f32.mrb[0].mxu0
        %v8654 = vadd.f32 %v8516, %v8653
        %v8655 = vpop.f32.mrb[0].mxu0
        %v8656 = vpop.f32.mrb[0].mxu0
        %v8657 = vadd.f32 %v8516, %v8656
        %v8658 = vpop.f32.mrb[0].mxu0
        %8659 = vdwg.mxu0
        %v8660 = vmax.f32 %v8622, 0.0
        %v8661 = vmax.f32 %v8625, 0.0
        %v8662 = vmax.f32 %v8630, 0.0
        %v8663 = vmax.f32 %v8633, 0.0
        %v8664 = vmax.f32 %v8638, 0.0
        %v8665 = vmax.f32 %v8641, 0.0
        %v8666 = vmax.f32 %v8646, 0.0
        %v8667 = vmax.f32 %v8649, 0.0
        %v8668 = vmax.f32 %v8654, 0.0
        %v8669 = vmax.f32 %v8657, 0.0
        %v8670 = vld [vmem:[%s22] sm:$0xff]
        %v8671 = vld [vmem:[%s22 + $0x8] sm:$0xff]
        %v8672 = vld [vmem:[%s22 + $0x10] sm:$0xff]
        %v8673 = vld [vmem:[%s22 + $0x18] sm:$0xff]
        %v8674 = vld [vmem:[%s22 + $0x20] sm:$0xff]
        %v8675 = vld [vmem:[%s22 + $0x28] sm:$0xff]
        %v8676 = vld [vmem:[%s22 + $0x30] sm:$0xff]
        %v8677 = vld [vmem:[%s22 + $0x38] sm:$0xff]
        %v8678 = vld [vmem:[%s22 + $0x40] sm:$0xff]
        %v8679 = vld [vmem:[%s22 + $0x48] sm:$0xff]
        %8681 = vset.pattern.permute.xlu0 0
        %8682 = vperm.xlu0 %8681, %v8670
        %v8683 = vpop.permute.xlu0 %8682
        %8686 = vset.pattern.permute.xlu0 0
        %8687 = vperm.xlu0 %8686, %v8671
        %v8688 = vpop.permute.xlu0 %8687
        %8691 = vset.pattern.permute.xlu0 0
        %8692 = vperm.xlu0 %8691, %v8672
        %v8693 = vpop.permute.xlu0 %8692
        %8696 = vset.pattern.permute.xlu0 0
        %8697 = vperm.xlu0 %8696, %v8673
        %v8698 = vpop.permute.xlu0 %8697
        %8701 = vset.pattern.permute.xlu0 0
        %8702 = vperm.xlu0 %8701, %v8674
        %v8703 = vpop.permute.xlu0 %8702
        %8706 = vset.pattern.permute.xlu0 0
        %8707 = vperm.xlu0 %8706, %v8675
        %v8708 = vpop.permute.xlu0 %8707
        %8711 = vset.pattern.permute.xlu0 0
        %8712 = vperm.xlu0 %8711, %v8676
        %v8713 = vpop.permute.xlu0 %8712
        %8716 = vset.pattern.permute.xlu0 0
        %8717 = vperm.xlu0 %8716, %v8677
        %v8718 = vpop.permute.xlu0 %8717
        %8721 = vset.pattern.permute.xlu0 0
        %8722 = vperm.xlu0 %8721, %v8678
        %v8723 = vpop.permute.xlu0 %8722
        %8726 = vset.pattern.permute.xlu0 0
        %8727 = vperm.xlu0 %8726, %v8679
        %v8728 = vpop.permute.xlu0 %8727
        %v8730 = vmul.f32 %v8660, %v8683
        %v8731 = vmul.f32 %v8661, %v8688
        %v8732 = vmul.f32 %v8662, %v8693
        %v8733 = vmul.f32 %v8663, %v8698
        %v8734 = vmul.f32 %v8664, %v8703
        %v8735 = vmul.f32 %v8665, %v8708
        %v8736 = vmul.f32 %v8666, %v8713
        %v8737 = vmul.f32 %v8667, %v8718
        %v8738 = vmul.f32 %v8668, %v8723
        %v8739 = vmul.f32 %v8669, %v8728
        %v8740 = vpack.c.bf16 %v8731, %v8730
        %v8741 = vpack.c.bf16 %v8733, %v8732
        %v8742 = vpack.c.bf16 %v8735, %v8734
        %v8743 = vpack.c.bf16 %v8737, %v8736
        %v8744 = vpack.c.bf16 %v8739, %v8738
        %v8750 = vunpack.c.l.b16 %v8740
        %v8751 = vunpack.c.h.b16 %v8740
        %v8752 = vunpack.c.l.b16 %v8741
        %v8753 = vunpack.c.h.b16 %v8741
        %v8754 = vunpack.c.l.b16 %v8742
        %v8755 = vunpack.c.h.b16 %v8742
        %v8756 = vunpack.c.l.b16 %v8743
        %v8757 = vunpack.c.h.b16 %v8743
        %v8758 = vunpack.c.l.b16 %v8744
        %v8759 = vunpack.c.h.b16 %v8744
        %v8760 = vpack.c.b16 %v8750, %v8750
        %v8761 = vpack.c.b16 %v8751, %v8751
        %v8762 = vpack.c.b16 %v8752, %v8752
        %v8763 = vpack.c.b16 %v8753, %v8753
        %v8764 = vpack.c.b16 %v8754, %v8754
        %v8765 = vpack.c.b16 %v8755, %v8755
        %v8766 = vpack.c.b16 %v8756, %v8756
        %v8767 = vpack.c.b16 %v8757, %v8757
        %v8768 = vpack.c.b16 %v8758, %v8758
        %v8769 = vpack.c.b16 %v8759, %v8759
        %v8771 = vshrl.u32 %v8760, 16
        %v8773 = vrot.slane %v8771, 6
        %v8774 = vshll.u32 %v8760, 16
        %v8776 = vrot.slane %v8774, 7
        %v8777 = vor.u32 %v8773, %v8776
        %v8778 = vrot.slane %v8777, 4
        %v8780 = vshrl.u32 %v8761, 16
        %v8782 = vrot.slane %v8780, 6
        %v8783 = vshll.u32 %v8761, 16
        %v8785 = vrot.slane %v8783, 7
        %v8786 = vor.u32 %v8782, %v8785
        %v8787 = vsel %vm1732, %v8778, %v8786
        %v8788 = vrot.slane %v8786, 4
        %v8790 = vshrl.u32 %v8762, 16
        %v8792 = vrot.slane %v8790, 6
        %v8793 = vshll.u32 %v8762, 16
        %v8795 = vrot.slane %v8793, 7
        %v8796 = vor.u32 %v8792, %v8795
        %v8797 = vsel %vm1732, %v8788, %v8796
        %v8798 = vrot.slane %v8796, 4
        %v8800 = vshrl.u32 %v8763, 16
        %v8802 = vrot.slane %v8800, 6
        %v8803 = vshll.u32 %v8763, 16
        %v8805 = vrot.slane %v8803, 7
        %v8806 = vor.u32 %v8802, %v8805
        %v8807 = vsel %vm1732, %v8798, %v8806
        %v8808 = vrot.slane %v8806, 4
        %v8810 = vshrl.u32 %v8764, 16
        %v8812 = vrot.slane %v8810, 6
        %v8813 = vshll.u32 %v8764, 16
        %v8815 = vrot.slane %v8813, 7
        %v8816 = vor.u32 %v8812, %v8815
        %v8817 = vsel %vm1732, %v8808, %v8816
        %v8818 = vrot.slane %v8816, 4
        %v8820 = vshrl.u32 %v8765, 16
        %v8822 = vrot.slane %v8820, 6
        %v8823 = vshll.u32 %v8765, 16
        %v8825 = vrot.slane %v8823, 7
        %v8826 = vor.u32 %v8822, %v8825
        %v8827 = vsel %vm1732, %v8818, %v8826
        %v8828 = vrot.slane %v8826, 4
        %v8830 = vshrl.u32 %v8766, 16
        %v8832 = vrot.slane %v8830, 6
        %v8833 = vshll.u32 %v8766, 16
        %v8835 = vrot.slane %v8833, 7
        %v8836 = vor.u32 %v8832, %v8835
        %v8837 = vsel %vm1732, %v8828, %v8836
        %v8838 = vrot.slane %v8836, 4
        %v8840 = vshrl.u32 %v8767, 16
        %v8842 = vrot.slane %v8840, 6
        %v8843 = vshll.u32 %v8767, 16
        %v8845 = vrot.slane %v8843, 7
        %v8846 = vor.u32 %v8842, %v8845
        %v8847 = vsel %vm1732, %v8838, %v8846
        %v8848 = vrot.slane %v8846, 4
        %v8850 = vshrl.u32 %v8768, 16
        %v8852 = vrot.slane %v8850, 6
        %v8853 = vshll.u32 %v8768, 16
        %v8855 = vrot.slane %v8853, 7
        %v8856 = vor.u32 %v8852, %v8855
        %v8857 = vsel %vm1732, %v8848, %v8856
        %v8858 = vrot.slane %v8856, 4
        %v8860 = vshrl.u32 %v8769, 16
        %v8862 = vrot.slane %v8860, 6
        %v8863 = vshll.u32 %v8769, 16
        %v8865 = vrot.slane %v8863, 7
        %v8866 = vor.u32 %v8862, %v8865
        %v8867 = vsel %vm1732, %v8858, %v8866
        %v8868 = vrot.slane %v8866, 4
        %vm8880 = vcmask 257025
        %vm8881 = vmand %vm8880, %vm2130
        %v8882 = vld [vmem:[#allocation5 + $0x4] sm:$0xe]
        %v8883 = vsel %vm8881, %v8777, %v8882
        %8884 = vst [vmem:[#allocation5 + $0x4] sm:$0xe] %v8883
        %8885 = vst.msk [vmem:[#allocation5 + $0x8] sm:$0xf] %vm914, %v8787
        %8886 = vst.msk [vmem:[#allocation5 + $0xc] sm:$0xf] %vm914, %v8797
        %8887 = vst.msk [vmem:[#allocation5 + $0x10] sm:$0xf] %vm914, %v8807
        %8888 = vst.msk [vmem:[#allocation5 + $0x14] sm:$0xf] %vm914, %v8817
        %8889 = vst.msk [vmem:[#allocation5 + $0x18] sm:$0xf] %vm914, %v8827
        %8890 = vst.msk [vmem:[#allocation5 + $0x1c] sm:$0xf] %vm914, %v8837
        %8891 = vst.msk [vmem:[#allocation5 + $0x20] sm:$0xf] %vm914, %v8847
        %8892 = vst.msk [vmem:[#allocation5 + $0x24] sm:$0xf] %vm914, %v8857
        %8893 = vst.msk [vmem:[#allocation5 + $0x28] sm:$0xf] %vm914, %v8867
        %vm8894 = vcmask 254976
        %vm8895 = vmand %vm8894, %vm1730
        %v8896 = vld [vmem:[#allocation5 + $0x2c] sm:$0x3]
        %v8897 = vsel %vm8895, %v8868, %v8896
        %8898 = vst [vmem:[#allocation5 + $0x2c] sm:$0x3] %v8897
        %v8899 = vld [vmem:[#allocation5] sm:$0xf]
        %v8900 = vld [vmem:[#allocation5 + $0x4] sm:$0xf]
        %v8901 = vld [vmem:[#allocation5 + $0x8] sm:$0xf]
        %v8902 = vld [vmem:[#allocation5 + $0xc] sm:$0xf]
        %v8903 = vld [vmem:[#allocation5 + $0x10] sm:$0xf]
        %v8904 = vld [vmem:[#allocation5 + $0x14] sm:$0xf]
        %v8905 = vld [vmem:[#allocation5 + $0x18] sm:$0xf]
        %v8906 = vld [vmem:[#allocation5 + $0x1c] sm:$0xf]
        %v8907 = vld [vmem:[#allocation5 + $0x20] sm:$0xf]
        %v8908 = vld [vmem:[#allocation5 + $0x24] sm:$0xf]
        %v8909 = vld [vmem:[#allocation5 + $0x28] sm:$0x1]
        %v8910 = vld [vmem:[#allocation5] sm:$0xe]
        %v8911 = vld [vmem:[#allocation5 + $0x4] sm:$0xe]
        %v8912 = vld [vmem:[#allocation5 + $0x28] sm:$0xf]
        %v8913 = vld [vmem:[#allocation5 + $0x2c] sm:$0x1]
        %v8914 = vld [vmem:[#allocation5 + $0x2c] sm:$0x3]
        %v8915 = vld [vmem:[#allocation5 + $0x4] sm:$0xc]
        %v8916 = vld [vmem:[#allocation5 + $0x8] sm:$0xc]
        %v8917 = vld [vmem:[#allocation5 + $0x2c] sm:$0xf]
        %v8918 = vld [vmem:[#allocation5 + $0x30] sm:$0x3]
        %v8919 = vld [vmem:[#allocation5 + $0x30] sm:$0x7]
        %v8920 = vld [vmem:[#allocation5 + $0x8] sm:$0x8]
        %v8931 = vunpack.c.l.b16 %v8899
        %v8932 = vunpack.c.l.b16 %v8900
        %v8933 = vunpack.c.l.b16 %v8901
        %v8934 = vunpack.c.l.b16 %v8902
        %v8935 = vunpack.c.l.b16 %v8903
        %v8936 = vunpack.c.l.b16 %v8904
        %v8937 = vunpack.c.l.b16 %v8905
        %v8938 = vunpack.c.l.b16 %v8906
        %v8939 = vunpack.c.l.b16 %v8907
        %v8940 = vunpack.c.l.b16 %v8908
        %v8941 = vpack.c.b16 %v8932, %v8931
        %v8942 = vpack.c.b16 %v8934, %v8933
        %v8943 = vpack.c.b16 %v8936, %v8935
        %v8944 = vpack.c.b16 %v8938, %v8937
        %v8945 = vpack.c.b16 %v8940, %v8939
        %v8947 = vunpack.c.l.b16 %v8909
        %v8948 = vpack.c.b16 %v8947, %v8947
        %v8950 = vshrl.u32 %v8941, 16
        %v8952 = vshll.u32 %v8941, 16
        %v8954 = vrot.slane %v8952, 1
        %v8955 = vor.u32 %v8950, %v8954
        %v8957 = vshll.u32 %v8942, 16
        %v8959 = vrot.slane %v8957, 1
        %v8960 = vsel %vm2318, %v8955, %v8959
        %v8961 = vshrl.u32 %v8942, 16
        %v8963 = vor.u32 %v8961, %v8959
        %v8965 = vshll.u32 %v8943, 16
        %v8967 = vrot.slane %v8965, 1
        %v8968 = vsel %vm2318, %v8963, %v8967
        %v8969 = vshrl.u32 %v8943, 16
        %v8971 = vor.u32 %v8969, %v8967
        %v8973 = vshll.u32 %v8944, 16
        %v8975 = vrot.slane %v8973, 1
        %v8976 = vsel %vm2318, %v8971, %v8975
        %v8977 = vshrl.u32 %v8944, 16
        %v8979 = vor.u32 %v8977, %v8975
        %v8981 = vshll.u32 %v8945, 16
        %v8983 = vrot.slane %v8981, 1
        %v8984 = vsel %vm2318, %v8979, %v8983
        %v8985 = vshrl.u32 %v8945, 16
        %v8987 = vor.u32 %v8985, %v8983
        %v8989 = vshll.u32 %v8948, 16
        %v8991 = vrot.slane %v8989, 1
        %v8992 = vsel %vm2318, %v8987, %v8991
        %8993 = vrot.lane.b32.xlu0 %v8960, 32
        %v8994 = vpop.permute.xlu0 %8993
        %8995 = vrot.lane.b32.xlu0 %v8968, 32
        %v8996 = vpop.permute.xlu0 %8995
        %8997 = vrot.lane.b32.xlu0 %v8976, 32
        %v8998 = vpop.permute.xlu0 %8997
        %8999 = vrot.lane.b32.xlu0 %v8984, 32
        %v9000 = vpop.permute.xlu0 %8999
        %9001 = vrot.lane.b32.xlu0 %v8992, 32
        %v9002 = vpop.permute.xlu0 %9001
        %v9004 = vunpack.c.l.b16 %v8910
        %v9005 = vpack.c.b16 %v8932, %v9004
        %v9006 = vrot.slane %v9005, 1
        %v9007 = vrot.slane %v8942, 1
        %v9008 = vsel %vm2506, %v9006, %v9007
        %v9009 = vrot.slane %v8943, 1
        %v9010 = vsel %vm2506, %v9007, %v9009
        %v9011 = vrot.slane %v8944, 1
        %v9012 = vsel %vm2506, %v9009, %v9011
        %v9013 = vrot.slane %v8945, 1
        %v9014 = vsel %vm2506, %v9011, %v9013
        %v9015 = vrot.slane %v8948, 1
        %v9016 = vsel %vm2506, %v9013, %v9015
        %9017 = vrot.lane.b32.xlu0 %v9008, 64
        %v9018 = vpop.permute.xlu0 %9017
        %9019 = vrot.lane.b32.xlu0 %v9010, 64
        %v9020 = vpop.permute.xlu0 %9019
        %9021 = vrot.lane.b32.xlu0 %v9012, 64
        %v9022 = vpop.permute.xlu0 %9021
        %9023 = vrot.lane.b32.xlu0 %v9014, 64
        %v9024 = vpop.permute.xlu0 %9023
        %9025 = vrot.lane.b32.xlu0 %v9016, 64
        %v9026 = vpop.permute.xlu0 %9025
        %v9030 = vunpack.c.l.b16 %v8911
        %v9031 = vunpack.c.l.b16 %v8912
        %v9032 = vunpack.c.l.b16 %v8913
        %v9033 = vpack.c.b16 %v8933, %v9030
        %v9034 = vpack.c.b16 %v8935, %v8934
        %v9035 = vpack.c.b16 %v8937, %v8936
        %v9036 = vpack.c.b16 %v8939, %v8938
        %v9037 = vpack.c.b16 %v9031, %v8940
        %v9038 = vpack.c.b16 %v9032, %v9032
        %v9039 = vrot.slane %v9033, 1
        %v9040 = vrot.slane %v9034, 1
        %v9041 = vsel %vm2506, %v9039, %v9040
        %v9042 = vrot.slane %v9035, 1
        %v9043 = vsel %vm2506, %v9040, %v9042
        %v9044 = vrot.slane %v9036, 1
        %v9045 = vsel %vm2506, %v9042, %v9044
        %v9046 = vrot.slane %v9037, 1
        %v9047 = vsel %vm2506, %v9044, %v9046
        %v9048 = vrot.slane %v9038, 1
        %v9049 = vsel %vm2506, %v9046, %v9048
        %9050 = vrot.lane.b32.xlu0 %v9041, 96
        %v9051 = vpop.permute.xlu0 %9050
        %9052 = vrot.lane.b32.xlu0 %v9043, 96
        %v9053 = vpop.permute.xlu0 %9052
        %9054 = vrot.lane.b32.xlu0 %v9045, 96
        %v9055 = vpop.permute.xlu0 %9054
        %9056 = vrot.lane.b32.xlu0 %v9047, 96
        %v9057 = vpop.permute.xlu0 %9056
        %9058 = vrot.lane.b32.xlu0 %v9049, 96
        %v9059 = vpop.permute.xlu0 %9058
        %v9061 = vunpack.c.l.b16 %v8914
        %v9062 = vpack.c.b16 %v9061, %v9061
        %v9064 = vshrl.u32 %v9033, 16
        %v9066 = vrot.slane %v9064, 1
        %v9067 = vshll.u32 %v9033, 16
        %v9069 = vrot.slane %v9067, 2
        %v9070 = vor.u32 %v9066, %v9069
        %v9072 = vshrl.u32 %v9034, 16
        %v9074 = vrot.slane %v9072, 1
        %v9075 = vshll.u32 %v9034, 16
        %v9077 = vrot.slane %v9075, 2
        %v9078 = vor.u32 %v9074, %v9077
        %v9079 = vsel %vm2636, %v9070, %v9078
        %v9081 = vshrl.u32 %v9035, 16
        %v9083 = vrot.slane %v9081, 1
        %v9084 = vshll.u32 %v9035, 16
        %v9086 = vrot.slane %v9084, 2
        %v9087 = vor.u32 %v9083, %v9086
        %v9088 = vsel %vm2636, %v9078, %v9087
        %v9090 = vshrl.u32 %v9036, 16
        %v9092 = vrot.slane %v9090, 1
        %v9093 = vshll.u32 %v9036, 16
        %v9095 = vrot.slane %v9093, 2
        %v9096 = vor.u32 %v9092, %v9095
        %v9097 = vsel %vm2636, %v9087, %v9096
        %v9099 = vshrl.u32 %v9037, 16
        %v9101 = vrot.slane %v9099, 1
        %v9102 = vshll.u32 %v9037, 16
        %v9104 = vrot.slane %v9102, 2
        %v9105 = vor.u32 %v9101, %v9104
        %v9106 = vsel %vm2636, %v9096, %v9105
        %v9108 = vshrl.u32 %v9062, 16
        %v9110 = vrot.slane %v9108, 1
        %v9111 = vshll.u32 %v9062, 16
        %v9113 = vrot.slane %v9111, 2
        %v9114 = vor.u32 %v9110, %v9113
        %v9115 = vsel %vm2636, %v9105, %v9114
        %v9117 = vunpack.c.l.b16 %v8915
        %v9118 = vpack.c.b16 %v8933, %v9117
        %v9119 = vrot.slane %v9118, 2
        %v9120 = vrot.slane %v9034, 2
        %v9121 = vsel %vm2766, %v9119, %v9120
        %v9122 = vrot.slane %v9035, 2
        %v9123 = vsel %vm2766, %v9120, %v9122
        %v9124 = vrot.slane %v9036, 2
        %v9125 = vsel %vm2766, %v9122, %v9124
        %v9126 = vrot.slane %v9037, 2
        %v9127 = vsel %vm2766, %v9124, %v9126
        %v9128 = vrot.slane %v9062, 2
        %v9129 = vsel %vm2766, %v9126, %v9128
        %9130 = vrot.lane.b32.xlu0 %v9121, 32
        %v9131 = vpop.permute.xlu0 %9130
        %9132 = vrot.lane.b32.xlu0 %v9123, 32
        %v9133 = vpop.permute.xlu0 %9132
        %9134 = vrot.lane.b32.xlu0 %v9125, 32
        %v9135 = vpop.permute.xlu0 %9134
        %9136 = vrot.lane.b32.xlu0 %v9127, 32
        %v9137 = vpop.permute.xlu0 %9136
        %9138 = vrot.lane.b32.xlu0 %v9129, 32
        %v9139 = vpop.permute.xlu0 %9138
        %v9143 = vunpack.c.l.b16 %v8916
        %v9144 = vunpack.c.l.b16 %v8917
        %v9145 = vunpack.c.l.b16 %v8918
        %v9146 = vpack.c.b16 %v8934, %v9143
        %v9147 = vpack.c.b16 %v9144, %v9031
        %v9148 = vpack.c.b16 %v9145, %v9145
        %v9149 = vrot.slane %v9146, 2
        %v9150 = vrot.slane %v8943, 2
        %v9151 = vsel %vm2766, %v9149, %v9150
        %v9152 = vrot.slane %v8944, 2
        %v9153 = vsel %vm2766, %v9150, %v9152
        %v9154 = vrot.slane %v8945, 2
        %v9155 = vsel %vm2766, %v9152, %v9154
        %v9156 = vrot.slane %v9147, 2
        %v9157 = vsel %vm2766, %v9154, %v9156
        %v9158 = vrot.slane %v9148, 2
        %v9159 = vsel %vm2766, %v9156, %v9158
        %9160 = vrot.lane.b32.xlu0 %v9151, 64
        %v9161 = vpop.permute.xlu0 %9160
        %9162 = vrot.lane.b32.xlu0 %v9153, 64
        %v9163 = vpop.permute.xlu0 %9162
        %9164 = vrot.lane.b32.xlu0 %v9155, 64
        %v9165 = vpop.permute.xlu0 %9164
        %9166 = vrot.lane.b32.xlu0 %v9157, 64
        %v9167 = vpop.permute.xlu0 %9166
        %9168 = vrot.lane.b32.xlu0 %v9159, 64
        %v9169 = vpop.permute.xlu0 %9168
        %v9171 = vunpack.c.l.b16 %v8919
        %v9172 = vpack.c.b16 %v9171, %v9171
        %v9174 = vshrl.u32 %v9146, 16
        %v9176 = vrot.slane %v9174, 2
        %v9177 = vshll.u32 %v9146, 16
        %v9179 = vrot.slane %v9177, 3
        %v9180 = vor.u32 %v9176, %v9179
        %v9181 = vrot.slane %v8969, 2
        %v9182 = vrot.slane %v8965, 3
        %v9183 = vor.u32 %v9181, %v9182
        %v9184 = vsel %vm2896, %v9180, %v9183
        %v9185 = vrot.slane %v8977, 2
        %v9186 = vrot.slane %v8973, 3
        %v9187 = vor.u32 %v9185, %v9186
        %v9188 = vsel %vm2896, %v9183, %v9187
        %v9189 = vrot.slane %v8985, 2
        %v9190 = vrot.slane %v8981, 3
        %v9191 = vor.u32 %v9189, %v9190
        %v9192 = vsel %vm2896, %v9187, %v9191
        %v9194 = vshrl.u32 %v9147, 16
        %v9196 = vrot.slane %v9194, 2
        %v9197 = vshll.u32 %v9147, 16
        %v9199 = vrot.slane %v9197, 3
        %v9200 = vor.u32 %v9196, %v9199
        %v9201 = vsel %vm2896, %v9191, %v9200
        %v9203 = vshrl.u32 %v9172, 16
        %v9205 = vrot.slane %v9203, 2
        %v9206 = vshll.u32 %v9172, 16
        %v9208 = vrot.slane %v9206, 3
        %v9209 = vor.u32 %v9205, %v9208
        %v9210 = vsel %vm2896, %v9200, %v9209
        %9211 = vrot.lane.b32.xlu0 %v9184, 96
        %v9212 = vpop.permute.xlu0 %9211
        %9213 = vrot.lane.b32.xlu0 %v9188, 96
        %v9214 = vpop.permute.xlu0 %9213
        %9215 = vrot.lane.b32.xlu0 %v9192, 96
        %v9216 = vpop.permute.xlu0 %9215
        %9217 = vrot.lane.b32.xlu0 %v9201, 96
        %v9218 = vpop.permute.xlu0 %9217
        %9219 = vrot.lane.b32.xlu0 %v9210, 96
        %v9220 = vpop.permute.xlu0 %9219
        %v9222 = vunpack.c.l.b16 %v8920
        %v9223 = vpack.c.b16 %v8934, %v9222
        %v9224 = vrot.slane %v9223, 3
        %v9225 = vrot.slane %v8943, 3
        %v9226 = vsel %vm3026, %v9224, %v9225
        %v9227 = vrot.slane %v8944, 3
        %v9228 = vsel %vm3026, %v9225, %v9227
        %v9229 = vrot.slane %v8945, 3
        %v9230 = vsel %vm3026, %v9227, %v9229
        %v9231 = vrot.slane %v9147, 3
        %v9232 = vsel %vm3026, %v9229, %v9231
        %v9233 = vrot.slane %v9172, 3
        %v9234 = vsel %vm3026, %v9231, %v9233
        %v9236 = vsel %vm3101, %v8941, %v8994
        %v9238 = vsel %vm3101, %v8942, %v8996
        %v9240 = vsel %vm3101, %v8943, %v8998
        %v9242 = vsel %vm3101, %v8944, %v9000
        %v9244 = vsel %vm3101, %v8945, %v9002
        %v9246 = vsel %vm3175, %v9236, %v9018
        %v9248 = vsel %vm3175, %v9238, %v9020
        %v9250 = vsel %vm3175, %v9240, %v9022
        %v9252 = vsel %vm3175, %v9242, %v9024
        %v9254 = vsel %vm3175, %v9244, %v9026
        %v9256 = vsel %vm3249, %v9246, %v9051
        %v9259 = vsel %vm3249, %v9248, %v9053
        %v9262 = vsel %vm3249, %v9250, %v9055
        %v9265 = vsel %vm3249, %v9252, %v9057
        %v9268 = vsel %vm3249, %v9254, %v9059
        %v9272 = vsel %vm3101, %v9079, %v9131
        %v9275 = vsel %vm3101, %v9088, %v9133
        %v9278 = vsel %vm3101, %v9097, %v9135
        %v9281 = vsel %vm3101, %v9106, %v9137
        %v9284 = vsel %vm3101, %v9115, %v9139
        %v9286 = vsel %vm3175, %v9272, %v9161
        %v9288 = vsel %vm3175, %v9275, %v9163
        %v9290 = vsel %vm3175, %v9278, %v9165
        %v9292 = vsel %vm3175, %v9281, %v9167
        %v9294 = vsel %vm3175, %v9284, %v9169
        %v9296 = vsel %vm3249, %v9286, %v9212
        %v9299 = vsel %vm3249, %v9288, %v9214
        %v9302 = vsel %vm3249, %v9290, %v9216
        %v9305 = vsel %vm3249, %v9292, %v9218
        %v9308 = vsel %vm3249, %v9294, %v9220
        %v9310 = vld [vmem:[%s9] sm:$0xf]
        %v9311 = vld [vmem:[%s9 + $0x4] sm:$0xf]
        %v9312 = vld [vmem:[%s9 + $0x8] sm:$0xf]
        %v9313 = vld [vmem:[%s9 + $0xc] sm:$0xf]
        %v9314 = vld [vmem:[%s9 + $0x10] sm:$0xf]
        %v9315 = vld [vmem:[%s9 + $0x14] sm:$0xf]
        %v9316 = vld [vmem:[%s9 + $0x18] sm:$0xf]
        %v9317 = vld [vmem:[%s9 + $0x1c] sm:$0xf]
        %v9318 = vld [vmem:[%s9 + $0x20] sm:$0xf]
        %v9319 = vld [vmem:[%s9 + $0x24] sm:$0xf]
        %v9320 = vld [vmem:[%s9 + $0x28] sm:$0xf]
        %v9321 = vld [vmem:[%s9 + $0x2c] sm:$0xf]
        %v9322 = vld [vmem:[%s9 + $0x30] sm:$0xf]
        %v9323 = vld [vmem:[%s9 + $0x34] sm:$0xf]
        %v9324 = vld [vmem:[%s9 + $0x38] sm:$0xf]
        %v9325 = vld [vmem:[%s9 + $0x3c] sm:$0xf]
        %v9326 = vld [vmem:[%s9 + $0x40] sm:$0xf]
        %v9327 = vld [vmem:[%s9 + $0x44] sm:$0xf]
        %v9328 = vld [vmem:[%s9 + $0x48] sm:$0xf]
        %v9329 = vld [vmem:[%s9 + $0x4c] sm:$0xf]
        %v9330 = vld [vmem:[%s9 + $0x50] sm:$0xf]
        %v9331 = vld [vmem:[%s9 + $0x54] sm:$0xf]
        %v9332 = vld [vmem:[%s9 + $0x58] sm:$0xf]
        %v9333 = vld [vmem:[%s9 + $0x5c] sm:$0xf]
        %v9334 = vld [vmem:[%s9 + $0x60] sm:$0xf]
        %v9335 = vld [vmem:[%s9 + $0x64] sm:$0xf]
        %v9336 = vld [vmem:[%s9 + $0x68] sm:$0xf]
        %v9337 = vld [vmem:[%s9 + $0x6c] sm:$0xf]
        %v9338 = vld [vmem:[%s9 + $0x70] sm:$0xf]
        %v9339 = vld [vmem:[%s9 + $0x74] sm:$0xf]
        %v9340 = vld [vmem:[%s9 + $0x78] sm:$0xf]
        %v9341 = vld [vmem:[%s9 + $0x7c] sm:$0xf]
        %v9342 = vld [vmem:[%s9 + $0x80] sm:$0xf]
        %v9343 = vld [vmem:[%s9 + $0x84] sm:$0xf]
        %v9344 = vld [vmem:[%s9 + $0x88] sm:$0xf]
        %v9345 = vld [vmem:[%s9 + $0x8c] sm:$0xf]
        %v9346 = vld [vmem:[%s10] sm:$0x1]
        %v9348 = vlaneseq
        %v9349 = vshrl.u32 %v9348, 7
        %v9350 = vsub.s32 0, %v9349
        %v9351 = vrot.slane %v9346, %v9350
        %v9389 = vunpack.c.l.b16 %v9310
        %v9390 = vunpack.c.l.b16 %v9311
        %v9391 = vunpack.c.l.b16 %v9312
        %v9392 = vunpack.c.l.b16 %v9313
        %v9393 = vunpack.c.l.b16 %v9314
        %v9394 = vunpack.c.l.b16 %v9315
        %v9395 = vunpack.c.l.b16 %v9316
        %v9396 = vunpack.c.l.b16 %v9317
        %v9397 = vunpack.c.l.b16 %v9318
        %v9398 = vunpack.c.l.b16 %v9319
        %v9399 = vunpack.c.l.b16 %v9320
        %v9400 = vunpack.c.l.b16 %v9321
        %v9401 = vunpack.c.l.b16 %v9322
        %v9402 = vunpack.c.l.b16 %v9323
        %v9403 = vunpack.c.l.b16 %v9324
        %v9404 = vunpack.c.l.b16 %v9325
        %v9405 = vunpack.c.l.b16 %v9326
        %v9406 = vunpack.c.l.b16 %v9327
        %v9407 = vunpack.c.l.b16 %v9328
        %v9408 = vunpack.c.l.b16 %v9329
        %v9409 = vunpack.c.l.b16 %v9330
        %v9410 = vunpack.c.l.b16 %v9331
        %v9411 = vunpack.c.l.b16 %v9332
        %v9412 = vunpack.c.l.b16 %v9333
        %v9413 = vunpack.c.l.b16 %v9334
        %v9414 = vunpack.c.l.b16 %v9335
        %v9415 = vunpack.c.l.b16 %v9336
        %v9416 = vunpack.c.l.b16 %v9337
        %v9417 = vunpack.c.l.b16 %v9338
        %v9418 = vunpack.c.l.b16 %v9339
        %v9419 = vunpack.c.l.b16 %v9340
        %v9420 = vunpack.c.l.b16 %v9341
        %v9421 = vunpack.c.l.b16 %v9342
        %v9422 = vunpack.c.l.b16 %v9343
        %v9423 = vunpack.c.l.b16 %v9344
        %v9424 = vunpack.c.l.b16 %v9345
        %v9425 = vpack.c.b16 %v9390, %v9389
        %v9426 = vpack.c.b16 %v9392, %v9391
        %v9427 = vpack.c.b16 %v9394, %v9393
        %v9428 = vpack.c.b16 %v9396, %v9395
        %v9429 = vpack.c.b16 %v9398, %v9397
        %v9430 = vpack.c.b16 %v9400, %v9399
        %v9431 = vpack.c.b16 %v9402, %v9401
        %v9432 = vpack.c.b16 %v9404, %v9403
        %v9433 = vpack.c.b16 %v9406, %v9405
        %v9434 = vpack.c.b16 %v9408, %v9407
        %v9435 = vpack.c.b16 %v9410, %v9409
        %v9436 = vpack.c.b16 %v9412, %v9411
        %v9437 = vpack.c.b16 %v9414, %v9413
        %v9438 = vpack.c.b16 %v9416, %v9415
        %v9439 = vpack.c.b16 %v9418, %v9417
        %v9440 = vpack.c.b16 %v9420, %v9419
        %v9441 = vpack.c.b16 %v9422, %v9421
        %v9442 = vpack.c.b16 %v9424, %v9423
        %v9462 = vsel %vm3101, %v9226, 0
        %v9465 = vsel %vm3101, %v9228, 0
        %v9468 = vsel %vm3101, %v9230, 0
        %v9471 = vsel %vm3101, %v9232, 0
        %v9474 = vsel %vm3101, %v9234, 0
        %9476 = vmatprep.subr.bf16.mxu0 0
        %9477 = vmatpush1.bf16.msra.mxu0 %v9425
        %9478 = vmatprep.subr.bf16.mxu0 0
        %9479 = vmatpush1.bf16.msra.mxu0 %v9426
        %9480 = vmatprep.subr.bf16.mxu0 0
        %9481 = vmatpush1.bf16.msra.mxu0 %v9427
        %9482 = vmatprep.subr.bf16.mxu0 0
        %9483 = vmatpush1.bf16.msra.mxu0 %v9428
        %9484 = vmatprep.subr.bf16.mxu0 0
        %9485 = vmatpush1.bf16.msra.mxu0 %v9429
        %9486 = vmatprep.subr.bf16.mxu0 0
        %9487 = vmatpush1.bf16.msra.mxu0 %v9430
        %9488 = vmatprep.subr.bf16.mxu0 0
        %9489 = vmatpush1.bf16.msra.mxu0 %v9431
        %9490 = vmatprep.subr.bf16.mxu0 0
        %9491 = vmatpush1.bf16.msra.mxu0 %v9432
        %9492 = vmatprep.subr.bf16.mxu0 0
        %9493 = vmatpush1.bf16.msra.mxu0 %v9433
        %9494 = vmatprep.subr.bf16.mxu0 0
        %9495 = vmatpush1.bf16.msra.mxu0 %v9434
        %9496 = vmatprep.subr.bf16.mxu0 0
        %9497 = vmatpush1.bf16.msra.mxu0 %v9435
        %9498 = vmatprep.subr.bf16.mxu0 0
        %9499 = vmatpush1.bf16.msra.mxu0 %v9436
        %9500 = vmatprep.subr.bf16.mxu0 0
        %9501 = vmatpush1.bf16.msra.mxu0 %v9437
        %9502 = vmatprep.subr.bf16.mxu0 0
        %9503 = vmatpush1.bf16.msra.mxu0 %v9438
        %9504 = vmatprep.subr.bf16.mxu0 0
        %9505 = vmatpush1.bf16.msra.mxu0 %v9439
        %9506 = vmatprep.subr.bf16.mxu0 0
        %9507 = vmatpush1.bf16.msra.mxu0 %v9440
        %9508 = vmatprep.mubr.bf16.mxu0 %v9296
        %9509 = vmatmul.mubr.bf16.gmra.mrb[0].mxu0 %v9256
        %v9510 = vpop.f32.mrb[0].mxu0
        %v9511 = vadd.f32 %v9351, %v9510
        %v9512 = vpop.f32.mrb[0].mxu0
        %v9513 = vpop.f32.mrb[0].mxu0
        %v9514 = vadd.f32 %v9351, %v9513
        %v9515 = vpop.f32.mrb[0].mxu0
        %9516 = vmatprep.mubr.bf16.mxu0 %v9299
        %9517 = vmatmul.mubr.bf16.gmra.mrb[0].mxu0 %v9259
        %v9518 = vpop.f32.mrb[0].mxu0
        %v9519 = vadd.f32 %v9351, %v9518
        %v9520 = vpop.f32.mrb[0].mxu0
        %v9521 = vpop.f32.mrb[0].mxu0
        %v9522 = vadd.f32 %v9351, %v9521
        %v9523 = vpop.f32.mrb[0].mxu0
        %9524 = vmatprep.mubr.bf16.mxu0 %v9302
        %9525 = vmatmul.mubr.bf16.gmra.mrb[0].mxu0 %v9262
        %v9526 = vpop.f32.mrb[0].mxu0
        %v9527 = vadd.f32 %v9351, %v9526
        %v9528 = vpop.f32.mrb[0].mxu0
        %v9529 = vpop.f32.mrb[0].mxu0
        %v9530 = vadd.f32 %v9351, %v9529
        %v9531 = vpop.f32.mrb[0].mxu0
        %9532 = vmatprep.mubr.bf16.mxu0 %v9305
        %9533 = vmatmul.mubr.bf16.gmra.mrb[0].mxu0 %v9265
        %v9534 = vpop.f32.mrb[0].mxu0
        %v9535 = vadd.f32 %v9351, %v9534
        %v9536 = vpop.f32.mrb[0].mxu0
        %v9537 = vpop.f32.mrb[0].mxu0
        %v9538 = vadd.f32 %v9351, %v9537
        %v9539 = vpop.f32.mrb[0].mxu0
        %9540 = vmatprep.mubr.bf16.mxu0 %v9308
        %9541 = vmatmul.mubr.bf16.gmra.mrb[0].mxu0 %v9268
        %v9542 = vpop.f32.mrb[0].mxu0
        %v9543 = vadd.f32 %v9351, %v9542
        %v9544 = vpop.f32.mrb[0].mxu0
        %v9545 = vpop.f32.mrb[0].mxu0
        %v9546 = vadd.f32 %v9351, %v9545
        %v9547 = vpop.f32.mrb[0].mxu0
        %9548 = vdwg.mxu0
        %9549 = vmatprep.subr.bf16.mxu0 0
        %9550 = vmatpush1.bf16.msra.mxu0 %v9441
        %9551 = vmatprep.subr.bf16.mxu0 0
        %9552 = vmatpush1.bf16.msra.mxu0 %v9442
        %9553 = vmatprep.subr.bf16.mxu0 0
        %9554 = vmatpush1.bf16.msra.mxu0 0
        %9555 = vmatprep.subr.bf16.mxu0 0
        %9556 = vmatpush1.bf16.msra.mxu0 0
        %9557 = vmatprep.subr.bf16.mxu0 0
        %9558 = vmatpush1.bf16.msra.mxu0 0
        %9559 = vmatprep.subr.bf16.mxu0 0
        %9560 = vmatpush1.bf16.msra.mxu0 0
        %9561 = vmatprep.subr.bf16.mxu0 0
        %9562 = vmatpush1.bf16.msra.mxu0 0
        %9563 = vmatprep.subr.bf16.mxu0 0
        %9564 = vmatpush1.bf16.msra.mxu0 0
        %9565 = vmatprep.subr.bf16.mxu0 0
        %9566 = vmatpush1.bf16.msra.mxu0 0
        %9567 = vmatprep.subr.bf16.mxu0 0
        %9568 = vmatpush1.bf16.msra.mxu0 0
        %9569 = vmatprep.subr.bf16.mxu0 0
        %9570 = vmatpush1.bf16.msra.mxu0 0
        %9571 = vmatprep.subr.bf16.mxu0 0
        %9572 = vmatpush1.bf16.msra.mxu0 0
        %9573 = vmatprep.subr.bf16.mxu0 0
        %9574 = vmatpush1.bf16.msra.mxu0 0
        %9575 = vmatprep.subr.bf16.mxu0 0
        %9576 = vmatpush1.bf16.msra.mxu0 0
        %9577 = vmatprep.subr.bf16.mxu0 0
        %9578 = vmatpush1.bf16.msra.mxu0 0
        %9579 = vmatprep.subr.bf16.mxu0 0
        %9580 = vmatpush1.bf16.msra.mxu0 0
        %9581 = vmatprep.mubr.bf16.mxu0 0
        %9582 = vmatmul.mubr.bf16.gmra.mrb[0].mxu0 %v9462
        %v9583 = vpop.f32.mrb[0].mxu0
        %v9584 = vadd.f32 %v9511, %v9583
        %v9585 = vpop.f32.mrb[0].mxu0
        %v9586 = vpop.f32.mrb[0].mxu0
        %v9587 = vadd.f32 %v9514, %v9586
        %v9588 = vpop.f32.mrb[0].mxu0
        %9589 = vmatprep.mubr.bf16.mxu0 0
        %9590 = vmatmul.mubr.bf16.gmra.mrb[0].mxu0 %v9465
        %v9591 = vpop.f32.mrb[0].mxu0
        %v9592 = vadd.f32 %v9519, %v9591
        %v9593 = vpop.f32.mrb[0].mxu0
        %v9594 = vpop.f32.mrb[0].mxu0
        %v9595 = vadd.f32 %v9522, %v9594
        %v9596 = vpop.f32.mrb[0].mxu0
        %9597 = vmatprep.mubr.bf16.mxu0 0
        %9598 = vmatmul.mubr.bf16.gmra.mrb[0].mxu0 %v9468
        %v9599 = vpop.f32.mrb[0].mxu0
        %v9600 = vadd.f32 %v9527, %v9599
        %v9601 = vpop.f32.mrb[0].mxu0
        %v9602 = vpop.f32.mrb[0].mxu0
        %v9603 = vadd.f32 %v9530, %v9602
        %v9604 = vpop.f32.mrb[0].mxu0
        %9605 = vmatprep.mubr.bf16.mxu0 0
        %9606 = vmatmul.mubr.bf16.gmra.mrb[0].mxu0 %v9471
        %v9607 = vpop.f32.mrb[0].mxu0
        %v9608 = vadd.f32 %v9535, %v9607
        %v9609 = vpop.f32.mrb[0].mxu0
        %v9610 = vpop.f32.mrb[0].mxu0
        %v9611 = vadd.f32 %v9538, %v9610
        %v9612 = vpop.f32.mrb[0].mxu0
        %9613 = vmatprep.mubr.bf16.mxu0 0
        %9614 = vmatmul.mubr.bf16.gmra.mrb[0].mxu0 %v9474
        %v9615 = vpop.f32.mrb[0].mxu0
        %v9616 = vadd.f32 %v9543, %v9615
        %v9617 = vpop.f32.mrb[0].mxu0
        %v9618 = vpop.f32.mrb[0].mxu0
        %v9619 = vadd.f32 %v9546, %v9618
        %v9620 = vpop.f32.mrb[0].mxu0
        %9621 = vdwg.mxu0
        %v9622 = vld [vmem:[%s11] sm:$0xf]
        %v9623 = vld [vmem:[%s11 + $0x4] sm:$0xf]
        %v9624 = vld [vmem:[%s12] sm:$0x1]
        %v9626 = vlaneseq
        %v9627 = vshrl.u32 %v9626, 7
        %v9628 = vsub.s32 0, %v9627
        %v9629 = vrot.slane %v9624, %v9628
        %9636 = vrot.lane.b32.xlu0 %v8483, 64
        %v9637 = vpop.permute.xlu0 %9636
        %9638 = vrot.lane.b32.xlu0 %v8485, 64
        %v9639 = vpop.permute.xlu0 %9638
        %9640 = vrot.lane.b32.xlu0 %v8487, 64
        %v9641 = vpop.permute.xlu0 %9640
        %9642 = vrot.lane.b32.xlu0 %v8489, 64
        %v9643 = vpop.permute.xlu0 %9642
        %9644 = vrot.lane.b32.xlu0 %v8491, 64
        %v9645 = vpop.permute.xlu0 %9644
        %v9648 = vunpack.c.l.b16 %v9622
        %v9649 = vunpack.c.l.b16 %v9623
        %v9650 = vpack.c.b16 %v9649, %v9648
        %v9653 = vsel %vm3064, %v9637, 0
        %v9656 = vsel %vm3064, %v9639, 0
        %v9659 = vsel %vm3064, %v9641, 0
        %v9662 = vsel %vm3064, %v9643, 0
        %v9665 = vsel %vm3064, %v9645, 0
        %9667 = vmatprep.subr.bf16.mxu0 0
        %9668 = vmatpush1.bf16.msra.mxu0 %v9650
        %9669 = vmatprep.subr.bf16.mxu0 0
        %9670 = vmatpush1.bf16.msra.mxu0 0
        %9671 = vmatprep.subr.bf16.mxu0 0
        %9672 = vmatpush1.bf16.msra.mxu0 0
        %9673 = vmatprep.subr.bf16.mxu0 0
        %9674 = vmatpush1.bf16.msra.mxu0 0
        %9675 = vmatprep.subr.bf16.mxu0 0
        %9676 = vmatpush1.bf16.msra.mxu0 0
        %9677 = vmatprep.subr.bf16.mxu0 0
        %9678 = vmatpush1.bf16.msra.mxu0 0
        %9679 = vmatprep.subr.bf16.mxu0 0
        %9680 = vmatpush1.bf16.msra.mxu0 0
        %9681 = vmatprep.subr.bf16.mxu0 0
        %9682 = vmatpush1.bf16.msra.mxu0 0
        %9683 = vmatprep.subr.bf16.mxu0 0
        %9684 = vmatpush1.bf16.msra.mxu0 0
        %9685 = vmatprep.subr.bf16.mxu0 0
        %9686 = vmatpush1.bf16.msra.mxu0 0
        %9687 = vmatprep.subr.bf16.mxu0 0
        %9688 = vmatpush1.bf16.msra.mxu0 0
        %9689 = vmatprep.subr.bf16.mxu0 0
        %9690 = vmatpush1.bf16.msra.mxu0 0
        %9691 = vmatprep.subr.bf16.mxu0 0
        %9692 = vmatpush1.bf16.msra.mxu0 0
        %9693 = vmatprep.subr.bf16.mxu0 0
        %9694 = vmatpush1.bf16.msra.mxu0 0
        %9695 = vmatprep.subr.bf16.mxu0 0
        %9696 = vmatpush1.bf16.msra.mxu0 0
        %9697 = vmatprep.subr.bf16.mxu0 0
        %9698 = vmatpush1.bf16.msra.mxu0 0
        %9699 = vmatprep.mubr.bf16.mxu0 0
        %9700 = vmatmul.mubr.bf16.gmra.mrb[0].mxu0 %v9653
        %v9701 = vpop.f32.mrb[0].mxu0
        %v9702 = vadd.f32 %v9629, %v9701
        %v9703 = vpop.f32.mrb[0].mxu0
        %v9704 = vpop.f32.mrb[0].mxu0
        %v9705 = vadd.f32 %v9629, %v9704
        %v9706 = vpop.f32.mrb[0].mxu0
        %9707 = vmatprep.mubr.bf16.mxu0 0
        %9708 = vmatmul.mubr.bf16.gmra.mrb[0].mxu0 %v9656
        %v9709 = vpop.f32.mrb[0].mxu0
        %v9710 = vadd.f32 %v9629, %v9709
        %v9711 = vpop.f32.mrb[0].mxu0
        %v9712 = vpop.f32.mrb[0].mxu0
        %v9713 = vadd.f32 %v9629, %v9712
        %v9714 = vpop.f32.mrb[0].mxu0
        %9715 = vmatprep.mubr.bf16.mxu0 0
        %9716 = vmatmul.mubr.bf16.gmra.mrb[0].mxu0 %v9659
        %v9717 = vpop.f32.mrb[0].mxu0
        %v9718 = vadd.f32 %v9629, %v9717
        %v9719 = vpop.f32.mrb[0].mxu0
        %v9720 = vpop.f32.mrb[0].mxu0
        %v9721 = vadd.f32 %v9629, %v9720
        %v9722 = vpop.f32.mrb[0].mxu0
        %9723 = vmatprep.mubr.bf16.mxu0 0
        %9724 = vmatmul.mubr.bf16.gmra.mrb[0].mxu0 %v9662
        %v9725 = vpop.f32.mrb[0].mxu0
        %v9726 = vadd.f32 %v9629, %v9725
        %v9727 = vpop.f32.mrb[0].mxu0
        %v9728 = vpop.f32.mrb[0].mxu0
        %v9729 = vadd.f32 %v9629, %v9728
        %v9730 = vpop.f32.mrb[0].mxu0
        %9731 = vmatprep.mubr.bf16.mxu0 0
        %9732 = vmatmul.mubr.bf16.gmra.mrb[0].mxu0 %v9665
        %v9733 = vpop.f32.mrb[0].mxu0
        %v9734 = vadd.f32 %v9629, %v9733
        %v9735 = vpop.f32.mrb[0].mxu0
        %v9736 = vpop.f32.mrb[0].mxu0
        %v9737 = vadd.f32 %v9629, %v9736
        %v9738 = vpop.f32.mrb[0].mxu0
        %9739 = vdwg.mxu0
        %v9740 = vadd.f32 %v9584, %v9702
        %v9741 = vadd.f32 %v9587, %v9705
        %v9742 = vadd.f32 %v9592, %v9710
        %v9743 = vadd.f32 %v9595, %v9713
        %v9744 = vadd.f32 %v9600, %v9718
        %v9745 = vadd.f32 %v9603, %v9721
        %v9746 = vadd.f32 %v9608, %v9726
        %v9747 = vadd.f32 %v9611, %v9729
        %v9748 = vadd.f32 %v9616, %v9734
        %v9749 = vadd.f32 %v9619, %v9737
        %v9750 = vmax.f32 %v9740, 0.0
        %v9751 = vmax.f32 %v9741, 0.0
        %v9752 = vmax.f32 %v9742, 0.0
        %v9753 = vmax.f32 %v9743, 0.0
        %v9754 = vmax.f32 %v9744, 0.0
        %v9755 = vmax.f32 %v9745, 0.0
        %v9756 = vmax.f32 %v9746, 0.0
        %v9757 = vmax.f32 %v9747, 0.0
        %v9758 = vmax.f32 %v9748, 0.0
        %v9759 = vmax.f32 %v9749, 0.0
        %v9760 = vld [vmem:[%s22] sm:$0xff]
        %v9761 = vld [vmem:[%s22 + $0x8] sm:$0xff]
        %v9762 = vld [vmem:[%s22 + $0x10] sm:$0xff]
        %v9763 = vld [vmem:[%s22 + $0x18] sm:$0xff]
        %v9764 = vld [vmem:[%s22 + $0x20] sm:$0xff]
        %v9765 = vld [vmem:[%s22 + $0x28] sm:$0xff]
        %v9766 = vld [vmem:[%s22 + $0x30] sm:$0xff]
        %v9767 = vld [vmem:[%s22 + $0x38] sm:$0xff]
        %v9768 = vld [vmem:[%s22 + $0x40] sm:$0xff]
        %v9769 = vld [vmem:[%s22 + $0x48] sm:$0xff]
        %9771 = vset.pattern.permute.xlu0 0
        %9772 = vperm.xlu0 %9771, %v9760
        %v9773 = vpop.permute.xlu0 %9772
        %9776 = vset.pattern.permute.xlu0 0
        %9777 = vperm.xlu0 %9776, %v9761
        %v9778 = vpop.permute.xlu0 %9777
        %9781 = vset.pattern.permute.xlu0 0
        %9782 = vperm.xlu0 %9781, %v9762
        %v9783 = vpop.permute.xlu0 %9782
        %9786 = vset.pattern.permute.xlu0 0
        %9787 = vperm.xlu0 %9786, %v9763
        %v9788 = vpop.permute.xlu0 %9787
        %9791 = vset.pattern.permute.xlu0 0
        %9792 = vperm.xlu0 %9791, %v9764
        %v9793 = vpop.permute.xlu0 %9792
        %9796 = vset.pattern.permute.xlu0 0
        %9797 = vperm.xlu0 %9796, %v9765
        %v9798 = vpop.permute.xlu0 %9797
        %9801 = vset.pattern.permute.xlu0 0
        %9802 = vperm.xlu0 %9801, %v9766
        %v9803 = vpop.permute.xlu0 %9802
        %9806 = vset.pattern.permute.xlu0 0
        %9807 = vperm.xlu0 %9806, %v9767
        %v9808 = vpop.permute.xlu0 %9807
        %9811 = vset.pattern.permute.xlu0 0
        %9812 = vperm.xlu0 %9811, %v9768
        %v9813 = vpop.permute.xlu0 %9812
        %9816 = vset.pattern.permute.xlu0 0
        %9817 = vperm.xlu0 %9816, %v9769
        %v9818 = vpop.permute.xlu0 %9817
        %v9820 = vmul.f32 %v9750, %v9773
        %v9821 = vmul.f32 %v9751, %v9778
        %v9822 = vmul.f32 %v9752, %v9783
        %v9823 = vmul.f32 %v9753, %v9788
        %v9824 = vmul.f32 %v9754, %v9793
        %v9825 = vmul.f32 %v9755, %v9798
        %v9826 = vmul.f32 %v9756, %v9803
        %v9827 = vmul.f32 %v9757, %v9808
        %v9828 = vmul.f32 %v9758, %v9813
        %v9829 = vmul.f32 %v9759, %v9818
        %v9830 = vpack.c.bf16 %v9821, %v9820
        %v9831 = vpack.c.bf16 %v9823, %v9822
        %v9832 = vpack.c.bf16 %v9825, %v9824
        %v9833 = vpack.c.bf16 %v9827, %v9826
        %v9834 = vpack.c.bf16 %v9829, %v9828
        %v9840 = vunpack.c.l.b16 %v9830
        %v9841 = vunpack.c.h.b16 %v9830
        %v9842 = vunpack.c.l.b16 %v9831
        %v9843 = vunpack.c.h.b16 %v9831
        %v9844 = vunpack.c.l.b16 %v9832
        %v9845 = vunpack.c.h.b16 %v9832
        %v9846 = vunpack.c.l.b16 %v9833
        %v9847 = vunpack.c.h.b16 %v9833
        %v9848 = vunpack.c.l.b16 %v9834
        %v9849 = vunpack.c.h.b16 %v9834
        %v9850 = vpack.c.b16 %v9840, %v9840
        %v9851 = vpack.c.b16 %v9841, %v9841
        %v9852 = vpack.c.b16 %v9842, %v9842
        %v9853 = vpack.c.b16 %v9843, %v9843
        %v9854 = vpack.c.b16 %v9844, %v9844
        %v9855 = vpack.c.b16 %v9845, %v9845
        %v9856 = vpack.c.b16 %v9846, %v9846
        %v9857 = vpack.c.b16 %v9847, %v9847
        %v9858 = vpack.c.b16 %v9848, %v9848
        %v9859 = vpack.c.b16 %v9849, %v9849
        %v9861 = vshrl.u32 %v9850, 16
        %v9863 = vrot.slane %v9861, 6
        %v9864 = vshll.u32 %v9850, 16
        %v9866 = vrot.slane %v9864, 7
        %v9867 = vor.u32 %v9863, %v9866
        %v9868 = vrot.slane %v9867, 4
        %v9870 = vshrl.u32 %v9851, 16
        %v9872 = vrot.slane %v9870, 6
        %v9873 = vshll.u32 %v9851, 16
        %v9875 = vrot.slane %v9873, 7
        %v9876 = vor.u32 %v9872, %v9875
        %v9877 = vsel %vm1732, %v9868, %v9876
        %v9878 = vrot.slane %v9876, 4
        %v9880 = vshrl.u32 %v9852, 16
        %v9882 = vrot.slane %v9880, 6
        %v9883 = vshll.u32 %v9852, 16
        %v9885 = vrot.slane %v9883, 7
        %v9886 = vor.u32 %v9882, %v9885
        %v9887 = vsel %vm1732, %v9878, %v9886
        %v9888 = vrot.slane %v9886, 4
        %v9890 = vshrl.u32 %v9853, 16
        %v9892 = vrot.slane %v9890, 6
        %v9893 = vshll.u32 %v9853, 16
        %v9895 = vrot.slane %v9893, 7
        %v9896 = vor.u32 %v9892, %v9895
        %v9897 = vsel %vm1732, %v9888, %v9896
        %v9898 = vrot.slane %v9896, 4
        %v9900 = vshrl.u32 %v9854, 16
        %v9902 = vrot.slane %v9900, 6
        %v9903 = vshll.u32 %v9854, 16
        %v9905 = vrot.slane %v9903, 7
        %v9906 = vor.u32 %v9902, %v9905
        %v9907 = vsel %vm1732, %v9898, %v9906
        %v9908 = vrot.slane %v9906, 4
        %v9910 = vshrl.u32 %v9855, 16
        %v9912 = vrot.slane %v9910, 6
        %v9913 = vshll.u32 %v9855, 16
        %v9915 = vrot.slane %v9913, 7
        %v9916 = vor.u32 %v9912, %v9915
        %v9917 = vsel %vm1732, %v9908, %v9916
        %v9918 = vrot.slane %v9916, 4
        %v9920 = vshrl.u32 %v9856, 16
        %v9922 = vrot.slane %v9920, 6
        %v9923 = vshll.u32 %v9856, 16
        %v9925 = vrot.slane %v9923, 7
        %v9926 = vor.u32 %v9922, %v9925
        %v9927 = vsel %vm1732, %v9918, %v9926
        %v9928 = vrot.slane %v9926, 4
        %v9930 = vshrl.u32 %v9857, 16
        %v9932 = vrot.slane %v9930, 6
        %v9933 = vshll.u32 %v9857, 16
        %v9935 = vrot.slane %v9933, 7
        %v9936 = vor.u32 %v9932, %v9935
        %v9937 = vsel %vm1732, %v9928, %v9936
        %v9938 = vrot.slane %v9936, 4
        %v9940 = vshrl.u32 %v9858, 16
        %v9942 = vrot.slane %v9940, 6
        %v9943 = vshll.u32 %v9858, 16
        %v9945 = vrot.slane %v9943, 7
        %v9946 = vor.u32 %v9942, %v9945
        %v9947 = vsel %vm1732, %v9938, %v9946
        %v9948 = vrot.slane %v9946, 4
        %v9950 = vshrl.u32 %v9859, 16
        %v9952 = vrot.slane %v9950, 6
        %v9953 = vshll.u32 %v9859, 16
        %v9955 = vrot.slane %v9953, 7
        %v9956 = vor.u32 %v9952, %v9955
        %v9957 = vsel %vm1732, %v9948, %v9956
        %v9958 = vrot.slane %v9956, 4
        %v9970 = vld [vmem:[#allocation6 + $0x4] sm:$0xe]
        %v9971 = vsel %vm8881, %v9867, %v9970
        %9972 = vst [vmem:[#allocation6 + $0x4] sm:$0xe] %v9971
        %9973 = vst.msk [vmem:[#allocation6 + $0x8] sm:$0xf] %vm914, %v9877
        %9974 = vst.msk [vmem:[#allocation6 + $0xc] sm:$0xf] %vm914, %v9887
        %9975 = vst.msk [vmem:[#allocation6 + $0x10] sm:$0xf] %vm914, %v9897
        %9976 = vst.msk [vmem:[#allocation6 + $0x14] sm:$0xf] %vm914, %v9907
        %9977 = vst.msk [vmem:[#allocation6 + $0x18] sm:$0xf] %vm914, %v9917
        %9978 = vst.msk [vmem:[#allocation6 + $0x1c] sm:$0xf] %vm914, %v9927
        %9979 = vst.msk [vmem:[#allocation6 + $0x20] sm:$0xf] %vm914, %v9937
        %9980 = vst.msk [vmem:[#allocation6 + $0x24] sm:$0xf] %vm914, %v9947
        %9981 = vst.msk [vmem:[#allocation6 + $0x28] sm:$0xf] %vm914, %v9957
        %v9982 = vld [vmem:[#allocation6 + $0x2c] sm:$0x3]
        %v9983 = vsel %vm8895, %v9958, %v9982
        %9984 = vst [vmem:[#allocation6 + $0x2c] sm:$0x3] %v9983
        %v9985 = vld [vmem:[%s20] sm:$0xf]
        %v9986 = vld [vmem:[%s20 + $0x4] sm:$0xf]
        %v9987 = vld [vmem:[%s20 + $0x8] sm:$0xf]
        %v9988 = vld [vmem:[#allocation6] sm:$0xf]
        %v9989 = vld [vmem:[#allocation6 + $0x4] sm:$0xf]
        %v9990 = vld [vmem:[#allocation6 + $0x8] sm:$0xf]
        %v9991 = vld [vmem:[#allocation6 + $0xc] sm:$0xf]
        %v9992 = vld [vmem:[#allocation6 + $0x10] sm:$0xf]
        %v9993 = vld [vmem:[#allocation6 + $0x14] sm:$0xf]
        %v9994 = vld [vmem:[#allocation6 + $0x18] sm:$0xf]
        %v9995 = vld [vmem:[#allocation6 + $0x1c] sm:$0xf]
        %v9996 = vld [vmem:[#allocation6 + $0x20] sm:$0xf]
        %v9997 = vld [vmem:[#allocation6 + $0x24] sm:$0xf]
        %v9998 = vld [vmem:[#allocation6 + $0x28] sm:$0x1]
        %v9999 = vld [vmem:[#allocation6] sm:$0xe]
        %v10000 = vld [vmem:[#allocation6 + $0x4] sm:$0xe]
        %v10001 = vld [vmem:[#allocation6 + $0x28] sm:$0xf]
        %v10002 = vld [vmem:[#allocation6 + $0x2c] sm:$0x1]
        %v10003 = vld [vmem:[#allocation6 + $0x2c] sm:$0x3]
        %v10004 = vld [vmem:[#allocation6 + $0x4] sm:$0xc]
        %v10005 = vld [vmem:[#allocation6 + $0x8] sm:$0xc]
        %v10006 = vld [vmem:[#allocation6 + $0x2c] sm:$0xf]
        %v10007 = vld [vmem:[#allocation6 + $0x30] sm:$0x3]
        %v10008 = vld [vmem:[#allocation6 + $0x30] sm:$0x7]
        %v10009 = vld [vmem:[#allocation6 + $0x8] sm:$0x8]
        %v10020 = vunpack.c.l.b16 %v9988
        %v10021 = vunpack.c.l.b16 %v9989
        %v10022 = vunpack.c.l.b16 %v9990
        %v10023 = vunpack.c.l.b16 %v9991
        %v10024 = vunpack.c.l.b16 %v9992
        %v10025 = vunpack.c.l.b16 %v9993
        %v10026 = vunpack.c.l.b16 %v9994
        %v10027 = vunpack.c.l.b16 %v9995
        %v10028 = vunpack.c.l.b16 %v9996
        %v10029 = vunpack.c.l.b16 %v9997
        %v10030 = vpack.c.b16 %v10021, %v10020
        %v10031 = vpack.c.b16 %v10023, %v10022
        %v10032 = vpack.c.b16 %v10025, %v10024
        %v10033 = vpack.c.b16 %v10027, %v10026
        %v10034 = vpack.c.b16 %v10029, %v10028
        %v10036 = vunpack.c.l.b16 %v9998
        %v10037 = vpack.c.b16 %v10036, %v10036
        %v10039 = vshrl.u32 %v10030, 16
        %v10041 = vshll.u32 %v10030, 16
        %v10043 = vrot.slane %v10041, 1
        %v10044 = vor.u32 %v10039, %v10043
        %v10046 = vshll.u32 %v10031, 16
        %v10048 = vrot.slane %v10046, 1
        %v10049 = vsel %vm2318, %v10044, %v10048
        %v10050 = vshrl.u32 %v10031, 16
        %v10052 = vor.u32 %v10050, %v10048
        %v10054 = vshll.u32 %v10032, 16
        %v10056 = vrot.slane %v10054, 1
        %v10057 = vsel %vm2318, %v10052, %v10056
        %v10058 = vshrl.u32 %v10032, 16
        %v10060 = vor.u32 %v10058, %v10056
        %v10062 = vshll.u32 %v10033, 16
        %v10064 = vrot.slane %v10062, 1
        %v10065 = vsel %vm2318, %v10060, %v10064
        %v10066 = vshrl.u32 %v10033, 16
        %v10068 = vor.u32 %v10066, %v10064
        %v10070 = vshll.u32 %v10034, 16
        %v10072 = vrot.slane %v10070, 1
        %v10073 = vsel %vm2318, %v10068, %v10072
        %v10074 = vshrl.u32 %v10034, 16
        %v10076 = vor.u32 %v10074, %v10072
        %v10078 = vshll.u32 %v10037, 16
        %v10080 = vrot.slane %v10078, 1
        %v10081 = vsel %vm2318, %v10076, %v10080
        %10082 = vrot.lane.b32.xlu0 %v10049, 32
        %v10083 = vpop.permute.xlu0 %10082
        %10084 = vrot.lane.b32.xlu0 %v10057, 32
        %v10085 = vpop.permute.xlu0 %10084
        %10086 = vrot.lane.b32.xlu0 %v10065, 32
        %v10087 = vpop.permute.xlu0 %10086
        %10088 = vrot.lane.b32.xlu0 %v10073, 32
        %v10089 = vpop.permute.xlu0 %10088
        %10090 = vrot.lane.b32.xlu0 %v10081, 32
        %v10091 = vpop.permute.xlu0 %10090
        %v10093 = vunpack.c.l.b16 %v9999
        %v10094 = vpack.c.b16 %v10021, %v10093
        %v10095 = vrot.slane %v10094, 1
        %v10096 = vrot.slane %v10031, 1
        %v10097 = vsel %vm2506, %v10095, %v10096
        %v10098 = vrot.slane %v10032, 1
        %v10099 = vsel %vm2506, %v10096, %v10098
        %v10100 = vrot.slane %v10033, 1
        %v10101 = vsel %vm2506, %v10098, %v10100
        %v10102 = vrot.slane %v10034, 1
        %v10103 = vsel %vm2506, %v10100, %v10102
        %v10104 = vrot.slane %v10037, 1
        %v10105 = vsel %vm2506, %v10102, %v10104
        %10106 = vrot.lane.b32.xlu0 %v10097, 64
        %v10107 = vpop.permute.xlu0 %10106
        %10108 = vrot.lane.b32.xlu0 %v10099, 64
        %v10109 = vpop.permute.xlu0 %10108
        %10110 = vrot.lane.b32.xlu0 %v10101, 64
        %v10111 = vpop.permute.xlu0 %10110
        %10112 = vrot.lane.b32.xlu0 %v10103, 64
        %v10113 = vpop.permute.xlu0 %10112
        %10114 = vrot.lane.b32.xlu0 %v10105, 64
        %v10115 = vpop.permute.xlu0 %10114
        %v10119 = vunpack.c.l.b16 %v10000
        %v10120 = vunpack.c.l.b16 %v10001
        %v10121 = vunpack.c.l.b16 %v10002
        %v10122 = vpack.c.b16 %v10022, %v10119
        %v10123 = vpack.c.b16 %v10024, %v10023
        %v10124 = vpack.c.b16 %v10026, %v10025
        %v10125 = vpack.c.b16 %v10028, %v10027
        %v10126 = vpack.c.b16 %v10120, %v10029
        %v10127 = vpack.c.b16 %v10121, %v10121
        %v10128 = vrot.slane %v10122, 1
        %v10129 = vrot.slane %v10123, 1
        %v10130 = vsel %vm2506, %v10128, %v10129
        %v10131 = vrot.slane %v10124, 1
        %v10132 = vsel %vm2506, %v10129, %v10131
        %v10133 = vrot.slane %v10125, 1
        %v10134 = vsel %vm2506, %v10131, %v10133
        %v10135 = vrot.slane %v10126, 1
        %v10136 = vsel %vm2506, %v10133, %v10135
        %v10137 = vrot.slane %v10127, 1
        %v10138 = vsel %vm2506, %v10135, %v10137
        %10139 = vrot.lane.b32.xlu0 %v10130, 96
        %v10140 = vpop.permute.xlu0 %10139
        %10141 = vrot.lane.b32.xlu0 %v10132, 96
        %v10142 = vpop.permute.xlu0 %10141
        %10143 = vrot.lane.b32.xlu0 %v10134, 96
        %v10144 = vpop.permute.xlu0 %10143
        %10145 = vrot.lane.b32.xlu0 %v10136, 96
        %v10146 = vpop.permute.xlu0 %10145
        %10147 = vrot.lane.b32.xlu0 %v10138, 96
        %v10148 = vpop.permute.xlu0 %10147
        %v10150 = vunpack.c.l.b16 %v10003
        %v10151 = vpack.c.b16 %v10150, %v10150
        %v10153 = vshrl.u32 %v10122, 16
        %v10155 = vrot.slane %v10153, 1
        %v10156 = vshll.u32 %v10122, 16
        %v10158 = vrot.slane %v10156, 2
        %v10159 = vor.u32 %v10155, %v10158
        %v10161 = vshrl.u32 %v10123, 16
        %v10163 = vrot.slane %v10161, 1
        %v10164 = vshll.u32 %v10123, 16
        %v10166 = vrot.slane %v10164, 2
        %v10167 = vor.u32 %v10163, %v10166
        %v10168 = vsel %vm2636, %v10159, %v10167
        %v10170 = vshrl.u32 %v10124, 16
        %v10172 = vrot.slane %v10170, 1
        %v10173 = vshll.u32 %v10124, 16
        %v10175 = vrot.slane %v10173, 2
        %v10176 = vor.u32 %v10172, %v10175
        %v10177 = vsel %vm2636, %v10167, %v10176
        %v10179 = vshrl.u32 %v10125, 16
        %v10181 = vrot.slane %v10179, 1
        %v10182 = vshll.u32 %v10125, 16
        %v10184 = vrot.slane %v10182, 2
        %v10185 = vor.u32 %v10181, %v10184
        %v10186 = vsel %vm2636, %v10176, %v10185
        %v10188 = vshrl.u32 %v10126, 16
        %v10190 = vrot.slane %v10188, 1
        %v10191 = vshll.u32 %v10126, 16
        %v10193 = vrot.slane %v10191, 2
        %v10194 = vor.u32 %v10190, %v10193
        %v10195 = vsel %vm2636, %v10185, %v10194
        %v10197 = vshrl.u32 %v10151, 16
        %v10199 = vrot.slane %v10197, 1
        %v10200 = vshll.u32 %v10151, 16
        %v10202 = vrot.slane %v10200, 2
        %v10203 = vor.u32 %v10199, %v10202
        %v10204 = vsel %vm2636, %v10194, %v10203
        %v10206 = vunpack.c.l.b16 %v10004
        %v10207 = vpack.c.b16 %v10022, %v10206
        %v10208 = vrot.slane %v10207, 2
        %v10209 = vrot.slane %v10123, 2
        %v10210 = vsel %vm2766, %v10208, %v10209
        %v10211 = vrot.slane %v10124, 2
        %v10212 = vsel %vm2766, %v10209, %v10211
        %v10213 = vrot.slane %v10125, 2
        %v10214 = vsel %vm2766, %v10211, %v10213
        %v10215 = vrot.slane %v10126, 2
        %v10216 = vsel %vm2766, %v10213, %v10215
        %v10217 = vrot.slane %v10151, 2
        %v10218 = vsel %vm2766, %v10215, %v10217
        %10219 = vrot.lane.b32.xlu0 %v10210, 32
        %v10220 = vpop.permute.xlu0 %10219
        %10221 = vrot.lane.b32.xlu0 %v10212, 32
        %v10222 = vpop.permute.xlu0 %10221
        %10223 = vrot.lane.b32.xlu0 %v10214, 32
        %v10224 = vpop.permute.xlu0 %10223
        %10225 = vrot.lane.b32.xlu0 %v10216, 32
        %v10226 = vpop.permute.xlu0 %10225
        %10227 = vrot.lane.b32.xlu0 %v10218, 32
        %v10228 = vpop.permute.xlu0 %10227
        %v10232 = vunpack.c.l.b16 %v10005
        %v10233 = vunpack.c.l.b16 %v10006
        %v10234 = vunpack.c.l.b16 %v10007
        %v10235 = vpack.c.b16 %v10023, %v10232
        %v10236 = vpack.c.b16 %v10233, %v10120
        %v10237 = vpack.c.b16 %v10234, %v10234
        %v10238 = vrot.slane %v10235, 2
        %v10239 = vrot.slane %v10032, 2
        %v10240 = vsel %vm2766, %v10238, %v10239
        %v10241 = vrot.slane %v10033, 2
        %v10242 = vsel %vm2766, %v10239, %v10241
        %v10243 = vrot.slane %v10034, 2
        %v10244 = vsel %vm2766, %v10241, %v10243
        %v10245 = vrot.slane %v10236, 2
        %v10246 = vsel %vm2766, %v10243, %v10245
        %v10247 = vrot.slane %v10237, 2
        %v10248 = vsel %vm2766, %v10245, %v10247
        %10249 = vrot.lane.b32.xlu0 %v10240, 64
        %v10250 = vpop.permute.xlu0 %10249
        %10251 = vrot.lane.b32.xlu0 %v10242, 64
        %v10252 = vpop.permute.xlu0 %10251
        %10253 = vrot.lane.b32.xlu0 %v10244, 64
        %v10254 = vpop.permute.xlu0 %10253
        %10255 = vrot.lane.b32.xlu0 %v10246, 64
        %v10256 = vpop.permute.xlu0 %10255
        %10257 = vrot.lane.b32.xlu0 %v10248, 64
        %v10258 = vpop.permute.xlu0 %10257
        %v10260 = vunpack.c.l.b16 %v10008
        %v10261 = vpack.c.b16 %v10260, %v10260
        %v10263 = vshrl.u32 %v10235, 16
        %v10265 = vrot.slane %v10263, 2
        %v10266 = vshll.u32 %v10235, 16
        %v10268 = vrot.slane %v10266, 3
        %v10269 = vor.u32 %v10265, %v10268
        %v10270 = vrot.slane %v10058, 2
        %v10271 = vrot.slane %v10054, 3
        %v10272 = vor.u32 %v10270, %v10271
        %v10273 = vsel %vm2896, %v10269, %v10272
        %v10274 = vrot.slane %v10066, 2
        %v10275 = vrot.slane %v10062, 3
        %v10276 = vor.u32 %v10274, %v10275
        %v10277 = vsel %vm2896, %v10272, %v10276
        %v10278 = vrot.slane %v10074, 2
        %v10279 = vrot.slane %v10070, 3
        %v10280 = vor.u32 %v10278, %v10279
        %v10281 = vsel %vm2896, %v10276, %v10280
        %v10283 = vshrl.u32 %v10236, 16
        %v10285 = vrot.slane %v10283, 2
        %v10286 = vshll.u32 %v10236, 16
        %v10288 = vrot.slane %v10286, 3
        %v10289 = vor.u32 %v10285, %v10288
        %v10290 = vsel %vm2896, %v10280, %v10289
        %v10292 = vshrl.u32 %v10261, 16
        %v10294 = vrot.slane %v10292, 2
        %v10295 = vshll.u32 %v10261, 16
        %v10297 = vrot.slane %v10295, 3
        %v10298 = vor.u32 %v10294, %v10297
        %v10299 = vsel %vm2896, %v10289, %v10298
        %10300 = vrot.lane.b32.xlu0 %v10273, 96
        %v10301 = vpop.permute.xlu0 %10300
        %10302 = vrot.lane.b32.xlu0 %v10277, 96
        %v10303 = vpop.permute.xlu0 %10302
        %10304 = vrot.lane.b32.xlu0 %v10281, 96
        %v10305 = vpop.permute.xlu0 %10304
        %10306 = vrot.lane.b32.xlu0 %v10290, 96
        %v10307 = vpop.permute.xlu0 %10306
        %10308 = vrot.lane.b32.xlu0 %v10299, 96
        %v10309 = vpop.permute.xlu0 %10308
        %v10311 = vunpack.c.l.b16 %v10009
        %v10312 = vpack.c.b16 %v10023, %v10311
        %v10313 = vrot.slane %v10312, 3
        %v10314 = vrot.slane %v10032, 3
        %v10315 = vsel %vm3026, %v10313, %v10314
        %v10316 = vrot.slane %v10033, 3
        %v10317 = vsel %vm3026, %v10314, %v10316
        %v10318 = vrot.slane %v10034, 3
        %v10319 = vsel %vm3026, %v10316, %v10318
        %v10320 = vrot.slane %v10236, 3
        %v10321 = vsel %vm3026, %v10318, %v10320
        %v10322 = vrot.slane %v10261, 3
        %v10323 = vsel %vm3026, %v10320, %v10322
        %v10330 = vsel %vm3101, %v10030, %v10083
        %v10332 = vsel %vm3101, %v10031, %v10085
        %v10334 = vsel %vm3101, %v10032, %v10087
        %v10336 = vsel %vm3101, %v10033, %v10089
        %v10338 = vsel %vm3101, %v10034, %v10091
        %v10340 = vsel %vm3175, %v10330, %v10107
        %v10342 = vsel %vm3175, %v10332, %v10109
        %v10344 = vsel %vm3175, %v10334, %v10111
        %v10346 = vsel %vm3175, %v10336, %v10113
        %v10348 = vsel %vm3175, %v10338, %v10115
        %v10350 = vsel %vm3249, %v10340, %v10140
        %v10353 = vsel %vm3249, %v10342, %v10142
        %v10356 = vsel %vm3249, %v10344, %v10144
        %v10359 = vsel %vm3249, %v10346, %v10146
        %v10362 = vsel %vm3249, %v10348, %v10148
        %v10366 = vsel %vm3101, %v10168, %v10220
        %v10369 = vsel %vm3101, %v10177, %v10222
        %v10372 = vsel %vm3101, %v10186, %v10224
        %v10375 = vsel %vm3101, %v10195, %v10226
        %v10378 = vsel %vm3101, %v10204, %v10228
        %v10380 = vsel %vm3175, %v10366, %v10250
        %v10382 = vsel %vm3175, %v10369, %v10252
        %v10384 = vsel %vm3175, %v10372, %v10254
        %v10386 = vsel %vm3175, %v10375, %v10256
        %v10388 = vsel %vm3175, %v10378, %v10258
        %v10390 = vsel %vm3249, %v10380, %v10301
        %v10393 = vsel %vm3249, %v10382, %v10303
        %v10396 = vsel %vm3249, %v10384, %v10305
        %v10399 = vsel %vm3249, %v10386, %v10307
        %v10402 = vsel %vm3249, %v10388, %v10309
        %v10407 = vunpack.c.l.b16 %v9985
        %v10408 = vunpack.c.l.b16 %v9986
        %v10409 = vunpack.c.l.b16 %v9987
        %v10410 = vpack.c.b16 %v10408, %v10407
        %v10411 = vpack.c.b16 %v10409, %v10409
        %v10413 = vsel %vm3212, %v10410, 0
        %v10416 = vsel %vm3212, %v10411, 0
        %10418 = vmatprep.subr.bf16.mxu0 %v10390
        %10419 = vmatpush1.bf16.msra.mxu0 %v10350
        %10420 = vmatprep.subr.bf16.mxu0 %v10393
        %10421 = vmatpush1.bf16.msra.mxu0 %v10353
        %10422 = vmatprep.subr.bf16.mxu0 %v10396
        %10423 = vmatpush1.bf16.msra.mxu0 %v10356
        %10424 = vmatprep.subr.bf16.mxu0 %v10399
        %10425 = vmatpush1.bf16.msra.mxu0 %v10359
        %10426 = vmatprep.subr.bf16.mxu0 %v10402
        %10427 = vmatpush1.bf16.msra.mxu0 %v10362
        %10428 = vmatprep.subr.bf16.mxu0 0
        %10429 = vmatpush1.bf16.msra.mxu0 0
        %10430 = vmatprep.subr.bf16.mxu0 0
        %10431 = vmatpush1.bf16.msra.mxu0 0
        %10432 = vmatprep.subr.bf16.mxu0 0
        %10433 = vmatpush1.bf16.msra.mxu0 0
        %10434 = vmatprep.subr.bf16.mxu0 0
        %10435 = vmatpush1.bf16.msra.mxu0 0
        %10436 = vmatprep.subr.bf16.mxu0 0
        %10437 = vmatpush1.bf16.msra.mxu0 0
        %10438 = vmatprep.subr.bf16.mxu0 0
        %10439 = vmatpush1.bf16.msra.mxu0 0
        %10440 = vmatprep.subr.bf16.mxu0 0
        %10441 = vmatpush1.bf16.msra.mxu0 0
        %10442 = vmatprep.subr.bf16.mxu0 0
        %10443 = vmatpush1.bf16.msra.mxu0 0
        %10444 = vmatprep.subr.bf16.mxu0 0
        %10445 = vmatpush1.bf16.msra.mxu0 0
        %10446 = vmatprep.subr.bf16.mxu0 0
        %10447 = vmatpush1.bf16.msra.mxu0 0
        %10448 = vmatprep.subr.bf16.mxu0 0
        %10449 = vmatpush1.bf16.msra.mxu0 0
        %10450 = vmatprep.mubr.bf16.mxu0 0
        %10451 = vmatmul.mubr.bf16.gmra.mrb[0].mxu0 %v10413
        %v10452 = vpop.f32.mrb[0].mxu0
        %v10453 = vadd.f32 0.0, %v10452
        %v10454 = vpop.f32.mrb[0].mxu0
        %v10455 = vadd.f32 0.0, %v10454
        %v10456 = vpop.f32.mrb[0].mxu0
        %v10457 = vadd.f32 0.0, %v10456
        %v10458 = vpop.f32.mrb[0].mxu0
        %v10459 = vadd.f32 0.0, %v10458
        %10460 = vmatprep.mubr.bf16.mxu0 0
        %10461 = vmatmul.mubr.bf16.gmra.mrb[0].mxu0 %v10416
        %v10462 = vpop.f32.mrb[0].mxu0
        %v10463 = vadd.f32 0.0, %v10462
        %v10464 = vpop.f32.mrb[0].mxu0
        %v10465 = vadd.f32 0.0, %v10464
        %v10466 = vpop.f32.mrb[0].mxu0
        %v10467 = vpop.f32.mrb[0].mxu0
        %10468 = vdwg.mxu0
        %10469 = vmatprep.subr.bf16.mxu0 0
        %10470 = vmatpush1.bf16.msra.mxu0 %v10315
        %10471 = vmatprep.subr.bf16.mxu0 0
        %10472 = vmatpush1.bf16.msra.mxu0 %v10317
        %10473 = vmatprep.subr.bf16.mxu0 0
        %10474 = vmatpush1.bf16.msra.mxu0 %v10319
        %10475 = vmatprep.subr.bf16.mxu0 0
        %10476 = vmatpush1.bf16.msra.mxu0 %v10321
        %10477 = vmatprep.subr.bf16.mxu0 0
        %10478 = vmatpush1.bf16.msra.mxu0 %v10323
        %10479 = vmatprep.subr.bf16.mxu0 0
        %10480 = vmatpush1.bf16.msra.mxu0 0
        %10481 = vmatprep.subr.bf16.mxu0 0
        %10482 = vmatpush1.bf16.msra.mxu0 0
        %10483 = vmatprep.subr.bf16.mxu0 0
        %10484 = vmatpush1.bf16.msra.mxu0 0
        %10485 = vmatprep.subr.bf16.mxu0 0
        %10486 = vmatpush1.bf16.msra.mxu0 0
        %10487 = vmatprep.subr.bf16.mxu0 0
        %10488 = vmatpush1.bf16.msra.mxu0 0
        %10489 = vmatprep.subr.bf16.mxu0 0
        %10490 = vmatpush1.bf16.msra.mxu0 0
        %10491 = vmatprep.subr.bf16.mxu0 0
        %10492 = vmatpush1.bf16.msra.mxu0 0
        %10493 = vmatprep.subr.bf16.mxu0 0
        %10494 = vmatpush1.bf16.msra.mxu0 0
        %10495 = vmatprep.subr.bf16.mxu0 0
        %10496 = vmatpush1.bf16.msra.mxu0 0
        %10497 = vmatprep.subr.bf16.mxu0 0
        %10498 = vmatpush1.bf16.msra.mxu0 0
        %10499 = vmatprep.subr.bf16.mxu0 0
        %10500 = vmatpush1.bf16.msra.mxu0 0
        %10501 = vmatprep.mubr.bf16.mxu0 0
        %10502 = vmatmul.mubr.bf16.gmra.mrb[0].mxu0 %v10413
        %v10503 = vpop.f32.mrb[0].mxu0
        %v10504 = vadd.f32 0.0, %v10503
        %v10505 = vpop.f32.mrb[0].mxu0
        %v10506 = vpop.f32.mrb[0].mxu0
        %v10507 = vadd.f32 0.0, %v10506
        %v10508 = vpop.f32.mrb[0].mxu0
        %10509 = vmatprep.mubr.bf16.mxu0 0
        %10510 = vmatmul.mubr.bf16.gmra.mrb[0].mxu0 %v10416
        %v10511 = vpop.f32.mrb[0].mxu0
        %v10512 = vadd.f32 0.0, %v10511
        %v10513 = vpop.f32.mrb[0].mxu0
        %v10514 = vpop.f32.mrb[0].mxu0
        %v10515 = vpop.f32.mrb[0].mxu0
        %10516 = vdwg.mxu0
        %v10517 = vpack.c.bf16 %v10457, %v10453
        %v10518 = vpack.c.bf16 %v10459, %v10455
        %v10519 = vpack.c.bf16 %v10507, %v10504
        %v10520 = vpack.c.bf16 %v10463, %v10463
        %v10521 = vpack.c.bf16 %v10465, %v10465
        %v10522 = vpack.c.bf16 %v10512, %v10512
        %v10523 = vld [vmem:[%s13] sm:$0xf]
        %v10524 = vld [vmem:[%s13 + $0x4] sm:$0xf]
        %v10525 = vld [vmem:[%s13 + $0x8] sm:$0xf]
        %v10526 = vld [vmem:[%s13 + $0xc] sm:$0xf]
        %v10527 = vld [vmem:[%s13 + $0x10] sm:$0xf]
        %v10528 = vld [vmem:[%s13 + $0x14] sm:$0xf]
        %v10529 = vld [vmem:[%s13 + $0x18] sm:$0xf]
        %v10530 = vld [vmem:[%s13 + $0x1c] sm:$0xf]
        %v10531 = vld [vmem:[%s13 + $0x20] sm:$0xf]
        %v10532 = vld [vmem:[%s13 + $0x24] sm:$0xf]
        %v10533 = vld [vmem:[%s13 + $0x28] sm:$0xf]
        %v10534 = vld [vmem:[%s13 + $0x2c] sm:$0xf]
        %v10535 = vld [vmem:[%s13 + $0x30] sm:$0xf]
        %v10536 = vld [vmem:[%s13 + $0x34] sm:$0xf]
        %v10537 = vld [vmem:[%s13 + $0x38] sm:$0xf]
        %v10538 = vld [vmem:[%s13 + $0x3c] sm:$0xf]
        %v10539 = vld [vmem:[%s13 + $0x40] sm:$0xf]
        %v10540 = vld [vmem:[%s13 + $0x44] sm:$0xf]
        %v10541 = vld [vmem:[%s13 + $0x48] sm:$0xf]
        %v10542 = vld [vmem:[%s13 + $0x4c] sm:$0xf]
        %v10543 = vld [vmem:[%s13 + $0x50] sm:$0xf]
        %v10544 = vld [vmem:[%s13 + $0x54] sm:$0xf]
        %v10545 = vld [vmem:[%s13 + $0x58] sm:$0xf]
        %v10546 = vld [vmem:[%s13 + $0x5c] sm:$0xf]
        %v10547 = vld [vmem:[%s13 + $0x60] sm:$0xf]
        %v10548 = vld [vmem:[%s13 + $0x64] sm:$0xf]
        %v10549 = vld [vmem:[%s13 + $0x68] sm:$0xf]
        %v10550 = vld [vmem:[%s13 + $0x6c] sm:$0xf]
        %v10551 = vld [vmem:[%s13 + $0x70] sm:$0xf]
        %v10552 = vld [vmem:[%s13 + $0x74] sm:$0xf]
        %v10553 = vld [vmem:[%s13 + $0x78] sm:$0xf]
        %v10554 = vld [vmem:[%s13 + $0x7c] sm:$0xf]
        %v10555 = vld [vmem:[%s13 + $0x80] sm:$0xf]
        %v10556 = vld [vmem:[%s13 + $0x84] sm:$0xf]
        %v10557 = vld [vmem:[%s13 + $0x88] sm:$0xf]
        %v10558 = vld [vmem:[%s13 + $0x8c] sm:$0xf]
        %v10559 = vld [vmem:[%s14] sm:$0x1]
        %v10561 = vlaneseq
        %v10562 = vshrl.u32 %v10561, 7
        %v10563 = vsub.s32 0, %v10562
        %v10564 = vrot.slane %v10559, %v10563
        %v10602 = vunpack.c.l.b16 %v10523
        %v10603 = vunpack.c.l.b16 %v10524
        %v10604 = vunpack.c.l.b16 %v10525
        %v10605 = vunpack.c.l.b16 %v10526
        %v10606 = vunpack.c.l.b16 %v10527
        %v10607 = vunpack.c.l.b16 %v10528
        %v10608 = vunpack.c.l.b16 %v10529
        %v10609 = vunpack.c.l.b16 %v10530
        %v10610 = vunpack.c.l.b16 %v10531
        %v10611 = vunpack.c.l.b16 %v10532
        %v10612 = vunpack.c.l.b16 %v10533
        %v10613 = vunpack.c.l.b16 %v10534
        %v10614 = vunpack.c.l.b16 %v10535
        %v10615 = vunpack.c.l.b16 %v10536
        %v10616 = vunpack.c.l.b16 %v10537
        %v10617 = vunpack.c.l.b16 %v10538
        %v10618 = vunpack.c.l.b16 %v10539
        %v10619 = vunpack.c.l.b16 %v10540
        %v10620 = vunpack.c.l.b16 %v10541
        %v10621 = vunpack.c.l.b16 %v10542
        %v10622 = vunpack.c.l.b16 %v10543
        %v10623 = vunpack.c.l.b16 %v10544
        %v10624 = vunpack.c.l.b16 %v10545
        %v10625 = vunpack.c.l.b16 %v10546
        %v10626 = vunpack.c.l.b16 %v10547
        %v10627 = vunpack.c.l.b16 %v10548
        %v10628 = vunpack.c.l.b16 %v10549
        %v10629 = vunpack.c.l.b16 %v10550
        %v10630 = vunpack.c.l.b16 %v10551
        %v10631 = vunpack.c.l.b16 %v10552
        %v10632 = vunpack.c.l.b16 %v10553
        %v10633 = vunpack.c.l.b16 %v10554
        %v10634 = vunpack.c.l.b16 %v10555
        %v10635 = vunpack.c.l.b16 %v10556
        %v10636 = vunpack.c.l.b16 %v10557
        %v10637 = vunpack.c.l.b16 %v10558
        %v10638 = vpack.c.b16 %v10603, %v10602
        %v10639 = vpack.c.b16 %v10605, %v10604
        %v10640 = vpack.c.b16 %v10607, %v10606
        %v10641 = vpack.c.b16 %v10609, %v10608
        %v10642 = vpack.c.b16 %v10611, %v10610
        %v10643 = vpack.c.b16 %v10613, %v10612
        %v10644 = vpack.c.b16 %v10615, %v10614
        %v10645 = vpack.c.b16 %v10617, %v10616
        %v10646 = vpack.c.b16 %v10619, %v10618
        %v10647 = vpack.c.b16 %v10621, %v10620
        %v10648 = vpack.c.b16 %v10623, %v10622
        %v10649 = vpack.c.b16 %v10625, %v10624
        %v10650 = vpack.c.b16 %v10627, %v10626
        %v10651 = vpack.c.b16 %v10629, %v10628
        %v10652 = vpack.c.b16 %v10631, %v10630
        %v10653 = vpack.c.b16 %v10633, %v10632
        %v10654 = vpack.c.b16 %v10635, %v10634
        %v10655 = vpack.c.b16 %v10637, %v10636
        %v10675 = vsel %vm3101, %v10519, 0
        %v10678 = vsel %vm3101, %v10522, 0
        %10680 = vmatprep.subr.bf16.mxu0 0
        %10681 = vmatpush1.bf16.msra.mxu0 %v10638
        %10682 = vmatprep.subr.bf16.mxu0 0
        %10683 = vmatpush1.bf16.msra.mxu0 %v10639
        %10684 = vmatprep.subr.bf16.mxu0 0
        %10685 = vmatpush1.bf16.msra.mxu0 %v10640
        %10686 = vmatprep.subr.bf16.mxu0 0
        %10687 = vmatpush1.bf16.msra.mxu0 %v10641
        %10688 = vmatprep.subr.bf16.mxu0 0
        %10689 = vmatpush1.bf16.msra.mxu0 %v10642
        %10690 = vmatprep.subr.bf16.mxu0 0
        %10691 = vmatpush1.bf16.msra.mxu0 %v10643
        %10692 = vmatprep.subr.bf16.mxu0 0
        %10693 = vmatpush1.bf16.msra.mxu0 %v10644
        %10694 = vmatprep.subr.bf16.mxu0 0
        %10695 = vmatpush1.bf16.msra.mxu0 %v10645
        %10696 = vmatprep.subr.bf16.mxu0 0
        %10697 = vmatpush1.bf16.msra.mxu0 %v10646
        %10698 = vmatprep.subr.bf16.mxu0 0
        %10699 = vmatpush1.bf16.msra.mxu0 %v10647
        %10700 = vmatprep.subr.bf16.mxu0 0
        %10701 = vmatpush1.bf16.msra.mxu0 %v10648
        %10702 = vmatprep.subr.bf16.mxu0 0
        %10703 = vmatpush1.bf16.msra.mxu0 %v10649
        %10704 = vmatprep.subr.bf16.mxu0 0
        %10705 = vmatpush1.bf16.msra.mxu0 %v10650
        %10706 = vmatprep.subr.bf16.mxu0 0
        %10707 = vmatpush1.bf16.msra.mxu0 %v10651
        %10708 = vmatprep.subr.bf16.mxu0 0
        %10709 = vmatpush1.bf16.msra.mxu0 %v10652
        %10710 = vmatprep.subr.bf16.mxu0 0
        %10711 = vmatpush1.bf16.msra.mxu0 %v10653
        %10712 = vmatprep.mubr.bf16.mxu0 %v10518
        %10713 = vmatmul.mubr.bf16.gmra.mrb[0].mxu0 %v10517
        %v10714 = vpop.f32.mrb[0].mxu0
        %v10715 = vadd.f32 %v10564, %v10714
        %v10716 = vpop.f32.mrb[0].mxu0
        %v10717 = vpop.f32.mrb[0].mxu0
        %v10718 = vadd.f32 %v10564, %v10717
        %v10719 = vpop.f32.mrb[0].mxu0
        %10720 = vmatprep.mubr.bf16.mxu0 %v10521
        %10721 = vmatmul.mubr.bf16.gmra.mrb[0].mxu0 %v10520
        %v10722 = vpop.f32.mrb[0].mxu0
        %v10723 = vadd.f32 %v10564, %v10722
        %v10724 = vpop.f32.mrb[0].mxu0
        %v10725 = vpop.f32.mrb[0].mxu0
        %v10726 = vpop.f32.mrb[0].mxu0
        %10727 = vdwg.mxu0
        %10728 = vmatprep.subr.bf16.mxu0 0
        %10729 = vmatpush1.bf16.msra.mxu0 %v10654
        %10730 = vmatprep.subr.bf16.mxu0 0
        %10731 = vmatpush1.bf16.msra.mxu0 %v10655
        %10732 = vmatprep.subr.bf16.mxu0 0
        %10733 = vmatpush1.bf16.msra.mxu0 0
        %10734 = vmatprep.subr.bf16.mxu0 0
        %10735 = vmatpush1.bf16.msra.mxu0 0
        %10736 = vmatprep.subr.bf16.mxu0 0
        %10737 = vmatpush1.bf16.msra.mxu0 0
        %10738 = vmatprep.subr.bf16.mxu0 0
        %10739 = vmatpush1.bf16.msra.mxu0 0
        %10740 = vmatprep.subr.bf16.mxu0 0
        %10741 = vmatpush1.bf16.msra.mxu0 0
        %10742 = vmatprep.subr.bf16.mxu0 0
        %10743 = vmatpush1.bf16.msra.mxu0 0
        %10744 = vmatprep.subr.bf16.mxu0 0
        %10745 = vmatpush1.bf16.msra.mxu0 0
        %10746 = vmatprep.subr.bf16.mxu0 0
        %10747 = vmatpush1.bf16.msra.mxu0 0
        %10748 = vmatprep.subr.bf16.mxu0 0
        %10749 = vmatpush1.bf16.msra.mxu0 0
        %10750 = vmatprep.subr.bf16.mxu0 0
        %10751 = vmatpush1.bf16.msra.mxu0 0
        %10752 = vmatprep.subr.bf16.mxu0 0
        %10753 = vmatpush1.bf16.msra.mxu0 0
        %10754 = vmatprep.subr.bf16.mxu0 0
        %10755 = vmatpush1.bf16.msra.mxu0 0
        %10756 = vmatprep.subr.bf16.mxu0 0
        %10757 = vmatpush1.bf16.msra.mxu0 0
        %10758 = vmatprep.subr.bf16.mxu0 0
        %10759 = vmatpush1.bf16.msra.mxu0 0
        %10760 = vmatprep.mubr.bf16.mxu0 0
        %10761 = vmatmul.mubr.bf16.gmra.mrb[0].mxu0 %v10675
        %v10762 = vpop.f32.mrb[0].mxu0
        %v10763 = vadd.f32 %v10715, %v10762
        %v10764 = vpop.f32.mrb[0].mxu0
        %v10765 = vpop.f32.mrb[0].mxu0
        %v10766 = vadd.f32 %v10718, %v10765
        %v10767 = vpop.f32.mrb[0].mxu0
        %10768 = vmatprep.mubr.bf16.mxu0 0
        %10769 = vmatmul.mubr.bf16.gmra.mrb[0].mxu0 %v10678
        %v10770 = vpop.f32.mrb[0].mxu0
        %v10771 = vadd.f32 %v10723, %v10770
        %v10772 = vpop.f32.mrb[0].mxu0
        %v10773 = vpop.f32.mrb[0].mxu0
        %v10774 = vpop.f32.mrb[0].mxu0
        %10775 = vdwg.mxu0
        %v10776 = vmax.f32 %v10763, 0.0
        %v10777 = vmax.f32 %v10766, 0.0
        %v10778 = vmax.f32 %v10771, 0.0
        %v10779 = vld [vmem:[%s23] sm:$0xff]
        %v10780 = vld [vmem:[%s23 + $0x8] sm:$0xff]
        %v10781 = vld [vmem:[%s23 + $0x10] sm:$0xff]
        %10783 = vset.pattern.permute.xlu0 0
        %10784 = vperm.xlu0 %10783, %v10779
        %v10785 = vpop.permute.xlu0 %10784
        %10788 = vset.pattern.permute.xlu0 0
        %10789 = vperm.xlu0 %10788, %v10780
        %v10790 = vpop.permute.xlu0 %10789
        %10793 = vset.pattern.permute.xlu0 0
        %10794 = vperm.xlu0 %10793, %v10781
        %v10795 = vpop.permute.xlu0 %10794
        %v10797 = vmul.f32 %v10776, %v10785
        %v10798 = vmul.f32 %v10777, %v10790
        %v10799 = vmul.f32 %v10778, %v10795
        %v10800 = vpack.c.bf16 %v10798, %v10797
        %v10801 = vpack.c.bf16 %v10799, %v10799
        %v10804 = vunpack.c.l.b16 %v10800
        %v10805 = vunpack.c.h.b16 %v10800
        %v10806 = vunpack.c.l.b16 %v10801
        %v10807 = vpack.c.b16 %v10804, %v10804
        %v10808 = vpack.c.b16 %v10805, %v10805
        %v10809 = vpack.c.b16 %v10806, %v10806
        %vm10810 = vsmask.f32 3328
        %vm10811 = vsmask.f32 7440
        %vm10812 = vmor %vm10810, %vm10811
        %v10814 = vshll.u32 %v10807, 16
        %v10816 = vrot.slane %v10814, 5
        %v10817 = vshrl.u32 %v10807, 16
        %v10819 = vrot.slane %v10817, 4
        %v10820 = vor.u32 %v10819, %v10816
        %v10821 = vrot.slane %v10820, 4
        %v10823 = vshll.u32 %v10808, 16
        %v10825 = vrot.slane %v10823, 5
        %v10826 = vsel %vm10812, %v10821, %v10825
        %v10827 = vshrl.u32 %v10808, 16
        %v10829 = vrot.slane %v10827, 4
        %v10830 = vor.u32 %v10829, %v10825
        %v10831 = vrot.slane %v10830, 4
        %v10833 = vshll.u32 %v10809, 16
        %v10835 = vrot.slane %v10833, 5
        %v10836 = vsel %vm10812, %v10831, %v10835
        %v10837 = vshrl.u32 %v10809, 16
        %v10839 = vrot.slane %v10837, 4
        %v10840 = vor.u32 %v10839, %v10835
        %v10841 = vrot.slane %v10840, 4
        %vm10846 = vcmask 519171
        %vm10847 = vsmask.f32 7950
        %vm10848 = vmand %vm10846, %vm10847
        %v10849 = vld [vmem:[#allocation7] sm:$0x8]
        %v10850 = vsel %vm10848, %v10816, %v10849
        %10851 = vst [vmem:[#allocation7] sm:$0x8] %v10850
        %10852 = vst.msk [vmem:[#allocation7 + $0x4] sm:$0xf] %vm941, %v10826
        %10853 = vst.msk [vmem:[#allocation7 + $0x8] sm:$0xf] %vm941, %v10836
        %vm10854 = vcmask 519168
        %vm10855 = vmand %vm10854, %vm10810
        %v10856 = vld [vmem:[#allocation7 + $0xc] sm:$0xf]
        %v10857 = vsel %vm10855, %v10841, %v10856
        %10858 = vst [vmem:[#allocation7 + $0xc] sm:$0xf] %v10857
        %v10859 = vld [vmem:[#allocation7] sm:$0xf]
        %v10860 = vld [vmem:[#allocation7 + $0x4] sm:$0xf]
        %v10861 = vld [vmem:[#allocation7 + $0x8] sm:$0xf]
        %v10862 = vld [vmem:[#allocation7 + $0xc] sm:$0x1]
        %v10863 = vld [vmem:[#allocation7] sm:$0xe]
        %v10864 = vld [vmem:[#allocation7] sm:$0x8]
        %v10865 = vld [vmem:[#allocation7 + $0xc] sm:$0x7]
        %v10866 = vld [vmem:[#allocation7 + $0xc] sm:$0xf]
        %v10867 = vld [vmem:[#allocation7 + $0x4] sm:$0xc]
        %v10868 = vld [vmem:[#allocation7 + $0x10] sm:$0x3]
        %v10869 = vld [vmem:[#allocation7 + $0x10] sm:$0x7]
        %v10870 = vld [vmem:[#allocation7 + $0x4] sm:$0x8]
        %v10874 = vunpack.c.l.b16 %v10859
        %v10875 = vunpack.c.l.b16 %v10860
        %v10876 = vunpack.c.l.b16 %v10861
        %v10877 = vpack.c.b16 %v10875, %v10874
        %v10878 = vpack.c.b16 %v10876, %v10876
        %v10880 = vunpack.c.l.b16 %v10862
        %v10881 = vpack.c.b16 %v10880, %v10876
        %v10883 = vshrl.u32 %v10877, 16
        %v10885 = vshll.u32 %v10877, 16
        %v10887 = vrot.slane %v10885, 1
        %v10888 = vor.u32 %v10883, %v10887
        %v10890 = vshll.u32 %v10881, 16
        %v10892 = vrot.slane %v10890, 1
        %v10893 = vsel %vm2318, %v10888, %v10892
        %v10894 = vshrl.u32 %v10881, 16
        %v10896 = vor.u32 %v10894, %v10892
        %10897 = vrot.lane.b32.xlu0 %v10893, 64
        %v10898 = vpop.permute.xlu0 %10897
        %10899 = vrot.lane.b32.xlu0 %v10896, 64
        %v10900 = vpop.permute.xlu0 %10899
        %v10902 = vunpack.c.l.b16 %v10863
        %v10903 = vpack.c.b16 %v10875, %v10902
        %v10904 = vrot.slane %v10903, 1
        %v10905 = vrot.slane %v10881, 1
        %v10906 = vsel %vm2506, %v10904, %v10905
        %v10909 = vunpack.c.l.b16 %v10864
        %v10910 = vunpack.c.l.b16 %v10865
        %v10911 = vpack.c.b16 %v10875, %v10909
        %v10912 = vpack.c.b16 %v10910, %v10876
        %v10913 = vrot.slane %v10911, 3
        %v10914 = vrot.slane %v10912, 3
        %v10915 = vsel %vm3026, %v10913, %v10914
        %10916 = vrot.lane.b32.xlu0 %v10915, 64
        %v10917 = vpop.permute.xlu0 %10916
        %10918 = vrot.lane.b32.xlu0 %v10914, 64
        %v10919 = vpop.permute.xlu0 %10918
        %v10921 = vunpack.c.l.b16 %v10866
        %v10922 = vpack.c.b16 %v10921, %v10876
        %vm10923 = vsmask.f32 4352
        %v10925 = vshrl.u32 %v10911, 16
        %v10927 = vrot.slane %v10925, 3
        %v10928 = vshll.u32 %v10911, 16
        %v10930 = vrot.slane %v10928, 4
        %v10931 = vor.u32 %v10927, %v10930
        %v10933 = vshrl.u32 %v10922, 16
        %v10935 = vrot.slane %v10933, 3
        %v10936 = vshll.u32 %v10922, 16
        %v10938 = vrot.slane %v10936, 4
        %v10939 = vor.u32 %v10935, %v10938
        %v10940 = vsel %vm10923, %v10931, %v10939
        %v10941 = vpack.c.b16 %v10876, %v10875
        %v10942 = vpack.c.b16 %v10921, %v10921
        %10943 = vrot.lane.b32.xlu0 %v10941, 64
        %v10944 = vpop.permute.xlu0 %10943
        %10945 = vrot.lane.b32.xlu0 %v10942, 64
        %v10946 = vpop.permute.xlu0 %10945
        %v10949 = vunpack.c.l.b16 %v10867
        %v10950 = vunpack.c.l.b16 %v10868
        %v10951 = vpack.c.b16 %v10876, %v10949
        %v10952 = vpack.c.b16 %v10950, %v10921
        %v10953 = vrot.slane %v10951, 2
        %v10954 = vrot.slane %v10952, 2
        %v10955 = vsel %vm2766, %v10953, %v10954
        %v10957 = vunpack.c.l.b16 %v10869
        %v10958 = vpack.c.b16 %v10957, %v10921
        %v10960 = vshrl.u32 %v10951, 16
        %v10962 = vrot.slane %v10960, 2
        %v10963 = vshll.u32 %v10951, 16
        %v10965 = vrot.slane %v10963, 3
        %v10966 = vor.u32 %v10962, %v10965
        %v10968 = vshrl.u32 %v10958, 16
        %v10970 = vrot.slane %v10968, 2
        %v10971 = vshll.u32 %v10958, 16
        %v10973 = vrot.slane %v10971, 3
        %v10974 = vor.u32 %v10970, %v10973
        %v10975 = vsel %vm2896, %v10966, %v10974
        %10976 = vrot.lane.b32.xlu0 %v10975, 64
        %v10977 = vpop.permute.xlu0 %10976
        %10978 = vrot.lane.b32.xlu0 %v10974, 64
        %v10979 = vpop.permute.xlu0 %10978
        %v10981 = vunpack.c.l.b16 %v10870
        %v10982 = vpack.c.b16 %v10876, %v10981
        %v10983 = vrot.slane %v10982, 3
        %v10984 = vrot.slane %v10958, 3
        %v10985 = vsel %vm3026, %v10983, %v10984
        %v10987 = vsel %vm3175, %v10877, %v10898
        %v10991 = vsel %vm3175, %v10878, %v10900
        %v10995 = vsel %vm3175, %v10906, %v10917
        %v10999 = vsel %vm3175, %v10905, %v10919
        %v11003 = vsel %vm3175, %v10940, %v10944
        %v11007 = vsel %vm3175, %v10939, %v10946
        %v11011 = vsel %vm3175, %v10955, %v10977
        %v11015 = vsel %vm3175, %v10954, %v10979
        %v11017 = vld [vmem:[%s15] sm:$0xf]
        %v11018 = vld [vmem:[%s15 + $0x4] sm:$0xf]
        %v11019 = vld [vmem:[%s15 + $0x8] sm:$0xf]
        %v11020 = vld [vmem:[%s15 + $0xc] sm:$0xf]
        %v11021 = vld [vmem:[%s15 + $0x10] sm:$0xf]
        %v11022 = vld [vmem:[%s15 + $0x14] sm:$0xf]
        %v11023 = vld [vmem:[%s15 + $0x18] sm:$0xf]
        %v11024 = vld [vmem:[%s15 + $0x1c] sm:$0xf]
        %v11025 = vld [vmem:[%s15 + $0x20] sm:$0xf]
        %v11026 = vld [vmem:[%s15 + $0x24] sm:$0xf]
        %v11027 = vld [vmem:[%s15 + $0x28] sm:$0xf]
        %v11028 = vld [vmem:[%s15 + $0x2c] sm:$0xf]
        %v11029 = vld [vmem:[%s15 + $0x30] sm:$0xf]
        %v11030 = vld [vmem:[%s15 + $0x34] sm:$0xf]
        %v11031 = vld [vmem:[%s15 + $0x38] sm:$0xf]
        %v11032 = vld [vmem:[%s15 + $0x3c] sm:$0xf]
        %v11033 = vld [vmem:[%s15 + $0x40] sm:$0xf]
        %v11034 = vld [vmem:[%s15 + $0x44] sm:$0xf]
        %v11035 = vld [vmem:[%s15 + $0x48] sm:$0xf]
        %v11036 = vld [vmem:[%s15 + $0x4c] sm:$0xf]
        %v11037 = vld [vmem:[%s15 + $0x50] sm:$0xf]
        %v11038 = vld [vmem:[%s15 + $0x54] sm:$0xf]
        %v11039 = vld [vmem:[%s15 + $0x58] sm:$0xf]
        %v11040 = vld [vmem:[%s15 + $0x5c] sm:$0xf]
        %v11041 = vld [vmem:[%s15 + $0x60] sm:$0xf]
        %v11042 = vld [vmem:[%s15 + $0x64] sm:$0xf]
        %v11043 = vld [vmem:[%s15 + $0x68] sm:$0xf]
        %v11044 = vld [vmem:[%s15 + $0x6c] sm:$0xf]
        %v11045 = vld [vmem:[%s15 + $0x70] sm:$0xf]
        %v11046 = vld [vmem:[%s15 + $0x74] sm:$0xf]
        %v11047 = vld [vmem:[%s15 + $0x78] sm:$0xf]
        %v11048 = vld [vmem:[%s15 + $0x7c] sm:$0xf]
        %v11049 = vld [vmem:[%s15 + $0x80] sm:$0xf]
        %v11050 = vld [vmem:[%s15 + $0x84] sm:$0xf]
        %v11051 = vld [vmem:[%s15 + $0x88] sm:$0xf]
        %v11052 = vld [vmem:[%s15 + $0x8c] sm:$0xf]
        %v11053 = vld [vmem:[%s15 + $0x90] sm:$0xf]
        %v11054 = vld [vmem:[%s15 + $0x94] sm:$0xf]
        %v11055 = vld [vmem:[%s15 + $0x98] sm:$0xf]
        %v11056 = vld [vmem:[%s15 + $0x9c] sm:$0xf]
        %v11057 = vld [vmem:[%s15 + $0xa0] sm:$0xf]
        %v11058 = vld [vmem:[%s15 + $0xa4] sm:$0xf]
        %v11059 = vld [vmem:[%s15 + $0xa8] sm:$0xf]
        %v11060 = vld [vmem:[%s15 + $0xac] sm:$0xf]
        %v11061 = vld [vmem:[%s15 + $0xb0] sm:$0xf]
        %v11062 = vld [vmem:[%s15 + $0xb4] sm:$0xf]
        %v11063 = vld [vmem:[%s15 + $0xb8] sm:$0xf]
        %v11064 = vld [vmem:[%s15 + $0xbc] sm:$0xf]
        %v11065 = vld [vmem:[%s15 + $0xc0] sm:$0xf]
        %v11066 = vld [vmem:[%s15 + $0xc4] sm:$0xf]
        %v11067 = vld [vmem:[%s15 + $0xc8] sm:$0xf]
        %v11068 = vld [vmem:[%s15 + $0xcc] sm:$0xf]
        %v11069 = vld [vmem:[%s15 + $0xd0] sm:$0xf]
        %v11070 = vld [vmem:[%s15 + $0xd4] sm:$0xf]
        %v11071 = vld [vmem:[%s15 + $0xd8] sm:$0xf]
        %v11072 = vld [vmem:[%s15 + $0xdc] sm:$0xf]
        %v11073 = vld [vmem:[%s15 + $0xe0] sm:$0xf]
        %v11074 = vld [vmem:[%s15 + $0xe4] sm:$0xf]
        %v11075 = vld [vmem:[%s15 + $0xe8] sm:$0xf]
        %v11076 = vld [vmem:[%s15 + $0xec] sm:$0xf]
        %v11077 = vld [vmem:[%s15 + $0xf0] sm:$0xf]
        %v11078 = vld [vmem:[%s15 + $0xf4] sm:$0xf]
        %v11079 = vld [vmem:[%s15 + $0xf8] sm:$0xf]
        %v11080 = vld [vmem:[%s15 + $0xfc] sm:$0xf]
        %v11081 = vld [vmem:[%s15 + $0x100] sm:$0xf]
        %v11082 = vld [vmem:[%s15 + $0x104] sm:$0xf]
        %v11083 = vld [vmem:[%s15 + $0x108] sm:$0xf]
        %v11084 = vld [vmem:[%s15 + $0x10c] sm:$0xf]
        %v11085 = vld [vmem:[%s15 + $0x110] sm:$0xf]
        %v11086 = vld [vmem:[%s15 + $0x114] sm:$0xf]
        %v11087 = vld [vmem:[%s15 + $0x118] sm:$0xf]
        %v11088 = vld [vmem:[%s15 + $0x11c] sm:$0xf]
        %v11089 = vld [vmem:[%s16] sm:$0x1]
        %v11091 = vlaneseq
        %v11092 = vshrl.u32 %v11091, 7
        %v11093 = vsub.s32 0, %v11092
        %v11094 = vrot.slane %v11089, %v11093
        %v11168 = vunpack.c.l.b16 %v11017
        %v11169 = vunpack.c.l.b16 %v11018
        %v11170 = vunpack.c.l.b16 %v11019
        %v11171 = vunpack.c.l.b16 %v11020
        %v11172 = vunpack.c.l.b16 %v11021
        %v11173 = vunpack.c.l.b16 %v11022
        %v11174 = vunpack.c.l.b16 %v11023
        %v11175 = vunpack.c.l.b16 %v11024
        %v11176 = vunpack.c.l.b16 %v11025
        %v11177 = vunpack.c.l.b16 %v11026
        %v11178 = vunpack.c.l.b16 %v11027
        %v11179 = vunpack.c.l.b16 %v11028
        %v11180 = vunpack.c.l.b16 %v11029
        %v11181 = vunpack.c.l.b16 %v11030
        %v11182 = vunpack.c.l.b16 %v11031
        %v11183 = vunpack.c.l.b16 %v11032
        %v11184 = vunpack.c.l.b16 %v11033
        %v11185 = vunpack.c.l.b16 %v11034
        %v11186 = vunpack.c.l.b16 %v11035
        %v11187 = vunpack.c.l.b16 %v11036
        %v11188 = vunpack.c.l.b16 %v11037
        %v11189 = vunpack.c.l.b16 %v11038
        %v11190 = vunpack.c.l.b16 %v11039
        %v11191 = vunpack.c.l.b16 %v11040
        %v11192 = vunpack.c.l.b16 %v11041
        %v11193 = vunpack.c.l.b16 %v11042
        %v11194 = vunpack.c.l.b16 %v11043
        %v11195 = vunpack.c.l.b16 %v11044
        %v11196 = vunpack.c.l.b16 %v11045
        %v11197 = vunpack.c.l.b16 %v11046
        %v11198 = vunpack.c.l.b16 %v11047
        %v11199 = vunpack.c.l.b16 %v11048
        %v11200 = vunpack.c.l.b16 %v11049
        %v11201 = vunpack.c.l.b16 %v11050
        %v11202 = vunpack.c.l.b16 %v11051
        %v11203 = vunpack.c.l.b16 %v11052
        %v11204 = vunpack.c.l.b16 %v11053
        %v11205 = vunpack.c.l.b16 %v11054
        %v11206 = vunpack.c.l.b16 %v11055
        %v11207 = vunpack.c.l.b16 %v11056
        %v11208 = vunpack.c.l.b16 %v11057
        %v11209 = vunpack.c.l.b16 %v11058
        %v11210 = vunpack.c.l.b16 %v11059
        %v11211 = vunpack.c.l.b16 %v11060
        %v11212 = vunpack.c.l.b16 %v11061
        %v11213 = vunpack.c.l.b16 %v11062
        %v11214 = vunpack.c.l.b16 %v11063
        %v11215 = vunpack.c.l.b16 %v11064
        %v11216 = vunpack.c.l.b16 %v11065
        %v11217 = vunpack.c.l.b16 %v11066
        %v11218 = vunpack.c.l.b16 %v11067
        %v11219 = vunpack.c.l.b16 %v11068
        %v11220 = vunpack.c.l.b16 %v11069
        %v11221 = vunpack.c.l.b16 %v11070
        %v11222 = vunpack.c.l.b16 %v11071
        %v11223 = vunpack.c.l.b16 %v11072
        %v11224 = vunpack.c.l.b16 %v11073
        %v11225 = vunpack.c.l.b16 %v11074
        %v11226 = vunpack.c.l.b16 %v11075
        %v11227 = vunpack.c.l.b16 %v11076
        %v11228 = vunpack.c.l.b16 %v11077
        %v11229 = vunpack.c.l.b16 %v11078
        %v11230 = vunpack.c.l.b16 %v11079
        %v11231 = vunpack.c.l.b16 %v11080
        %v11232 = vunpack.c.l.b16 %v11081
        %v11233 = vunpack.c.l.b16 %v11082
        %v11234 = vunpack.c.l.b16 %v11083
        %v11235 = vunpack.c.l.b16 %v11084
        %v11236 = vunpack.c.l.b16 %v11085
        %v11237 = vunpack.c.l.b16 %v11086
        %v11238 = vunpack.c.l.b16 %v11087
        %v11239 = vunpack.c.l.b16 %v11088
        %v11240 = vpack.c.b16 %v11169, %v11168
        %v11241 = vpack.c.b16 %v11171, %v11170
        %v11242 = vpack.c.b16 %v11173, %v11172
        %v11243 = vpack.c.b16 %v11175, %v11174
        %v11244 = vpack.c.b16 %v11177, %v11176
        %v11245 = vpack.c.b16 %v11179, %v11178
        %v11246 = vpack.c.b16 %v11181, %v11180
        %v11247 = vpack.c.b16 %v11183, %v11182
        %v11248 = vpack.c.b16 %v11185, %v11184
        %v11249 = vpack.c.b16 %v11187, %v11186
        %v11250 = vpack.c.b16 %v11189, %v11188
        %v11251 = vpack.c.b16 %v11191, %v11190
        %v11252 = vpack.c.b16 %v11193, %v11192
        %v11253 = vpack.c.b16 %v11195, %v11194
        %v11254 = vpack.c.b16 %v11197, %v11196
        %v11255 = vpack.c.b16 %v11199, %v11198
        %v11256 = vpack.c.b16 %v11201, %v11200
        %v11257 = vpack.c.b16 %v11203, %v11202
        %v11258 = vpack.c.b16 %v11205, %v11204
        %v11259 = vpack.c.b16 %v11207, %v11206
        %v11260 = vpack.c.b16 %v11209, %v11208
        %v11261 = vpack.c.b16 %v11211, %v11210
        %v11262 = vpack.c.b16 %v11213, %v11212
        %v11263 = vpack.c.b16 %v11215, %v11214
        %v11264 = vpack.c.b16 %v11217, %v11216
        %v11265 = vpack.c.b16 %v11219, %v11218
        %v11266 = vpack.c.b16 %v11221, %v11220
        %v11267 = vpack.c.b16 %v11223, %v11222
        %v11268 = vpack.c.b16 %v11225, %v11224
        %v11269 = vpack.c.b16 %v11227, %v11226
        %v11270 = vpack.c.b16 %v11229, %v11228
        %v11271 = vpack.c.b16 %v11231, %v11230
        %v11272 = vpack.c.b16 %v11233, %v11232
        %v11273 = vpack.c.b16 %v11235, %v11234
        %v11274 = vpack.c.b16 %v11237, %v11236
        %v11275 = vpack.c.b16 %v11239, %v11238
        %v11313 = vsel %vm3175, %v10985, 0
        %v11316 = vsel %vm3175, %v10984, 0
        %11318 = vmatprep.subr.bf16.mxu0 0
        %11319 = vmatpush1.bf16.msra.mxu0 %v11240
        %11320 = vmatprep.subr.bf16.mxu0 0
        %11321 = vmatpush1.bf16.msra.mxu0 %v11241
        %11322 = vmatprep.subr.bf16.mxu0 0
        %11323 = vmatpush1.bf16.msra.mxu0 %v11242
        %11324 = vmatprep.subr.bf16.mxu0 0
        %11325 = vmatpush1.bf16.msra.mxu0 %v11243
        %11326 = vmatprep.subr.bf16.mxu0 0
        %11327 = vmatpush1.bf16.msra.mxu0 %v11244
        %11328 = vmatprep.subr.bf16.mxu0 0
        %11329 = vmatpush1.bf16.msra.mxu0 %v11245
        %11330 = vmatprep.subr.bf16.mxu0 0
        %11331 = vmatpush1.bf16.msra.mxu0 %v11246
        %11332 = vmatprep.subr.bf16.mxu0 0
        %11333 = vmatpush1.bf16.msra.mxu0 %v11247
        %11334 = vmatprep.subr.bf16.mxu0 0
        %11335 = vmatpush1.bf16.msra.mxu0 %v11248
        %11336 = vmatprep.subr.bf16.mxu0 0
        %11337 = vmatpush1.bf16.msra.mxu0 %v11249
        %11338 = vmatprep.subr.bf16.mxu0 0
        %11339 = vmatpush1.bf16.msra.mxu0 %v11250
        %11340 = vmatprep.subr.bf16.mxu0 0
        %11341 = vmatpush1.bf16.msra.mxu0 %v11251
        %11342 = vmatprep.subr.bf16.mxu0 0
        %11343 = vmatpush1.bf16.msra.mxu0 %v11252
        %11344 = vmatprep.subr.bf16.mxu0 0
        %11345 = vmatpush1.bf16.msra.mxu0 %v11253
        %11346 = vmatprep.subr.bf16.mxu0 0
        %11347 = vmatpush1.bf16.msra.mxu0 %v11254
        %11348 = vmatprep.subr.bf16.mxu0 0
        %11349 = vmatpush1.bf16.msra.mxu0 %v11255
        %11350 = vmatprep.mubr.bf16.mxu0 %v10995
        %11351 = vmatmul.mubr.bf16.gmra.mrb[0].mxu0 %v10987
        %v11352 = vpop.f32.mrb[0].mxu0
        %v11353 = vadd.f32 %v11094, %v11352
        %v11354 = vpop.f32.mrb[0].mxu0
        %v11355 = vpop.f32.mrb[0].mxu0
        %v11356 = vadd.f32 %v11094, %v11355
        %v11357 = vpop.f32.mrb[0].mxu0
        %11358 = vmatprep.mubr.bf16.mxu0 %v10999
        %11359 = vmatmul.mubr.bf16.gmra.mrb[0].mxu0 %v10991
        %v11360 = vpop.f32.mrb[0].mxu0
        %v11361 = vadd.f32 %v11094, %v11360
        %v11362 = vpop.f32.mrb[0].mxu0
        %v11363 = vpop.f32.mrb[0].mxu0
        %v11364 = vpop.f32.mrb[0].mxu0
        %11365 = vdwg.mxu0
        %11366 = vmatprep.subr.bf16.mxu0 0
        %11367 = vmatpush1.bf16.msra.mxu0 %v11256
        %11368 = vmatprep.subr.bf16.mxu0 0
        %11369 = vmatpush1.bf16.msra.mxu0 %v11257
        %11370 = vmatprep.subr.bf16.mxu0 0
        %11371 = vmatpush1.bf16.msra.mxu0 %v11258
        %11372 = vmatprep.subr.bf16.mxu0 0
        %11373 = vmatpush1.bf16.msra.mxu0 %v11259
        %11374 = vmatprep.subr.bf16.mxu0 0
        %11375 = vmatpush1.bf16.msra.mxu0 %v11260
        %11376 = vmatprep.subr.bf16.mxu0 0
        %11377 = vmatpush1.bf16.msra.mxu0 %v11261
        %11378 = vmatprep.subr.bf16.mxu0 0
        %11379 = vmatpush1.bf16.msra.mxu0 %v11262
        %11380 = vmatprep.subr.bf16.mxu0 0
        %11381 = vmatpush1.bf16.msra.mxu0 %v11263
        %11382 = vmatprep.subr.bf16.mxu0 0
        %11383 = vmatpush1.bf16.msra.mxu0 %v11264
        %11384 = vmatprep.subr.bf16.mxu0 0
        %11385 = vmatpush1.bf16.msra.mxu0 %v11265
        %11386 = vmatprep.subr.bf16.mxu0 0
        %11387 = vmatpush1.bf16.msra.mxu0 %v11266
        %11388 = vmatprep.subr.bf16.mxu0 0
        %11389 = vmatpush1.bf16.msra.mxu0 %v11267
        %11390 = vmatprep.subr.bf16.mxu0 0
        %11391 = vmatpush1.bf16.msra.mxu0 %v11268
        %11392 = vmatprep.subr.bf16.mxu0 0
        %11393 = vmatpush1.bf16.msra.mxu0 %v11269
        %11394 = vmatprep.subr.bf16.mxu0 0
        %11395 = vmatpush1.bf16.msra.mxu0 %v11270
        %11396 = vmatprep.subr.bf16.mxu0 0
        %11397 = vmatpush1.bf16.msra.mxu0 %v11271
        %11398 = vmatprep.mubr.bf16.mxu0 %v11011
        %11399 = vmatmul.mubr.bf16.gmra.mrb[0].mxu0 %v11003
        %v11400 = vpop.f32.mrb[0].mxu0
        %v11401 = vadd.f32 %v11353, %v11400
        %v11402 = vpop.f32.mrb[0].mxu0
        %v11403 = vpop.f32.mrb[0].mxu0
        %v11404 = vadd.f32 %v11356, %v11403
        %v11405 = vpop.f32.mrb[0].mxu0
        %11406 = vmatprep.mubr.bf16.mxu0 %v11015
        %11407 = vmatmul.mubr.bf16.gmra.mrb[0].mxu0 %v11007
        %v11408 = vpop.f32.mrb[0].mxu0
        %v11409 = vadd.f32 %v11361, %v11408
        %v11410 = vpop.f32.mrb[0].mxu0
        %v11411 = vpop.f32.mrb[0].mxu0
        %v11412 = vpop.f32.mrb[0].mxu0
        %11413 = vdwg.mxu0
        %11414 = vmatprep.subr.bf16.mxu0 0
        %11415 = vmatpush1.bf16.msra.mxu0 %v11272
        %11416 = vmatprep.subr.bf16.mxu0 0
        %11417 = vmatpush1.bf16.msra.mxu0 %v11273
        %11418 = vmatprep.subr.bf16.mxu0 0
        %11419 = vmatpush1.bf16.msra.mxu0 %v11274
        %11420 = vmatprep.subr.bf16.mxu0 0
        %11421 = vmatpush1.bf16.msra.mxu0 %v11275
        %11422 = vmatprep.subr.bf16.mxu0 0
        %11423 = vmatpush1.bf16.msra.mxu0 0
        %11424 = vmatprep.subr.bf16.mxu0 0
        %11425 = vmatpush1.bf16.msra.mxu0 0
        %11426 = vmatprep.subr.bf16.mxu0 0
        %11427 = vmatpush1.bf16.msra.mxu0 0
        %11428 = vmatprep.subr.bf16.mxu0 0
        %11429 = vmatpush1.bf16.msra.mxu0 0
        %11430 = vmatprep.subr.bf16.mxu0 0
        %11431 = vmatpush1.bf16.msra.mxu0 0
        %11432 = vmatprep.subr.bf16.mxu0 0
        %11433 = vmatpush1.bf16.msra.mxu0 0
        %11434 = vmatprep.subr.bf16.mxu0 0
        %11435 = vmatpush1.bf16.msra.mxu0 0
        %11436 = vmatprep.subr.bf16.mxu0 0
        %11437 = vmatpush1.bf16.msra.mxu0 0
        %11438 = vmatprep.subr.bf16.mxu0 0
        %11439 = vmatpush1.bf16.msra.mxu0 0
        %11440 = vmatprep.subr.bf16.mxu0 0
        %11441 = vmatpush1.bf16.msra.mxu0 0
        %11442 = vmatprep.subr.bf16.mxu0 0
        %11443 = vmatpush1.bf16.msra.mxu0 0
        %11444 = vmatprep.subr.bf16.mxu0 0
        %11445 = vmatpush1.bf16.msra.mxu0 0
        %11446 = vmatprep.mubr.bf16.mxu0 0
        %11447 = vmatmul.mubr.bf16.gmra.mrb[0].mxu0 %v11313
        %v11448 = vpop.f32.mrb[0].mxu0
        %v11449 = vadd.f32 %v11401, %v11448
        %v11450 = vpop.f32.mrb[0].mxu0
        %v11451 = vpop.f32.mrb[0].mxu0
        %v11452 = vadd.f32 %v11404, %v11451
        %v11453 = vpop.f32.mrb[0].mxu0
        %11454 = vmatprep.mubr.bf16.mxu0 0
        %11455 = vmatmul.mubr.bf16.gmra.mrb[0].mxu0 %v11316
        %v11456 = vpop.f32.mrb[0].mxu0
        %v11457 = vadd.f32 %v11409, %v11456
        %v11458 = vpop.f32.mrb[0].mxu0
        %v11459 = vpop.f32.mrb[0].mxu0
        %v11460 = vpop.f32.mrb[0].mxu0
        %11461 = vdwg.mxu0
        %v11462 = vld [vmem:[%s17] sm:$0xf]
        %v11463 = vld [vmem:[%s17 + $0x4] sm:$0xf]
        %v11464 = vld [vmem:[%s17 + $0x8] sm:$0xf]
        %v11465 = vld [vmem:[%s17 + $0xc] sm:$0xf]
        %v11466 = vld [vmem:[%s18] sm:$0x1]
        %v11468 = vlaneseq
        %v11469 = vshrl.u32 %v11468, 7
        %v11470 = vsub.s32 0, %v11469
        %v11471 = vrot.slane %v11466, %v11470
        %v11477 = vunpack.c.l.b16 %v11462
        %v11478 = vunpack.c.l.b16 %v11463
        %v11479 = vunpack.c.l.b16 %v11464
        %v11480 = vunpack.c.l.b16 %v11465
        %v11481 = vpack.c.b16 %v11478, %v11477
        %v11482 = vpack.c.b16 %v11480, %v11479
        %v11486 = vsel %vm3101, %v10518, 0
        %v11489 = vsel %vm3101, %v10521, 0
        %11491 = vmatprep.subr.bf16.mxu0 0
        %11492 = vmatpush1.bf16.msra.mxu0 %v11481
        %11493 = vmatprep.subr.bf16.mxu0 0
        %11494 = vmatpush1.bf16.msra.mxu0 %v11482
        %11495 = vmatprep.subr.bf16.mxu0 0
        %11496 = vmatpush1.bf16.msra.mxu0 0
        %11497 = vmatprep.subr.bf16.mxu0 0
        %11498 = vmatpush1.bf16.msra.mxu0 0
        %11499 = vmatprep.subr.bf16.mxu0 0
        %11500 = vmatpush1.bf16.msra.mxu0 0
        %11501 = vmatprep.subr.bf16.mxu0 0
        %11502 = vmatpush1.bf16.msra.mxu0 0
        %11503 = vmatprep.subr.bf16.mxu0 0
        %11504 = vmatpush1.bf16.msra.mxu0 0
        %11505 = vmatprep.subr.bf16.mxu0 0
        %11506 = vmatpush1.bf16.msra.mxu0 0
        %11507 = vmatprep.subr.bf16.mxu0 0
        %11508 = vmatpush1.bf16.msra.mxu0 0
        %11509 = vmatprep.subr.bf16.mxu0 0
        %11510 = vmatpush1.bf16.msra.mxu0 0
        %11511 = vmatprep.subr.bf16.mxu0 0
        %11512 = vmatpush1.bf16.msra.mxu0 0
        %11513 = vmatprep.subr.bf16.mxu0 0
        %11514 = vmatpush1.bf16.msra.mxu0 0
        %11515 = vmatprep.subr.bf16.mxu0 0
        %11516 = vmatpush1.bf16.msra.mxu0 0
        %11517 = vmatprep.subr.bf16.mxu0 0
        %11518 = vmatpush1.bf16.msra.mxu0 0
        %11519 = vmatprep.subr.bf16.mxu0 0
        %11520 = vmatpush1.bf16.msra.mxu0 0
        %11521 = vmatprep.subr.bf16.mxu0 0
        %11522 = vmatpush1.bf16.msra.mxu0 0
        %11523 = vmatprep.mubr.bf16.mxu0 0
        %11524 = vmatmul.mubr.bf16.gmra.mrb[0].mxu0 %v11486
        %v11525 = vpop.f32.mrb[0].mxu0
        %v11526 = vadd.f32 %v11471, %v11525
        %v11527 = vpop.f32.mrb[0].mxu0
        %v11528 = vpop.f32.mrb[0].mxu0
        %v11529 = vadd.f32 %v11471, %v11528
        %v11530 = vpop.f32.mrb[0].mxu0
        %11531 = vmatprep.mubr.bf16.mxu0 0
        %11532 = vmatmul.mubr.bf16.gmra.mrb[0].mxu0 %v11489
        %v11533 = vpop.f32.mrb[0].mxu0
        %v11534 = vadd.f32 %v11471, %v11533
        %v11535 = vpop.f32.mrb[0].mxu0
        %v11536 = vpop.f32.mrb[0].mxu0
        %v11537 = vpop.f32.mrb[0].mxu0
        %11538 = vdwg.mxu0
        %v11539 = vadd.f32 %v11449, %v11526
        %v11540 = vadd.f32 %v11452, %v11529
        %v11541 = vadd.f32 %v11457, %v11534
        %v11542 = vmax.f32 %v11539, 0.0
        %v11543 = vmax.f32 %v11540, 0.0
        %v11544 = vmax.f32 %v11541, 0.0
        %v11545 = vld [vmem:[%s23] sm:$0xff]
        %v11546 = vld [vmem:[%s23 + $0x8] sm:$0xff]
        %v11547 = vld [vmem:[%s23 + $0x10] sm:$0xff]
        %11549 = vset.pattern.permute.xlu0 0
        %11550 = vperm.xlu0 %11549, %v11545
        %v11551 = vpop.permute.xlu0 %11550
        %11554 = vset.pattern.permute.xlu0 0
        %11555 = vperm.xlu0 %11554, %v11546
        %v11556 = vpop.permute.xlu0 %11555
        %11559 = vset.pattern.permute.xlu0 0
        %11560 = vperm.xlu0 %11559, %v11547
        %v11561 = vpop.permute.xlu0 %11560
        %v11563 = vmul.f32 %v11542, %v11551
        %v11564 = vmul.f32 %v11543, %v11556
        %v11565 = vmul.f32 %v11544, %v11561
        %v11566 = vsel %vm3175, %v11563, 0.0
        %v11567 = vsel %vm3175, %v11564, 0.0
        %v11568 = vadd.f32 %v11566, %v11567
        %v11569 = vsel %vm3175, %v11565, 0.0
        %v11570 = vadd.f32 %v11568, %v11569
        %v11571 = vrot.slane %v11570, 4
        %v11572 = vadd.f32 %v11570, %v11571
        %v11573 = vrot.slane %v11572, 2
        %v11574 = vadd.f32 %v11572, %v11573
        %v11575 = vrot.slane %v11574, 1
        %v11576 = vadd.f32 %v11574, %v11575
        %v11577 = vmul.f32 %v11576, 0.0625
        %v11578 = vld [vmem:[%s24] sm:$0xff]
        %v11579 = vld [vmem:[%s24 + $0x8] sm:$0xff]
        %v11580 = vld [vmem:[%s24 + $0x10] sm:$0xff]
        %v11581 = vld [vmem:[%s24 + $0x18] sm:$0xff]
        %v11582 = vld [vmem:[%s24 + $0x20] sm:$0xff]
        %v11583 = vld [vmem:[%s24 + $0x28] sm:$0xff]
        %v11584 = vld [vmem:[%s24 + $0x30] sm:$0xff]
        %v11585 = vld [vmem:[%s24 + $0x38] sm:$0xff]
        %v11586 = vld [vmem:[%s25] sm:$0x1]
        %v11588 = vsel %vm3175, %v11577, 0
        %11590 = vmatprep.subr.mxu0 0.0
        %11591 = vmatpush1.msra.mxu0 %v11578
        %11592 = vmatprep.subr.mxu0 0.0
        %11593 = vmatpush1.msra.mxu0 %v11579
        %11594 = vmatprep.subr.mxu0 0.0
        %11595 = vmatpush1.msra.mxu0 %v11580
        %11596 = vmatprep.subr.mxu0 0.0
        %11597 = vmatpush1.msra.mxu0 %v11581
        %11598 = vmatprep.subr.mxu0 0.0
        %11599 = vmatpush1.msra.mxu0 %v11582
        %11600 = vmatprep.subr.mxu0 0.0
        %11601 = vmatpush1.msra.mxu0 %v11583
        %11602 = vmatprep.subr.mxu0 0.0
        %11603 = vmatpush1.msra.mxu0 %v11584
        %11604 = vmatprep.subr.mxu0 0.0
        %11605 = vmatpush1.msra.mxu0 %v11585
        %11606 = vmatprep.subr.mxu0 0.0
        %11607 = vmatpush1.msra.mxu0 0.0
        %11608 = vmatprep.subr.mxu0 0.0
        %11609 = vmatpush1.msra.mxu0 0.0
        %11610 = vmatprep.subr.mxu0 0.0
        %11611 = vmatpush1.msra.mxu0 0.0
        %11612 = vmatprep.subr.mxu0 0.0
        %11613 = vmatpush1.msra.mxu0 0.0
        %11614 = vmatprep.subr.mxu0 0.0
        %11615 = vmatpush1.msra.mxu0 0.0
        %11616 = vmatprep.subr.mxu0 0.0
        %11617 = vmatpush1.msra.mxu0 0.0
        %11618 = vmatprep.subr.mxu0 0.0
        %11619 = vmatpush1.msra.mxu0 0.0
        %11620 = vmatprep.subr.mxu0 0.0
        %11621 = vmatpush1.msra.mxu0 0.0
        %11622 = vmatprep.subr.mxu0 0.0
        %11623 = vmatpush1.msra.mxu0 0.0
        %11624 = vmatprep.subr.mxu0 0.0
        %11625 = vmatpush1.msra.mxu0 0.0
        %11626 = vmatprep.subr.mxu0 0.0
        %11627 = vmatpush1.msra.mxu0 0.0
        %11628 = vmatprep.subr.mxu0 0.0
        %11629 = vmatpush1.msra.mxu0 0.0
        %11630 = vmatprep.subr.mxu0 0.0
        %11631 = vmatpush1.msra.mxu0 0.0
        %11632 = vmatprep.subr.mxu0 0.0
        %11633 = vmatpush1.msra.mxu0 0.0
        %11634 = vmatprep.subr.mxu0 0.0
        %11635 = vmatpush1.msra.mxu0 0.0
        %11636 = vmatprep.subr.mxu0 0.0
        %11637 = vmatpush1.msra.mxu0 0.0
        %11638 = vmatprep.subr.mxu0 0.0
        %11639 = vmatpush1.msra.mxu0 0.0
        %11640 = vmatprep.subr.mxu0 0.0
        %11641 = vmatpush1.msra.mxu0 0.0
        %11642 = vmatprep.subr.mxu0 0.0
        %11643 = vmatpush1.msra.mxu0 0.0
        %11644 = vmatprep.subr.mxu0 0.0
        %11645 = vmatpush1.msra.mxu0 0.0
        %11646 = vmatprep.subr.mxu0 0.0
        %11647 = vmatpush1.msra.mxu0 0.0
        %11648 = vmatprep.subr.mxu0 0.0
        %11649 = vmatpush1.msra.mxu0 0.0
        %11650 = vmatprep.subr.mxu0 0.0
        %11651 = vmatpush1.msra.mxu0 0.0
        %11652 = vmatprep.subr.mxu0 0.0
        %11653 = vmatpush1.msra.mxu0 0.0
        %11654 = vmatprep.mubr.f32.mxu0 0.0
        %11655 = vmatmul.mubr.f32.gmra.mrb[0].mxu0 %v11588
        %v11656 = vpop.f32.mrb[0].mxu0
        %v11657 = vadd.f32 %v11586, %v11656
        %v11658 = vpop.f32.mrb[0].mxu0
        %11659 = vdwg.mxu0
        %vm11660 = vcmask 73728
        %11661 = vst.msk [vmem:[%s783] sm:$0x1] %vm11660, %v11657
        %s11662 = sand.u32 %s599, 1
        %s11663 = scalar_lea.sflag [#allocation9], %s11662
        %s11664 = sand.u32 %s599, 1
        %s11665 = scalar_lea.vmem [#allocation8], %s11664
        // Predicated region
        $region125: #{foldnet_forward.1} parent=123 // pred_check
          %p11666 = pneg %p609
        $region126: #{foldnet_forward.1} parent=123 // pred_check_branch
          %11668 = sbr.rel (%p11666) target = $region128
        $region127: #{foldnet_forward.1} parent=123 // pred_region
          %s11670 = ssub.s32 16, 16
          %11671 = vsyncadd %s11663, %s11670
          %s11672 = smul.addr %s40, 16
          %s11673 = scalar_lea.hbm %s26, %s11672
          %s11675 = sshll.u32 %s11665, 4
          %s11676 = int_to_ptr.vmem [resolvable:$true] %s11675
          %11678 = dma.vmem_to_hbm [thread:$0]  %s11676, 16, %s11673, %s11663
        $region128: #{foldnet_forward.1} parent=123 // pred_fallthru
          _
      $region124: #{foldnet_forward.1} parent=5 // pred_fallthru
        _
      %p11679 = scmp.le.s32.totalorder 2, %s35
      // Predicated region
      $region129: #{foldnet_forward.1} parent=5 // pred_check
        %p11680 = pneg %p11679
      $region130: #{foldnet_forward.1} parent=5 // pred_check_branch
        %11682 = sbr.rel (%p11680) target = $region132
      $region131: #{foldnet_forward.1} parent=5 // pred_region
        %s11683 = ssub.s32 %s35, 2
        // Predicated region
        $region133: #{foldnet_forward.1} parent=131 // pred_check
          %p11684 = pneg %p615
        $region134: #{foldnet_forward.1} parent=131 // pred_check_branch
          %11686 = sbr.rel (%p11684) target = $region136
        $region135: #{foldnet_forward.1} parent=131 // pred_region
          %s11687 = sand.u32 %s600, 1
          %s11688 = scalar_lea.sflag [#allocation9], %s11687
          %s11689 = sand.u32 %s600, 1
          %s11690 = scalar_lea.vmem [#allocation8], %s11689
          %11691 = dma.done %s11688, 16
        $region136: #{foldnet_forward.1} parent=131 // pred_fallthru
          _
      $region132: #{foldnet_forward.1} parent=5 // pred_fallthru
        _
    $region6: #{foldnet_forward.1} parent=1 // loop_footer
      %s39 = sadd.s32 1, %s35
    $region7: #{foldnet_forward.1} parent=1 // loop_footer_branch
      %34 = sbr.rel target = $region3
    $region8: #{foldnet_forward.1} parent=1 // loop_exit
      _
    %11692 = vsyncpa [#allocation9], 1
    %s11693 = scalar_lea.sflag [#allocation9], 1
    %11694 = vsyncpa %s11693, 1

</llo_original>
